<compile_context>
chip_gen: v7x
topology: tpu7x:2x2x1
jax: 0.10.0
libtpu: 0.0.40
codegen_flags: <defaults>
</compile_context>

<pallas_src>
import functools

import jax
import jax.numpy as jnp
from jax.experimental import pallas as pl
from jax.experimental.pallas import tpu as pltpu


# ---------------------------------------------------------------------------
# Fused kernel: conv1+BN1+ReLU -> conv2+BN2 -> SE -> +residual -> ReLU
# One grid step processes one batch element.
# ---------------------------------------------------------------------------
def se_block_kernel(x_ref, mask_ref, w1_ref, b1_ref, w2_ref, b2_ref,
                    fc1w_ref, fc1b_ref, fc2w_ref, fc2b_ref,
                    o_ref,
                    xpad_ref, midpad_ref, acc_ref,
                    *, H, W):
    """Refs:
      x_ref    : (1, H, W, Cin)   input block (f32)
      mask_ref : (H*WP, 1)        1.0 on valid columns, 0.0 on the 2 junk cols
      w1_ref   : (9, Cin, C)      conv1 weight, BN1 scale folded, bf16
      b1_ref   : (1, C)           folded BN1 bias (f32)
      w2_ref   : (9, C, C)        conv2 weight, BN2 scale folded, bf16
      b2_ref   : (1, C)           folded BN2 bias (f32)
      fc1w/fc1b/fc2w/fc2b         SE linear layers (f32)
      o_ref    : (1, H, W, C)     output block
      xpad_ref : ((H+3)*WP, Cin)  VMEM: zero-padded, width-flattened input
      midpad_ref:((H+3)*WP, C)    VMEM: zero-padded, width-flattened conv1 out
      acc_ref  : (H*WP, C)        VMEM: f32 conv accumulator (shared by both convs)
    Flat layout: padded pixel (yy, xx) lives at flat row yy*WP + xx, WP = W+2;
    original pixel (y, x) therefore lives at (y+1)*WP + (x+1).
    """
    WP = W + 2
    HWP = H * WP
    f32 = jnp.float32
    bf16 = jnp.bfloat16

    # --- zero the padded scratch buffers: their borders must stay zero ------
    xpad_ref[...] = jnp.zeros_like(xpad_ref)
    midpad_ref[...] = jnp.zeros_like(midpad_ref)

    # --- copy the input rows into the padded / width-flattened layout -------
    for y in range(H):
        xpad_ref[pl.ds((y + 1) * WP + 1, W), :] = x_ref[0, y, :, :].astype(f32)

    # --- conv1 (+ folded BN1 scale): 9 shifted 1-D slices -> 9 MXU matmuls --
    acc_ref[...] = jnp.zeros_like(acc_ref)
    for t in range(9):
        dy, dx = t // 3, t % 3
        patch = xpad_ref[pl.ds(dy * WP + dx, HWP), :].astype(bf16)
        acc_ref[...] += jnp.dot(patch, w1_ref[t, :, :],
                                preferred_element_type=f32)

    # bias + ReLU; zero the 2 junk columns so they cannot leak into the zero
    # border of midpad; a single shifted store re-pads the result for conv2
    # (extended index q maps to padded index q + WP + 1).
    mid = jnp.maximum(acc_ref[...] + b1_ref[...], 0.0) * mask_ref[...]
    midpad_ref[pl.ds(WP + 1, HWP), :] = mid

    # --- conv2 (+ folded BN2 scale), no ReLU ---------------------------------
    acc_ref[...] = jnp.zeros_like(acc_ref)
    for t in range(9):
        dy, dx = t // 3, t % 3
        patch = midpad_ref[pl.ds(dy * WP + dx, HWP), :].astype(bf16)
        acc_ref[...] += jnp.dot(patch, w2_ref[t, :, :],
                                preferred_element_type=f32)

    # --- SE: masked global average pool -> FC -> ReLU -> FC -> sigmoid ------
    # mean(conv + bias) over valid pixels == mean(conv) + bias.
    pooled = jnp.sum(acc_ref[...] * mask_ref[...], axis=0, keepdims=True) / (H * W)
    pooled = pooled + b2_ref[...]                                    # (1, C)
    h = jnp.maximum(jnp.dot(pooled, fc1w_ref[...],
                            preferred_element_type=f32) + fc1b_ref[...], 0.0)
    gate = jax.nn.sigmoid(jnp.dot(h, fc2w_ref[...],
                                  preferred_element_type=f32) + fc2b_ref[...])

    # --- scale, add residual (f32 input rows), final ReLU, store ------------
    for y in range(H):
        row = (acc_ref[pl.ds(y * WP, W), :] + b2_ref[...]) * gate \
              + x_ref[0, y, :, :].astype(f32)
        o_ref[0, y, :, :] = jnp.maximum(row, 0.0).astype(o_ref.dtype)


# ---------------------------------------------------------------------------
# Wrapper: fold BN, reshape weights, build column mask, launch the fused kernel
# ---------------------------------------------------------------------------
def se_basic_block(x_nhwc, p):
    N, H, W, Cin = x_nhwc.shape
    planes = p["w1"].shape[-1]
    R = p["fc1_w"].shape[-1]
    WP = W + 2
    HWP = H * WP
    eps = 1e-5

    # Fold BN (inference mode) into per-channel scale/bias; fold the scale
    # directly into the conv weights (free, compile-time op on tiny tensors).
    scale1 = p["gamma1"] / jnp.sqrt(p["var1"] + eps)
    bias1 = (p["beta1"] - p["mean1"] * scale1)[None, :]
    scale2 = p["gamma2"] / jnp.sqrt(p["var2"] + eps)
    bias2 = (p["beta2"] - p["mean2"] * scale2)[None, :]

    w1f = (p["w1"] * scale1[None, None, None, :]
           ).reshape(9, Cin, planes).astype(jnp.bfloat16)
    w2f = (p["w2"] * scale2[None, None, None, :]
           ).reshape(9, planes, planes).astype(jnp.bfloat16)

    # 0/1 mask over the width-extended flat spatial index: 1.0 on real columns,
    # 0.0 on the 2 junk columns produced by the width-flattened conv trick.
    colmask = ((jnp.arange(HWP) % WP) < W).astype(jnp.float32)[:, None]

    kernel = functools.partial(se_block_kernel, H=H, W=W)

    return pl.pallas_call(
        kernel,
        out_shape=jax.ShapeDtypeStruct((N, H, W, planes), x_nhwc.dtype),
        grid_spec=pltpu.PrefetchScalarGridSpec(
            num_scalar_prefetch=0,
            grid=(N,),
            in_specs=[
                pl.BlockSpec((1, H, W, Cin), lambda n: (n, 0, 0, 0)),   # x
                pl.BlockSpec((HWP, 1), lambda n: (0, 0)),               # col mask
                pl.BlockSpec((9, Cin, planes), lambda n: (0, 0, 0)),    # w1 (bf16)
                pl.BlockSpec((1, planes), lambda n: (0, 0)),            # bias1
                pl.BlockSpec((9, planes, planes), lambda n: (0, 0, 0)), # w2 (bf16)
                pl.BlockSpec((1, planes), lambda n: (0, 0)),            # bias2
                pl.BlockSpec((planes, R), lambda n: (0, 0)),            # fc1_w
                pl.BlockSpec((1, R), lambda n: (0, 0)),                 # fc1_b
                pl.BlockSpec((R, planes), lambda n: (0, 0)),            # fc2_w
                pl.BlockSpec((1, planes), lambda n: (0, 0)),            # fc2_b
            ],
            out_specs=pl.BlockSpec((1, H, W, planes), lambda n: (n, 0, 0, 0)),
            scratch_shapes=[
                pltpu.VMEM(((H + 3) * WP, Cin), jnp.float32),    # padded input
                pltpu.VMEM(((H + 3) * WP, planes), jnp.float32), # padded conv1 out
                pltpu.VMEM((HWP, planes), jnp.float32),          # conv accumulator
            ],
        ),
        compiler_params=pltpu.CompilerParams(
            dimension_semantics=("parallel",)),
    )(x_nhwc, colmask, w1f, bias1, w2f, bias2,
      p["fc1_w"], p["fc1_b"][None, :], p["fc2_w"], p["fc2_b"][None, :])


# ---------------------------------------------------------------------------
# Pure-JAX reference (f32 throughout) for correctness checking
# ---------------------------------------------------------------------------
def ref_forward(x_nhwc, p):
    eps = 1e-5

    def conv(x, w):
        return jax.lax.conv_general_dilated(
            x, w, window_strides=(1, 1), padding="SAME",
            dimension_numbers=("NHWC", "HWIO", "NHWC"))

    def bn(x, g, b, m, v):
        return (x - m) / jnp.sqrt(v + eps) * g + b

    out = jax.nn.relu(bn(conv(x_nhwc, p["w1"]),
                         p["gamma1"], p["beta1"], p["mean1"], p["var1"]))
    out = bn(conv(out, p["w2"]), p["gamma2"], p["beta2"], p["mean2"], p["var2"])
    pooled = jnp.mean(out, axis=(1, 2))                      # (N, C)
    y = jax.nn.relu(pooled @ p["fc1_w"] + p["fc1_b"])
    y = jax.nn.sigmoid(y @ p["fc2_w"] + p["fc2_b"])
    out = out * y[:, None, None, :]
    return jax.nn.relu(out + x_nhwc)


if __name__ == "__main__":
    # Small shapes consistent with the module: inplanes == planes, stride=1,
    # downsample=None so the identity residual is valid.
    N, C, H, W = 2, 4, 16, 16
    planes, reduction = C, 16

    key = jax.random.PRNGKey(0)
    ks = jax.random.split(key, 16)

    x_nchw = jax.random.normal(ks[0], (N, C, H, W), jnp.float32)
    x = jnp.transpose(x_nchw, (0, 2, 3, 1))  # NCHW -> NHWC

    params = {
        "w1": 0.1 * jax.random.normal(ks[1], (3, 3, C, planes), jnp.float32),
        "w2": 0.1 * jax.random.normal(ks[2], (3, 3, planes, planes), jnp.float32),
        "gamma1": 1.0 + 0.1 * jax.random.normal(ks[3], (planes,), jnp.float32),
        "beta1": 0.1 * jax.random.normal(ks[4], (planes,), jnp.float32),
        "mean1": 0.1 * jax.random.normal(ks[5], (planes,), jnp.float32),
        "var1": 1.0 + 0.1 * jnp.abs(jax.random.normal(ks[6], (planes,), jnp.float32)),
        "gamma2": 1.0 + 0.1 * jax.random.normal(ks[7], (planes,), jnp.float32),
        "beta2": 0.1 * jax.random.normal(ks[8], (planes,), jnp.float32),
        "mean2": 0.1 * jax.random.normal(ks[9], (planes,), jnp.float32),
        "var2": 1.0 + 0.1 * jnp.abs(jax.random.normal(ks[10], (planes,), jnp.float32)),
        # nn.Linear(channel, reduction) / nn.Linear(reduction, channel),
        # stored pre-transposed as (in, out) for the kernel matmuls.
        "fc1_w": 0.2 * jax.random.normal(ks[11], (planes, reduction), jnp.float32),
        "fc1_b": 0.1 * jax.random.normal(ks[12], (reduction,), jnp.float32),
        "fc2_w": 0.2 * jax.random.normal(ks[13], (reduction, planes), jnp.float32),
        "fc2_b": 0.1 * jax.random.normal(ks[14], (planes,), jnp.float32),
    }

    out = jax.block_until_ready(se_basic_block(x, params))
    ref = jax.block_until_ready(ref_forward(x, params))

    assert out.shape == (N, H, W, C)
    # Tolerance loosened slightly because the conv matmuls run with bf16 inputs
    # (f32 accumulation); everything else is f32.
    max_err = jnp.max(jnp.abs(out - ref))
    assert jnp.allclose(out, ref, rtol=5e-2, atol=5e-2), f"max abs err = {max_err}"

    print("KERNEL_OK")
</pallas_src>

<mosaic_0001>
module attributes {stable_mosaic.version = 11 : i64} {
  func.func @se_block_kernel(%arg0: i32, %arg1: memref<1x16x16x4xf32, #tpu.memory_space<vmem>>, %arg2: memref<288x1xf32, #tpu.memory_space<vmem>>, %arg3: memref<9x4x4xbf16, #tpu.memory_space<vmem>>, %arg4: memref<1x4xf32, #tpu.memory_space<vmem>>, %arg5: memref<9x4x4xbf16, #tpu.memory_space<vmem>>, %arg6: memref<1x4xf32, #tpu.memory_space<vmem>>, %arg7: memref<4x16xf32, #tpu.memory_space<vmem>>, %arg8: memref<1x16xf32, #tpu.memory_space<vmem>>, %arg9: memref<16x4xf32, #tpu.memory_space<vmem>>, %arg10: memref<1x4xf32, #tpu.memory_space<vmem>>, %arg11: memref<1x16x16x4xf32, #tpu.memory_space<vmem>>, %arg12: memref<342x4xf32, #tpu.memory_space<vmem>>, %arg13: memref<342x4xf32, #tpu.memory_space<vmem>>, %arg14: memref<288x4xf32, #tpu.memory_space<vmem>>) attributes {dimension_semantics = [#tpu.dimension_semantics<parallel>], iteration_bounds = array<i64: 2>, scalar_prefetch = 0 : i64, scratch_operands = 3 : i64, tpu.core_type = #tpu.core_type<tc>, window_params = [{transform_indices = @transform_0, window_bounds = array<i64: 1, 16, 16, 4>}, {pipeline_mode = #tpu.pipeline_mode<synchronous>, transform_indices = @transform_1, window_bounds = array<i64: 288, 1>}, {pipeline_mode = #tpu.pipeline_mode<synchronous>, transform_indices = @transform_2, window_bounds = array<i64: 9, 4, 4>}, {pipeline_mode = #tpu.pipeline_mode<synchronous>, transform_indices = @transform_3, window_bounds = array<i64: 1, 4>}, {pipeline_mode = #tpu.pipeline_mode<synchronous>, transform_indices = @transform_4, window_bounds = array<i64: 9, 4, 4>}, {pipeline_mode = #tpu.pipeline_mode<synchronous>, transform_indices = @transform_5, window_bounds = array<i64: 1, 4>}, {pipeline_mode = #tpu.pipeline_mode<synchronous>, transform_indices = @transform_6, window_bounds = array<i64: 4, 16>}, {pipeline_mode = #tpu.pipeline_mode<synchronous>, transform_indices = @transform_7, window_bounds = array<i64: 1, 16>}, {pipeline_mode = #tpu.pipeline_mode<synchronous>, transform_indices = @transform_8, window_bounds = array<i64: 16, 4>}, {pipeline_mode = #tpu.pipeline_mode<synchronous>, transform_indices = @transform_9, window_bounds = array<i64: 1, 4>}, {transform_indices = @transform_10, window_bounds = array<i64: 1, 16, 16, 4>}]} {
    %cst = arith.constant 0.000000e+00 : f32
    %0 = vector.broadcast %cst : f32 to vector<342x4xf32>
    %c0 = arith.constant 0 : index
    %c0_0 = arith.constant 0 : index
    %1 = vector.load %arg12[%c0, %c0_0] : memref<342x4xf32, #tpu.memory_space<vmem>>, vector<342x4xf32>
    tpu.vector_store %arg12[%c0, %c0_0], %0 {strides = array<i32>} : memref<342x4xf32, #tpu.memory_space<vmem>>, vector<342x4xf32>,
    %cst_1 = arith.constant 0.000000e+00 : f32
    %2 = vector.broadcast %cst_1 : f32 to vector<342x4xf32>
    %c0_2 = arith.constant 0 : index
    %c0_3 = arith.constant 0 : index
    %3 = vector.load %arg13[%c0_2, %c0_3] : memref<342x4xf32, #tpu.memory_space<vmem>>, vector<342x4xf32>
    tpu.vector_store %arg13[%c0_2, %c0_3], %2 {strides = array<i32>} : memref<342x4xf32, #tpu.memory_space<vmem>>, vector<342x4xf32>,
    %c0_4 = arith.constant 0 : index
    %c0_5 = arith.constant 0 : index
    %c0_6 = arith.constant 0 : index
    %c0_7 = arith.constant 0 : index
    %4 = vector.load %arg1[%c0_4, %c0_5, %c0_6, %c0_7] : memref<1x16x16x4xf32, #tpu.memory_space<vmem>>, vector<1x1x16x4xf32>
    %5 = vector.shape_cast %4 : vector<1x1x16x4xf32> to vector<16x4xf32>
    %c19 = arith.constant 19 : index
    %c0_8 = arith.constant 0 : index
    %6 = vector.load %arg12[%c19, %c0_8] : memref<342x4xf32, #tpu.memory_space<vmem>>, vector<16x4xf32>
    tpu.vector_store %arg12[%c19, %c0_8], %5 {strides = array<i32>} : memref<342x4xf32, #tpu.memory_space<vmem>>, vector<16x4xf32>,
    %c0_9 = arith.constant 0 : index
    %c1 = arith.constant 1 : index
    %c0_10 = arith.constant 0 : index
    %c0_11 = arith.constant 0 : index
    %7 = vector.load %arg1[%c0_9, %c1, %c0_10, %c0_11] : memref<1x16x16x4xf32, #tpu.memory_space<vmem>>, vector<1x1x16x4xf32>
    %8 = vector.shape_cast %7 : vector<1x1x16x4xf32> to vector<16x4xf32>
    %c37 = arith.constant 37 : index
    %c0_12 = arith.constant 0 : index
    %9 = vector.load %arg12[%c37, %c0_12] : memref<342x4xf32, #tpu.memory_space<vmem>>, vector<16x4xf32>
    tpu.vector_store %arg12[%c37, %c0_12], %8 {strides = array<i32>} : memref<342x4xf32, #tpu.memory_space<vmem>>, vector<16x4xf32>,
    %c0_13 = arith.constant 0 : index
    %c2 = arith.constant 2 : index
    %c0_14 = arith.constant 0 : index
    %c0_15 = arith.constant 0 : index
    %10 = vector.load %arg1[%c0_13, %c2, %c0_14, %c0_15] : memref<1x16x16x4xf32, #tpu.memory_space<vmem>>, vector<1x1x16x4xf32>
    %11 = vector.shape_cast %10 : vector<1x1x16x4xf32> to vector<16x4xf32>
    %c55 = arith.constant 55 : index
    %c0_16 = arith.constant 0 : index
    %12 = vector.load %arg12[%c55, %c0_16] : memref<342x4xf32, #tpu.memory_space<vmem>>, vector<16x4xf32>
    tpu.vector_store %arg12[%c55, %c0_16], %11 {strides = array<i32>} : memref<342x4xf32, #tpu.memory_space<vmem>>, vector<16x4xf32>,
    %c0_17 = arith.constant 0 : index
    %c3 = arith.constant 3 : index
    %c0_18 = arith.constant 0 : index
    %c0_19 = arith.constant 0 : index
    %13 = vector.load %arg1[%c0_17, %c3, %c0_18, %c0_19] : memref<1x16x16x4xf32, #tpu.memory_space<vmem>>, vector<1x1x16x4xf32>
    %14 = vector.shape_cast %13 : vector<1x1x16x4xf32> to vector<16x4xf32>
    %c73 = arith.constant 73 : index
    %c0_20 = arith.constant 0 : index
    %15 = vector.load %arg12[%c73, %c0_20] : memref<342x4xf32, #tpu.memory_space<vmem>>, vector<16x4xf32>
    tpu.vector_store %arg12[%c73, %c0_20], %14 {strides = array<i32>} : memref<342x4xf32, #tpu.memory_space<vmem>>, vector<16x4xf32>,
    %c0_21 = arith.constant 0 : index
    %c4 = arith.constant 4 : index
    %c0_22 = arith.constant 0 : index
    %c0_23 = arith.constant 0 : index
    %16 = vector.load %arg1[%c0_21, %c4, %c0_22, %c0_23] : memref<1x16x16x4xf32, #tpu.memory_space<vmem>>, vector<1x1x16x4xf32>
    %17 = vector.shape_cast %16 : vector<1x1x16x4xf32> to vector<16x4xf32>
    %c91 = arith.constant 91 : index
    %c0_24 = arith.constant 0 : index
    %18 = vector.load %arg12[%c91, %c0_24] : memref<342x4xf32, #tpu.memory_space<vmem>>, vector<16x4xf32>
    tpu.vector_store %arg12[%c91, %c0_24], %17 {strides = array<i32>} : memref<342x4xf32, #tpu.memory_space<vmem>>, vector<16x4xf32>,
    %c0_25 = arith.constant 0 : index
    %c5 = arith.constant 5 : index
    %c0_26 = arith.constant 0 : index
    %c0_27 = arith.constant 0 : index
    %19 = vector.load %arg1[%c0_25, %c5, %c0_26, %c0_27] : memref<1x16x16x4xf32, #tpu.memory_space<vmem>>, vector<1x1x16x4xf32>
    %20 = vector.shape_cast %19 : vector<1x1x16x4xf32> to vector<16x4xf32>
    %c109 = arith.constant 109 : index
    %c0_28 = arith.constant 0 : index
    %21 = vector.load %arg12[%c109, %c0_28] : memref<342x4xf32, #tpu.memory_space<vmem>>, vector<16x4xf32>
    tpu.vector_store %arg12[%c109, %c0_28], %20 {strides = array<i32>} : memref<342x4xf32, #tpu.memory_space<vmem>>, vector<16x4xf32>,
    %c0_29 = arith.constant 0 : index
    %c6 = arith.constant 6 : index
    %c0_30 = arith.constant 0 : index
    %c0_31 = arith.constant 0 : index
    %22 = vector.load %arg1[%c0_29, %c6, %c0_30, %c0_31] : memref<1x16x16x4xf32, #tpu.memory_space<vmem>>, vector<1x1x16x4xf32>
    %23 = vector.shape_cast %22 : vector<1x1x16x4xf32> to vector<16x4xf32>
    %c127 = arith.constant 127 : index
    %c0_32 = arith.constant 0 : index
    %24 = vector.load %arg12[%c127, %c0_32] : memref<342x4xf32, #tpu.memory_space<vmem>>, vector<16x4xf32>
    tpu.vector_store %arg12[%c127, %c0_32], %23 {strides = array<i32>} : memref<342x4xf32, #tpu.memory_space<vmem>>, vector<16x4xf32>,
    %c0_33 = arith.constant 0 : index
    %c7 = arith.constant 7 : index
    %c0_34 = arith.constant 0 : index
    %c0_35 = arith.constant 0 : index
    %25 = vector.load %arg1[%c0_33, %c7, %c0_34, %c0_35] : memref<1x16x16x4xf32, #tpu.memory_space<vmem>>, vector<1x1x16x4xf32>
    %26 = vector.shape_cast %25 : vector<1x1x16x4xf32> to vector<16x4xf32>
    %c145 = arith.constant 145 : index
    %c0_36 = arith.constant 0 : index
    %27 = vector.load %arg12[%c145, %c0_36] : memref<342x4xf32, #tpu.memory_space<vmem>>, vector<16x4xf32>
    tpu.vector_store %arg12[%c145, %c0_36], %26 {strides = array<i32>} : memref<342x4xf32, #tpu.memory_space<vmem>>, vector<16x4xf32>,
    %c0_37 = arith.constant 0 : index
    %c8 = arith.constant 8 : index
    %c0_38 = arith.constant 0 : index
    %c0_39 = arith.constant 0 : index
    %28 = vector.load %arg1[%c0_37, %c8, %c0_38, %c0_39] : memref<1x16x16x4xf32, #tpu.memory_space<vmem>>, vector<1x1x16x4xf32>
    %29 = vector.shape_cast %28 : vector<1x1x16x4xf32> to vector<16x4xf32>
    %c163 = arith.constant 163 : index
    %c0_40 = arith.constant 0 : index
    %30 = vector.load %arg12[%c163, %c0_40] : memref<342x4xf32, #tpu.memory_space<vmem>>, vector<16x4xf32>
    tpu.vector_store %arg12[%c163, %c0_40], %29 {strides = array<i32>} : memref<342x4xf32, #tpu.memory_space<vmem>>, vector<16x4xf32>,
    %c0_41 = arith.constant 0 : index
    %c9 = arith.constant 9 : index
    %c0_42 = arith.constant 0 : index
    %c0_43 = arith.constant 0 : index
    %31 = vector.load %arg1[%c0_41, %c9, %c0_42, %c0_43] : memref<1x16x16x4xf32, #tpu.memory_space<vmem>>, vector<1x1x16x4xf32>
    %32 = vector.shape_cast %31 : vector<1x1x16x4xf32> to vector<16x4xf32>
    %c181 = arith.constant 181 : index
    %c0_44 = arith.constant 0 : index
    %33 = vector.load %arg12[%c181, %c0_44] : memref<342x4xf32, #tpu.memory_space<vmem>>, vector<16x4xf32>
    tpu.vector_store %arg12[%c181, %c0_44], %32 {strides = array<i32>} : memref<342x4xf32, #tpu.memory_space<vmem>>, vector<16x4xf32>,
    %c0_45 = arith.constant 0 : index
    %c10 = arith.constant 10 : index
    %c0_46 = arith.constant 0 : index
    %c0_47 = arith.constant 0 : index
    %34 = vector.load %arg1[%c0_45, %c10, %c0_46, %c0_47] : memref<1x16x16x4xf32, #tpu.memory_space<vmem>>, vector<1x1x16x4xf32>
    %35 = vector.shape_cast %34 : vector<1x1x16x4xf32> to vector<16x4xf32>
    %c199 = arith.constant 199 : index
    %c0_48 = arith.constant 0 : index
    %36 = vector.load %arg12[%c199, %c0_48] : memref<342x4xf32, #tpu.memory_space<vmem>>, vector<16x4xf32>
    tpu.vector_store %arg12[%c199, %c0_48], %35 {strides = array<i32>} : memref<342x4xf32, #tpu.memory_space<vmem>>, vector<16x4xf32>,
    %c0_49 = arith.constant 0 : index
    %c11 = arith.constant 11 : index
    %c0_50 = arith.constant 0 : index
    %c0_51 = arith.constant 0 : index
    %37 = vector.load %arg1[%c0_49, %c11, %c0_50, %c0_51] : memref<1x16x16x4xf32, #tpu.memory_space<vmem>>, vector<1x1x16x4xf32>
    %38 = vector.shape_cast %37 : vector<1x1x16x4xf32> to vector<16x4xf32>
    %c217 = arith.constant 217 : index
    %c0_52 = arith.constant 0 : index
    %39 = vector.load %arg12[%c217, %c0_52] : memref<342x4xf32, #tpu.memory_space<vmem>>, vector<16x4xf32>
    tpu.vector_store %arg12[%c217, %c0_52], %38 {strides = array<i32>} : memref<342x4xf32, #tpu.memory_space<vmem>>, vector<16x4xf32>,
    %c0_53 = arith.constant 0 : index
    %c12 = arith.constant 12 : index
    %c0_54 = arith.constant 0 : index
    %c0_55 = arith.constant 0 : index
    %40 = vector.load %arg1[%c0_53, %c12, %c0_54, %c0_55] : memref<1x16x16x4xf32, #tpu.memory_space<vmem>>, vector<1x1x16x4xf32>
    %41 = vector.shape_cast %40 : vector<1x1x16x4xf32> to vector<16x4xf32>
    %c235 = arith.constant 235 : index
    %c0_56 = arith.constant 0 : index
    %42 = vector.load %arg12[%c235, %c0_56] : memref<342x4xf32, #tpu.memory_space<vmem>>, vector<16x4xf32>
    tpu.vector_store %arg12[%c235, %c0_56], %41 {strides = array<i32>} : memref<342x4xf32, #tpu.memory_space<vmem>>, vector<16x4xf32>,
    %c0_57 = arith.constant 0 : index
    %c13 = arith.constant 13 : index
    %c0_58 = arith.constant 0 : index
    %c0_59 = arith.constant 0 : index
    %43 = vector.load %arg1[%c0_57, %c13, %c0_58, %c0_59] : memref<1x16x16x4xf32, #tpu.memory_space<vmem>>, vector<1x1x16x4xf32>
    %44 = vector.shape_cast %43 : vector<1x1x16x4xf32> to vector<16x4xf32>
    %c253 = arith.constant 253 : index
    %c0_60 = arith.constant 0 : index
    %45 = vector.load %arg12[%c253, %c0_60] : memref<342x4xf32, #tpu.memory_space<vmem>>, vector<16x4xf32>
    tpu.vector_store %arg12[%c253, %c0_60], %44 {strides = array<i32>} : memref<342x4xf32, #tpu.memory_space<vmem>>, vector<16x4xf32>,
    %c0_61 = arith.constant 0 : index
    %c14 = arith.constant 14 : index
    %c0_62 = arith.constant 0 : index
    %c0_63 = arith.constant 0 : index
    %46 = vector.load %arg1[%c0_61, %c14, %c0_62, %c0_63] : memref<1x16x16x4xf32, #tpu.memory_space<vmem>>, vector<1x1x16x4xf32>
    %47 = vector.shape_cast %46 : vector<1x1x16x4xf32> to vector<16x4xf32>
    %c271 = arith.constant 271 : index
    %c0_64 = arith.constant 0 : index
    %48 = vector.load %arg12[%c271, %c0_64] : memref<342x4xf32, #tpu.memory_space<vmem>>, vector<16x4xf32>
    tpu.vector_store %arg12[%c271, %c0_64], %47 {strides = array<i32>} : memref<342x4xf32, #tpu.memory_space<vmem>>, vector<16x4xf32>,
    %c0_65 = arith.constant 0 : index
    %c15 = arith.constant 15 : index
    %c0_66 = arith.constant 0 : index
    %c0_67 = arith.constant 0 : index
    %49 = vector.load %arg1[%c0_65, %c15, %c0_66, %c0_67] : memref<1x16x16x4xf32, #tpu.memory_space<vmem>>, vector<1x1x16x4xf32>
    %50 = vector.shape_cast %49 : vector<1x1x16x4xf32> to vector<16x4xf32>
    %c289 = arith.constant 289 : index
    %c0_68 = arith.constant 0 : index
    %51 = vector.load %arg12[%c289, %c0_68] : memref<342x4xf32, #tpu.memory_space<vmem>>, vector<16x4xf32>
    tpu.vector_store %arg12[%c289, %c0_68], %50 {strides = array<i32>} : memref<342x4xf32, #tpu.memory_space<vmem>>, vector<16x4xf32>,
    %cst_69 = arith.constant 0.000000e+00 : f32
    %52 = vector.broadcast %cst_69 : f32 to vector<288x4xf32>
    %c0_70 = arith.constant 0 : index
    %c0_71 = arith.constant 0 : index
    %53 = vector.load %arg14[%c0_70, %c0_71] : memref<288x4xf32, #tpu.memory_space<vmem>>, vector<288x4xf32>
    tpu.vector_store %arg14[%c0_70, %c0_71], %52 {strides = array<i32>} : memref<288x4xf32, #tpu.memory_space<vmem>>, vector<288x4xf32>,
    %c0_72 = arith.constant 0 : index
    %c0_73 = arith.constant 0 : index
    %54 = vector.load %arg12[%c0_72, %c0_73] : memref<342x4xf32, #tpu.memory_space<vmem>>, vector<288x4xf32>
    %55 = arith.truncf %54 : vector<288x4xf32> to vector<288x4xbf16>
    %c0_74 = arith.constant 0 : index
    %c0_75 = arith.constant 0 : index
    %56 = vector.load %arg14[%c0_74, %c0_75] : memref<288x4xf32, #tpu.memory_space<vmem>>, vector<288x4xf32>
    %c0_76 = arith.constant 0 : index
    %c0_77 = arith.constant 0 : index
    %c0_78 = arith.constant 0 : index
    %57 = vector.load %arg3[%c0_76, %c0_77, %c0_78] : memref<9x4x4xbf16, #tpu.memory_space<vmem>>, vector<1x4x4xbf16>
    %58 = vector.shape_cast %57 : vector<1x4x4xbf16> to vector<4x4xbf16>
    %cst_79 = arith.constant dense<0.000000e+00> : vector<288x4xf32>
    %59 = tpu.matmul %55, %58, %cst_79 {dimension_numbers = #tpu.dot_dimension_numbers<[1], [0], [0], [1], [0, 0, 1, 1], [], []>} : vector<288x4xbf16>, vector<4x4xbf16>, vector<288x4xf32> -> vector<288x4xf32>
    %60 = arith.addf %56, %59 : vector<288x4xf32>
    %c0_80 = arith.constant 0 : index
    %c0_81 = arith.constant 0 : index
    %61 = vector.load %arg14[%c0_80, %c0_81] : memref<288x4xf32, #tpu.memory_space<vmem>>, vector<288x4xf32>
    tpu.vector_store %arg14[%c0_80, %c0_81], %60 {strides = array<i32>} : memref<288x4xf32, #tpu.memory_space<vmem>>, vector<288x4xf32>,
    %c1_82 = arith.constant 1 : index
    %c0_83 = arith.constant 0 : index
    %62 = vector.load %arg12[%c1_82, %c0_83] : memref<342x4xf32, #tpu.memory_space<vmem>>, vector<288x4xf32>
    %63 = arith.truncf %62 : vector<288x4xf32> to vector<288x4xbf16>
    %c0_84 = arith.constant 0 : index
    %c0_85 = arith.constant 0 : index
    %64 = vector.load %arg14[%c0_84, %c0_85] : memref<288x4xf32, #tpu.memory_space<vmem>>, vector<288x4xf32>
    %c1_86 = arith.constant 1 : index
    %c0_87 = arith.constant 0 : index
    %c0_88 = arith.constant 0 : index
    %65 = vector.load %arg3[%c1_86, %c0_87, %c0_88] : memref<9x4x4xbf16, #tpu.memory_space<vmem>>, vector<1x4x4xbf16>
    %66 = vector.shape_cast %65 : vector<1x4x4xbf16> to vector<4x4xbf16>
    %cst_89 = arith.constant dense<0.000000e+00> : vector<288x4xf32>
    %67 = tpu.matmul %63, %66, %cst_89 {dimension_numbers = #tpu.dot_dimension_numbers<[1], [0], [0], [1], [0, 0, 1, 1], [], []>} : vector<288x4xbf16>, vector<4x4xbf16>, vector<288x4xf32> -> vector<288x4xf32>
    %68 = arith.addf %64, %67 : vector<288x4xf32>
    %c0_90 = arith.constant 0 : index
    %c0_91 = arith.constant 0 : index
    %69 = vector.load %arg14[%c0_90, %c0_91] : memref<288x4xf32, #tpu.memory_space<vmem>>, vector<288x4xf32>
    tpu.vector_store %arg14[%c0_90, %c0_91], %68 {strides = array<i32>} : memref<288x4xf32, #tpu.memory_space<vmem>>, vector<288x4xf32>,
    %c2_92 = arith.constant 2 : index
    %c0_93 = arith.constant 0 : index
    %70 = vector.load %arg12[%c2_92, %c0_93] : memref<342x4xf32, #tpu.memory_space<vmem>>, vector<288x4xf32>
    %71 = arith.truncf %70 : vector<288x4xf32> to vector<288x4xbf16>
    %c0_94 = arith.constant 0 : index
    %c0_95 = arith.constant 0 : index
    %72 = vector.load %arg14[%c0_94, %c0_95] : memref<288x4xf32, #tpu.memory_space<vmem>>, vector<288x4xf32>
    %c2_96 = arith.constant 2 : index
    %c0_97 = arith.constant 0 : index
    %c0_98 = arith.constant 0 : index
    %73 = vector.load %arg3[%c2_96, %c0_97, %c0_98] : memref<9x4x4xbf16, #tpu.memory_space<vmem>>, vector<1x4x4xbf16>
    %74 = vector.shape_cast %73 : vector<1x4x4xbf16> to vector<4x4xbf16>
    %cst_99 = arith.constant dense<0.000000e+00> : vector<288x4xf32>
    %75 = tpu.matmul %71, %74, %cst_99 {dimension_numbers = #tpu.dot_dimension_numbers<[1], [0], [0], [1], [0, 0, 1, 1], [], []>} : vector<288x4xbf16>, vector<4x4xbf16>, vector<288x4xf32> -> vector<288x4xf32>
    %76 = arith.addf %72, %75 : vector<288x4xf32>
    %c0_100 = arith.constant 0 : index
    %c0_101 = arith.constant 0 : index
    %77 = vector.load %arg14[%c0_100, %c0_101] : memref<288x4xf32, #tpu.memory_space<vmem>>, vector<288x4xf32>
    tpu.vector_store %arg14[%c0_100, %c0_101], %76 {strides = array<i32>} : memref<288x4xf32, #tpu.memory_space<vmem>>, vector<288x4xf32>,
    %c18 = arith.constant 18 : index
    %c0_102 = arith.constant 0 : index
    %78 = vector.load %arg12[%c18, %c0_102] : memref<342x4xf32, #tpu.memory_space<vmem>>, vector<288x4xf32>
    %79 = arith.truncf %78 : vector<288x4xf32> to vector<288x4xbf16>
    %c0_103 = arith.constant 0 : index
    %c0_104 = arith.constant 0 : index
    %80 = vector.load %arg14[%c0_103, %c0_104] : memref<288x4xf32, #tpu.memory_space<vmem>>, vector<288x4xf32>
    %c3_105 = arith.constant 3 : index
    %c0_106 = arith.constant 0 : index
    %c0_107 = arith.constant 0 : index
    %81 = vector.load %arg3[%c3_105, %c0_106, %c0_107] : memref<9x4x4xbf16, #tpu.memory_space<vmem>>, vector<1x4x4xbf16>
    %82 = vector.shape_cast %81 : vector<1x4x4xbf16> to vector<4x4xbf16>
    %cst_108 = arith.constant dense<0.000000e+00> : vector<288x4xf32>
    %83 = tpu.matmul %79, %82, %cst_108 {dimension_numbers = #tpu.dot_dimension_numbers<[1], [0], [0], [1], [0, 0, 1, 1], [], []>} : vector<288x4xbf16>, vector<4x4xbf16>, vector<288x4xf32> -> vector<288x4xf32>
    %84 = arith.addf %80, %83 : vector<288x4xf32>
    %c0_109 = arith.constant 0 : index
    %c0_110 = arith.constant 0 : index
    %85 = vector.load %arg14[%c0_109, %c0_110] : memref<288x4xf32, #tpu.memory_space<vmem>>, vector<288x4xf32>
    tpu.vector_store %arg14[%c0_109, %c0_110], %84 {strides = array<i32>} : memref<288x4xf32, #tpu.memory_space<vmem>>, vector<288x4xf32>,
    %c19_111 = arith.constant 19 : index
    %c0_112 = arith.constant 0 : index
    %86 = vector.load %arg12[%c19_111, %c0_112] : memref<342x4xf32, #tpu.memory_space<vmem>>, vector<288x4xf32>
    %87 = arith.truncf %86 : vector<288x4xf32> to vector<288x4xbf16>
    %c0_113 = arith.constant 0 : index
    %c0_114 = arith.constant 0 : index
    %88 = vector.load %arg14[%c0_113, %c0_114] : memref<288x4xf32, #tpu.memory_space<vmem>>, vector<288x4xf32>
    %c4_115 = arith.constant 4 : index
    %c0_116 = arith.constant 0 : index
    %c0_117 = arith.constant 0 : index
    %89 = vector.load %arg3[%c4_115, %c0_116, %c0_117] : memref<9x4x4xbf16, #tpu.memory_space<vmem>>, vector<1x4x4xbf16>
    %90 = vector.shape_cast %89 : vector<1x4x4xbf16> to vector<4x4xbf16>
    %cst_118 = arith.constant dense<0.000000e+00> : vector<288x4xf32>
    %91 = tpu.matmul %87, %90, %cst_118 {dimension_numbers = #tpu.dot_dimension_numbers<[1], [0], [0], [1], [0, 0, 1, 1], [], []>} : vector<288x4xbf16>, vector<4x4xbf16>, vector<288x4xf32> -> vector<288x4xf32>
    %92 = arith.addf %88, %91 : vector<288x4xf32>
    %c0_119 = arith.constant 0 : index
    %c0_120 = arith.constant 0 : index
    %93 = vector.load %arg14[%c0_119, %c0_120] : memref<288x4xf32, #tpu.memory_space<vmem>>, vector<288x4xf32>
    tpu.vector_store %arg14[%c0_119, %c0_120], %92 {strides = array<i32>} : memref<288x4xf32, #tpu.memory_space<vmem>>, vector<288x4xf32>,
    %c20 = arith.constant 20 : index
    %c0_121 = arith.constant 0 : index
    %94 = vector.load %arg12[%c20, %c0_121] : memref<342x4xf32, #tpu.memory_space<vmem>>, vector<288x4xf32>
    %95 = arith.truncf %94 : vector<288x4xf32> to vector<288x4xbf16>
    %c0_122 = arith.constant 0 : index
    %c0_123 = arith.constant 0 : index
    %96 = vector.load %arg14[%c0_122, %c0_123] : memref<288x4xf32, #tpu.memory_space<vmem>>, vector<288x4xf32>
    %c5_124 = arith.constant 5 : index
    %c0_125 = arith.constant 0 : index
    %c0_126 = arith.constant 0 : index
    %97 = vector.load %arg3[%c5_124, %c0_125, %c0_126] : memref<9x4x4xbf16, #tpu.memory_space<vmem>>, vector<1x4x4xbf16>
    %98 = vector.shape_cast %97 : vector<1x4x4xbf16> to vector<4x4xbf16>
    %cst_127 = arith.constant dense<0.000000e+00> : vector<288x4xf32>
    %99 = tpu.matmul %95, %98, %cst_127 {dimension_numbers = #tpu.dot_dimension_numbers<[1], [0], [0], [1], [0, 0, 1, 1], [], []>} : vector<288x4xbf16>, vector<4x4xbf16>, vector<288x4xf32> -> vector<288x4xf32>
    %100 = arith.addf %96, %99 : vector<288x4xf32>
    %c0_128 = arith.constant 0 : index
    %c0_129 = arith.constant 0 : index
    %101 = vector.load %arg14[%c0_128, %c0_129] : memref<288x4xf32, #tpu.memory_space<vmem>>, vector<288x4xf32>
    tpu.vector_store %arg14[%c0_128, %c0_129], %100 {strides = array<i32>} : memref<288x4xf32, #tpu.memory_space<vmem>>, vector<288x4xf32>,
    %c36 = arith.constant 36 : index
    %c0_130 = arith.constant 0 : index
    %102 = vector.load %arg12[%c36, %c0_130] : memref<342x4xf32, #tpu.memory_space<vmem>>, vector<288x4xf32>
    %103 = arith.truncf %102 : vector<288x4xf32> to vector<288x4xbf16>
    %c0_131 = arith.constant 0 : index
    %c0_132 = arith.constant 0 : index
    %104 = vector.load %arg14[%c0_131, %c0_132] : memref<288x4xf32, #tpu.memory_space<vmem>>, vector<288x4xf32>
    %c6_133 = arith.constant 6 : index
    %c0_134 = arith.constant 0 : index
    %c0_135 = arith.constant 0 : index
    %105 = vector.load %arg3[%c6_133, %c0_134, %c0_135] : memref<9x4x4xbf16, #tpu.memory_space<vmem>>, vector<1x4x4xbf16>
    %106 = vector.shape_cast %105 : vector<1x4x4xbf16> to vector<4x4xbf16>
    %cst_136 = arith.constant dense<0.000000e+00> : vector<288x4xf32>
    %107 = tpu.matmul %103, %106, %cst_136 {dimension_numbers = #tpu.dot_dimension_numbers<[1], [0], [0], [1], [0, 0, 1, 1], [], []>} : vector<288x4xbf16>, vector<4x4xbf16>, vector<288x4xf32> -> vector<288x4xf32>
    %108 = arith.addf %104, %107 : vector<288x4xf32>
    %c0_137 = arith.constant 0 : index
    %c0_138 = arith.constant 0 : index
    %109 = vector.load %arg14[%c0_137, %c0_138] : memref<288x4xf32, #tpu.memory_space<vmem>>, vector<288x4xf32>
    tpu.vector_store %arg14[%c0_137, %c0_138], %108 {strides = array<i32>} : memref<288x4xf32, #tpu.memory_space<vmem>>, vector<288x4xf32>,
    %c37_139 = arith.constant 37 : index
    %c0_140 = arith.constant 0 : index
    %110 = vector.load %arg12[%c37_139, %c0_140] : memref<342x4xf32, #tpu.memory_space<vmem>>, vector<288x4xf32>
    %111 = arith.truncf %110 : vector<288x4xf32> to vector<288x4xbf16>
    %c0_141 = arith.constant 0 : index
    %c0_142 = arith.constant 0 : index
    %112 = vector.load %arg14[%c0_141, %c0_142] : memref<288x4xf32, #tpu.memory_space<vmem>>, vector<288x4xf32>
    %c7_143 = arith.constant 7 : index
    %c0_144 = arith.constant 0 : index
    %c0_145 = arith.constant 0 : index
    %113 = vector.load %arg3[%c7_143, %c0_144, %c0_145] : memref<9x4x4xbf16, #tpu.memory_space<vmem>>, vector<1x4x4xbf16>
    %114 = vector.shape_cast %113 : vector<1x4x4xbf16> to vector<4x4xbf16>
    %cst_146 = arith.constant dense<0.000000e+00> : vector<288x4xf32>
    %115 = tpu.matmul %111, %114, %cst_146 {dimension_numbers = #tpu.dot_dimension_numbers<[1], [0], [0], [1], [0, 0, 1, 1], [], []>} : vector<288x4xbf16>, vector<4x4xbf16>, vector<288x4xf32> -> vector<288x4xf32>
    %116 = arith.addf %112, %115 : vector<288x4xf32>
    %c0_147 = arith.constant 0 : index
    %c0_148 = arith.constant 0 : index
    %117 = vector.load %arg14[%c0_147, %c0_148] : memref<288x4xf32, #tpu.memory_space<vmem>>, vector<288x4xf32>
    tpu.vector_store %arg14[%c0_147, %c0_148], %116 {strides = array<i32>} : memref<288x4xf32, #tpu.memory_space<vmem>>, vector<288x4xf32>,
    %c38 = arith.constant 38 : index
    %c0_149 = arith.constant 0 : index
    %118 = vector.load %arg12[%c38, %c0_149] : memref<342x4xf32, #tpu.memory_space<vmem>>, vector<288x4xf32>
    %119 = arith.truncf %118 : vector<288x4xf32> to vector<288x4xbf16>
    %c0_150 = arith.constant 0 : index
    %c0_151 = arith.constant 0 : index
    %120 = vector.load %arg14[%c0_150, %c0_151] : memref<288x4xf32, #tpu.memory_space<vmem>>, vector<288x4xf32>
    %c8_152 = arith.constant 8 : index
    %c0_153 = arith.constant 0 : index
    %c0_154 = arith.constant 0 : index
    %121 = vector.load %arg3[%c8_152, %c0_153, %c0_154] : memref<9x4x4xbf16, #tpu.memory_space<vmem>>, vector<1x4x4xbf16>
    %122 = vector.shape_cast %121 : vector<1x4x4xbf16> to vector<4x4xbf16>
    %cst_155 = arith.constant dense<0.000000e+00> : vector<288x4xf32>
    %123 = tpu.matmul %119, %122, %cst_155 {dimension_numbers = #tpu.dot_dimension_numbers<[1], [0], [0], [1], [0, 0, 1, 1], [], []>} : vector<288x4xbf16>, vector<4x4xbf16>, vector<288x4xf32> -> vector<288x4xf32>
    %124 = arith.addf %120, %123 : vector<288x4xf32>
    %c0_156 = arith.constant 0 : index
    %c0_157 = arith.constant 0 : index
    %125 = vector.load %arg14[%c0_156, %c0_157] : memref<288x4xf32, #tpu.memory_space<vmem>>, vector<288x4xf32>
    tpu.vector_store %arg14[%c0_156, %c0_157], %124 {strides = array<i32>} : memref<288x4xf32, #tpu.memory_space<vmem>>, vector<288x4xf32>,
    %c0_158 = arith.constant 0 : index
    %c0_159 = arith.constant 0 : index
    %126 = vector.load %arg14[%c0_158, %c0_159] : memref<288x4xf32, #tpu.memory_space<vmem>>, vector<288x4xf32>
    %c0_160 = arith.constant 0 : index
    %c0_161 = arith.constant 0 : index
    %127 = vector.load %arg4[%c0_160, %c0_161] : memref<1x4xf32, #tpu.memory_space<vmem>>, vector<1x4xf32>
    %128 = vector.broadcast %127 : vector<1x4xf32> to vector<288x4xf32>
    %129 = arith.addf %126, %128 : vector<288x4xf32>
    %cst_162 = arith.constant 0.000000e+00 : f32
    %130 = vector.broadcast %cst_162 : f32 to vector<288x4xf32>
    %131 = arith.maximumf %129, %130 : vector<288x4xf32>
    %c0_163 = arith.constant 0 : index
    %c0_164 = arith.constant 0 : index
    %132 = vector.load %arg2[%c0_163, %c0_164] : memref<288x1xf32, #tpu.memory_space<vmem>>, vector<288x1xf32>
    %133 = vector.broadcast %132 : vector<288x1xf32> to vector<288x4xf32>
    %134 = arith.mulf %131, %133 : vector<288x4xf32>
    %c19_165 = arith.constant 19 : index
    %c0_166 = arith.constant 0 : index
    %135 = vector.load %arg13[%c19_165, %c0_166] : memref<342x4xf32, #tpu.memory_space<vmem>>, vector<288x4xf32>
    tpu.vector_store %arg13[%c19_165, %c0_166], %134 {strides = array<i32>} : memref<342x4xf32, #tpu.memory_space<vmem>>, vector<288x4xf32>,
    %cst_167 = arith.constant 0.000000e+00 : f32
    %136 = vector.broadcast %cst_167 : f32 to vector<288x4xf32>
    %c0_168 = arith.constant 0 : index
    %c0_169 = arith.constant 0 : index
    %137 = vector.load %arg14[%c0_168, %c0_169] : memref<288x4xf32, #tpu.memory_space<vmem>>, vector<288x4xf32>
    tpu.vector_store %arg14[%c0_168, %c0_169], %136 {strides = array<i32>} : memref<288x4xf32, #tpu.memory_space<vmem>>, vector<288x4xf32>,
    %c0_170 = arith.constant 0 : index
    %c0_171 = arith.constant 0 : index
    %138 = vector.load %arg13[%c0_170, %c0_171] : memref<342x4xf32, #tpu.memory_space<vmem>>, vector<288x4xf32>
    %139 = arith.truncf %138 : vector<288x4xf32> to vector<288x4xbf16>
    %c0_172 = arith.constant 0 : index
    %c0_173 = arith.constant 0 : index
    %140 = vector.load %arg14[%c0_172, %c0_173] : memref<288x4xf32, #tpu.memory_space<vmem>>, vector<288x4xf32>
    %c0_174 = arith.constant 0 : index
    %c0_175 = arith.constant 0 : index
    %c0_176 = arith.constant 0 : index
    %141 = vector.load %arg5[%c0_174, %c0_175, %c0_176] : memref<9x4x4xbf16, #tpu.memory_space<vmem>>, vector<1x4x4xbf16>
    %142 = vector.shape_cast %141 : vector<1x4x4xbf16> to vector<4x4xbf16>
    %cst_177 = arith.constant dense<0.000000e+00> : vector<288x4xf32>
    %143 = tpu.matmul %139, %142, %cst_177 {dimension_numbers = #tpu.dot_dimension_numbers<[1], [0], [0], [1], [0, 0, 1, 1], [], []>} : vector<288x4xbf16>, vector<4x4xbf16>, vector<288x4xf32> -> vector<288x4xf32>
    %144 = arith.addf %140, %143 : vector<288x4xf32>
    %c0_178 = arith.constant 0 : index
    %c0_179 = arith.constant 0 : index
    %145 = vector.load %arg14[%c0_178, %c0_179] : memref<288x4xf32, #tpu.memory_space<vmem>>, vector<288x4xf32>
    tpu.vector_store %arg14[%c0_178, %c0_179], %144 {strides = array<i32>} : memref<288x4xf32, #tpu.memory_space<vmem>>, vector<288x4xf32>,
    %c1_180 = arith.constant 1 : index
    %c0_181 = arith.constant 0 : index
    %146 = vector.load %arg13[%c1_180, %c0_181] : memref<342x4xf32, #tpu.memory_space<vmem>>, vector<288x4xf32>
    %147 = arith.truncf %146 : vector<288x4xf32> to vector<288x4xbf16>
    %c0_182 = arith.constant 0 : index
    %c0_183 = arith.constant 0 : index
    %148 = vector.load %arg14[%c0_182, %c0_183] : memref<288x4xf32, #tpu.memory_space<vmem>>, vector<288x4xf32>
    %c1_184 = arith.constant 1 : index
    %c0_185 = arith.constant 0 : index
    %c0_186 = arith.constant 0 : index
    %149 = vector.load %arg5[%c1_184, %c0_185, %c0_186] : memref<9x4x4xbf16, #tpu.memory_space<vmem>>, vector<1x4x4xbf16>
    %150 = vector.shape_cast %149 : vector<1x4x4xbf16> to vector<4x4xbf16>
    %cst_187 = arith.constant dense<0.000000e+00> : vector<288x4xf32>
    %151 = tpu.matmul %147, %150, %cst_187 {dimension_numbers = #tpu.dot_dimension_numbers<[1], [0], [0], [1], [0, 0, 1, 1], [], []>} : vector<288x4xbf16>, vector<4x4xbf16>, vector<288x4xf32> -> vector<288x4xf32>
    %152 = arith.addf %148, %151 : vector<288x4xf32>
    %c0_188 = arith.constant 0 : index
    %c0_189 = arith.constant 0 : index
    %153 = vector.load %arg14[%c0_188, %c0_189] : memref<288x4xf32, #tpu.memory_space<vmem>>, vector<288x4xf32>
    tpu.vector_store %arg14[%c0_188, %c0_189], %152 {strides = array<i32>} : memref<288x4xf32, #tpu.memory_space<vmem>>, vector<288x4xf32>,
    %c2_190 = arith.constant 2 : index
    %c0_191 = arith.constant 0 : index
    %154 = vector.load %arg13[%c2_190, %c0_191] : memref<342x4xf32, #tpu.memory_space<vmem>>, vector<288x4xf32>
    %155 = arith.truncf %154 : vector<288x4xf32> to vector<288x4xbf16>
    %c0_192 = arith.constant 0 : index
    %c0_193 = arith.constant 0 : index
    %156 = vector.load %arg14[%c0_192, %c0_193] : memref<288x4xf32, #tpu.memory_space<vmem>>, vector<288x4xf32>
    %c2_194 = arith.constant 2 : index
    %c0_195 = arith.constant 0 : index
    %c0_196 = arith.constant 0 : index
    %157 = vector.load %arg5[%c2_194, %c0_195, %c0_196] : memref<9x4x4xbf16, #tpu.memory_space<vmem>>, vector<1x4x4xbf16>
    %158 = vector.shape_cast %157 : vector<1x4x4xbf16> to vector<4x4xbf16>
    %cst_197 = arith.constant dense<0.000000e+00> : vector<288x4xf32>
    %159 = tpu.matmul %155, %158, %cst_197 {dimension_numbers = #tpu.dot_dimension_numbers<[1], [0], [0], [1], [0, 0, 1, 1], [], []>} : vector<288x4xbf16>, vector<4x4xbf16>, vector<288x4xf32> -> vector<288x4xf32>
    %160 = arith.addf %156, %159 : vector<288x4xf32>
    %c0_198 = arith.constant 0 : index
    %c0_199 = arith.constant 0 : index
    %161 = vector.load %arg14[%c0_198, %c0_199] : memref<288x4xf32, #tpu.memory_space<vmem>>, vector<288x4xf32>
    tpu.vector_store %arg14[%c0_198, %c0_199], %160 {strides = array<i32>} : memref<288x4xf32, #tpu.memory_space<vmem>>, vector<288x4xf32>,
    %c18_200 = arith.constant 18 : index
    %c0_201 = arith.constant 0 : index
    %162 = vector.load %arg13[%c18_200, %c0_201] : memref<342x4xf32, #tpu.memory_space<vmem>>, vector<288x4xf32>
    %163 = arith.truncf %162 : vector<288x4xf32> to vector<288x4xbf16>
    %c0_202 = arith.constant 0 : index
    %c0_203 = arith.constant 0 : index
    %164 = vector.load %arg14[%c0_202, %c0_203] : memref<288x4xf32, #tpu.memory_space<vmem>>, vector<288x4xf32>
    %c3_204 = arith.constant 3 : index
    %c0_205 = arith.constant 0 : index
    %c0_206 = arith.constant 0 : index
    %165 = vector.load %arg5[%c3_204, %c0_205, %c0_206] : memref<9x4x4xbf16, #tpu.memory_space<vmem>>, vector<1x4x4xbf16>
    %166 = vector.shape_cast %165 : vector<1x4x4xbf16> to vector<4x4xbf16>
    %cst_207 = arith.constant dense<0.000000e+00> : vector<288x4xf32>
    %167 = tpu.matmul %163, %166, %cst_207 {dimension_numbers = #tpu.dot_dimension_numbers<[1], [0], [0], [1], [0, 0, 1, 1], [], []>} : vector<288x4xbf16>, vector<4x4xbf16>, vector<288x4xf32> -> vector<288x4xf32>
    %168 = arith.addf %164, %167 : vector<288x4xf32>
    %c0_208 = arith.constant 0 : index
    %c0_209 = arith.constant 0 : index
    %169 = vector.load %arg14[%c0_208, %c0_209] : memref<288x4xf32, #tpu.memory_space<vmem>>, vector<288x4xf32>
    tpu.vector_store %arg14[%c0_208, %c0_209], %168 {strides = array<i32>} : memref<288x4xf32, #tpu.memory_space<vmem>>, vector<288x4xf32>,
    %c19_210 = arith.constant 19 : index
    %c0_211 = arith.constant 0 : index
    %170 = vector.load %arg13[%c19_210, %c0_211] : memref<342x4xf32, #tpu.memory_space<vmem>>, vector<288x4xf32>
    %171 = arith.truncf %170 : vector<288x4xf32> to vector<288x4xbf16>
    %c0_212 = arith.constant 0 : index
    %c0_213 = arith.constant 0 : index
    %172 = vector.load %arg14[%c0_212, %c0_213] : memref<288x4xf32, #tpu.memory_space<vmem>>, vector<288x4xf32>
    %c4_214 = arith.constant 4 : index
    %c0_215 = arith.constant 0 : index
    %c0_216 = arith.constant 0 : index
    %173 = vector.load %arg5[%c4_214, %c0_215, %c0_216] : memref<9x4x4xbf16, #tpu.memory_space<vmem>>, vector<1x4x4xbf16>
    %174 = vector.shape_cast %173 : vector<1x4x4xbf16> to vector<4x4xbf16>
    %cst_217 = arith.constant dense<0.000000e+00> : vector<288x4xf32>
    %175 = tpu.matmul %171, %174, %cst_217 {dimension_numbers = #tpu.dot_dimension_numbers<[1], [0], [0], [1], [0, 0, 1, 1], [], []>} : vector<288x4xbf16>, vector<4x4xbf16>, vector<288x4xf32> -> vector<288x4xf32>
    %176 = arith.addf %172, %175 : vector<288x4xf32>
    %c0_218 = arith.constant 0 : index
    %c0_219 = arith.constant 0 : index
    %177 = vector.load %arg14[%c0_218, %c0_219] : memref<288x4xf32, #tpu.memory_space<vmem>>, vector<288x4xf32>
    tpu.vector_store %arg14[%c0_218, %c0_219], %176 {strides = array<i32>} : memref<288x4xf32, #tpu.memory_space<vmem>>, vector<288x4xf32>,
    %c20_220 = arith.constant 20 : index
    %c0_221 = arith.constant 0 : index
    %178 = vector.load %arg13[%c20_220, %c0_221] : memref<342x4xf32, #tpu.memory_space<vmem>>, vector<288x4xf32>
    %179 = arith.truncf %178 : vector<288x4xf32> to vector<288x4xbf16>
    %c0_222 = arith.constant 0 : index
    %c0_223 = arith.constant 0 : index
    %180 = vector.load %arg14[%c0_222, %c0_223] : memref<288x4xf32, #tpu.memory_space<vmem>>, vector<288x4xf32>
    %c5_224 = arith.constant 5 : index
    %c0_225 = arith.constant 0 : index
    %c0_226 = arith.constant 0 : index
    %181 = vector.load %arg5[%c5_224, %c0_225, %c0_226] : memref<9x4x4xbf16, #tpu.memory_space<vmem>>, vector<1x4x4xbf16>
    %182 = vector.shape_cast %181 : vector<1x4x4xbf16> to vector<4x4xbf16>
    %cst_227 = arith.constant dense<0.000000e+00> : vector<288x4xf32>
    %183 = tpu.matmul %179, %182, %cst_227 {dimension_numbers = #tpu.dot_dimension_numbers<[1], [0], [0], [1], [0, 0, 1, 1], [], []>} : vector<288x4xbf16>, vector<4x4xbf16>, vector<288x4xf32> -> vector<288x4xf32>
    %184 = arith.addf %180, %183 : vector<288x4xf32>
    %c0_228 = arith.constant 0 : index
    %c0_229 = arith.constant 0 : index
    %185 = vector.load %arg14[%c0_228, %c0_229] : memref<288x4xf32, #tpu.memory_space<vmem>>, vector<288x4xf32>
    tpu.vector_store %arg14[%c0_228, %c0_229], %184 {strides = array<i32>} : memref<288x4xf32, #tpu.memory_space<vmem>>, vector<288x4xf32>,
    %c36_230 = arith.constant 36 : index
    %c0_231 = arith.constant 0 : index
    %186 = vector.load %arg13[%c36_230, %c0_231] : memref<342x4xf32, #tpu.memory_space<vmem>>, vector<288x4xf32>
    %187 = arith.truncf %186 : vector<288x4xf32> to vector<288x4xbf16>
    %c0_232 = arith.constant 0 : index
    %c0_233 = arith.constant 0 : index
    %188 = vector.load %arg14[%c0_232, %c0_233] : memref<288x4xf32, #tpu.memory_space<vmem>>, vector<288x4xf32>
    %c6_234 = arith.constant 6 : index
    %c0_235 = arith.constant 0 : index
    %c0_236 = arith.constant 0 : index
    %189 = vector.load %arg5[%c6_234, %c0_235, %c0_236] : memref<9x4x4xbf16, #tpu.memory_space<vmem>>, vector<1x4x4xbf16>
    %190 = vector.shape_cast %189 : vector<1x4x4xbf16> to vector<4x4xbf16>
    %cst_237 = arith.constant dense<0.000000e+00> : vector<288x4xf32>
    %191 = tpu.matmul %187, %190, %cst_237 {dimension_numbers = #tpu.dot_dimension_numbers<[1], [0], [0], [1], [0, 0, 1, 1], [], []>} : vector<288x4xbf16>, vector<4x4xbf16>, vector<288x4xf32> -> vector<288x4xf32>
    %192 = arith.addf %188, %191 : vector<288x4xf32>
    %c0_238 = arith.constant 0 : index
    %c0_239 = arith.constant 0 : index
    %193 = vector.load %arg14[%c0_238, %c0_239] : memref<288x4xf32, #tpu.memory_space<vmem>>, vector<288x4xf32>
    tpu.vector_store %arg14[%c0_238, %c0_239], %192 {strides = array<i32>} : memref<288x4xf32, #tpu.memory_space<vmem>>, vector<288x4xf32>,
    %c37_240 = arith.constant 37 : index
    %c0_241 = arith.constant 0 : index
    %194 = vector.load %arg13[%c37_240, %c0_241] : memref<342x4xf32, #tpu.memory_space<vmem>>, vector<288x4xf32>
    %195 = arith.truncf %194 : vector<288x4xf32> to vector<288x4xbf16>
    %c0_242 = arith.constant 0 : index
    %c0_243 = arith.constant 0 : index
    %196 = vector.load %arg14[%c0_242, %c0_243] : memref<288x4xf32, #tpu.memory_space<vmem>>, vector<288x4xf32>
    %c7_244 = arith.constant 7 : index
    %c0_245 = arith.constant 0 : index
    %c0_246 = arith.constant 0 : index
    %197 = vector.load %arg5[%c7_244, %c0_245, %c0_246] : memref<9x4x4xbf16, #tpu.memory_space<vmem>>, vector<1x4x4xbf16>
    %198 = vector.shape_cast %197 : vector<1x4x4xbf16> to vector<4x4xbf16>
    %cst_247 = arith.constant dense<0.000000e+00> : vector<288x4xf32>
    %199 = tpu.matmul %195, %198, %cst_247 {dimension_numbers = #tpu.dot_dimension_numbers<[1], [0], [0], [1], [0, 0, 1, 1], [], []>} : vector<288x4xbf16>, vector<4x4xbf16>, vector<288x4xf32> -> vector<288x4xf32>
    %200 = arith.addf %196, %199 : vector<288x4xf32>
    %c0_248 = arith.constant 0 : index
    %c0_249 = arith.constant 0 : index
    %201 = vector.load %arg14[%c0_248, %c0_249] : memref<288x4xf32, #tpu.memory_space<vmem>>, vector<288x4xf32>
    tpu.vector_store %arg14[%c0_248, %c0_249], %200 {strides = array<i32>} : memref<288x4xf32, #tpu.memory_space<vmem>>, vector<288x4xf32>,
    %c38_250 = arith.constant 38 : index
    %c0_251 = arith.constant 0 : index
    %202 = vector.load %arg13[%c38_250, %c0_251] : memref<342x4xf32, #tpu.memory_space<vmem>>, vector<288x4xf32>
    %203 = arith.truncf %202 : vector<288x4xf32> to vector<288x4xbf16>
    %c0_252 = arith.constant 0 : index
    %c0_253 = arith.constant 0 : index
    %204 = vector.load %arg14[%c0_252, %c0_253] : memref<288x4xf32, #tpu.memory_space<vmem>>, vector<288x4xf32>
    %c8_254 = arith.constant 8 : index
    %c0_255 = arith.constant 0 : index
    %c0_256 = arith.constant 0 : index
    %205 = vector.load %arg5[%c8_254, %c0_255, %c0_256] : memref<9x4x4xbf16, #tpu.memory_space<vmem>>, vector<1x4x4xbf16>
    %206 = vector.shape_cast %205 : vector<1x4x4xbf16> to vector<4x4xbf16>
    %cst_257 = arith.constant dense<0.000000e+00> : vector<288x4xf32>
    %207 = tpu.matmul %203, %206, %cst_257 {dimension_numbers = #tpu.dot_dimension_numbers<[1], [0], [0], [1], [0, 0, 1, 1], [], []>} : vector<288x4xbf16>, vector<4x4xbf16>, vector<288x4xf32> -> vector<288x4xf32>
    %208 = arith.addf %204, %207 : vector<288x4xf32>
    %c0_258 = arith.constant 0 : index
    %c0_259 = arith.constant 0 : index
    %209 = vector.load %arg14[%c0_258, %c0_259] : memref<288x4xf32, #tpu.memory_space<vmem>>, vector<288x4xf32>
    tpu.vector_store %arg14[%c0_258, %c0_259], %208 {strides = array<i32>} : memref<288x4xf32, #tpu.memory_space<vmem>>, vector<288x4xf32>,
    %c0_260 = arith.constant 0 : index
    %c0_261 = arith.constant 0 : index
    %210 = vector.load %arg14[%c0_260, %c0_261] : memref<288x4xf32, #tpu.memory_space<vmem>>, vector<288x4xf32>
    %c0_262 = arith.constant 0 : index
    %c0_263 = arith.constant 0 : index
    %211 = vector.load %arg2[%c0_262, %c0_263] : memref<288x1xf32, #tpu.memory_space<vmem>>, vector<288x1xf32>
    %212 = vector.broadcast %211 : vector<288x1xf32> to vector<288x4xf32>
    %213 = arith.mulf %210, %212 : vector<288x4xf32>
    %cst_264 = arith.constant dense<0.000000e+00> : vector<4xf32>
    %214 = vector.multi_reduction <add>, %213, %cst_264 [0] : vector<288x4xf32> to vector<4xf32>
    %215 = vector.shape_cast %214 : vector<4xf32> to vector<1x4xf32>
    %cst_265 = arith.constant 2.560000e+02 : f32
    %216 = vector.broadcast %cst_265 : f32 to vector<1x4xf32>
    %217 = arith.divf %215, %216 : vector<1x4xf32>
    %c0_266 = arith.constant 0 : index
    %c0_267 = arith.constant 0 : index
    %218 = vector.load %arg6[%c0_266, %c0_267] : memref<1x4xf32, #tpu.memory_space<vmem>>, vector<1x4xf32>
    %219 = arith.addf %217, %218 : vector<1x4xf32>
    %c0_268 = arith.constant 0 : index
    %c0_269 = arith.constant 0 : index
    %220 = vector.load %arg7[%c0_268, %c0_269] : memref<4x16xf32, #tpu.memory_space<vmem>>, vector<4x16xf32>
    %cst_270 = arith.constant dense<0.000000e+00> : vector<1x16xf32>
    %221 = tpu.matmul %219, %220, %cst_270 {dimension_numbers = #tpu.dot_dimension_numbers<[1], [0], [0], [1], [0, 0, 1, 1], [], []>} : vector<1x4xf32>, vector<4x16xf32>, vector<1x16xf32> -> vector<1x16xf32>
    %c0_271 = arith.constant 0 : index
    %c0_272 = arith.constant 0 : index
    %222 = vector.load %arg8[%c0_271, %c0_272] : memref<1x16xf32, #tpu.memory_space<vmem>>, vector<1x16xf32>
    %223 = arith.addf %221, %222 : vector<1x16xf32>
    %cst_273 = arith.constant 0.000000e+00 : f32
    %224 = vector.broadcast %cst_273 : f32 to vector<1x16xf32>
    %225 = arith.maximumf %223, %224 : vector<1x16xf32>
    %c0_274 = arith.constant 0 : index
    %c0_275 = arith.constant 0 : index
    %226 = vector.load %arg9[%c0_274, %c0_275] : memref<16x4xf32, #tpu.memory_space<vmem>>, vector<16x4xf32>
    %cst_276 = arith.constant dense<0.000000e+00> : vector<1x4xf32>
    %227 = tpu.matmul %225, %226, %cst_276 {dimension_numbers = #tpu.dot_dimension_numbers<[1], [0], [0], [1], [0, 0, 1, 1], [], []>} : vector<1x16xf32>, vector<16x4xf32>, vector<1x4xf32> -> vector<1x4xf32>
    %c0_277 = arith.constant 0 : index
    %c0_278 = arith.constant 0 : index
    %228 = vector.load %arg10[%c0_277, %c0_278] : memref<1x4xf32, #tpu.memory_space<vmem>>, vector<1x4xf32>
    %229 = arith.addf %227, %228 : vector<1x4xf32>
    %230 = arith.negf %229 : vector<1x4xf32>
    %231 = math.exp %230 : vector<1x4xf32>
    %cst_279 = arith.constant 1.000000e+00 : f32
    %232 = vector.broadcast %cst_279 : f32 to vector<1x4xf32>
    %233 = arith.addf %232, %231 : vector<1x4xf32>
    %234 = arith.divf %232, %233 : vector<1x4xf32>
    %c0_280 = arith.constant 0 : index
    %c0_281 = arith.constant 0 : index
    %235 = vector.load %arg14[%c0_280, %c0_281] : memref<288x4xf32, #tpu.memory_space<vmem>>, vector<16x4xf32>
    %c0_282 = arith.constant 0 : index
    %c0_283 = arith.constant 0 : index
    %236 = vector.load %arg6[%c0_282, %c0_283] : memref<1x4xf32, #tpu.memory_space<vmem>>, vector<1x4xf32>
    %237 = vector.broadcast %236 : vector<1x4xf32> to vector<16x4xf32>
    %238 = arith.addf %235, %237 : vector<16x4xf32>
    %239 = vector.broadcast %234 : vector<1x4xf32> to vector<16x4xf32>
    %240 = arith.mulf %238, %239 : vector<16x4xf32>
    %c0_284 = arith.constant 0 : index
    %c0_285 = arith.constant 0 : index
    %c0_286 = arith.constant 0 : index
    %c0_287 = arith.constant 0 : index
    %241 = vector.load %arg1[%c0_284, %c0_285, %c0_286, %c0_287] : memref<1x16x16x4xf32, #tpu.memory_space<vmem>>, vector<1x1x16x4xf32>
    %242 = vector.shape_cast %241 : vector<1x1x16x4xf32> to vector<16x4xf32>
    %243 = arith.addf %240, %242 : vector<16x4xf32>
    %cst_288 = arith.constant 0.000000e+00 : f32
    %244 = vector.broadcast %cst_288 : f32 to vector<16x4xf32>
    %245 = arith.maximumf %243, %244 : vector<16x4xf32>
    %c0_289 = arith.constant 0 : index
    %c0_290 = arith.constant 0 : index
    %c0_291 = arith.constant 0 : index
    %c0_292 = arith.constant 0 : index
    %246 = vector.load %arg11[%c0_289, %c0_290, %c0_291, %c0_292] : memref<1x16x16x4xf32, #tpu.memory_space<vmem>>, vector<1x1x16x4xf32>
    %247 = vector.shape_cast %246 : vector<1x1x16x4xf32> to vector<16x4xf32>
    %248 = vector.shape_cast %245 : vector<16x4xf32> to vector<1x1x16x4xf32>
    tpu.vector_store %arg11[%c0_289, %c0_290, %c0_291, %c0_292], %248 {strides = array<i32>} : memref<1x16x16x4xf32, #tpu.memory_space<vmem>>, vector<1x1x16x4xf32>,
    %c18_293 = arith.constant 18 : index
    %c0_294 = arith.constant 0 : index
    %249 = vector.load %arg14[%c18_293, %c0_294] : memref<288x4xf32, #tpu.memory_space<vmem>>, vector<16x4xf32>
    %c0_295 = arith.constant 0 : index
    %c0_296 = arith.constant 0 : index
    %250 = vector.load %arg6[%c0_295, %c0_296] : memref<1x4xf32, #tpu.memory_space<vmem>>, vector<1x4xf32>
    %251 = vector.broadcast %250 : vector<1x4xf32> to vector<16x4xf32>
    %252 = arith.addf %249, %251 : vector<16x4xf32>
    %253 = vector.broadcast %234 : vector<1x4xf32> to vector<16x4xf32>
    %254 = arith.mulf %252, %253 : vector<16x4xf32>
    %c0_297 = arith.constant 0 : index
    %c1_298 = arith.constant 1 : index
    %c0_299 = arith.constant 0 : index
    %c0_300 = arith.constant 0 : index
    %255 = vector.load %arg1[%c0_297, %c1_298, %c0_299, %c0_300] : memref<1x16x16x4xf32, #tpu.memory_space<vmem>>, vector<1x1x16x4xf32>
    %256 = vector.shape_cast %255 : vector<1x1x16x4xf32> to vector<16x4xf32>
    %257 = arith.addf %254, %256 : vector<16x4xf32>
    %cst_301 = arith.constant 0.000000e+00 : f32
    %258 = vector.broadcast %cst_301 : f32 to vector<16x4xf32>
    %259 = arith.maximumf %257, %258 : vector<16x4xf32>
    %c0_302 = arith.constant 0 : index
    %c1_303 = arith.constant 1 : index
    %c0_304 = arith.constant 0 : index
    %c0_305 = arith.constant 0 : index
    %260 = vector.load %arg11[%c0_302, %c1_303, %c0_304, %c0_305] : memref<1x16x16x4xf32, #tpu.memory_space<vmem>>, vector<1x1x16x4xf32>
    %261 = vector.shape_cast %260 : vector<1x1x16x4xf32> to vector<16x4xf32>
    %262 = vector.shape_cast %259 : vector<16x4xf32> to vector<1x1x16x4xf32>
    tpu.vector_store %arg11[%c0_302, %c1_303, %c0_304, %c0_305], %262 {strides = array<i32>} : memref<1x16x16x4xf32, #tpu.memory_space<vmem>>, vector<1x1x16x4xf32>,
    %c36_306 = arith.constant 36 : index
    %c0_307 = arith.constant 0 : index
    %263 = vector.load %arg14[%c36_306, %c0_307] : memref<288x4xf32, #tpu.memory_space<vmem>>, vector<16x4xf32>
    %c0_308 = arith.constant 0 : index
    %c0_309 = arith.constant 0 : index
    %264 = vector.load %arg6[%c0_308, %c0_309] : memref<1x4xf32, #tpu.memory_space<vmem>>, vector<1x4xf32>
    %265 = vector.broadcast %264 : vector<1x4xf32> to vector<16x4xf32>
    %266 = arith.addf %263, %265 : vector<16x4xf32>
    %267 = vector.broadcast %234 : vector<1x4xf32> to vector<16x4xf32>
    %268 = arith.mulf %266, %267 : vector<16x4xf32>
    %c0_310 = arith.constant 0 : index
    %c2_311 = arith.constant 2 : index
    %c0_312 = arith.constant 0 : index
    %c0_313 = arith.constant 0 : index
    %269 = vector.load %arg1[%c0_310, %c2_311, %c0_312, %c0_313] : memref<1x16x16x4xf32, #tpu.memory_space<vmem>>, vector<1x1x16x4xf32>
    %270 = vector.shape_cast %269 : vector<1x1x16x4xf32> to vector<16x4xf32>
    %271 = arith.addf %268, %270 : vector<16x4xf32>
    %cst_314 = arith.constant 0.000000e+00 : f32
    %272 = vector.broadcast %cst_314 : f32 to vector<16x4xf32>
    %273 = arith.maximumf %271, %272 : vector<16x4xf32>
    %c0_315 = arith.constant 0 : index
    %c2_316 = arith.constant 2 : index
    %c0_317 = arith.constant 0 : index
    %c0_318 = arith.constant 0 : index
    %274 = vector.load %arg11[%c0_315, %c2_316, %c0_317, %c0_318] : memref<1x16x16x4xf32, #tpu.memory_space<vmem>>, vector<1x1x16x4xf32>
    %275 = vector.shape_cast %274 : vector<1x1x16x4xf32> to vector<16x4xf32>
    %276 = vector.shape_cast %273 : vector<16x4xf32> to vector<1x1x16x4xf32>
    tpu.vector_store %arg11[%c0_315, %c2_316, %c0_317, %c0_318], %276 {strides = array<i32>} : memref<1x16x16x4xf32, #tpu.memory_space<vmem>>, vector<1x1x16x4xf32>,
    %c54 = arith.constant 54 : index
    %c0_319 = arith.constant 0 : index
    %277 = vector.load %arg14[%c54, %c0_319] : memref<288x4xf32, #tpu.memory_space<vmem>>, vector<16x4xf32>
    %c0_320 = arith.constant 0 : index
    %c0_321 = arith.constant 0 : index
    %278 = vector.load %arg6[%c0_320, %c0_321] : memref<1x4xf32, #tpu.memory_space<vmem>>, vector<1x4xf32>
    %279 = vector.broadcast %278 : vector<1x4xf32> to vector<16x4xf32>
    %280 = arith.addf %277, %279 : vector<16x4xf32>
    %281 = vector.broadcast %234 : vector<1x4xf32> to vector<16x4xf32>
    %282 = arith.mulf %280, %281 : vector<16x4xf32>
    %c0_322 = arith.constant 0 : index
    %c3_323 = arith.constant 3 : index
    %c0_324 = arith.constant 0 : index
    %c0_325 = arith.constant 0 : index
    %283 = vector.load %arg1[%c0_322, %c3_323, %c0_324, %c0_325] : memref<1x16x16x4xf32, #tpu.memory_space<vmem>>, vector<1x1x16x4xf32>
    %284 = vector.shape_cast %283 : vector<1x1x16x4xf32> to vector<16x4xf32>
    %285 = arith.addf %282, %284 : vector<16x4xf32>
    %cst_326 = arith.constant 0.000000e+00 : f32
    %286 = vector.broadcast %cst_326 : f32 to vector<16x4xf32>
    %287 = arith.maximumf %285, %286 : vector<16x4xf32>
    %c0_327 = arith.constant 0 : index
    %c3_328 = arith.constant 3 : index
    %c0_329 = arith.constant 0 : index
    %c0_330 = arith.constant 0 : index
    %288 = vector.load %arg11[%c0_327, %c3_328, %c0_329, %c0_330] : memref<1x16x16x4xf32, #tpu.memory_space<vmem>>, vector<1x1x16x4xf32>
    %289 = vector.shape_cast %288 : vector<1x1x16x4xf32> to vector<16x4xf32>
    %290 = vector.shape_cast %287 : vector<16x4xf32> to vector<1x1x16x4xf32>
    tpu.vector_store %arg11[%c0_327, %c3_328, %c0_329, %c0_330], %290 {strides = array<i32>} : memref<1x16x16x4xf32, #tpu.memory_space<vmem>>, vector<1x1x16x4xf32>,
    %c72 = arith.constant 72 : index
    %c0_331 = arith.constant 0 : index
    %291 = vector.load %arg14[%c72, %c0_331] : memref<288x4xf32, #tpu.memory_space<vmem>>, vector<16x4xf32>
    %c0_332 = arith.constant 0 : index
    %c0_333 = arith.constant 0 : index
    %292 = vector.load %arg6[%c0_332, %c0_333] : memref<1x4xf32, #tpu.memory_space<vmem>>, vector<1x4xf32>
    %293 = vector.broadcast %292 : vector<1x4xf32> to vector<16x4xf32>
    %294 = arith.addf %291, %293 : vector<16x4xf32>
    %295 = vector.broadcast %234 : vector<1x4xf32> to vector<16x4xf32>
    %296 = arith.mulf %294, %295 : vector<16x4xf32>
    %c0_334 = arith.constant 0 : index
    %c4_335 = arith.constant 4 : index
    %c0_336 = arith.constant 0 : index
    %c0_337 = arith.constant 0 : index
    %297 = vector.load %arg1[%c0_334, %c4_335, %c0_336, %c0_337] : memref<1x16x16x4xf32, #tpu.memory_space<vmem>>, vector<1x1x16x4xf32>
    %298 = vector.shape_cast %297 : vector<1x1x16x4xf32> to vector<16x4xf32>
    %299 = arith.addf %296, %298 : vector<16x4xf32>
    %cst_338 = arith.constant 0.000000e+00 : f32
    %300 = vector.broadcast %cst_338 : f32 to vector<16x4xf32>
    %301 = arith.maximumf %299, %300 : vector<16x4xf32>
    %c0_339 = arith.constant 0 : index
    %c4_340 = arith.constant 4 : index
    %c0_341 = arith.constant 0 : index
    %c0_342 = arith.constant 0 : index
    %302 = vector.load %arg11[%c0_339, %c4_340, %c0_341, %c0_342] : memref<1x16x16x4xf32, #tpu.memory_space<vmem>>, vector<1x1x16x4xf32>
    %303 = vector.shape_cast %302 : vector<1x1x16x4xf32> to vector<16x4xf32>
    %304 = vector.shape_cast %301 : vector<16x4xf32> to vector<1x1x16x4xf32>
    tpu.vector_store %arg11[%c0_339, %c4_340, %c0_341, %c0_342], %304 {strides = array<i32>} : memref<1x16x16x4xf32, #tpu.memory_space<vmem>>, vector<1x1x16x4xf32>,
    %c90 = arith.constant 90 : index
    %c0_343 = arith.constant 0 : index
    %305 = vector.load %arg14[%c90, %c0_343] : memref<288x4xf32, #tpu.memory_space<vmem>>, vector<16x4xf32>
    %c0_344 = arith.constant 0 : index
    %c0_345 = arith.constant 0 : index
    %306 = vector.load %arg6[%c0_344, %c0_345] : memref<1x4xf32, #tpu.memory_space<vmem>>, vector<1x4xf32>
    %307 = vector.broadcast %306 : vector<1x4xf32> to vector<16x4xf32>
    %308 = arith.addf %305, %307 : vector<16x4xf32>
    %309 = vector.broadcast %234 : vector<1x4xf32> to vector<16x4xf32>
    %310 = arith.mulf %308, %309 : vector<16x4xf32>
    %c0_346 = arith.constant 0 : index
    %c5_347 = arith.constant 5 : index
    %c0_348 = arith.constant 0 : index
    %c0_349 = arith.constant 0 : index
    %311 = vector.load %arg1[%c0_346, %c5_347, %c0_348, %c0_349] : memref<1x16x16x4xf32, #tpu.memory_space<vmem>>, vector<1x1x16x4xf32>
    %312 = vector.shape_cast %311 : vector<1x1x16x4xf32> to vector<16x4xf32>
    %313 = arith.addf %310, %312 : vector<16x4xf32>
    %cst_350 = arith.constant 0.000000e+00 : f32
    %314 = vector.broadcast %cst_350 : f32 to vector<16x4xf32>
    %315 = arith.maximumf %313, %314 : vector<16x4xf32>
    %c0_351 = arith.constant 0 : index
    %c5_352 = arith.constant 5 : index
    %c0_353 = arith.constant 0 : index
    %c0_354 = arith.constant 0 : index
    %316 = vector.load %arg11[%c0_351, %c5_352, %c0_353, %c0_354] : memref<1x16x16x4xf32, #tpu.memory_space<vmem>>, vector<1x1x16x4xf32>
    %317 = vector.shape_cast %316 : vector<1x1x16x4xf32> to vector<16x4xf32>
    %318 = vector.shape_cast %315 : vector<16x4xf32> to vector<1x1x16x4xf32>
    tpu.vector_store %arg11[%c0_351, %c5_352, %c0_353, %c0_354], %318 {strides = array<i32>} : memref<1x16x16x4xf32, #tpu.memory_space<vmem>>, vector<1x1x16x4xf32>,
    %c108 = arith.constant 108 : index
    %c0_355 = arith.constant 0 : index
    %319 = vector.load %arg14[%c108, %c0_355] : memref<288x4xf32, #tpu.memory_space<vmem>>, vector<16x4xf32>
    %c0_356 = arith.constant 0 : index
    %c0_357 = arith.constant 0 : index
    %320 = vector.load %arg6[%c0_356, %c0_357] : memref<1x4xf32, #tpu.memory_space<vmem>>, vector<1x4xf32>
    %321 = vector.broadcast %320 : vector<1x4xf32> to vector<16x4xf32>
    %322 = arith.addf %319, %321 : vector<16x4xf32>
    %323 = vector.broadcast %234 : vector<1x4xf32> to vector<16x4xf32>
    %324 = arith.mulf %322, %323 : vector<16x4xf32>
    %c0_358 = arith.constant 0 : index
    %c6_359 = arith.constant 6 : index
    %c0_360 = arith.constant 0 : index
    %c0_361 = arith.constant 0 : index
    %325 = vector.load %arg1[%c0_358, %c6_359, %c0_360, %c0_361] : memref<1x16x16x4xf32, #tpu.memory_space<vmem>>, vector<1x1x16x4xf32>
    %326 = vector.shape_cast %325 : vector<1x1x16x4xf32> to vector<16x4xf32>
    %327 = arith.addf %324, %326 : vector<16x4xf32>
    %cst_362 = arith.constant 0.000000e+00 : f32
    %328 = vector.broadcast %cst_362 : f32 to vector<16x4xf32>
    %329 = arith.maximumf %327, %328 : vector<16x4xf32>
    %c0_363 = arith.constant 0 : index
    %c6_364 = arith.constant 6 : index
    %c0_365 = arith.constant 0 : index
    %c0_366 = arith.constant 0 : index
    %330 = vector.load %arg11[%c0_363, %c6_364, %c0_365, %c0_366] : memref<1x16x16x4xf32, #tpu.memory_space<vmem>>, vector<1x1x16x4xf32>
    %331 = vector.shape_cast %330 : vector<1x1x16x4xf32> to vector<16x4xf32>
    %332 = vector.shape_cast %329 : vector<16x4xf32> to vector<1x1x16x4xf32>
    tpu.vector_store %arg11[%c0_363, %c6_364, %c0_365, %c0_366], %332 {strides = array<i32>} : memref<1x16x16x4xf32, #tpu.memory_space<vmem>>, vector<1x1x16x4xf32>,
    %c126 = arith.constant 126 : index
    %c0_367 = arith.constant 0 : index
    %333 = vector.load %arg14[%c126, %c0_367] : memref<288x4xf32, #tpu.memory_space<vmem>>, vector<16x4xf32>
    %c0_368 = arith.constant 0 : index
    %c0_369 = arith.constant 0 : index
    %334 = vector.load %arg6[%c0_368, %c0_369] : memref<1x4xf32, #tpu.memory_space<vmem>>, vector<1x4xf32>
    %335 = vector.broadcast %334 : vector<1x4xf32> to vector<16x4xf32>
    %336 = arith.addf %333, %335 : vector<16x4xf32>
    %337 = vector.broadcast %234 : vector<1x4xf32> to vector<16x4xf32>
    %338 = arith.mulf %336, %337 : vector<16x4xf32>
    %c0_370 = arith.constant 0 : index
    %c7_371 = arith.constant 7 : index
    %c0_372 = arith.constant 0 : index
    %c0_373 = arith.constant 0 : index
    %339 = vector.load %arg1[%c0_370, %c7_371, %c0_372, %c0_373] : memref<1x16x16x4xf32, #tpu.memory_space<vmem>>, vector<1x1x16x4xf32>
    %340 = vector.shape_cast %339 : vector<1x1x16x4xf32> to vector<16x4xf32>
    %341 = arith.addf %338, %340 : vector<16x4xf32>
    %cst_374 = arith.constant 0.000000e+00 : f32
    %342 = vector.broadcast %cst_374 : f32 to vector<16x4xf32>
    %343 = arith.maximumf %341, %342 : vector<16x4xf32>
    %c0_375 = arith.constant 0 : index
    %c7_376 = arith.constant 7 : index
    %c0_377 = arith.constant 0 : index
    %c0_378 = arith.constant 0 : index
    %344 = vector.load %arg11[%c0_375, %c7_376, %c0_377, %c0_378] : memref<1x16x16x4xf32, #tpu.memory_space<vmem>>, vector<1x1x16x4xf32>
    %345 = vector.shape_cast %344 : vector<1x1x16x4xf32> to vector<16x4xf32>
    %346 = vector.shape_cast %343 : vector<16x4xf32> to vector<1x1x16x4xf32>
    tpu.vector_store %arg11[%c0_375, %c7_376, %c0_377, %c0_378], %346 {strides = array<i32>} : memref<1x16x16x4xf32, #tpu.memory_space<vmem>>, vector<1x1x16x4xf32>,
    %c144 = arith.constant 144 : index
    %c0_379 = arith.constant 0 : index
    %347 = vector.load %arg14[%c144, %c0_379] : memref<288x4xf32, #tpu.memory_space<vmem>>, vector<16x4xf32>
    %c0_380 = arith.constant 0 : index
    %c0_381 = arith.constant 0 : index
    %348 = vector.load %arg6[%c0_380, %c0_381] : memref<1x4xf32, #tpu.memory_space<vmem>>, vector<1x4xf32>
    %349 = vector.broadcast %348 : vector<1x4xf32> to vector<16x4xf32>
    %350 = arith.addf %347, %349 : vector<16x4xf32>
    %351 = vector.broadcast %234 : vector<1x4xf32> to vector<16x4xf32>
    %352 = arith.mulf %350, %351 : vector<16x4xf32>
    %c0_382 = arith.constant 0 : index
    %c8_383 = arith.constant 8 : index
    %c0_384 = arith.constant 0 : index
    %c0_385 = arith.constant 0 : index
    %353 = vector.load %arg1[%c0_382, %c8_383, %c0_384, %c0_385] : memref<1x16x16x4xf32, #tpu.memory_space<vmem>>, vector<1x1x16x4xf32>
    %354 = vector.shape_cast %353 : vector<1x1x16x4xf32> to vector<16x4xf32>
    %355 = arith.addf %352, %354 : vector<16x4xf32>
    %cst_386 = arith.constant 0.000000e+00 : f32
    %356 = vector.broadcast %cst_386 : f32 to vector<16x4xf32>
    %357 = arith.maximumf %355, %356 : vector<16x4xf32>
    %c0_387 = arith.constant 0 : index
    %c8_388 = arith.constant 8 : index
    %c0_389 = arith.constant 0 : index
    %c0_390 = arith.constant 0 : index
    %358 = vector.load %arg11[%c0_387, %c8_388, %c0_389, %c0_390] : memref<1x16x16x4xf32, #tpu.memory_space<vmem>>, vector<1x1x16x4xf32>
    %359 = vector.shape_cast %358 : vector<1x1x16x4xf32> to vector<16x4xf32>
    %360 = vector.shape_cast %357 : vector<16x4xf32> to vector<1x1x16x4xf32>
    tpu.vector_store %arg11[%c0_387, %c8_388, %c0_389, %c0_390], %360 {strides = array<i32>} : memref<1x16x16x4xf32, #tpu.memory_space<vmem>>, vector<1x1x16x4xf32>,
    %c162 = arith.constant 162 : index
    %c0_391 = arith.constant 0 : index
    %361 = vector.load %arg14[%c162, %c0_391] : memref<288x4xf32, #tpu.memory_space<vmem>>, vector<16x4xf32>
    %c0_392 = arith.constant 0 : index
    %c0_393 = arith.constant 0 : index
    %362 = vector.load %arg6[%c0_392, %c0_393] : memref<1x4xf32, #tpu.memory_space<vmem>>, vector<1x4xf32>
    %363 = vector.broadcast %362 : vector<1x4xf32> to vector<16x4xf32>
    %364 = arith.addf %361, %363 : vector<16x4xf32>
    %365 = vector.broadcast %234 : vector<1x4xf32> to vector<16x4xf32>
    %366 = arith.mulf %364, %365 : vector<16x4xf32>
    %c0_394 = arith.constant 0 : index
    %c9_395 = arith.constant 9 : index
    %c0_396 = arith.constant 0 : index
    %c0_397 = arith.constant 0 : index
    %367 = vector.load %arg1[%c0_394, %c9_395, %c0_396, %c0_397] : memref<1x16x16x4xf32, #tpu.memory_space<vmem>>, vector<1x1x16x4xf32>
    %368 = vector.shape_cast %367 : vector<1x1x16x4xf32> to vector<16x4xf32>
    %369 = arith.addf %366, %368 : vector<16x4xf32>
    %cst_398 = arith.constant 0.000000e+00 : f32
    %370 = vector.broadcast %cst_398 : f32 to vector<16x4xf32>
    %371 = arith.maximumf %369, %370 : vector<16x4xf32>
    %c0_399 = arith.constant 0 : index
    %c9_400 = arith.constant 9 : index
    %c0_401 = arith.constant 0 : index
    %c0_402 = arith.constant 0 : index
    %372 = vector.load %arg11[%c0_399, %c9_400, %c0_401, %c0_402] : memref<1x16x16x4xf32, #tpu.memory_space<vmem>>, vector<1x1x16x4xf32>
    %373 = vector.shape_cast %372 : vector<1x1x16x4xf32> to vector<16x4xf32>
    %374 = vector.shape_cast %371 : vector<16x4xf32> to vector<1x1x16x4xf32>
    tpu.vector_store %arg11[%c0_399, %c9_400, %c0_401, %c0_402], %374 {strides = array<i32>} : memref<1x16x16x4xf32, #tpu.memory_space<vmem>>, vector<1x1x16x4xf32>,
    %c180 = arith.constant 180 : index
    %c0_403 = arith.constant 0 : index
    %375 = vector.load %arg14[%c180, %c0_403] : memref<288x4xf32, #tpu.memory_space<vmem>>, vector<16x4xf32>
    %c0_404 = arith.constant 0 : index
    %c0_405 = arith.constant 0 : index
    %376 = vector.load %arg6[%c0_404, %c0_405] : memref<1x4xf32, #tpu.memory_space<vmem>>, vector<1x4xf32>
    %377 = vector.broadcast %376 : vector<1x4xf32> to vector<16x4xf32>
    %378 = arith.addf %375, %377 : vector<16x4xf32>
    %379 = vector.broadcast %234 : vector<1x4xf32> to vector<16x4xf32>
    %380 = arith.mulf %378, %379 : vector<16x4xf32>
    %c0_406 = arith.constant 0 : index
    %c10_407 = arith.constant 10 : index
    %c0_408 = arith.constant 0 : index
    %c0_409 = arith.constant 0 : index
    %381 = vector.load %arg1[%c0_406, %c10_407, %c0_408, %c0_409] : memref<1x16x16x4xf32, #tpu.memory_space<vmem>>, vector<1x1x16x4xf32>
    %382 = vector.shape_cast %381 : vector<1x1x16x4xf32> to vector<16x4xf32>
    %383 = arith.addf %380, %382 : vector<16x4xf32>
    %cst_410 = arith.constant 0.000000e+00 : f32
    %384 = vector.broadcast %cst_410 : f32 to vector<16x4xf32>
    %385 = arith.maximumf %383, %384 : vector<16x4xf32>
    %c0_411 = arith.constant 0 : index
    %c10_412 = arith.constant 10 : index
    %c0_413 = arith.constant 0 : index
    %c0_414 = arith.constant 0 : index
    %386 = vector.load %arg11[%c0_411, %c10_412, %c0_413, %c0_414] : memref<1x16x16x4xf32, #tpu.memory_space<vmem>>, vector<1x1x16x4xf32>
    %387 = vector.shape_cast %386 : vector<1x1x16x4xf32> to vector<16x4xf32>
    %388 = vector.shape_cast %385 : vector<16x4xf32> to vector<1x1x16x4xf32>
    tpu.vector_store %arg11[%c0_411, %c10_412, %c0_413, %c0_414], %388 {strides = array<i32>} : memref<1x16x16x4xf32, #tpu.memory_space<vmem>>, vector<1x1x16x4xf32>,
    %c198 = arith.constant 198 : index
    %c0_415 = arith.constant 0 : index
    %389 = vector.load %arg14[%c198, %c0_415] : memref<288x4xf32, #tpu.memory_space<vmem>>, vector<16x4xf32>
    %c0_416 = arith.constant 0 : index
    %c0_417 = arith.constant 0 : index
    %390 = vector.load %arg6[%c0_416, %c0_417] : memref<1x4xf32, #tpu.memory_space<vmem>>, vector<1x4xf32>
    %391 = vector.broadcast %390 : vector<1x4xf32> to vector<16x4xf32>
    %392 = arith.addf %389, %391 : vector<16x4xf32>
    %393 = vector.broadcast %234 : vector<1x4xf32> to vector<16x4xf32>
    %394 = arith.mulf %392, %393 : vector<16x4xf32>
    %c0_418 = arith.constant 0 : index
    %c11_419 = arith.constant 11 : index
    %c0_420 = arith.constant 0 : index
    %c0_421 = arith.constant 0 : index
    %395 = vector.load %arg1[%c0_418, %c11_419, %c0_420, %c0_421] : memref<1x16x16x4xf32, #tpu.memory_space<vmem>>, vector<1x1x16x4xf32>
    %396 = vector.shape_cast %395 : vector<1x1x16x4xf32> to vector<16x4xf32>
    %397 = arith.addf %394, %396 : vector<16x4xf32>
    %cst_422 = arith.constant 0.000000e+00 : f32
    %398 = vector.broadcast %cst_422 : f32 to vector<16x4xf32>
    %399 = arith.maximumf %397, %398 : vector<16x4xf32>
    %c0_423 = arith.constant 0 : index
    %c11_424 = arith.constant 11 : index
    %c0_425 = arith.constant 0 : index
    %c0_426 = arith.constant 0 : index
    %400 = vector.load %arg11[%c0_423, %c11_424, %c0_425, %c0_426] : memref<1x16x16x4xf32, #tpu.memory_space<vmem>>, vector<1x1x16x4xf32>
    %401 = vector.shape_cast %400 : vector<1x1x16x4xf32> to vector<16x4xf32>
    %402 = vector.shape_cast %399 : vector<16x4xf32> to vector<1x1x16x4xf32>
    tpu.vector_store %arg11[%c0_423, %c11_424, %c0_425, %c0_426], %402 {strides = array<i32>} : memref<1x16x16x4xf32, #tpu.memory_space<vmem>>, vector<1x1x16x4xf32>,
    %c216 = arith.constant 216 : index
    %c0_427 = arith.constant 0 : index
    %403 = vector.load %arg14[%c216, %c0_427] : memref<288x4xf32, #tpu.memory_space<vmem>>, vector<16x4xf32>
    %c0_428 = arith.constant 0 : index
    %c0_429 = arith.constant 0 : index
    %404 = vector.load %arg6[%c0_428, %c0_429] : memref<1x4xf32, #tpu.memory_space<vmem>>, vector<1x4xf32>
    %405 = vector.broadcast %404 : vector<1x4xf32> to vector<16x4xf32>
    %406 = arith.addf %403, %405 : vector<16x4xf32>
    %407 = vector.broadcast %234 : vector<1x4xf32> to vector<16x4xf32>
    %408 = arith.mulf %406, %407 : vector<16x4xf32>
    %c0_430 = arith.constant 0 : index
    %c12_431 = arith.constant 12 : index
    %c0_432 = arith.constant 0 : index
    %c0_433 = arith.constant 0 : index
    %409 = vector.load %arg1[%c0_430, %c12_431, %c0_432, %c0_433] : memref<1x16x16x4xf32, #tpu.memory_space<vmem>>, vector<1x1x16x4xf32>
    %410 = vector.shape_cast %409 : vector<1x1x16x4xf32> to vector<16x4xf32>
    %411 = arith.addf %408, %410 : vector<16x4xf32>
    %cst_434 = arith.constant 0.000000e+00 : f32
    %412 = vector.broadcast %cst_434 : f32 to vector<16x4xf32>
    %413 = arith.maximumf %411, %412 : vector<16x4xf32>
    %c0_435 = arith.constant 0 : index
    %c12_436 = arith.constant 12 : index
    %c0_437 = arith.constant 0 : index
    %c0_438 = arith.constant 0 : index
    %414 = vector.load %arg11[%c0_435, %c12_436, %c0_437, %c0_438] : memref<1x16x16x4xf32, #tpu.memory_space<vmem>>, vector<1x1x16x4xf32>
    %415 = vector.shape_cast %414 : vector<1x1x16x4xf32> to vector<16x4xf32>
    %416 = vector.shape_cast %413 : vector<16x4xf32> to vector<1x1x16x4xf32>
    tpu.vector_store %arg11[%c0_435, %c12_436, %c0_437, %c0_438], %416 {strides = array<i32>} : memref<1x16x16x4xf32, #tpu.memory_space<vmem>>, vector<1x1x16x4xf32>,
    %c234 = arith.constant 234 : index
    %c0_439 = arith.constant 0 : index
    %417 = vector.load %arg14[%c234, %c0_439] : memref<288x4xf32, #tpu.memory_space<vmem>>, vector<16x4xf32>
    %c0_440 = arith.constant 0 : index
    %c0_441 = arith.constant 0 : index
    %418 = vector.load %arg6[%c0_440, %c0_441] : memref<1x4xf32, #tpu.memory_space<vmem>>, vector<1x4xf32>
    %419 = vector.broadcast %418 : vector<1x4xf32> to vector<16x4xf32>
    %420 = arith.addf %417, %419 : vector<16x4xf32>
    %421 = vector.broadcast %234 : vector<1x4xf32> to vector<16x4xf32>
    %422 = arith.mulf %420, %421 : vector<16x4xf32>
    %c0_442 = arith.constant 0 : index
    %c13_443 = arith.constant 13 : index
    %c0_444 = arith.constant 0 : index
    %c0_445 = arith.constant 0 : index
    %423 = vector.load %arg1[%c0_442, %c13_443, %c0_444, %c0_445] : memref<1x16x16x4xf32, #tpu.memory_space<vmem>>, vector<1x1x16x4xf32>
    %424 = vector.shape_cast %423 : vector<1x1x16x4xf32> to vector<16x4xf32>
    %425 = arith.addf %422, %424 : vector<16x4xf32>
    %cst_446 = arith.constant 0.000000e+00 : f32
    %426 = vector.broadcast %cst_446 : f32 to vector<16x4xf32>
    %427 = arith.maximumf %425, %426 : vector<16x4xf32>
    %c0_447 = arith.constant 0 : index
    %c13_448 = arith.constant 13 : index
    %c0_449 = arith.constant 0 : index
    %c0_450 = arith.constant 0 : index
    %428 = vector.load %arg11[%c0_447, %c13_448, %c0_449, %c0_450] : memref<1x16x16x4xf32, #tpu.memory_space<vmem>>, vector<1x1x16x4xf32>
    %429 = vector.shape_cast %428 : vector<1x1x16x4xf32> to vector<16x4xf32>
    %430 = vector.shape_cast %427 : vector<16x4xf32> to vector<1x1x16x4xf32>
    tpu.vector_store %arg11[%c0_447, %c13_448, %c0_449, %c0_450], %430 {strides = array<i32>} : memref<1x16x16x4xf32, #tpu.memory_space<vmem>>, vector<1x1x16x4xf32>,
    %c252 = arith.constant 252 : index
    %c0_451 = arith.constant 0 : index
    %431 = vector.load %arg14[%c252, %c0_451] : memref<288x4xf32, #tpu.memory_space<vmem>>, vector<16x4xf32>
    %c0_452 = arith.constant 0 : index
    %c0_453 = arith.constant 0 : index
    %432 = vector.load %arg6[%c0_452, %c0_453] : memref<1x4xf32, #tpu.memory_space<vmem>>, vector<1x4xf32>
    %433 = vector.broadcast %432 : vector<1x4xf32> to vector<16x4xf32>
    %434 = arith.addf %431, %433 : vector<16x4xf32>
    %435 = vector.broadcast %234 : vector<1x4xf32> to vector<16x4xf32>
    %436 = arith.mulf %434, %435 : vector<16x4xf32>
    %c0_454 = arith.constant 0 : index
    %c14_455 = arith.constant 14 : index
    %c0_456 = arith.constant 0 : index
    %c0_457 = arith.constant 0 : index
    %437 = vector.load %arg1[%c0_454, %c14_455, %c0_456, %c0_457] : memref<1x16x16x4xf32, #tpu.memory_space<vmem>>, vector<1x1x16x4xf32>
    %438 = vector.shape_cast %437 : vector<1x1x16x4xf32> to vector<16x4xf32>
    %439 = arith.addf %436, %438 : vector<16x4xf32>
    %cst_458 = arith.constant 0.000000e+00 : f32
    %440 = vector.broadcast %cst_458 : f32 to vector<16x4xf32>
    %441 = arith.maximumf %439, %440 : vector<16x4xf32>
    %c0_459 = arith.constant 0 : index
    %c14_460 = arith.constant 14 : index
    %c0_461 = arith.constant 0 : index
    %c0_462 = arith.constant 0 : index
    %442 = vector.load %arg11[%c0_459, %c14_460, %c0_461, %c0_462] : memref<1x16x16x4xf32, #tpu.memory_space<vmem>>, vector<1x1x16x4xf32>
    %443 = vector.shape_cast %442 : vector<1x1x16x4xf32> to vector<16x4xf32>
    %444 = vector.shape_cast %441 : vector<16x4xf32> to vector<1x1x16x4xf32>
    tpu.vector_store %arg11[%c0_459, %c14_460, %c0_461, %c0_462], %444 {strides = array<i32>} : memref<1x16x16x4xf32, #tpu.memory_space<vmem>>, vector<1x1x16x4xf32>,
    %c270 = arith.constant 270 : index
    %c0_463 = arith.constant 0 : index
    %445 = vector.load %arg14[%c270, %c0_463] : memref<288x4xf32, #tpu.memory_space<vmem>>, vector<16x4xf32>
    %c0_464 = arith.constant 0 : index
    %c0_465 = arith.constant 0 : index
    %446 = vector.load %arg6[%c0_464, %c0_465] : memref<1x4xf32, #tpu.memory_space<vmem>>, vector<1x4xf32>
    %447 = vector.broadcast %446 : vector<1x4xf32> to vector<16x4xf32>
    %448 = arith.addf %445, %447 : vector<16x4xf32>
    %449 = vector.broadcast %234 : vector<1x4xf32> to vector<16x4xf32>
    %450 = arith.mulf %448, %449 : vector<16x4xf32>
    %c0_466 = arith.constant 0 : index
    %c15_467 = arith.constant 15 : index
    %c0_468 = arith.constant 0 : index
    %c0_469 = arith.constant 0 : index
    %451 = vector.load %arg1[%c0_466, %c15_467, %c0_468, %c0_469] : memref<1x16x16x4xf32, #tpu.memory_space<vmem>>, vector<1x1x16x4xf32>
    %452 = vector.shape_cast %451 : vector<1x1x16x4xf32> to vector<16x4xf32>
    %453 = arith.addf %450, %452 : vector<16x4xf32>
    %cst_470 = arith.constant 0.000000e+00 : f32
    %454 = vector.broadcast %cst_470 : f32 to vector<16x4xf32>
    %455 = arith.maximumf %453, %454 : vector<16x4xf32>
    %c0_471 = arith.constant 0 : index
    %c15_472 = arith.constant 15 : index
    %c0_473 = arith.constant 0 : index
    %c0_474 = arith.constant 0 : index
    %456 = vector.load %arg11[%c0_471, %c15_472, %c0_473, %c0_474] : memref<1x16x16x4xf32, #tpu.memory_space<vmem>>, vector<1x1x16x4xf32>
    %457 = vector.shape_cast %456 : vector<1x1x16x4xf32> to vector<16x4xf32>
    %458 = vector.shape_cast %455 : vector<16x4xf32> to vector<1x1x16x4xf32>
    tpu.vector_store %arg11[%c0_471, %c15_472, %c0_473, %c0_474], %458 {strides = array<i32>} : memref<1x16x16x4xf32, #tpu.memory_space<vmem>>, vector<1x1x16x4xf32>,
    return
  }
  func.func @transform_0(%arg0: i32) -> (i32, i32, i32, i32) {
    %c0_i32 = arith.constant 0 : i32
    %c0_i32_0 = arith.constant 0 : i32
    %c0_i32_1 = arith.constant 0 : i32
    %c0_i32_2 = arith.constant 0 : i32
    return %arg0, %c0_i32, %c0_i32_0, %c0_i32_1 : i32, i32, i32, i32
  }
  func.func @transform_1(%arg0: i32) -> (i32, i32) {
    %c0_i32 = arith.constant 0 : i32
    %c0_i32_0 = arith.constant 0 : i32
    %c0_i32_1 = arith.constant 0 : i32
    return %c0_i32, %c0_i32_0 : i32, i32
  }
  func.func @transform_2(%arg0: i32) -> (i32, i32, i32) {
    %c0_i32 = arith.constant 0 : i32
    %c0_i32_0 = arith.constant 0 : i32
    %c0_i32_1 = arith.constant 0 : i32
    %c0_i32_2 = arith.constant 0 : i32
    return %c0_i32, %c0_i32_0, %c0_i32_1 : i32, i32, i32
  }
  func.func @transform_3(%arg0: i32) -> (i32, i32) {
    %c0_i32 = arith.constant 0 : i32
    %c0_i32_0 = arith.constant 0 : i32
    %c0_i32_1 = arith.constant 0 : i32
    return %c0_i32, %c0_i32_0 : i32, i32
  }
  func.func @transform_4(%arg0: i32) -> (i32, i32, i32) {
    %c0_i32 = arith.constant 0 : i32
    %c0_i32_0 = arith.constant 0 : i32
    %c0_i32_1 = arith.constant 0 : i32
    %c0_i32_2 = arith.constant 0 : i32
    return %c0_i32, %c0_i32_0, %c0_i32_1 : i32, i32, i32
  }
  func.func @transform_5(%arg0: i32) -> (i32, i32) {
    %c0_i32 = arith.constant 0 : i32
    %c0_i32_0 = arith.constant 0 : i32
    %c0_i32_1 = arith.constant 0 : i32
    return %c0_i32, %c0_i32_0 : i32, i32
  }
  func.func @transform_6(%arg0: i32) -> (i32, i32) {
    %c0_i32 = arith.constant 0 : i32
    %c0_i32_0 = arith.constant 0 : i32
    %c0_i32_1 = arith.constant 0 : i32
    return %c0_i32, %c0_i32_0 : i32, i32
  }
  func.func @transform_7(%arg0: i32) -> (i32, i32) {
    %c0_i32 = arith.constant 0 : i32
    %c0_i32_0 = arith.constant 0 : i32
    %c0_i32_1 = arith.constant 0 : i32
    return %c0_i32, %c0_i32_0 : i32, i32
  }
  func.func @transform_8(%arg0: i32) -> (i32, i32) {
    %c0_i32 = arith.constant 0 : i32
    %c0_i32_0 = arith.constant 0 : i32
    %c0_i32_1 = arith.constant 0 : i32
    return %c0_i32, %c0_i32_0 : i32, i32
  }
  func.func @transform_9(%arg0: i32) -> (i32, i32) {
    %c0_i32 = arith.constant 0 : i32
    %c0_i32_0 = arith.constant 0 : i32
    %c0_i32_1 = arith.constant 0 : i32
    return %c0_i32, %c0_i32_0 : i32, i32
  }
  func.func @transform_10(%arg0: i32) -> (i32, i32, i32, i32) {
    %c0_i32 = arith.constant 0 : i32
    %c0_i32_0 = arith.constant 0 : i32
    %c0_i32_1 = arith.constant 0 : i32
    %c0_i32_2 = arith.constant 0 : i32
    return %arg0, %c0_i32, %c0_i32_0, %c0_i32_1 : i32, i32, i32, i32
  }
}

</mosaic_0001>

<llo_original>
// kernel: tpu_custom_call.1
$region0: #{tpu_custom_call.1}
  #allocation0 [shape = 'u32[]', space=smem, size = 0x4, offset = 0x4, fixed_abs, tag = 'smem constant byte address 0x4 - core index']
  #allocation1 [shape = 'u32[144,128]{1,0:T(1,128)}', space=vmem, size = 0x12000, scoped, tag = 'internal scratch']
  #allocation2 [shape = 'f32[342,4]{1,0:T(8,128)}', space=vmem, size = 0x2b000, scoped, tag = 'scratch operand']
  #allocation3 [shape = 'f32[342,4]{1,0:T(8,128)}', space=vmem, size = 0x2b000, scoped, tag = 'scratch operand']
  #allocation4 [shape = 'f32[288,4]{1,0:T(8,128)}', space=vmem, size = 0x24000, scoped, tag = 'scratch operand']
  %s0 = inlined_call_operand.vmem [shape: f32[2,16,16,4], index: 0, kind: input, shape index: {}]
  %s1 = inlined_call_operand.vmem [shape: f32[288,1], index: 1, kind: input, shape index: {}]
  %s2 = inlined_call_operand.vmem [shape: bf16[9,4,4], index: 2, kind: input, shape index: {}]
  %s3 = inlined_call_operand.vmem [shape: f32[1,4], index: 3, kind: input, shape index: {}]
  %s4 = inlined_call_operand.vmem [shape: bf16[9,4,4], index: 4, kind: input, shape index: {}]
  %s5 = inlined_call_operand.vmem [shape: f32[1,4], index: 5, kind: input, shape index: {}]
  %s6 = inlined_call_operand.vmem [shape: f32[4,16], index: 6, kind: input, shape index: {}]
  %s7 = inlined_call_operand.vmem [shape: f32[1,16], index: 7, kind: input, shape index: {}]
  %s8 = inlined_call_operand.vmem [shape: f32[16,4], index: 8, kind: input, shape index: {}]
  %s9 = inlined_call_operand.vmem [shape: f32[1,4], index: 9, kind: input, shape index: {}]
  %s10 = inlined_call_operand.vmem [shape: f32[2,16,16,4], index: 10, kind: output, shape index: {}]
  %s11 = sld [smem:[#allocation0]]
  $region73: #{tpu_custom_call.1} parent=0
    _
  %s13 = ssub.s32 1, %s11
  %s14 = scalar_select 0, %s13, %s11
  loop: start=0, step=1, limit=4
  $region2: #{tpu_custom_call.1} parent=0 // loop_pre_header
    _
  $region3: #{tpu_custom_call.1} parent=0 // loop_header
    %s16 = sphi 0, %s20
    %p17 = scmp.ge.s32.totalorder %s16, 4
    %s26 = sphi 0, %s28
    %s29 = sphi 0, %s26
    %s30 = sphi 0, %s29
    %s46 = sphi 0, %s30
    %s50 = sphi 0, %s50
    %s52 = sphi 0, %s50
    %s53 = sphi 0, %s52
    %s67 = sphi 0, %s53
    %s71 = sphi 0, %s71
    %s73 = sphi 0, %s71
    %s74 = sphi 0, %s73
    %s88 = sphi 0, %s74
    %s92 = sphi 0, %s92
    %s94 = sphi 0, %s92
    %s95 = sphi 0, %s94
    %s109 = sphi 0, %s95
    %s113 = sphi 0, %s113
    %s115 = sphi 0, %s113
    %s116 = sphi 0, %s115
    %s130 = sphi 0, %s116
    %s134 = sphi 0, %s134
    %s136 = sphi 0, %s134
    %s137 = sphi 0, %s136
    %s151 = sphi 0, %s137
    %s155 = sphi 0, %s155
    %s157 = sphi 0, %s155
    %s158 = sphi 0, %s157
    %s172 = sphi 0, %s158
    %s176 = sphi 0, %s176
    %s178 = sphi 0, %s176
    %s179 = sphi 0, %s178
    %s193 = sphi 0, %s179
    %s197 = sphi 0, %s197
    %s199 = sphi 0, %s197
    %s200 = sphi 0, %s199
    %s214 = sphi 0, %s200
    %s218 = sphi 0, %s218
    %s220 = sphi 0, %s218
    %s221 = sphi 0, %s220
    %s235 = sphi 0, %s221
    %s241 = sphi 0, %s243
    %s244 = sphi 0, %s241
    %s245 = sphi 0, %s244
    %s261 = sphi 0, %s245
  $region4: #{tpu_custom_call.1} parent=0 // loop_header_branch
    %19 = sbr.rel (%p17) target = $region8
  $region5: #{tpu_custom_call.1} parent=0 // loop_body
    %s21 = ssub.s32 %s16, 1
    %s22 = ssub.s32 %s16, 2
    %s23 = sadd.s32 %s16, 1
    %s24 = ssub.s32 %s16, %s23
    %p25 = scmp.eq.s32.totalorder %s24, 0
    %s27 = sadd.s32 %s26, 1
    %s28 = scalar_select %p25, %s26, %s27
    %p31 = pneg %p25
    %p32 = scmp.eq.s32.totalorder %s16, 1
    %p33 = por %p31, %p32
    %p34 = scmp.ne.s32.totalorder %s26, %s29
    %p35 = scmp.eq.s32.totalorder %s16, 0
    %p36 = por %p34, %p35
    %p37 = scmp.ne.s32.totalorder %s26, %s29
    %p38 = scmp.eq.s32.totalorder %s21, 1
    %p39 = por %p37, %p38
    %p40 = scmp.ne.s32.totalorder %s29, %s30
    %p41 = scmp.eq.s32.totalorder %s21, 0
    %p42 = por %p40, %p41
    %p43 = scmp.ne.s32.totalorder %s29, %s30
    %p44 = scmp.eq.s32.totalorder %s22, 1
    %p45 = por %p43, %p44
    %p47 = scmp.ne.s32.totalorder %s30, %s46
    %p48 = scmp.eq.s32.totalorder %s22, 0
    %p49 = por %p47, %p48
    %s51 = sadd.s32 %s50, 1
    %p54 = scmp.eq.s32.totalorder %s16, 1
    %p55 = scmp.ne.s32.totalorder %s50, %s52
    %p56 = scmp.eq.s32.totalorder %s16, 0
    %p57 = por %p55, %p56
    %p58 = scmp.ne.s32.totalorder %s50, %s52
    %p59 = scmp.eq.s32.totalorder %s21, 1
    %p60 = por %p58, %p59
    %p61 = scmp.ne.s32.totalorder %s52, %s53
    %p62 = scmp.eq.s32.totalorder %s21, 0
    %p63 = por %p61, %p62
    %p64 = scmp.ne.s32.totalorder %s52, %s53
    %p65 = scmp.eq.s32.totalorder %s22, 1
    %p66 = por %p64, %p65
    %p68 = scmp.ne.s32.totalorder %s53, %s67
    %p69 = scmp.eq.s32.totalorder %s22, 0
    %p70 = por %p68, %p69
    %s72 = sadd.s32 %s71, 1
    %p75 = scmp.eq.s32.totalorder %s16, 1
    %p76 = scmp.ne.s32.totalorder %s71, %s73
    %p77 = scmp.eq.s32.totalorder %s16, 0
    %p78 = por %p76, %p77
    %p79 = scmp.ne.s32.totalorder %s71, %s73
    %p80 = scmp.eq.s32.totalorder %s21, 1
    %p81 = por %p79, %p80
    %p82 = scmp.ne.s32.totalorder %s73, %s74
    %p83 = scmp.eq.s32.totalorder %s21, 0
    %p84 = por %p82, %p83
    %p85 = scmp.ne.s32.totalorder %s73, %s74
    %p86 = scmp.eq.s32.totalorder %s22, 1
    %p87 = por %p85, %p86
    %p89 = scmp.ne.s32.totalorder %s74, %s88
    %p90 = scmp.eq.s32.totalorder %s22, 0
    %p91 = por %p89, %p90
    %s93 = sadd.s32 %s92, 1
    %p96 = scmp.eq.s32.totalorder %s16, 1
    %p97 = scmp.ne.s32.totalorder %s92, %s94
    %p98 = scmp.eq.s32.totalorder %s16, 0
    %p99 = por %p97, %p98
    %p100 = scmp.ne.s32.totalorder %s92, %s94
    %p101 = scmp.eq.s32.totalorder %s21, 1
    %p102 = por %p100, %p101
    %p103 = scmp.ne.s32.totalorder %s94, %s95
    %p104 = scmp.eq.s32.totalorder %s21, 0
    %p105 = por %p103, %p104
    %p106 = scmp.ne.s32.totalorder %s94, %s95
    %p107 = scmp.eq.s32.totalorder %s22, 1
    %p108 = por %p106, %p107
    %p110 = scmp.ne.s32.totalorder %s95, %s109
    %p111 = scmp.eq.s32.totalorder %s22, 0
    %p112 = por %p110, %p111
    %s114 = sadd.s32 %s113, 1
    %p117 = scmp.eq.s32.totalorder %s16, 1
    %p118 = scmp.ne.s32.totalorder %s113, %s115
    %p119 = scmp.eq.s32.totalorder %s16, 0
    %p120 = por %p118, %p119
    %p121 = scmp.ne.s32.totalorder %s113, %s115
    %p122 = scmp.eq.s32.totalorder %s21, 1
    %p123 = por %p121, %p122
    %p124 = scmp.ne.s32.totalorder %s115, %s116
    %p125 = scmp.eq.s32.totalorder %s21, 0
    %p126 = por %p124, %p125
    %p127 = scmp.ne.s32.totalorder %s115, %s116
    %p128 = scmp.eq.s32.totalorder %s22, 1
    %p129 = por %p127, %p128
    %p131 = scmp.ne.s32.totalorder %s116, %s130
    %p132 = scmp.eq.s32.totalorder %s22, 0
    %p133 = por %p131, %p132
    %s135 = sadd.s32 %s134, 1
    %p138 = scmp.eq.s32.totalorder %s16, 1
    %p139 = scmp.ne.s32.totalorder %s134, %s136
    %p140 = scmp.eq.s32.totalorder %s16, 0
    %p141 = por %p139, %p140
    %p142 = scmp.ne.s32.totalorder %s134, %s136
    %p143 = scmp.eq.s32.totalorder %s21, 1
    %p144 = por %p142, %p143
    %p145 = scmp.ne.s32.totalorder %s136, %s137
    %p146 = scmp.eq.s32.totalorder %s21, 0
    %p147 = por %p145, %p146
    %p148 = scmp.ne.s32.totalorder %s136, %s137
    %p149 = scmp.eq.s32.totalorder %s22, 1
    %p150 = por %p148, %p149
    %p152 = scmp.ne.s32.totalorder %s137, %s151
    %p153 = scmp.eq.s32.totalorder %s22, 0
    %p154 = por %p152, %p153
    %s156 = sadd.s32 %s155, 1
    %p159 = scmp.eq.s32.totalorder %s16, 1
    %p160 = scmp.ne.s32.totalorder %s155, %s157
    %p161 = scmp.eq.s32.totalorder %s16, 0
    %p162 = por %p160, %p161
    %p163 = scmp.ne.s32.totalorder %s155, %s157
    %p164 = scmp.eq.s32.totalorder %s21, 1
    %p165 = por %p163, %p164
    %p166 = scmp.ne.s32.totalorder %s157, %s158
    %p167 = scmp.eq.s32.totalorder %s21, 0
    %p168 = por %p166, %p167
    %p169 = scmp.ne.s32.totalorder %s157, %s158
    %p170 = scmp.eq.s32.totalorder %s22, 1
    %p171 = por %p169, %p170
    %p173 = scmp.ne.s32.totalorder %s158, %s172
    %p174 = scmp.eq.s32.totalorder %s22, 0
    %p175 = por %p173, %p174
    %s177 = sadd.s32 %s176, 1
    %p180 = scmp.eq.s32.totalorder %s16, 1
    %p181 = scmp.ne.s32.totalorder %s176, %s178
    %p182 = scmp.eq.s32.totalorder %s16, 0
    %p183 = por %p181, %p182
    %p184 = scmp.ne.s32.totalorder %s176, %s178
    %p185 = scmp.eq.s32.totalorder %s21, 1
    %p186 = por %p184, %p185
    %p187 = scmp.ne.s32.totalorder %s178, %s179
    %p188 = scmp.eq.s32.totalorder %s21, 0
    %p189 = por %p187, %p188
    %p190 = scmp.ne.s32.totalorder %s178, %s179
    %p191 = scmp.eq.s32.totalorder %s22, 1
    %p192 = por %p190, %p191
    %p194 = scmp.ne.s32.totalorder %s179, %s193
    %p195 = scmp.eq.s32.totalorder %s22, 0
    %p196 = por %p194, %p195
    %s198 = sadd.s32 %s197, 1
    %p201 = scmp.eq.s32.totalorder %s16, 1
    %p202 = scmp.ne.s32.totalorder %s197, %s199
    %p203 = scmp.eq.s32.totalorder %s16, 0
    %p204 = por %p202, %p203
    %p205 = scmp.ne.s32.totalorder %s197, %s199
    %p206 = scmp.eq.s32.totalorder %s21, 1
    %p207 = por %p205, %p206
    %p208 = scmp.ne.s32.totalorder %s199, %s200
    %p209 = scmp.eq.s32.totalorder %s21, 0
    %p210 = por %p208, %p209
    %p211 = scmp.ne.s32.totalorder %s199, %s200
    %p212 = scmp.eq.s32.totalorder %s22, 1
    %p213 = por %p211, %p212
    %p215 = scmp.ne.s32.totalorder %s200, %s214
    %p216 = scmp.eq.s32.totalorder %s22, 0
    %p217 = por %p215, %p216
    %s219 = sadd.s32 %s218, 1
    %p222 = scmp.eq.s32.totalorder %s16, 1
    %p223 = scmp.ne.s32.totalorder %s218, %s220
    %p224 = scmp.eq.s32.totalorder %s16, 0
    %p225 = por %p223, %p224
    %p226 = scmp.ne.s32.totalorder %s218, %s220
    %p227 = scmp.eq.s32.totalorder %s21, 1
    %p228 = por %p226, %p227
    %p229 = scmp.ne.s32.totalorder %s220, %s221
    %p230 = scmp.eq.s32.totalorder %s21, 0
    %p231 = por %p229, %p230
    %p232 = scmp.ne.s32.totalorder %s220, %s221
    %p233 = scmp.eq.s32.totalorder %s22, 1
    %p234 = por %p232, %p233
    %p236 = scmp.ne.s32.totalorder %s221, %s235
    %p237 = scmp.eq.s32.totalorder %s22, 0
    %p238 = por %p236, %p237
    %s239 = ssub.s32 %s16, %s23
    %p240 = scmp.eq.s32.totalorder %s239, 0
    %s242 = sadd.s32 %s241, 1
    %s243 = scalar_select %p240, %s241, %s242
    %p246 = pneg %p240
    %p247 = scmp.eq.s32.totalorder %s16, 1
    %p248 = por %p246, %p247
    %p249 = scmp.ne.s32.totalorder %s241, %s244
    %p250 = scmp.eq.s32.totalorder %s16, 0
    %p251 = por %p249, %p250
    %p252 = scmp.ne.s32.totalorder %s241, %s244
    %p253 = scmp.eq.s32.totalorder %s21, 1
    %p254 = por %p252, %p253
    %p255 = scmp.ne.s32.totalorder %s244, %s245
    %p256 = scmp.eq.s32.totalorder %s21, 0
    %p257 = por %p255, %p256
    %p258 = scmp.ne.s32.totalorder %s244, %s245
    %p259 = scmp.eq.s32.totalorder %s22, 1
    %p260 = por %p258, %p259
    %p262 = scmp.ne.s32.totalorder %s245, %s261
    %p263 = scmp.eq.s32.totalorder %s22, 0
    %p264 = por %p262, %p263
    %p265 = scmp.le.s32.totalorder 1, %s16
    %p266 = scmp.lt.s32.totalorder %s16, 3
    %p267 = pnand %p265, %p266
    %p268 = pneg %p267
    // Predicated region
    $region9: #{tpu_custom_call.1} parent=5 // pred_check
      _
    $region10: #{tpu_custom_call.1} parent=5 // pred_check_branch
      %270 = sbr.rel (%p267) target = $region12
    $region11: #{tpu_custom_call.1} parent=5 // pred_region
      %s271 = ssub.s32 %s16, 1
      // Predicated region
      $region13: #{tpu_custom_call.1} parent=11 // pred_check
        %p272 = pneg %p63
      $region14: #{tpu_custom_call.1} parent=11 // pred_check_branch
        %274 = sbr.rel (%p272) target = $region16
      $region15: #{tpu_custom_call.1} parent=11 // pred_region
        _
      $region16: #{tpu_custom_call.1} parent=11 // pred_fallthru
        _
      // Predicated region
      $region17: #{tpu_custom_call.1} parent=11 // pred_check
        %p275 = pneg %p84
      $region18: #{tpu_custom_call.1} parent=11 // pred_check_branch
        %277 = sbr.rel (%p275) target = $region20
      $region19: #{tpu_custom_call.1} parent=11 // pred_region
        _
      $region20: #{tpu_custom_call.1} parent=11 // pred_fallthru
        _
      // Predicated region
      $region21: #{tpu_custom_call.1} parent=11 // pred_check
        %p278 = pneg %p105
      $region22: #{tpu_custom_call.1} parent=11 // pred_check_branch
        %280 = sbr.rel (%p278) target = $region24
      $region23: #{tpu_custom_call.1} parent=11 // pred_region
        _
      $region24: #{tpu_custom_call.1} parent=11 // pred_fallthru
        _
      // Predicated region
      $region25: #{tpu_custom_call.1} parent=11 // pred_check
        %p281 = pneg %p126
      $region26: #{tpu_custom_call.1} parent=11 // pred_check_branch
        %283 = sbr.rel (%p281) target = $region28
      $region27: #{tpu_custom_call.1} parent=11 // pred_region
        _
      $region28: #{tpu_custom_call.1} parent=11 // pred_fallthru
        _
      // Predicated region
      $region29: #{tpu_custom_call.1} parent=11 // pred_check
        %p284 = pneg %p147
      $region30: #{tpu_custom_call.1} parent=11 // pred_check_branch
        %286 = sbr.rel (%p284) target = $region32
      $region31: #{tpu_custom_call.1} parent=11 // pred_region
        _
      $region32: #{tpu_custom_call.1} parent=11 // pred_fallthru
        _
      // Predicated region
      $region33: #{tpu_custom_call.1} parent=11 // pred_check
        %p287 = pneg %p168
      $region34: #{tpu_custom_call.1} parent=11 // pred_check_branch
        %289 = sbr.rel (%p287) target = $region36
      $region35: #{tpu_custom_call.1} parent=11 // pred_region
        _
      $region36: #{tpu_custom_call.1} parent=11 // pred_fallthru
        _
      // Predicated region
      $region37: #{tpu_custom_call.1} parent=11 // pred_check
        %p290 = pneg %p189
      $region38: #{tpu_custom_call.1} parent=11 // pred_check_branch
        %292 = sbr.rel (%p290) target = $region40
      $region39: #{tpu_custom_call.1} parent=11 // pred_region
        _
      $region40: #{tpu_custom_call.1} parent=11 // pred_fallthru
        _
      // Predicated region
      $region41: #{tpu_custom_call.1} parent=11 // pred_check
        %p293 = pneg %p210
      $region42: #{tpu_custom_call.1} parent=11 // pred_check_branch
        %295 = sbr.rel (%p293) target = $region44
      $region43: #{tpu_custom_call.1} parent=11 // pred_region
        _
      $region44: #{tpu_custom_call.1} parent=11 // pred_fallthru
        _
      // Predicated region
      $region45: #{tpu_custom_call.1} parent=11 // pred_check
        %p296 = pneg %p231
      $region46: #{tpu_custom_call.1} parent=11 // pred_check_branch
        %298 = sbr.rel (%p296) target = $region48
      $region47: #{tpu_custom_call.1} parent=11 // pred_region
        _
      $region48: #{tpu_custom_call.1} parent=11 // pred_fallthru
        _
    $region12: #{tpu_custom_call.1} parent=5 // pred_fallthru
      _
    %p299 = scmp.lt.s32.totalorder %s16, 2
    // Predicated region
    $region49: #{tpu_custom_call.1} parent=5 // pred_check
      %p300 = pneg %p299
    $region50: #{tpu_custom_call.1} parent=5 // pred_check_branch
      %302 = sbr.rel (%p300) target = $region52
    $region51: #{tpu_custom_call.1} parent=5 // pred_region
      // Predicated region
      $region53: #{tpu_custom_call.1} parent=51 // pred_check
        %p303 = pneg %p36
      $region54: #{tpu_custom_call.1} parent=51 // pred_check_branch
        %305 = sbr.rel (%p303) target = $region56
      $region55: #{tpu_custom_call.1} parent=51 // pred_region
        %p306 = scmp.lt.s32.totalorder %s16, 1
        %s307 = scalar_select %p306, %s16, 1
        %s308 = smul.addr %s307, 32
        %s309 = smul.addr %s308, 8
        %s310 = scalar_lea.vmem %s0, %s309
      $region56: #{tpu_custom_call.1} parent=51 // pred_fallthru
        _
    $region52: #{tpu_custom_call.1} parent=5 // pred_fallthru
      _
    %p311 = scmp.le.s32.totalorder 1, %s16
    %p312 = scmp.lt.s32.totalorder %s16, 3
    %p313 = pnand %p311, %p312
    %p314 = pneg %p313
    // Predicated region
    $region57: #{tpu_custom_call.1} parent=5 // pred_check
      _
    $region58: #{tpu_custom_call.1} parent=5 // pred_check_branch
      %316 = sbr.rel (%p313) target = $region60
    $region59: #{tpu_custom_call.1} parent=5 // pred_region
      %s317 = ssub.s32 %s16, 1
      %p318 = scmp.lt.s32.totalorder %s21, 1
      %s319 = scalar_select %p318, %s21, 1
      %s320 = smul.addr %s319, 32
      %s321 = smul.addr %s320, 8
      %s322 = scalar_lea.vmem %s0, %s321
      %p323 = pneg %p42
      %p324 = pneg %p39
      %p325 = pneg %p63
      %p326 = pneg %p60
      %p327 = pneg %p84
      %p328 = pneg %p81
      %p329 = pneg %p105
      %p330 = pneg %p102
      %p331 = pneg %p126
      %p332 = pneg %p123
      %p333 = pneg %p147
      %p334 = pneg %p144
      %p335 = pneg %p168
      %p336 = pneg %p165
      %p337 = pneg %p189
      %p338 = pneg %p186
      %p339 = pneg %p210
      %p340 = pneg %p207
      %p341 = pneg %p231
      %p342 = pneg %p228
      %p343 = pneg %p257
      %p344 = pneg %p254
      %p345 = scmp.lt.s32.totalorder %s21, 1
      %s346 = scalar_select %p345, %s21, 1
      %s347 = smul.addr %s346, 32
      %s348 = smul.addr %s347, 8
      %s349 = scalar_lea.vmem %s10, %s348
      %p350 = scmp.lt.s32.totalorder %s21, 1
      %s351 = scalar_select %p350, %s21, 1
      %s352 = smul.addr %s351, 32
      %s353 = smul.addr %s352, 8
      %s354 = scalar_lea.vmem %s0, %s353
      %p355 = scmp.lt.s32.totalorder %s21, 1
      %s356 = scalar_select %p355, %s21, 1
      %s357 = smul.addr %s356, 32
      %s358 = smul.addr %s357, 8
      %s359 = scalar_lea.vmem %s10, %s358
      %vm361 = vcmask 31744
      %362 = vst.msk [vmem:[#allocation2] sm:$0xff] %vm361, 0.0
      %363 = vst.msk [vmem:[#allocation2 + $0x8] sm:$0xff] %vm361, 0.0
      %364 = vst.msk [vmem:[#allocation2 + $0x10] sm:$0xff] %vm361, 0.0
      %365 = vst.msk [vmem:[#allocation2 + $0x18] sm:$0xff] %vm361, 0.0
      %366 = vst.msk [vmem:[#allocation2 + $0x20] sm:$0xff] %vm361, 0.0
      %367 = vst.msk [vmem:[#allocation2 + $0x28] sm:$0xff] %vm361, 0.0
      %368 = vst.msk [vmem:[#allocation2 + $0x30] sm:$0xff] %vm361, 0.0
      %369 = vst.msk [vmem:[#allocation2 + $0x38] sm:$0xff] %vm361, 0.0
      %370 = vst.msk [vmem:[#allocation2 + $0x40] sm:$0xff] %vm361, 0.0
      %371 = vst.msk [vmem:[#allocation2 + $0x48] sm:$0xff] %vm361, 0.0
      %372 = vst.msk [vmem:[#allocation2 + $0x50] sm:$0xff] %vm361, 0.0
      %373 = vst.msk [vmem:[#allocation2 + $0x58] sm:$0xff] %vm361, 0.0
      %374 = vst.msk [vmem:[#allocation2 + $0x60] sm:$0xff] %vm361, 0.0
      %375 = vst.msk [vmem:[#allocation2 + $0x68] sm:$0xff] %vm361, 0.0
      %376 = vst.msk [vmem:[#allocation2 + $0x70] sm:$0xff] %vm361, 0.0
      %377 = vst.msk [vmem:[#allocation2 + $0x78] sm:$0xff] %vm361, 0.0
      %378 = vst.msk [vmem:[#allocation2 + $0x80] sm:$0xff] %vm361, 0.0
      %379 = vst.msk [vmem:[#allocation2 + $0x88] sm:$0xff] %vm361, 0.0
      %380 = vst.msk [vmem:[#allocation2 + $0x90] sm:$0xff] %vm361, 0.0
      %381 = vst.msk [vmem:[#allocation2 + $0x98] sm:$0xff] %vm361, 0.0
      %382 = vst.msk [vmem:[#allocation2 + $0xa0] sm:$0xff] %vm361, 0.0
      %383 = vst.msk [vmem:[#allocation2 + $0xa8] sm:$0xff] %vm361, 0.0
      %384 = vst.msk [vmem:[#allocation2 + $0xb0] sm:$0xff] %vm361, 0.0
      %385 = vst.msk [vmem:[#allocation2 + $0xb8] sm:$0xff] %vm361, 0.0
      %386 = vst.msk [vmem:[#allocation2 + $0xc0] sm:$0xff] %vm361, 0.0
      %387 = vst.msk [vmem:[#allocation2 + $0xc8] sm:$0xff] %vm361, 0.0
      %388 = vst.msk [vmem:[#allocation2 + $0xd0] sm:$0xff] %vm361, 0.0
      %389 = vst.msk [vmem:[#allocation2 + $0xd8] sm:$0xff] %vm361, 0.0
      %390 = vst.msk [vmem:[#allocation2 + $0xe0] sm:$0xff] %vm361, 0.0
      %391 = vst.msk [vmem:[#allocation2 + $0xe8] sm:$0xff] %vm361, 0.0
      %392 = vst.msk [vmem:[#allocation2 + $0xf0] sm:$0xff] %vm361, 0.0
      %393 = vst.msk [vmem:[#allocation2 + $0xf8] sm:$0xff] %vm361, 0.0
      %394 = vst.msk [vmem:[#allocation2 + $0x100] sm:$0xff] %vm361, 0.0
      %395 = vst.msk [vmem:[#allocation2 + $0x108] sm:$0xff] %vm361, 0.0
      %396 = vst.msk [vmem:[#allocation2 + $0x110] sm:$0xff] %vm361, 0.0
      %397 = vst.msk [vmem:[#allocation2 + $0x118] sm:$0xff] %vm361, 0.0
      %398 = vst.msk [vmem:[#allocation2 + $0x120] sm:$0xff] %vm361, 0.0
      %399 = vst.msk [vmem:[#allocation2 + $0x128] sm:$0xff] %vm361, 0.0
      %400 = vst.msk [vmem:[#allocation2 + $0x130] sm:$0xff] %vm361, 0.0
      %401 = vst.msk [vmem:[#allocation2 + $0x138] sm:$0xff] %vm361, 0.0
      %402 = vst.msk [vmem:[#allocation2 + $0x140] sm:$0xff] %vm361, 0.0
      %403 = vst.msk [vmem:[#allocation2 + $0x148] sm:$0xff] %vm361, 0.0
      %vm404 = vcmask 29696
      %405 = vst.msk [vmem:[#allocation2 + $0x150] sm:$0x3f] %vm404, 0.0
      %406 = vst.msk [vmem:[#allocation3] sm:$0xff] %vm361, 0.0
      %407 = vst.msk [vmem:[#allocation3 + $0x8] sm:$0xff] %vm361, 0.0
      %408 = vst.msk [vmem:[#allocation3 + $0x10] sm:$0xff] %vm361, 0.0
      %409 = vst.msk [vmem:[#allocation3 + $0x18] sm:$0xff] %vm361, 0.0
      %410 = vst.msk [vmem:[#allocation3 + $0x20] sm:$0xff] %vm361, 0.0
      %411 = vst.msk [vmem:[#allocation3 + $0x28] sm:$0xff] %vm361, 0.0
      %412 = vst.msk [vmem:[#allocation3 + $0x30] sm:$0xff] %vm361, 0.0
      %413 = vst.msk [vmem:[#allocation3 + $0x38] sm:$0xff] %vm361, 0.0
      %414 = vst.msk [vmem:[#allocation3 + $0x40] sm:$0xff] %vm361, 0.0
      %415 = vst.msk [vmem:[#allocation3 + $0x48] sm:$0xff] %vm361, 0.0
      %416 = vst.msk [vmem:[#allocation3 + $0x50] sm:$0xff] %vm361, 0.0
      %417 = vst.msk [vmem:[#allocation3 + $0x58] sm:$0xff] %vm361, 0.0
      %418 = vst.msk [vmem:[#allocation3 + $0x60] sm:$0xff] %vm361, 0.0
      %419 = vst.msk [vmem:[#allocation3 + $0x68] sm:$0xff] %vm361, 0.0
      %420 = vst.msk [vmem:[#allocation3 + $0x70] sm:$0xff] %vm361, 0.0
      %421 = vst.msk [vmem:[#allocation3 + $0x78] sm:$0xff] %vm361, 0.0
      %422 = vst.msk [vmem:[#allocation3 + $0x80] sm:$0xff] %vm361, 0.0
      %423 = vst.msk [vmem:[#allocation3 + $0x88] sm:$0xff] %vm361, 0.0
      %424 = vst.msk [vmem:[#allocation3 + $0x90] sm:$0xff] %vm361, 0.0
      %425 = vst.msk [vmem:[#allocation3 + $0x98] sm:$0xff] %vm361, 0.0
      %426 = vst.msk [vmem:[#allocation3 + $0xa0] sm:$0xff] %vm361, 0.0
      %427 = vst.msk [vmem:[#allocation3 + $0xa8] sm:$0xff] %vm361, 0.0
      %428 = vst.msk [vmem:[#allocation3 + $0xb0] sm:$0xff] %vm361, 0.0
      %429 = vst.msk [vmem:[#allocation3 + $0xb8] sm:$0xff] %vm361, 0.0
      %430 = vst.msk [vmem:[#allocation3 + $0xc0] sm:$0xff] %vm361, 0.0
      %431 = vst.msk [vmem:[#allocation3 + $0xc8] sm:$0xff] %vm361, 0.0
      %432 = vst.msk [vmem:[#allocation3 + $0xd0] sm:$0xff] %vm361, 0.0
      %433 = vst.msk [vmem:[#allocation3 + $0xd8] sm:$0xff] %vm361, 0.0
      %434 = vst.msk [vmem:[#allocation3 + $0xe0] sm:$0xff] %vm361, 0.0
      %435 = vst.msk [vmem:[#allocation3 + $0xe8] sm:$0xff] %vm361, 0.0
      %436 = vst.msk [vmem:[#allocation3 + $0xf0] sm:$0xff] %vm361, 0.0
      %437 = vst.msk [vmem:[#allocation3 + $0xf8] sm:$0xff] %vm361, 0.0
      %438 = vst.msk [vmem:[#allocation3 + $0x100] sm:$0xff] %vm361, 0.0
      %439 = vst.msk [vmem:[#allocation3 + $0x108] sm:$0xff] %vm361, 0.0
      %440 = vst.msk [vmem:[#allocation3 + $0x110] sm:$0xff] %vm361, 0.0
      %441 = vst.msk [vmem:[#allocation3 + $0x118] sm:$0xff] %vm361, 0.0
      %442 = vst.msk [vmem:[#allocation3 + $0x120] sm:$0xff] %vm361, 0.0
      %443 = vst.msk [vmem:[#allocation3 + $0x128] sm:$0xff] %vm361, 0.0
      %444 = vst.msk [vmem:[#allocation3 + $0x130] sm:$0xff] %vm361, 0.0
      %445 = vst.msk [vmem:[#allocation3 + $0x138] sm:$0xff] %vm361, 0.0
      %446 = vst.msk [vmem:[#allocation3 + $0x140] sm:$0xff] %vm361, 0.0
      %447 = vst.msk [vmem:[#allocation3 + $0x148] sm:$0xff] %vm361, 0.0
      %448 = vst.msk [vmem:[#allocation3 + $0x150] sm:$0x3f] %vm404, 0.0
      %v449 = vld [vmem:[%s354] sm:$0xff]
      %v450 = vld [vmem:[%s354 + $0x8] sm:$0xff]
      %451 = vst.msk [vmem:[#allocation2 + $0x13] sm:$0xff] %vm361, %v449
      %452 = vst.msk [vmem:[#allocation2 + $0x1b] sm:$0xff] %vm361, %v450
      %s453 = scalar_lea.vmem %s354, 16
      %v454 = vld [vmem:[%s453] sm:$0xff]
      %v455 = vld [vmem:[%s453 + $0x8] sm:$0xff]
      %456 = vst.msk [vmem:[#allocation2 + $0x25] sm:$0xff] %vm361, %v454
      %457 = vst.msk [vmem:[#allocation2 + $0x2d] sm:$0xff] %vm361, %v455
      %s458 = scalar_lea.vmem %s354, 32
      %v459 = vld [vmem:[%s458] sm:$0xff]
      %v460 = vld [vmem:[%s458 + $0x8] sm:$0xff]
      %461 = vst.msk [vmem:[#allocation2 + $0x37] sm:$0xff] %vm361, %v459
      %462 = vst.msk [vmem:[#allocation2 + $0x3f] sm:$0xff] %vm361, %v460
      %s463 = scalar_lea.vmem %s354, 48
      %v464 = vld [vmem:[%s463] sm:$0xff]
      %v465 = vld [vmem:[%s463 + $0x8] sm:$0xff]
      %466 = vst.msk [vmem:[#allocation2 + $0x49] sm:$0xff] %vm361, %v464
      %467 = vst.msk [vmem:[#allocation2 + $0x51] sm:$0xff] %vm361, %v465
      %s468 = scalar_lea.vmem %s354, 64
      %v469 = vld [vmem:[%s468] sm:$0xff]
      %v470 = vld [vmem:[%s468 + $0x8] sm:$0xff]
      %471 = vst.msk [vmem:[#allocation2 + $0x5b] sm:$0xff] %vm361, %v469
      %472 = vst.msk [vmem:[#allocation2 + $0x63] sm:$0xff] %vm361, %v470
      %s473 = scalar_lea.vmem %s354, 80
      %v474 = vld [vmem:[%s473] sm:$0xff]
      %v475 = vld [vmem:[%s473 + $0x8] sm:$0xff]
      %476 = vst.msk [vmem:[#allocation2 + $0x6d] sm:$0xff] %vm361, %v474
      %477 = vst.msk [vmem:[#allocation2 + $0x75] sm:$0xff] %vm361, %v475
      %s478 = scalar_lea.vmem %s354, 96
      %v479 = vld [vmem:[%s478] sm:$0xff]
      %v480 = vld [vmem:[%s478 + $0x8] sm:$0xff]
      %481 = vst.msk [vmem:[#allocation2 + $0x7f] sm:$0xff] %vm361, %v479
      %482 = vst.msk [vmem:[#allocation2 + $0x87] sm:$0xff] %vm361, %v480
      %s483 = scalar_lea.vmem %s354, 112
      %v484 = vld [vmem:[%s483] sm:$0xff]
      %v485 = vld [vmem:[%s483 + $0x8] sm:$0xff]
      %486 = vst.msk [vmem:[#allocation2 + $0x91] sm:$0xff] %vm361, %v484
      %487 = vst.msk [vmem:[#allocation2 + $0x99] sm:$0xff] %vm361, %v485
      %s488 = scalar_lea.vmem %s354, 128
      %v489 = vld [vmem:[%s488] sm:$0xff]
      %v490 = vld [vmem:[%s488 + $0x8] sm:$0xff]
      %491 = vst.msk [vmem:[#allocation2 + $0xa3] sm:$0xff] %vm361, %v489
      %492 = vst.msk [vmem:[#allocation2 + $0xab] sm:$0xff] %vm361, %v490
      %s493 = scalar_lea.vmem %s354, 144
      %v494 = vld [vmem:[%s493] sm:$0xff]
      %v495 = vld [vmem:[%s493 + $0x8] sm:$0xff]
      %496 = vst.msk [vmem:[#allocation2 + $0xb5] sm:$0xff] %vm361, %v494
      %497 = vst.msk [vmem:[#allocation2 + $0xbd] sm:$0xff] %vm361, %v495
      %s498 = scalar_lea.vmem %s354, 160
      %v499 = vld [vmem:[%s498] sm:$0xff]
      %v500 = vld [vmem:[%s498 + $0x8] sm:$0xff]
      %501 = vst.msk [vmem:[#allocation2 + $0xc7] sm:$0xff] %vm361, %v499
      %502 = vst.msk [vmem:[#allocation2 + $0xcf] sm:$0xff] %vm361, %v500
      %s503 = scalar_lea.vmem %s354, 176
      %v504 = vld [vmem:[%s503] sm:$0xff]
      %v505 = vld [vmem:[%s503 + $0x8] sm:$0xff]
      %506 = vst.msk [vmem:[#allocation2 + $0xd9] sm:$0xff] %vm361, %v504
      %507 = vst.msk [vmem:[#allocation2 + $0xe1] sm:$0xff] %vm361, %v505
      %s508 = scalar_lea.vmem %s354, 192
      %v509 = vld [vmem:[%s508] sm:$0xff]
      %v510 = vld [vmem:[%s508 + $0x8] sm:$0xff]
      %511 = vst.msk [vmem:[#allocation2 + $0xeb] sm:$0xff] %vm361, %v509
      %512 = vst.msk [vmem:[#allocation2 + $0xf3] sm:$0xff] %vm361, %v510
      %s513 = scalar_lea.vmem %s354, 208
      %v514 = vld [vmem:[%s513] sm:$0xff]
      %v515 = vld [vmem:[%s513 + $0x8] sm:$0xff]
      %516 = vst.msk [vmem:[#allocation2 + $0xfd] sm:$0xff] %vm361, %v514
      %517 = vst.msk [vmem:[#allocation2 + $0x105] sm:$0xff] %vm361, %v515
      %s518 = scalar_lea.vmem %s354, 224
      %v519 = vld [vmem:[%s518] sm:$0xff]
      %v520 = vld [vmem:[%s518 + $0x8] sm:$0xff]
      %521 = vst.msk [vmem:[#allocation2 + $0x10f] sm:$0xff] %vm361, %v519
      %522 = vst.msk [vmem:[#allocation2 + $0x117] sm:$0xff] %vm361, %v520
      %s523 = scalar_lea.vmem %s354, 240
      %v524 = vld [vmem:[%s523] sm:$0xff]
      %v525 = vld [vmem:[%s523 + $0x8] sm:$0xff]
      %526 = vst.msk [vmem:[#allocation2 + $0x121] sm:$0xff] %vm361, %v524
      %527 = vst.msk [vmem:[#allocation2 + $0x129] sm:$0xff] %vm361, %v525
      %528 = vst.msk [vmem:[#allocation4] sm:$0xff] %vm361, 0.0
      %529 = vst.msk [vmem:[#allocation4 + $0x8] sm:$0xff] %vm361, 0.0
      %530 = vst.msk [vmem:[#allocation4 + $0x10] sm:$0xff] %vm361, 0.0
      %531 = vst.msk [vmem:[#allocation4 + $0x18] sm:$0xff] %vm361, 0.0
      %532 = vst.msk [vmem:[#allocation4 + $0x20] sm:$0xff] %vm361, 0.0
      %533 = vst.msk [vmem:[#allocation4 + $0x28] sm:$0xff] %vm361, 0.0
      %534 = vst.msk [vmem:[#allocation4 + $0x30] sm:$0xff] %vm361, 0.0
      %535 = vst.msk [vmem:[#allocation4 + $0x38] sm:$0xff] %vm361, 0.0
      %536 = vst.msk [vmem:[#allocation4 + $0x40] sm:$0xff] %vm361, 0.0
      %537 = vst.msk [vmem:[#allocation4 + $0x48] sm:$0xff] %vm361, 0.0
      %538 = vst.msk [vmem:[#allocation4 + $0x50] sm:$0xff] %vm361, 0.0
      %539 = vst.msk [vmem:[#allocation4 + $0x58] sm:$0xff] %vm361, 0.0
      %540 = vst.msk [vmem:[#allocation4 + $0x60] sm:$0xff] %vm361, 0.0
      %541 = vst.msk [vmem:[#allocation4 + $0x68] sm:$0xff] %vm361, 0.0
      %542 = vst.msk [vmem:[#allocation4 + $0x70] sm:$0xff] %vm361, 0.0
      %543 = vst.msk [vmem:[#allocation4 + $0x78] sm:$0xff] %vm361, 0.0
      %544 = vst.msk [vmem:[#allocation4 + $0x80] sm:$0xff] %vm361, 0.0
      %545 = vst.msk [vmem:[#allocation4 + $0x88] sm:$0xff] %vm361, 0.0
      %546 = vst.msk [vmem:[#allocation4 + $0x90] sm:$0xff] %vm361, 0.0
      %547 = vst.msk [vmem:[#allocation4 + $0x98] sm:$0xff] %vm361, 0.0
      %548 = vst.msk [vmem:[#allocation4 + $0xa0] sm:$0xff] %vm361, 0.0
      %549 = vst.msk [vmem:[#allocation4 + $0xa8] sm:$0xff] %vm361, 0.0
      %550 = vst.msk [vmem:[#allocation4 + $0xb0] sm:$0xff] %vm361, 0.0
      %551 = vst.msk [vmem:[#allocation4 + $0xb8] sm:$0xff] %vm361, 0.0
      %552 = vst.msk [vmem:[#allocation4 + $0xc0] sm:$0xff] %vm361, 0.0
      %553 = vst.msk [vmem:[#allocation4 + $0xc8] sm:$0xff] %vm361, 0.0
      %554 = vst.msk [vmem:[#allocation4 + $0xd0] sm:$0xff] %vm361, 0.0
      %555 = vst.msk [vmem:[#allocation4 + $0xd8] sm:$0xff] %vm361, 0.0
      %556 = vst.msk [vmem:[#allocation4 + $0xe0] sm:$0xff] %vm361, 0.0
      %557 = vst.msk [vmem:[#allocation4 + $0xe8] sm:$0xff] %vm361, 0.0
      %558 = vst.msk [vmem:[#allocation4 + $0xf0] sm:$0xff] %vm361, 0.0
      %559 = vst.msk [vmem:[#allocation4 + $0xf8] sm:$0xff] %vm361, 0.0
      %560 = vst.msk [vmem:[#allocation4 + $0x100] sm:$0xff] %vm361, 0.0
      %561 = vst.msk [vmem:[#allocation4 + $0x108] sm:$0xff] %vm361, 0.0
      %562 = vst.msk [vmem:[#allocation4 + $0x110] sm:$0xff] %vm361, 0.0
      %563 = vst.msk [vmem:[#allocation4 + $0x118] sm:$0xff] %vm361, 0.0
      %v564 = vld [vmem:[#allocation2] sm:$0xff]
      %v565 = vld [vmem:[#allocation2 + $0x8] sm:$0xff]
      %v566 = vld [vmem:[#allocation2 + $0x10] sm:$0xff]
      %v567 = vld [vmem:[#allocation2 + $0x18] sm:$0xff]
      %v568 = vld [vmem:[#allocation2 + $0x20] sm:$0xff]
      %v569 = vld [vmem:[#allocation2 + $0x28] sm:$0xff]
      %v570 = vld [vmem:[#allocation2 + $0x30] sm:$0xff]
      %v571 = vld [vmem:[#allocation2 + $0x38] sm:$0xff]
      %v572 = vld [vmem:[#allocation2 + $0x40] sm:$0xff]
      %v573 = vld [vmem:[#allocation2 + $0x48] sm:$0xff]
      %v574 = vld [vmem:[#allocation2 + $0x50] sm:$0xff]
      %v575 = vld [vmem:[#allocation2 + $0x58] sm:$0xff]
      %v576 = vld [vmem:[#allocation2 + $0x60] sm:$0xff]
      %v577 = vld [vmem:[#allocation2 + $0x68] sm:$0xff]
      %v578 = vld [vmem:[#allocation2 + $0x70] sm:$0xff]
      %v579 = vld [vmem:[#allocation2 + $0x78] sm:$0xff]
      %v580 = vld [vmem:[#allocation2 + $0x80] sm:$0xff]
      %v581 = vld [vmem:[#allocation2 + $0x88] sm:$0xff]
      %v582 = vld [vmem:[#allocation2 + $0x90] sm:$0xff]
      %v583 = vld [vmem:[#allocation2 + $0x98] sm:$0xff]
      %v584 = vld [vmem:[#allocation2 + $0xa0] sm:$0xff]
      %v585 = vld [vmem:[#allocation2 + $0xa8] sm:$0xff]
      %v586 = vld [vmem:[#allocation2 + $0xb0] sm:$0xff]
      %v587 = vld [vmem:[#allocation2 + $0xb8] sm:$0xff]
      %v588 = vld [vmem:[#allocation2 + $0xc0] sm:$0xff]
      %v589 = vld [vmem:[#allocation2 + $0xc8] sm:$0xff]
      %v590 = vld [vmem:[#allocation2 + $0xd0] sm:$0xff]
      %v591 = vld [vmem:[#allocation2 + $0xd8] sm:$0xff]
      %v592 = vld [vmem:[#allocation2 + $0xe0] sm:$0xff]
      %v593 = vld [vmem:[#allocation2 + $0xe8] sm:$0xff]
      %v594 = vld [vmem:[#allocation2 + $0xf0] sm:$0xff]
      %v595 = vld [vmem:[#allocation2 + $0xf8] sm:$0xff]
      %v596 = vld [vmem:[#allocation2 + $0x100] sm:$0xff]
      %v597 = vld [vmem:[#allocation2 + $0x108] sm:$0xff]
      %v598 = vld [vmem:[#allocation2 + $0x110] sm:$0xff]
      %v599 = vld [vmem:[#allocation2 + $0x118] sm:$0xff]
      %v600 = vpack.c.bf16 %v565, %v564
      %v601 = vpack.c.bf16 %v567, %v566
      %v602 = vpack.c.bf16 %v569, %v568
      %v603 = vpack.c.bf16 %v571, %v570
      %v604 = vpack.c.bf16 %v573, %v572
      %v605 = vpack.c.bf16 %v575, %v574
      %v606 = vpack.c.bf16 %v577, %v576
      %v607 = vpack.c.bf16 %v579, %v578
      %v608 = vpack.c.bf16 %v581, %v580
      %v609 = vpack.c.bf16 %v583, %v582
      %v610 = vpack.c.bf16 %v585, %v584
      %v611 = vpack.c.bf16 %v587, %v586
      %v612 = vpack.c.bf16 %v589, %v588
      %v613 = vpack.c.bf16 %v591, %v590
      %v614 = vpack.c.bf16 %v593, %v592
      %v615 = vpack.c.bf16 %v595, %v594
      %v616 = vpack.c.bf16 %v597, %v596
      %v617 = vpack.c.bf16 %v599, %v598
      %v618 = vld [vmem:[#allocation4] sm:$0xff]
      %v619 = vld [vmem:[#allocation4 + $0x8] sm:$0xff]
      %v620 = vld [vmem:[#allocation4 + $0x10] sm:$0xff]
      %v621 = vld [vmem:[#allocation4 + $0x18] sm:$0xff]
      %v622 = vld [vmem:[#allocation4 + $0x20] sm:$0xff]
      %v623 = vld [vmem:[#allocation4 + $0x28] sm:$0xff]
      %v624 = vld [vmem:[#allocation4 + $0x30] sm:$0xff]
      %v625 = vld [vmem:[#allocation4 + $0x38] sm:$0xff]
      %v626 = vld [vmem:[#allocation4 + $0x40] sm:$0xff]
      %v627 = vld [vmem:[#allocation4 + $0x48] sm:$0xff]
      %v628 = vld [vmem:[#allocation4 + $0x50] sm:$0xff]
      %v629 = vld [vmem:[#allocation4 + $0x58] sm:$0xff]
      %v630 = vld [vmem:[#allocation4 + $0x60] sm:$0xff]
      %v631 = vld [vmem:[#allocation4 + $0x68] sm:$0xff]
      %v632 = vld [vmem:[#allocation4 + $0x70] sm:$0xff]
      %v633 = vld [vmem:[#allocation4 + $0x78] sm:$0xff]
      %v634 = vld [vmem:[#allocation4 + $0x80] sm:$0xff]
      %v635 = vld [vmem:[#allocation4 + $0x88] sm:$0xff]
      %v636 = vld [vmem:[#allocation4 + $0x90] sm:$0xff]
      %v637 = vld [vmem:[#allocation4 + $0x98] sm:$0xff]
      %v638 = vld [vmem:[#allocation4 + $0xa0] sm:$0xff]
      %v639 = vld [vmem:[#allocation4 + $0xa8] sm:$0xff]
      %v640 = vld [vmem:[#allocation4 + $0xb0] sm:$0xff]
      %v641 = vld [vmem:[#allocation4 + $0xb8] sm:$0xff]
      %v642 = vld [vmem:[#allocation4 + $0xc0] sm:$0xff]
      %v643 = vld [vmem:[#allocation4 + $0xc8] sm:$0xff]
      %v644 = vld [vmem:[#allocation4 + $0xd0] sm:$0xff]
      %v645 = vld [vmem:[#allocation4 + $0xd8] sm:$0xff]
      %v646 = vld [vmem:[#allocation4 + $0xe0] sm:$0xff]
      %v647 = vld [vmem:[#allocation4 + $0xe8] sm:$0xff]
      %v648 = vld [vmem:[#allocation4 + $0xf0] sm:$0xff]
      %v649 = vld [vmem:[#allocation4 + $0xf8] sm:$0xff]
      %v650 = vld [vmem:[#allocation4 + $0x100] sm:$0xff]
      %v651 = vld [vmem:[#allocation4 + $0x108] sm:$0xff]
      %v652 = vld [vmem:[#allocation4 + $0x110] sm:$0xff]
      %v653 = vld [vmem:[#allocation4 + $0x118] sm:$0xff]
      %v654 = vld [vmem:[%s2] sm:$0x3]
      %v656 = vsel %vm361, %v600, 0
      %v659 = vsel %vm361, %v601, 0
      %v662 = vsel %vm361, %v602, 0
      %v665 = vsel %vm361, %v603, 0
      %v668 = vsel %vm361, %v604, 0
      %v671 = vsel %vm361, %v605, 0
      %v674 = vsel %vm361, %v606, 0
      %v677 = vsel %vm361, %v607, 0
      %v680 = vsel %vm361, %v608, 0
      %v683 = vsel %vm361, %v609, 0
      %v686 = vsel %vm361, %v610, 0
      %v689 = vsel %vm361, %v611, 0
      %v692 = vsel %vm361, %v612, 0
      %v695 = vsel %vm361, %v613, 0
      %v698 = vsel %vm361, %v614, 0
      %v701 = vsel %vm361, %v615, 0
      %v704 = vsel %vm361, %v616, 0
      %v707 = vsel %vm361, %v617, 0
      %vm709 = vcmask 1041408
      %v711 = vsel %vm709, %v654, 0
      %713 = vmatprep.subr.bf16.mxu0 0
      %714 = vmatpush1.bf16.msra.mxu0 %v711
      %715 = vmatprep.subr.bf16.mxu0 0
      %716 = vmatpush1.bf16.msra.mxu0 0
      %717 = vmatprep.subr.bf16.mxu0 0
      %718 = vmatpush1.bf16.msra.mxu0 0
      %719 = vmatprep.subr.bf16.mxu0 0
      %720 = vmatpush1.bf16.msra.mxu0 0
      %721 = vmatprep.subr.bf16.mxu0 0
      %722 = vmatpush1.bf16.msra.mxu0 0
      %723 = vmatprep.subr.bf16.mxu0 0
      %724 = vmatpush1.bf16.msra.mxu0 0
      %725 = vmatprep.subr.bf16.mxu0 0
      %726 = vmatpush1.bf16.msra.mxu0 0
      %727 = vmatprep.subr.bf16.mxu0 0
      %728 = vmatpush1.bf16.msra.mxu0 0
      %729 = vmatprep.subr.bf16.mxu0 0
      %730 = vmatpush1.bf16.msra.mxu0 0
      %731 = vmatprep.subr.bf16.mxu0 0
      %732 = vmatpush1.bf16.msra.mxu0 0
      %733 = vmatprep.subr.bf16.mxu0 0
      %734 = vmatpush1.bf16.msra.mxu0 0
      %735 = vmatprep.subr.bf16.mxu0 0
      %736 = vmatpush1.bf16.msra.mxu0 0
      %737 = vmatprep.subr.bf16.mxu0 0
      %738 = vmatpush1.bf16.msra.mxu0 0
      %739 = vmatprep.subr.bf16.mxu0 0
      %740 = vmatpush1.bf16.msra.mxu0 0
      %741 = vmatprep.subr.bf16.mxu0 0
      %742 = vmatpush1.bf16.msra.mxu0 0
      %743 = vmatprep.subr.bf16.mxu0 0
      %744 = vmatpush1.bf16.msra.mxu0 0
      %745 = vmatprep.mubr.bf16.mxu0 0
      %746 = vmatmul.mubr.bf16.gmra.mrb[0].mxu0 %v656
      %v747 = vpop.f32.mrb[0].mxu0
      %v748 = vadd.f32 0.0, %v747
      %v749 = vpop.f32.mrb[0].mxu0
      %v750 = vpop.f32.mrb[0].mxu0
      %v751 = vadd.f32 0.0, %v750
      %v752 = vpop.f32.mrb[0].mxu0
      %753 = vmatprep.mubr.bf16.mxu0 0
      %754 = vmatmul.mubr.bf16.gmra.mrb[0].mxu0 %v659
      %v755 = vpop.f32.mrb[0].mxu0
      %v756 = vadd.f32 0.0, %v755
      %v757 = vpop.f32.mrb[0].mxu0
      %v758 = vpop.f32.mrb[0].mxu0
      %v759 = vadd.f32 0.0, %v758
      %v760 = vpop.f32.mrb[0].mxu0
      %761 = vmatprep.mubr.bf16.mxu0 0
      %762 = vmatmul.mubr.bf16.gmra.mrb[0].mxu0 %v662
      %v763 = vpop.f32.mrb[0].mxu0
      %v764 = vadd.f32 0.0, %v763
      %v765 = vpop.f32.mrb[0].mxu0
      %v766 = vpop.f32.mrb[0].mxu0
      %v767 = vadd.f32 0.0, %v766
      %v768 = vpop.f32.mrb[0].mxu0
      %769 = vmatprep.mubr.bf16.mxu0 0
      %770 = vmatmul.mubr.bf16.gmra.mrb[0].mxu0 %v665
      %v771 = vpop.f32.mrb[0].mxu0
      %v772 = vadd.f32 0.0, %v771
      %v773 = vpop.f32.mrb[0].mxu0
      %v774 = vpop.f32.mrb[0].mxu0
      %v775 = vadd.f32 0.0, %v774
      %v776 = vpop.f32.mrb[0].mxu0
      %777 = vmatprep.mubr.bf16.mxu0 0
      %778 = vmatmul.mubr.bf16.gmra.mrb[0].mxu0 %v668
      %v779 = vpop.f32.mrb[0].mxu0
      %v780 = vadd.f32 0.0, %v779
      %v781 = vpop.f32.mrb[0].mxu0
      %v782 = vpop.f32.mrb[0].mxu0
      %v783 = vadd.f32 0.0, %v782
      %v784 = vpop.f32.mrb[0].mxu0
      %785 = vmatprep.mubr.bf16.mxu0 0
      %786 = vmatmul.mubr.bf16.gmra.mrb[0].mxu0 %v671
      %v787 = vpop.f32.mrb[0].mxu0
      %v788 = vadd.f32 0.0, %v787
      %v789 = vpop.f32.mrb[0].mxu0
      %v790 = vpop.f32.mrb[0].mxu0
      %v791 = vadd.f32 0.0, %v790
      %v792 = vpop.f32.mrb[0].mxu0
      %793 = vmatprep.mubr.bf16.mxu0 0
      %794 = vmatmul.mubr.bf16.gmra.mrb[0].mxu0 %v674
      %v795 = vpop.f32.mrb[0].mxu0
      %v796 = vadd.f32 0.0, %v795
      %v797 = vpop.f32.mrb[0].mxu0
      %v798 = vpop.f32.mrb[0].mxu0
      %v799 = vadd.f32 0.0, %v798
      %v800 = vpop.f32.mrb[0].mxu0
      %801 = vmatprep.mubr.bf16.mxu0 0
      %802 = vmatmul.mubr.bf16.gmra.mrb[0].mxu0 %v677
      %v803 = vpop.f32.mrb[0].mxu0
      %v804 = vadd.f32 0.0, %v803
      %v805 = vpop.f32.mrb[0].mxu0
      %v806 = vpop.f32.mrb[0].mxu0
      %v807 = vadd.f32 0.0, %v806
      %v808 = vpop.f32.mrb[0].mxu0
      %809 = vmatprep.mubr.bf16.mxu0 0
      %810 = vmatmul.mubr.bf16.gmra.mrb[0].mxu0 %v680
      %v811 = vpop.f32.mrb[0].mxu0
      %v812 = vadd.f32 0.0, %v811
      %v813 = vpop.f32.mrb[0].mxu0
      %v814 = vpop.f32.mrb[0].mxu0
      %v815 = vadd.f32 0.0, %v814
      %v816 = vpop.f32.mrb[0].mxu0
      %817 = vmatprep.mubr.bf16.mxu0 0
      %818 = vmatmul.mubr.bf16.gmra.mrb[0].mxu0 %v683
      %v819 = vpop.f32.mrb[0].mxu0
      %v820 = vadd.f32 0.0, %v819
      %v821 = vpop.f32.mrb[0].mxu0
      %v822 = vpop.f32.mrb[0].mxu0
      %v823 = vadd.f32 0.0, %v822
      %v824 = vpop.f32.mrb[0].mxu0
      %825 = vmatprep.mubr.bf16.mxu0 0
      %826 = vmatmul.mubr.bf16.gmra.mrb[0].mxu0 %v686
      %v827 = vpop.f32.mrb[0].mxu0
      %v828 = vadd.f32 0.0, %v827
      %v829 = vpop.f32.mrb[0].mxu0
      %v830 = vpop.f32.mrb[0].mxu0
      %v831 = vadd.f32 0.0, %v830
      %v832 = vpop.f32.mrb[0].mxu0
      %833 = vmatprep.mubr.bf16.mxu0 0
      %834 = vmatmul.mubr.bf16.gmra.mrb[0].mxu0 %v689
      %v835 = vpop.f32.mrb[0].mxu0
      %v836 = vadd.f32 0.0, %v835
      %v837 = vpop.f32.mrb[0].mxu0
      %v838 = vpop.f32.mrb[0].mxu0
      %v839 = vadd.f32 0.0, %v838
      %v840 = vpop.f32.mrb[0].mxu0
      %841 = vmatprep.mubr.bf16.mxu0 0
      %842 = vmatmul.mubr.bf16.gmra.mrb[0].mxu0 %v692
      %v843 = vpop.f32.mrb[0].mxu0
      %v844 = vadd.f32 0.0, %v843
      %v845 = vpop.f32.mrb[0].mxu0
      %v846 = vpop.f32.mrb[0].mxu0
      %v847 = vadd.f32 0.0, %v846
      %v848 = vpop.f32.mrb[0].mxu0
      %849 = vmatprep.mubr.bf16.mxu0 0
      %850 = vmatmul.mubr.bf16.gmra.mrb[0].mxu0 %v695
      %v851 = vpop.f32.mrb[0].mxu0
      %v852 = vadd.f32 0.0, %v851
      %v853 = vpop.f32.mrb[0].mxu0
      %v854 = vpop.f32.mrb[0].mxu0
      %v855 = vadd.f32 0.0, %v854
      %v856 = vpop.f32.mrb[0].mxu0
      %857 = vmatprep.mubr.bf16.mxu0 0
      %858 = vmatmul.mubr.bf16.gmra.mrb[0].mxu0 %v698
      %v859 = vpop.f32.mrb[0].mxu0
      %v860 = vadd.f32 0.0, %v859
      %v861 = vpop.f32.mrb[0].mxu0
      %v862 = vpop.f32.mrb[0].mxu0
      %v863 = vadd.f32 0.0, %v862
      %v864 = vpop.f32.mrb[0].mxu0
      %865 = vmatprep.mubr.bf16.mxu0 0
      %866 = vmatmul.mubr.bf16.gmra.mrb[0].mxu0 %v701
      %v867 = vpop.f32.mrb[0].mxu0
      %v868 = vadd.f32 0.0, %v867
      %v869 = vpop.f32.mrb[0].mxu0
      %v870 = vpop.f32.mrb[0].mxu0
      %v871 = vadd.f32 0.0, %v870
      %v872 = vpop.f32.mrb[0].mxu0
      %873 = vmatprep.mubr.bf16.mxu0 0
      %874 = vmatmul.mubr.bf16.gmra.mrb[0].mxu0 %v704
      %v875 = vpop.f32.mrb[0].mxu0
      %v876 = vadd.f32 0.0, %v875
      %v877 = vpop.f32.mrb[0].mxu0
      %v878 = vpop.f32.mrb[0].mxu0
      %v879 = vadd.f32 0.0, %v878
      %v880 = vpop.f32.mrb[0].mxu0
      %881 = vmatprep.mubr.bf16.mxu0 0
      %882 = vmatmul.mubr.bf16.gmra.mrb[0].mxu0 %v707
      %v883 = vpop.f32.mrb[0].mxu0
      %v884 = vadd.f32 0.0, %v883
      %v885 = vpop.f32.mrb[0].mxu0
      %v886 = vpop.f32.mrb[0].mxu0
      %v887 = vadd.f32 0.0, %v886
      %v888 = vpop.f32.mrb[0].mxu0
      %889 = vdwg.mxu0
      %v890 = vadd.f32 %v618, %v748
      %v891 = vadd.f32 %v619, %v751
      %v892 = vadd.f32 %v620, %v756
      %v893 = vadd.f32 %v621, %v759
      %v894 = vadd.f32 %v622, %v764
      %v895 = vadd.f32 %v623, %v767
      %v896 = vadd.f32 %v624, %v772
      %v897 = vadd.f32 %v625, %v775
      %v898 = vadd.f32 %v626, %v780
      %v899 = vadd.f32 %v627, %v783
      %v900 = vadd.f32 %v628, %v788
      %v901 = vadd.f32 %v629, %v791
      %v902 = vadd.f32 %v630, %v796
      %v903 = vadd.f32 %v631, %v799
      %v904 = vadd.f32 %v632, %v804
      %v905 = vadd.f32 %v633, %v807
      %v906 = vadd.f32 %v634, %v812
      %v907 = vadd.f32 %v635, %v815
      %v908 = vadd.f32 %v636, %v820
      %v909 = vadd.f32 %v637, %v823
      %v910 = vadd.f32 %v638, %v828
      %v911 = vadd.f32 %v639, %v831
      %v912 = vadd.f32 %v640, %v836
      %v913 = vadd.f32 %v641, %v839
      %v914 = vadd.f32 %v642, %v844
      %v915 = vadd.f32 %v643, %v847
      %v916 = vadd.f32 %v644, %v852
      %v917 = vadd.f32 %v645, %v855
      %v918 = vadd.f32 %v646, %v860
      %v919 = vadd.f32 %v647, %v863
      %v920 = vadd.f32 %v648, %v868
      %v921 = vadd.f32 %v649, %v871
      %v922 = vadd.f32 %v650, %v876
      %v923 = vadd.f32 %v651, %v879
      %v924 = vadd.f32 %v652, %v884
      %v925 = vadd.f32 %v653, %v887
      %926 = vst.msk [vmem:[#allocation4] sm:$0xff] %vm361, %v890
      %927 = vst.msk [vmem:[#allocation4 + $0x8] sm:$0xff] %vm361, %v891
      %928 = vst.msk [vmem:[#allocation4 + $0x10] sm:$0xff] %vm361, %v892
      %929 = vst.msk [vmem:[#allocation4 + $0x18] sm:$0xff] %vm361, %v893
      %930 = vst.msk [vmem:[#allocation4 + $0x20] sm:$0xff] %vm361, %v894
      %931 = vst.msk [vmem:[#allocation4 + $0x28] sm:$0xff] %vm361, %v895
      %932 = vst.msk [vmem:[#allocation4 + $0x30] sm:$0xff] %vm361, %v896
      %933 = vst.msk [vmem:[#allocation4 + $0x38] sm:$0xff] %vm361, %v897
      %934 = vst.msk [vmem:[#allocation4 + $0x40] sm:$0xff] %vm361, %v898
      %935 = vst.msk [vmem:[#allocation4 + $0x48] sm:$0xff] %vm361, %v899
      %936 = vst.msk [vmem:[#allocation4 + $0x50] sm:$0xff] %vm361, %v900
      %937 = vst.msk [vmem:[#allocation4 + $0x58] sm:$0xff] %vm361, %v901
      %938 = vst.msk [vmem:[#allocation4 + $0x60] sm:$0xff] %vm361, %v902
      %939 = vst.msk [vmem:[#allocation4 + $0x68] sm:$0xff] %vm361, %v903
      %940 = vst.msk [vmem:[#allocation4 + $0x70] sm:$0xff] %vm361, %v904
      %941 = vst.msk [vmem:[#allocation4 + $0x78] sm:$0xff] %vm361, %v905
      %942 = vst.msk [vmem:[#allocation4 + $0x80] sm:$0xff] %vm361, %v906
      %943 = vst.msk [vmem:[#allocation4 + $0x88] sm:$0xff] %vm361, %v907
      %944 = vst.msk [vmem:[#allocation4 + $0x90] sm:$0xff] %vm361, %v908
      %945 = vst.msk [vmem:[#allocation4 + $0x98] sm:$0xff] %vm361, %v909
      %946 = vst.msk [vmem:[#allocation4 + $0xa0] sm:$0xff] %vm361, %v910
      %947 = vst.msk [vmem:[#allocation4 + $0xa8] sm:$0xff] %vm361, %v911
      %948 = vst.msk [vmem:[#allocation4 + $0xb0] sm:$0xff] %vm361, %v912
      %949 = vst.msk [vmem:[#allocation4 + $0xb8] sm:$0xff] %vm361, %v913
      %950 = vst.msk [vmem:[#allocation4 + $0xc0] sm:$0xff] %vm361, %v914
      %951 = vst.msk [vmem:[#allocation4 + $0xc8] sm:$0xff] %vm361, %v915
      %952 = vst.msk [vmem:[#allocation4 + $0xd0] sm:$0xff] %vm361, %v916
      %953 = vst.msk [vmem:[#allocation4 + $0xd8] sm:$0xff] %vm361, %v917
      %954 = vst.msk [vmem:[#allocation4 + $0xe0] sm:$0xff] %vm361, %v918
      %955 = vst.msk [vmem:[#allocation4 + $0xe8] sm:$0xff] %vm361, %v919
      %956 = vst.msk [vmem:[#allocation4 + $0xf0] sm:$0xff] %vm361, %v920
      %957 = vst.msk [vmem:[#allocation4 + $0xf8] sm:$0xff] %vm361, %v921
      %958 = vst.msk [vmem:[#allocation4 + $0x100] sm:$0xff] %vm361, %v922
      %959 = vst.msk [vmem:[#allocation4 + $0x108] sm:$0xff] %vm361, %v923
      %960 = vst.msk [vmem:[#allocation4 + $0x110] sm:$0xff] %vm361, %v924
      %961 = vst.msk [vmem:[#allocation4 + $0x118] sm:$0xff] %vm361, %v925
      %v962 = vld [vmem:[#allocation2 + $0x1] sm:$0xff]
      %v963 = vld [vmem:[#allocation2 + $0x9] sm:$0xff]
      %v964 = vld [vmem:[#allocation2 + $0x11] sm:$0xff]
      %v965 = vld [vmem:[#allocation2 + $0x19] sm:$0xff]
      %v966 = vld [vmem:[#allocation2 + $0x21] sm:$0xff]
      %v967 = vld [vmem:[#allocation2 + $0x29] sm:$0xff]
      %v968 = vld [vmem:[#allocation2 + $0x31] sm:$0xff]
      %v969 = vld [vmem:[#allocation2 + $0x39] sm:$0xff]
      %v970 = vld [vmem:[#allocation2 + $0x41] sm:$0xff]
      %v971 = vld [vmem:[#allocation2 + $0x49] sm:$0xff]
      %v972 = vld [vmem:[#allocation2 + $0x51] sm:$0xff]
      %v973 = vld [vmem:[#allocation2 + $0x59] sm:$0xff]
      %v974 = vld [vmem:[#allocation2 + $0x61] sm:$0xff]
      %v975 = vld [vmem:[#allocation2 + $0x69] sm:$0xff]
      %v976 = vld [vmem:[#allocation2 + $0x71] sm:$0xff]
      %v977 = vld [vmem:[#allocation2 + $0x79] sm:$0xff]
      %v978 = vld [vmem:[#allocation2 + $0x81] sm:$0xff]
      %v979 = vld [vmem:[#allocation2 + $0x89] sm:$0xff]
      %v980 = vld [vmem:[#allocation2 + $0x91] sm:$0xff]
      %v981 = vld [vmem:[#allocation2 + $0x99] sm:$0xff]
      %v982 = vld [vmem:[#allocation2 + $0xa1] sm:$0xff]
      %v983 = vld [vmem:[#allocation2 + $0xa9] sm:$0xff]
      %v984 = vld [vmem:[#allocation2 + $0xb1] sm:$0xff]
      %v985 = vld [vmem:[#allocation2 + $0xb9] sm:$0xff]
      %v986 = vld [vmem:[#allocation2 + $0xc1] sm:$0xff]
      %v987 = vld [vmem:[#allocation2 + $0xc9] sm:$0xff]
      %v988 = vld [vmem:[#allocation2 + $0xd1] sm:$0xff]
      %v989 = vld [vmem:[#allocation2 + $0xd9] sm:$0xff]
      %v990 = vld [vmem:[#allocation2 + $0xe1] sm:$0xff]
      %v991 = vld [vmem:[#allocation2 + $0xe9] sm:$0xff]
      %v992 = vld [vmem:[#allocation2 + $0xf1] sm:$0xff]
      %v993 = vld [vmem:[#allocation2 + $0xf9] sm:$0xff]
      %v994 = vld [vmem:[#allocation2 + $0x101] sm:$0xff]
      %v995 = vld [vmem:[#allocation2 + $0x109] sm:$0xff]
      %v996 = vld [vmem:[#allocation2 + $0x111] sm:$0xff]
      %v997 = vld [vmem:[#allocation2 + $0x119] sm:$0xff]
      %v998 = vpack.c.bf16 %v963, %v962
      %v999 = vpack.c.bf16 %v965, %v964
      %v1000 = vpack.c.bf16 %v967, %v966
      %v1001 = vpack.c.bf16 %v969, %v968
      %v1002 = vpack.c.bf16 %v971, %v970
      %v1003 = vpack.c.bf16 %v973, %v972
      %v1004 = vpack.c.bf16 %v975, %v974
      %v1005 = vpack.c.bf16 %v977, %v976
      %v1006 = vpack.c.bf16 %v979, %v978
      %v1007 = vpack.c.bf16 %v981, %v980
      %v1008 = vpack.c.bf16 %v983, %v982
      %v1009 = vpack.c.bf16 %v985, %v984
      %v1010 = vpack.c.bf16 %v987, %v986
      %v1011 = vpack.c.bf16 %v989, %v988
      %v1012 = vpack.c.bf16 %v991, %v990
      %v1013 = vpack.c.bf16 %v993, %v992
      %v1014 = vpack.c.bf16 %v995, %v994
      %v1015 = vpack.c.bf16 %v997, %v996
      %v1016 = vld [vmem:[#allocation4] sm:$0xff]
      %v1017 = vld [vmem:[#allocation4 + $0x8] sm:$0xff]
      %v1018 = vld [vmem:[#allocation4 + $0x10] sm:$0xff]
      %v1019 = vld [vmem:[#allocation4 + $0x18] sm:$0xff]
      %v1020 = vld [vmem:[#allocation4 + $0x20] sm:$0xff]
      %v1021 = vld [vmem:[#allocation4 + $0x28] sm:$0xff]
      %v1022 = vld [vmem:[#allocation4 + $0x30] sm:$0xff]
      %v1023 = vld [vmem:[#allocation4 + $0x38] sm:$0xff]
      %v1024 = vld [vmem:[#allocation4 + $0x40] sm:$0xff]
      %v1025 = vld [vmem:[#allocation4 + $0x48] sm:$0xff]
      %v1026 = vld [vmem:[#allocation4 + $0x50] sm:$0xff]
      %v1027 = vld [vmem:[#allocation4 + $0x58] sm:$0xff]
      %v1028 = vld [vmem:[#allocation4 + $0x60] sm:$0xff]
      %v1029 = vld [vmem:[#allocation4 + $0x68] sm:$0xff]
      %v1030 = vld [vmem:[#allocation4 + $0x70] sm:$0xff]
      %v1031 = vld [vmem:[#allocation4 + $0x78] sm:$0xff]
      %v1032 = vld [vmem:[#allocation4 + $0x80] sm:$0xff]
      %v1033 = vld [vmem:[#allocation4 + $0x88] sm:$0xff]
      %v1034 = vld [vmem:[#allocation4 + $0x90] sm:$0xff]
      %v1035 = vld [vmem:[#allocation4 + $0x98] sm:$0xff]
      %v1036 = vld [vmem:[#allocation4 + $0xa0] sm:$0xff]
      %v1037 = vld [vmem:[#allocation4 + $0xa8] sm:$0xff]
      %v1038 = vld [vmem:[#allocation4 + $0xb0] sm:$0xff]
      %v1039 = vld [vmem:[#allocation4 + $0xb8] sm:$0xff]
      %v1040 = vld [vmem:[#allocation4 + $0xc0] sm:$0xff]
      %v1041 = vld [vmem:[#allocation4 + $0xc8] sm:$0xff]
      %v1042 = vld [vmem:[#allocation4 + $0xd0] sm:$0xff]
      %v1043 = vld [vmem:[#allocation4 + $0xd8] sm:$0xff]
      %v1044 = vld [vmem:[#allocation4 + $0xe0] sm:$0xff]
      %v1045 = vld [vmem:[#allocation4 + $0xe8] sm:$0xff]
      %v1046 = vld [vmem:[#allocation4 + $0xf0] sm:$0xff]
      %v1047 = vld [vmem:[#allocation4 + $0xf8] sm:$0xff]
      %v1048 = vld [vmem:[#allocation4 + $0x100] sm:$0xff]
      %v1049 = vld [vmem:[#allocation4 + $0x108] sm:$0xff]
      %v1050 = vld [vmem:[#allocation4 + $0x110] sm:$0xff]
      %v1051 = vld [vmem:[#allocation4 + $0x118] sm:$0xff]
      %s1052 = scalar_lea.vmem %s2, 2
      %v1053 = vld [vmem:[%s1052] sm:$0x3]
      %v1055 = vsel %vm361, %v998, 0
      %v1058 = vsel %vm361, %v999, 0
      %v1061 = vsel %vm361, %v1000, 0
      %v1064 = vsel %vm361, %v1001, 0
      %v1067 = vsel %vm361, %v1002, 0
      %v1070 = vsel %vm361, %v1003, 0
      %v1073 = vsel %vm361, %v1004, 0
      %v1076 = vsel %vm361, %v1005, 0
      %v1079 = vsel %vm361, %v1006, 0
      %v1082 = vsel %vm361, %v1007, 0
      %v1085 = vsel %vm361, %v1008, 0
      %v1088 = vsel %vm361, %v1009, 0
      %v1091 = vsel %vm361, %v1010, 0
      %v1094 = vsel %vm361, %v1011, 0
      %v1097 = vsel %vm361, %v1012, 0
      %v1100 = vsel %vm361, %v1013, 0
      %v1103 = vsel %vm361, %v1014, 0
      %v1106 = vsel %vm361, %v1015, 0
      %v1109 = vsel %vm709, %v1053, 0
      %1111 = vmatprep.subr.bf16.mxu0 0
      %1112 = vmatpush1.bf16.msra.mxu0 %v1109
      %1113 = vmatprep.subr.bf16.mxu0 0
      %1114 = vmatpush1.bf16.msra.mxu0 0
      %1115 = vmatprep.subr.bf16.mxu0 0
      %1116 = vmatpush1.bf16.msra.mxu0 0
      %1117 = vmatprep.subr.bf16.mxu0 0
      %1118 = vmatpush1.bf16.msra.mxu0 0
      %1119 = vmatprep.subr.bf16.mxu0 0
      %1120 = vmatpush1.bf16.msra.mxu0 0
      %1121 = vmatprep.subr.bf16.mxu0 0
      %1122 = vmatpush1.bf16.msra.mxu0 0
      %1123 = vmatprep.subr.bf16.mxu0 0
      %1124 = vmatpush1.bf16.msra.mxu0 0
      %1125 = vmatprep.subr.bf16.mxu0 0
      %1126 = vmatpush1.bf16.msra.mxu0 0
      %1127 = vmatprep.subr.bf16.mxu0 0
      %1128 = vmatpush1.bf16.msra.mxu0 0
      %1129 = vmatprep.subr.bf16.mxu0 0
      %1130 = vmatpush1.bf16.msra.mxu0 0
      %1131 = vmatprep.subr.bf16.mxu0 0
      %1132 = vmatpush1.bf16.msra.mxu0 0
      %1133 = vmatprep.subr.bf16.mxu0 0
      %1134 = vmatpush1.bf16.msra.mxu0 0
      %1135 = vmatprep.subr.bf16.mxu0 0
      %1136 = vmatpush1.bf16.msra.mxu0 0
      %1137 = vmatprep.subr.bf16.mxu0 0
      %1138 = vmatpush1.bf16.msra.mxu0 0
      %1139 = vmatprep.subr.bf16.mxu0 0
      %1140 = vmatpush1.bf16.msra.mxu0 0
      %1141 = vmatprep.subr.bf16.mxu0 0
      %1142 = vmatpush1.bf16.msra.mxu0 0
      %1143 = vmatprep.mubr.bf16.mxu0 0
      %1144 = vmatmul.mubr.bf16.gmra.mrb[0].mxu0 %v1055
      %v1145 = vpop.f32.mrb[0].mxu0
      %v1146 = vadd.f32 0.0, %v1145
      %v1147 = vpop.f32.mrb[0].mxu0
      %v1148 = vpop.f32.mrb[0].mxu0
      %v1149 = vadd.f32 0.0, %v1148
      %v1150 = vpop.f32.mrb[0].mxu0
      %1151 = vmatprep.mubr.bf16.mxu0 0
      %1152 = vmatmul.mubr.bf16.gmra.mrb[0].mxu0 %v1058
      %v1153 = vpop.f32.mrb[0].mxu0
      %v1154 = vadd.f32 0.0, %v1153
      %v1155 = vpop.f32.mrb[0].mxu0
      %v1156 = vpop.f32.mrb[0].mxu0
      %v1157 = vadd.f32 0.0, %v1156
      %v1158 = vpop.f32.mrb[0].mxu0
      %1159 = vmatprep.mubr.bf16.mxu0 0
      %1160 = vmatmul.mubr.bf16.gmra.mrb[0].mxu0 %v1061
      %v1161 = vpop.f32.mrb[0].mxu0
      %v1162 = vadd.f32 0.0, %v1161
      %v1163 = vpop.f32.mrb[0].mxu0
      %v1164 = vpop.f32.mrb[0].mxu0
      %v1165 = vadd.f32 0.0, %v1164
      %v1166 = vpop.f32.mrb[0].mxu0
      %1167 = vmatprep.mubr.bf16.mxu0 0
      %1168 = vmatmul.mubr.bf16.gmra.mrb[0].mxu0 %v1064
      %v1169 = vpop.f32.mrb[0].mxu0
      %v1170 = vadd.f32 0.0, %v1169
      %v1171 = vpop.f32.mrb[0].mxu0
      %v1172 = vpop.f32.mrb[0].mxu0
      %v1173 = vadd.f32 0.0, %v1172
      %v1174 = vpop.f32.mrb[0].mxu0
      %1175 = vmatprep.mubr.bf16.mxu0 0
      %1176 = vmatmul.mubr.bf16.gmra.mrb[0].mxu0 %v1067
      %v1177 = vpop.f32.mrb[0].mxu0
      %v1178 = vadd.f32 0.0, %v1177
      %v1179 = vpop.f32.mrb[0].mxu0
      %v1180 = vpop.f32.mrb[0].mxu0
      %v1181 = vadd.f32 0.0, %v1180
      %v1182 = vpop.f32.mrb[0].mxu0
      %1183 = vmatprep.mubr.bf16.mxu0 0
      %1184 = vmatmul.mubr.bf16.gmra.mrb[0].mxu0 %v1070
      %v1185 = vpop.f32.mrb[0].mxu0
      %v1186 = vadd.f32 0.0, %v1185
      %v1187 = vpop.f32.mrb[0].mxu0
      %v1188 = vpop.f32.mrb[0].mxu0
      %v1189 = vadd.f32 0.0, %v1188
      %v1190 = vpop.f32.mrb[0].mxu0
      %1191 = vmatprep.mubr.bf16.mxu0 0
      %1192 = vmatmul.mubr.bf16.gmra.mrb[0].mxu0 %v1073
      %v1193 = vpop.f32.mrb[0].mxu0
      %v1194 = vadd.f32 0.0, %v1193
      %v1195 = vpop.f32.mrb[0].mxu0
      %v1196 = vpop.f32.mrb[0].mxu0
      %v1197 = vadd.f32 0.0, %v1196
      %v1198 = vpop.f32.mrb[0].mxu0
      %1199 = vmatprep.mubr.bf16.mxu0 0
      %1200 = vmatmul.mubr.bf16.gmra.mrb[0].mxu0 %v1076
      %v1201 = vpop.f32.mrb[0].mxu0
      %v1202 = vadd.f32 0.0, %v1201
      %v1203 = vpop.f32.mrb[0].mxu0
      %v1204 = vpop.f32.mrb[0].mxu0
      %v1205 = vadd.f32 0.0, %v1204
      %v1206 = vpop.f32.mrb[0].mxu0
      %1207 = vmatprep.mubr.bf16.mxu0 0
      %1208 = vmatmul.mubr.bf16.gmra.mrb[0].mxu0 %v1079
      %v1209 = vpop.f32.mrb[0].mxu0
      %v1210 = vadd.f32 0.0, %v1209
      %v1211 = vpop.f32.mrb[0].mxu0
      %v1212 = vpop.f32.mrb[0].mxu0
      %v1213 = vadd.f32 0.0, %v1212
      %v1214 = vpop.f32.mrb[0].mxu0
      %1215 = vmatprep.mubr.bf16.mxu0 0
      %1216 = vmatmul.mubr.bf16.gmra.mrb[0].mxu0 %v1082
      %v1217 = vpop.f32.mrb[0].mxu0
      %v1218 = vadd.f32 0.0, %v1217
      %v1219 = vpop.f32.mrb[0].mxu0
      %v1220 = vpop.f32.mrb[0].mxu0
      %v1221 = vadd.f32 0.0, %v1220
      %v1222 = vpop.f32.mrb[0].mxu0
      %1223 = vmatprep.mubr.bf16.mxu0 0
      %1224 = vmatmul.mubr.bf16.gmra.mrb[0].mxu0 %v1085
      %v1225 = vpop.f32.mrb[0].mxu0
      %v1226 = vadd.f32 0.0, %v1225
      %v1227 = vpop.f32.mrb[0].mxu0
      %v1228 = vpop.f32.mrb[0].mxu0
      %v1229 = vadd.f32 0.0, %v1228
      %v1230 = vpop.f32.mrb[0].mxu0
      %1231 = vmatprep.mubr.bf16.mxu0 0
      %1232 = vmatmul.mubr.bf16.gmra.mrb[0].mxu0 %v1088
      %v1233 = vpop.f32.mrb[0].mxu0
      %v1234 = vadd.f32 0.0, %v1233
      %v1235 = vpop.f32.mrb[0].mxu0
      %v1236 = vpop.f32.mrb[0].mxu0
      %v1237 = vadd.f32 0.0, %v1236
      %v1238 = vpop.f32.mrb[0].mxu0
      %1239 = vmatprep.mubr.bf16.mxu0 0
      %1240 = vmatmul.mubr.bf16.gmra.mrb[0].mxu0 %v1091
      %v1241 = vpop.f32.mrb[0].mxu0
      %v1242 = vadd.f32 0.0, %v1241
      %v1243 = vpop.f32.mrb[0].mxu0
      %v1244 = vpop.f32.mrb[0].mxu0
      %v1245 = vadd.f32 0.0, %v1244
      %v1246 = vpop.f32.mrb[0].mxu0
      %1247 = vmatprep.mubr.bf16.mxu0 0
      %1248 = vmatmul.mubr.bf16.gmra.mrb[0].mxu0 %v1094
      %v1249 = vpop.f32.mrb[0].mxu0
      %v1250 = vadd.f32 0.0, %v1249
      %v1251 = vpop.f32.mrb[0].mxu0
      %v1252 = vpop.f32.mrb[0].mxu0
      %v1253 = vadd.f32 0.0, %v1252
      %v1254 = vpop.f32.mrb[0].mxu0
      %1255 = vmatprep.mubr.bf16.mxu0 0
      %1256 = vmatmul.mubr.bf16.gmra.mrb[0].mxu0 %v1097
      %v1257 = vpop.f32.mrb[0].mxu0
      %v1258 = vadd.f32 0.0, %v1257
      %v1259 = vpop.f32.mrb[0].mxu0
      %v1260 = vpop.f32.mrb[0].mxu0
      %v1261 = vadd.f32 0.0, %v1260
      %v1262 = vpop.f32.mrb[0].mxu0
      %1263 = vmatprep.mubr.bf16.mxu0 0
      %1264 = vmatmul.mubr.bf16.gmra.mrb[0].mxu0 %v1100
      %v1265 = vpop.f32.mrb[0].mxu0
      %v1266 = vadd.f32 0.0, %v1265
      %v1267 = vpop.f32.mrb[0].mxu0
      %v1268 = vpop.f32.mrb[0].mxu0
      %v1269 = vadd.f32 0.0, %v1268
      %v1270 = vpop.f32.mrb[0].mxu0
      %1271 = vmatprep.mubr.bf16.mxu0 0
      %1272 = vmatmul.mubr.bf16.gmra.mrb[0].mxu0 %v1103
      %v1273 = vpop.f32.mrb[0].mxu0
      %v1274 = vadd.f32 0.0, %v1273
      %v1275 = vpop.f32.mrb[0].mxu0
      %v1276 = vpop.f32.mrb[0].mxu0
      %v1277 = vadd.f32 0.0, %v1276
      %v1278 = vpop.f32.mrb[0].mxu0
      %1279 = vmatprep.mubr.bf16.mxu0 0
      %1280 = vmatmul.mubr.bf16.gmra.mrb[0].mxu0 %v1106
      %v1281 = vpop.f32.mrb[0].mxu0
      %v1282 = vadd.f32 0.0, %v1281
      %v1283 = vpop.f32.mrb[0].mxu0
      %v1284 = vpop.f32.mrb[0].mxu0
      %v1285 = vadd.f32 0.0, %v1284
      %v1286 = vpop.f32.mrb[0].mxu0
      %1287 = vdwg.mxu0
      %v1288 = vadd.f32 %v1016, %v1146
      %v1289 = vadd.f32 %v1017, %v1149
      %v1290 = vadd.f32 %v1018, %v1154
      %v1291 = vadd.f32 %v1019, %v1157
      %v1292 = vadd.f32 %v1020, %v1162
      %v1293 = vadd.f32 %v1021, %v1165
      %v1294 = vadd.f32 %v1022, %v1170
      %v1295 = vadd.f32 %v1023, %v1173
      %v1296 = vadd.f32 %v1024, %v1178
      %v1297 = vadd.f32 %v1025, %v1181
      %v1298 = vadd.f32 %v1026, %v1186
      %v1299 = vadd.f32 %v1027, %v1189
      %v1300 = vadd.f32 %v1028, %v1194
      %v1301 = vadd.f32 %v1029, %v1197
      %v1302 = vadd.f32 %v1030, %v1202
      %v1303 = vadd.f32 %v1031, %v1205
      %v1304 = vadd.f32 %v1032, %v1210
      %v1305 = vadd.f32 %v1033, %v1213
      %v1306 = vadd.f32 %v1034, %v1218
      %v1307 = vadd.f32 %v1035, %v1221
      %v1308 = vadd.f32 %v1036, %v1226
      %v1309 = vadd.f32 %v1037, %v1229
      %v1310 = vadd.f32 %v1038, %v1234
      %v1311 = vadd.f32 %v1039, %v1237
      %v1312 = vadd.f32 %v1040, %v1242
      %v1313 = vadd.f32 %v1041, %v1245
      %v1314 = vadd.f32 %v1042, %v1250
      %v1315 = vadd.f32 %v1043, %v1253
      %v1316 = vadd.f32 %v1044, %v1258
      %v1317 = vadd.f32 %v1045, %v1261
      %v1318 = vadd.f32 %v1046, %v1266
      %v1319 = vadd.f32 %v1047, %v1269
      %v1320 = vadd.f32 %v1048, %v1274
      %v1321 = vadd.f32 %v1049, %v1277
      %v1322 = vadd.f32 %v1050, %v1282
      %v1323 = vadd.f32 %v1051, %v1285
      %1324 = vst.msk [vmem:[#allocation4] sm:$0xff] %vm361, %v1288
      %1325 = vst.msk [vmem:[#allocation4 + $0x8] sm:$0xff] %vm361, %v1289
      %1326 = vst.msk [vmem:[#allocation4 + $0x10] sm:$0xff] %vm361, %v1290
      %1327 = vst.msk [vmem:[#allocation4 + $0x18] sm:$0xff] %vm361, %v1291
      %1328 = vst.msk [vmem:[#allocation4 + $0x20] sm:$0xff] %vm361, %v1292
      %1329 = vst.msk [vmem:[#allocation4 + $0x28] sm:$0xff] %vm361, %v1293
      %1330 = vst.msk [vmem:[#allocation4 + $0x30] sm:$0xff] %vm361, %v1294
      %1331 = vst.msk [vmem:[#allocation4 + $0x38] sm:$0xff] %vm361, %v1295
      %1332 = vst.msk [vmem:[#allocation4 + $0x40] sm:$0xff] %vm361, %v1296
      %1333 = vst.msk [vmem:[#allocation4 + $0x48] sm:$0xff] %vm361, %v1297
      %1334 = vst.msk [vmem:[#allocation4 + $0x50] sm:$0xff] %vm361, %v1298
      %1335 = vst.msk [vmem:[#allocation4 + $0x58] sm:$0xff] %vm361, %v1299
      %1336 = vst.msk [vmem:[#allocation4 + $0x60] sm:$0xff] %vm361, %v1300
      %1337 = vst.msk [vmem:[#allocation4 + $0x68] sm:$0xff] %vm361, %v1301
      %1338 = vst.msk [vmem:[#allocation4 + $0x70] sm:$0xff] %vm361, %v1302
      %1339 = vst.msk [vmem:[#allocation4 + $0x78] sm:$0xff] %vm361, %v1303
      %1340 = vst.msk [vmem:[#allocation4 + $0x80] sm:$0xff] %vm361, %v1304
      %1341 = vst.msk [vmem:[#allocation4 + $0x88] sm:$0xff] %vm361, %v1305
      %1342 = vst.msk [vmem:[#allocation4 + $0x90] sm:$0xff] %vm361, %v1306
      %1343 = vst.msk [vmem:[#allocation4 + $0x98] sm:$0xff] %vm361, %v1307
      %1344 = vst.msk [vmem:[#allocation4 + $0xa0] sm:$0xff] %vm361, %v1308
      %1345 = vst.msk [vmem:[#allocation4 + $0xa8] sm:$0xff] %vm361, %v1309
      %1346 = vst.msk [vmem:[#allocation4 + $0xb0] sm:$0xff] %vm361, %v1310
      %1347 = vst.msk [vmem:[#allocation4 + $0xb8] sm:$0xff] %vm361, %v1311
      %1348 = vst.msk [vmem:[#allocation4 + $0xc0] sm:$0xff] %vm361, %v1312
      %1349 = vst.msk [vmem:[#allocation4 + $0xc8] sm:$0xff] %vm361, %v1313
      %1350 = vst.msk [vmem:[#allocation4 + $0xd0] sm:$0xff] %vm361, %v1314
      %1351 = vst.msk [vmem:[#allocation4 + $0xd8] sm:$0xff] %vm361, %v1315
      %1352 = vst.msk [vmem:[#allocation4 + $0xe0] sm:$0xff] %vm361, %v1316
      %1353 = vst.msk [vmem:[#allocation4 + $0xe8] sm:$0xff] %vm361, %v1317
      %1354 = vst.msk [vmem:[#allocation4 + $0xf0] sm:$0xff] %vm361, %v1318
      %1355 = vst.msk [vmem:[#allocation4 + $0xf8] sm:$0xff] %vm361, %v1319
      %1356 = vst.msk [vmem:[#allocation4 + $0x100] sm:$0xff] %vm361, %v1320
      %1357 = vst.msk [vmem:[#allocation4 + $0x108] sm:$0xff] %vm361, %v1321
      %1358 = vst.msk [vmem:[#allocation4 + $0x110] sm:$0xff] %vm361, %v1322
      %1359 = vst.msk [vmem:[#allocation4 + $0x118] sm:$0xff] %vm361, %v1323
      %v1360 = vld [vmem:[#allocation2 + $0x2] sm:$0xff]
      %v1361 = vld [vmem:[#allocation2 + $0xa] sm:$0xff]
      %v1362 = vld [vmem:[#allocation2 + $0x12] sm:$0xff]
      %v1363 = vld [vmem:[#allocation2 + $0x1a] sm:$0xff]
      %v1364 = vld [vmem:[#allocation2 + $0x22] sm:$0xff]
      %v1365 = vld [vmem:[#allocation2 + $0x2a] sm:$0xff]
      %v1366 = vld [vmem:[#allocation2 + $0x32] sm:$0xff]
      %v1367 = vld [vmem:[#allocation2 + $0x3a] sm:$0xff]
      %v1368 = vld [vmem:[#allocation2 + $0x42] sm:$0xff]
      %v1369 = vld [vmem:[#allocation2 + $0x4a] sm:$0xff]
      %v1370 = vld [vmem:[#allocation2 + $0x52] sm:$0xff]
      %v1371 = vld [vmem:[#allocation2 + $0x5a] sm:$0xff]
      %v1372 = vld [vmem:[#allocation2 + $0x62] sm:$0xff]
      %v1373 = vld [vmem:[#allocation2 + $0x6a] sm:$0xff]
      %v1374 = vld [vmem:[#allocation2 + $0x72] sm:$0xff]
      %v1375 = vld [vmem:[#allocation2 + $0x7a] sm:$0xff]
      %v1376 = vld [vmem:[#allocation2 + $0x82] sm:$0xff]
      %v1377 = vld [vmem:[#allocation2 + $0x8a] sm:$0xff]
      %v1378 = vld [vmem:[#allocation2 + $0x92] sm:$0xff]
      %v1379 = vld [vmem:[#allocation2 + $0x9a] sm:$0xff]
      %v1380 = vld [vmem:[#allocation2 + $0xa2] sm:$0xff]
      %v1381 = vld [vmem:[#allocation2 + $0xaa] sm:$0xff]
      %v1382 = vld [vmem:[#allocation2 + $0xb2] sm:$0xff]
      %v1383 = vld [vmem:[#allocation2 + $0xba] sm:$0xff]
      %v1384 = vld [vmem:[#allocation2 + $0xc2] sm:$0xff]
      %v1385 = vld [vmem:[#allocation2 + $0xca] sm:$0xff]
      %v1386 = vld [vmem:[#allocation2 + $0xd2] sm:$0xff]
      %v1387 = vld [vmem:[#allocation2 + $0xda] sm:$0xff]
      %v1388 = vld [vmem:[#allocation2 + $0xe2] sm:$0xff]
      %v1389 = vld [vmem:[#allocation2 + $0xea] sm:$0xff]
      %v1390 = vld [vmem:[#allocation2 + $0xf2] sm:$0xff]
      %v1391 = vld [vmem:[#allocation2 + $0xfa] sm:$0xff]
      %v1392 = vld [vmem:[#allocation2 + $0x102] sm:$0xff]
      %v1393 = vld [vmem:[#allocation2 + $0x10a] sm:$0xff]
      %v1394 = vld [vmem:[#allocation2 + $0x112] sm:$0xff]
      %v1395 = vld [vmem:[#allocation2 + $0x11a] sm:$0xff]
      %v1396 = vpack.c.bf16 %v1361, %v1360
      %v1397 = vpack.c.bf16 %v1363, %v1362
      %v1398 = vpack.c.bf16 %v1365, %v1364
      %v1399 = vpack.c.bf16 %v1367, %v1366
      %v1400 = vpack.c.bf16 %v1369, %v1368
      %v1401 = vpack.c.bf16 %v1371, %v1370
      %v1402 = vpack.c.bf16 %v1373, %v1372
      %v1403 = vpack.c.bf16 %v1375, %v1374
      %v1404 = vpack.c.bf16 %v1377, %v1376
      %v1405 = vpack.c.bf16 %v1379, %v1378
      %v1406 = vpack.c.bf16 %v1381, %v1380
      %v1407 = vpack.c.bf16 %v1383, %v1382
      %v1408 = vpack.c.bf16 %v1385, %v1384
      %v1409 = vpack.c.bf16 %v1387, %v1386
      %v1410 = vpack.c.bf16 %v1389, %v1388
      %v1411 = vpack.c.bf16 %v1391, %v1390
      %v1412 = vpack.c.bf16 %v1393, %v1392
      %v1413 = vpack.c.bf16 %v1395, %v1394
      %v1414 = vld [vmem:[#allocation4] sm:$0xff]
      %v1415 = vld [vmem:[#allocation4 + $0x8] sm:$0xff]
      %v1416 = vld [vmem:[#allocation4 + $0x10] sm:$0xff]
      %v1417 = vld [vmem:[#allocation4 + $0x18] sm:$0xff]
      %v1418 = vld [vmem:[#allocation4 + $0x20] sm:$0xff]
      %v1419 = vld [vmem:[#allocation4 + $0x28] sm:$0xff]
      %v1420 = vld [vmem:[#allocation4 + $0x30] sm:$0xff]
      %v1421 = vld [vmem:[#allocation4 + $0x38] sm:$0xff]
      %v1422 = vld [vmem:[#allocation4 + $0x40] sm:$0xff]
      %v1423 = vld [vmem:[#allocation4 + $0x48] sm:$0xff]
      %v1424 = vld [vmem:[#allocation4 + $0x50] sm:$0xff]
      %v1425 = vld [vmem:[#allocation4 + $0x58] sm:$0xff]
      %v1426 = vld [vmem:[#allocation4 + $0x60] sm:$0xff]
      %v1427 = vld [vmem:[#allocation4 + $0x68] sm:$0xff]
      %v1428 = vld [vmem:[#allocation4 + $0x70] sm:$0xff]
      %v1429 = vld [vmem:[#allocation4 + $0x78] sm:$0xff]
      %v1430 = vld [vmem:[#allocation4 + $0x80] sm:$0xff]
      %v1431 = vld [vmem:[#allocation4 + $0x88] sm:$0xff]
      %v1432 = vld [vmem:[#allocation4 + $0x90] sm:$0xff]
      %v1433 = vld [vmem:[#allocation4 + $0x98] sm:$0xff]
      %v1434 = vld [vmem:[#allocation4 + $0xa0] sm:$0xff]
      %v1435 = vld [vmem:[#allocation4 + $0xa8] sm:$0xff]
      %v1436 = vld [vmem:[#allocation4 + $0xb0] sm:$0xff]
      %v1437 = vld [vmem:[#allocation4 + $0xb8] sm:$0xff]
      %v1438 = vld [vmem:[#allocation4 + $0xc0] sm:$0xff]
      %v1439 = vld [vmem:[#allocation4 + $0xc8] sm:$0xff]
      %v1440 = vld [vmem:[#allocation4 + $0xd0] sm:$0xff]
      %v1441 = vld [vmem:[#allocation4 + $0xd8] sm:$0xff]
      %v1442 = vld [vmem:[#allocation4 + $0xe0] sm:$0xff]
      %v1443 = vld [vmem:[#allocation4 + $0xe8] sm:$0xff]
      %v1444 = vld [vmem:[#allocation4 + $0xf0] sm:$0xff]
      %v1445 = vld [vmem:[#allocation4 + $0xf8] sm:$0xff]
      %v1446 = vld [vmem:[#allocation4 + $0x100] sm:$0xff]
      %v1447 = vld [vmem:[#allocation4 + $0x108] sm:$0xff]
      %v1448 = vld [vmem:[#allocation4 + $0x110] sm:$0xff]
      %v1449 = vld [vmem:[#allocation4 + $0x118] sm:$0xff]
      %s1450 = scalar_lea.vmem %s2, 4
      %v1451 = vld [vmem:[%s1450] sm:$0x3]
      %v1453 = vsel %vm361, %v1396, 0
      %v1456 = vsel %vm361, %v1397, 0
      %v1459 = vsel %vm361, %v1398, 0
      %v1462 = vsel %vm361, %v1399, 0
      %v1465 = vsel %vm361, %v1400, 0
      %v1468 = vsel %vm361, %v1401, 0
      %v1471 = vsel %vm361, %v1402, 0
      %v1474 = vsel %vm361, %v1403, 0
      %v1477 = vsel %vm361, %v1404, 0
      %v1480 = vsel %vm361, %v1405, 0
      %v1483 = vsel %vm361, %v1406, 0
      %v1486 = vsel %vm361, %v1407, 0
      %v1489 = vsel %vm361, %v1408, 0
      %v1492 = vsel %vm361, %v1409, 0
      %v1495 = vsel %vm361, %v1410, 0
      %v1498 = vsel %vm361, %v1411, 0
      %v1501 = vsel %vm361, %v1412, 0
      %v1504 = vsel %vm361, %v1413, 0
      %v1507 = vsel %vm709, %v1451, 0
      %1509 = vmatprep.subr.bf16.mxu0 0
      %1510 = vmatpush1.bf16.msra.mxu0 %v1507
      %1511 = vmatprep.subr.bf16.mxu0 0
      %1512 = vmatpush1.bf16.msra.mxu0 0
      %1513 = vmatprep.subr.bf16.mxu0 0
      %1514 = vmatpush1.bf16.msra.mxu0 0
      %1515 = vmatprep.subr.bf16.mxu0 0
      %1516 = vmatpush1.bf16.msra.mxu0 0
      %1517 = vmatprep.subr.bf16.mxu0 0
      %1518 = vmatpush1.bf16.msra.mxu0 0
      %1519 = vmatprep.subr.bf16.mxu0 0
      %1520 = vmatpush1.bf16.msra.mxu0 0
      %1521 = vmatprep.subr.bf16.mxu0 0
      %1522 = vmatpush1.bf16.msra.mxu0 0
      %1523 = vmatprep.subr.bf16.mxu0 0
      %1524 = vmatpush1.bf16.msra.mxu0 0
      %1525 = vmatprep.subr.bf16.mxu0 0
      %1526 = vmatpush1.bf16.msra.mxu0 0
      %1527 = vmatprep.subr.bf16.mxu0 0
      %1528 = vmatpush1.bf16.msra.mxu0 0
      %1529 = vmatprep.subr.bf16.mxu0 0
      %1530 = vmatpush1.bf16.msra.mxu0 0
      %1531 = vmatprep.subr.bf16.mxu0 0
      %1532 = vmatpush1.bf16.msra.mxu0 0
      %1533 = vmatprep.subr.bf16.mxu0 0
      %1534 = vmatpush1.bf16.msra.mxu0 0
      %1535 = vmatprep.subr.bf16.mxu0 0
      %1536 = vmatpush1.bf16.msra.mxu0 0
      %1537 = vmatprep.subr.bf16.mxu0 0
      %1538 = vmatpush1.bf16.msra.mxu0 0
      %1539 = vmatprep.subr.bf16.mxu0 0
      %1540 = vmatpush1.bf16.msra.mxu0 0
      %1541 = vmatprep.mubr.bf16.mxu0 0
      %1542 = vmatmul.mubr.bf16.gmra.mrb[0].mxu0 %v1453
      %v1543 = vpop.f32.mrb[0].mxu0
      %v1544 = vadd.f32 0.0, %v1543
      %v1545 = vpop.f32.mrb[0].mxu0
      %v1546 = vpop.f32.mrb[0].mxu0
      %v1547 = vadd.f32 0.0, %v1546
      %v1548 = vpop.f32.mrb[0].mxu0
      %1549 = vmatprep.mubr.bf16.mxu0 0
      %1550 = vmatmul.mubr.bf16.gmra.mrb[0].mxu0 %v1456
      %v1551 = vpop.f32.mrb[0].mxu0
      %v1552 = vadd.f32 0.0, %v1551
      %v1553 = vpop.f32.mrb[0].mxu0
      %v1554 = vpop.f32.mrb[0].mxu0
      %v1555 = vadd.f32 0.0, %v1554
      %v1556 = vpop.f32.mrb[0].mxu0
      %1557 = vmatprep.mubr.bf16.mxu0 0
      %1558 = vmatmul.mubr.bf16.gmra.mrb[0].mxu0 %v1459
      %v1559 = vpop.f32.mrb[0].mxu0
      %v1560 = vadd.f32 0.0, %v1559
      %v1561 = vpop.f32.mrb[0].mxu0
      %v1562 = vpop.f32.mrb[0].mxu0
      %v1563 = vadd.f32 0.0, %v1562
      %v1564 = vpop.f32.mrb[0].mxu0
      %1565 = vmatprep.mubr.bf16.mxu0 0
      %1566 = vmatmul.mubr.bf16.gmra.mrb[0].mxu0 %v1462
      %v1567 = vpop.f32.mrb[0].mxu0
      %v1568 = vadd.f32 0.0, %v1567
      %v1569 = vpop.f32.mrb[0].mxu0
      %v1570 = vpop.f32.mrb[0].mxu0
      %v1571 = vadd.f32 0.0, %v1570
      %v1572 = vpop.f32.mrb[0].mxu0
      %1573 = vmatprep.mubr.bf16.mxu0 0
      %1574 = vmatmul.mubr.bf16.gmra.mrb[0].mxu0 %v1465
      %v1575 = vpop.f32.mrb[0].mxu0
      %v1576 = vadd.f32 0.0, %v1575
      %v1577 = vpop.f32.mrb[0].mxu0
      %v1578 = vpop.f32.mrb[0].mxu0
      %v1579 = vadd.f32 0.0, %v1578
      %v1580 = vpop.f32.mrb[0].mxu0
      %1581 = vmatprep.mubr.bf16.mxu0 0
      %1582 = vmatmul.mubr.bf16.gmra.mrb[0].mxu0 %v1468
      %v1583 = vpop.f32.mrb[0].mxu0
      %v1584 = vadd.f32 0.0, %v1583
      %v1585 = vpop.f32.mrb[0].mxu0
      %v1586 = vpop.f32.mrb[0].mxu0
      %v1587 = vadd.f32 0.0, %v1586
      %v1588 = vpop.f32.mrb[0].mxu0
      %1589 = vmatprep.mubr.bf16.mxu0 0
      %1590 = vmatmul.mubr.bf16.gmra.mrb[0].mxu0 %v1471
      %v1591 = vpop.f32.mrb[0].mxu0
      %v1592 = vadd.f32 0.0, %v1591
      %v1593 = vpop.f32.mrb[0].mxu0
      %v1594 = vpop.f32.mrb[0].mxu0
      %v1595 = vadd.f32 0.0, %v1594
      %v1596 = vpop.f32.mrb[0].mxu0
      %1597 = vmatprep.mubr.bf16.mxu0 0
      %1598 = vmatmul.mubr.bf16.gmra.mrb[0].mxu0 %v1474
      %v1599 = vpop.f32.mrb[0].mxu0
      %v1600 = vadd.f32 0.0, %v1599
      %v1601 = vpop.f32.mrb[0].mxu0
      %v1602 = vpop.f32.mrb[0].mxu0
      %v1603 = vadd.f32 0.0, %v1602
      %v1604 = vpop.f32.mrb[0].mxu0
      %1605 = vmatprep.mubr.bf16.mxu0 0
      %1606 = vmatmul.mubr.bf16.gmra.mrb[0].mxu0 %v1477
      %v1607 = vpop.f32.mrb[0].mxu0
      %v1608 = vadd.f32 0.0, %v1607
      %v1609 = vpop.f32.mrb[0].mxu0
      %v1610 = vpop.f32.mrb[0].mxu0
      %v1611 = vadd.f32 0.0, %v1610
      %v1612 = vpop.f32.mrb[0].mxu0
      %1613 = vmatprep.mubr.bf16.mxu0 0
      %1614 = vmatmul.mubr.bf16.gmra.mrb[0].mxu0 %v1480
      %v1615 = vpop.f32.mrb[0].mxu0
      %v1616 = vadd.f32 0.0, %v1615
      %v1617 = vpop.f32.mrb[0].mxu0
      %v1618 = vpop.f32.mrb[0].mxu0
      %v1619 = vadd.f32 0.0, %v1618
      %v1620 = vpop.f32.mrb[0].mxu0
      %1621 = vmatprep.mubr.bf16.mxu0 0
      %1622 = vmatmul.mubr.bf16.gmra.mrb[0].mxu0 %v1483
      %v1623 = vpop.f32.mrb[0].mxu0
      %v1624 = vadd.f32 0.0, %v1623
      %v1625 = vpop.f32.mrb[0].mxu0
      %v1626 = vpop.f32.mrb[0].mxu0
      %v1627 = vadd.f32 0.0, %v1626
      %v1628 = vpop.f32.mrb[0].mxu0
      %1629 = vmatprep.mubr.bf16.mxu0 0
      %1630 = vmatmul.mubr.bf16.gmra.mrb[0].mxu0 %v1486
      %v1631 = vpop.f32.mrb[0].mxu0
      %v1632 = vadd.f32 0.0, %v1631
      %v1633 = vpop.f32.mrb[0].mxu0
      %v1634 = vpop.f32.mrb[0].mxu0
      %v1635 = vadd.f32 0.0, %v1634
      %v1636 = vpop.f32.mrb[0].mxu0
      %1637 = vmatprep.mubr.bf16.mxu0 0
      %1638 = vmatmul.mubr.bf16.gmra.mrb[0].mxu0 %v1489
      %v1639 = vpop.f32.mrb[0].mxu0
      %v1640 = vadd.f32 0.0, %v1639
      %v1641 = vpop.f32.mrb[0].mxu0
      %v1642 = vpop.f32.mrb[0].mxu0
      %v1643 = vadd.f32 0.0, %v1642
      %v1644 = vpop.f32.mrb[0].mxu0
      %1645 = vmatprep.mubr.bf16.mxu0 0
      %1646 = vmatmul.mubr.bf16.gmra.mrb[0].mxu0 %v1492
      %v1647 = vpop.f32.mrb[0].mxu0
      %v1648 = vadd.f32 0.0, %v1647
      %v1649 = vpop.f32.mrb[0].mxu0
      %v1650 = vpop.f32.mrb[0].mxu0
      %v1651 = vadd.f32 0.0, %v1650
      %v1652 = vpop.f32.mrb[0].mxu0
      %1653 = vmatprep.mubr.bf16.mxu0 0
      %1654 = vmatmul.mubr.bf16.gmra.mrb[0].mxu0 %v1495
      %v1655 = vpop.f32.mrb[0].mxu0
      %v1656 = vadd.f32 0.0, %v1655
      %v1657 = vpop.f32.mrb[0].mxu0
      %v1658 = vpop.f32.mrb[0].mxu0
      %v1659 = vadd.f32 0.0, %v1658
      %v1660 = vpop.f32.mrb[0].mxu0
      %1661 = vmatprep.mubr.bf16.mxu0 0
      %1662 = vmatmul.mubr.bf16.gmra.mrb[0].mxu0 %v1498
      %v1663 = vpop.f32.mrb[0].mxu0
      %v1664 = vadd.f32 0.0, %v1663
      %v1665 = vpop.f32.mrb[0].mxu0
      %v1666 = vpop.f32.mrb[0].mxu0
      %v1667 = vadd.f32 0.0, %v1666
      %v1668 = vpop.f32.mrb[0].mxu0
      %1669 = vmatprep.mubr.bf16.mxu0 0
      %1670 = vmatmul.mubr.bf16.gmra.mrb[0].mxu0 %v1501
      %v1671 = vpop.f32.mrb[0].mxu0
      %v1672 = vadd.f32 0.0, %v1671
      %v1673 = vpop.f32.mrb[0].mxu0
      %v1674 = vpop.f32.mrb[0].mxu0
      %v1675 = vadd.f32 0.0, %v1674
      %v1676 = vpop.f32.mrb[0].mxu0
      %1677 = vmatprep.mubr.bf16.mxu0 0
      %1678 = vmatmul.mubr.bf16.gmra.mrb[0].mxu0 %v1504
      %v1679 = vpop.f32.mrb[0].mxu0
      %v1680 = vadd.f32 0.0, %v1679
      %v1681 = vpop.f32.mrb[0].mxu0
      %v1682 = vpop.f32.mrb[0].mxu0
      %v1683 = vadd.f32 0.0, %v1682
      %v1684 = vpop.f32.mrb[0].mxu0
      %1685 = vdwg.mxu0
      %v1686 = vadd.f32 %v1414, %v1544
      %v1687 = vadd.f32 %v1415, %v1547
      %v1688 = vadd.f32 %v1416, %v1552
      %v1689 = vadd.f32 %v1417, %v1555
      %v1690 = vadd.f32 %v1418, %v1560
      %v1691 = vadd.f32 %v1419, %v1563
      %v1692 = vadd.f32 %v1420, %v1568
      %v1693 = vadd.f32 %v1421, %v1571
      %v1694 = vadd.f32 %v1422, %v1576
      %v1695 = vadd.f32 %v1423, %v1579
      %v1696 = vadd.f32 %v1424, %v1584
      %v1697 = vadd.f32 %v1425, %v1587
      %v1698 = vadd.f32 %v1426, %v1592
      %v1699 = vadd.f32 %v1427, %v1595
      %v1700 = vadd.f32 %v1428, %v1600
      %v1701 = vadd.f32 %v1429, %v1603
      %v1702 = vadd.f32 %v1430, %v1608
      %v1703 = vadd.f32 %v1431, %v1611
      %v1704 = vadd.f32 %v1432, %v1616
      %v1705 = vadd.f32 %v1433, %v1619
      %v1706 = vadd.f32 %v1434, %v1624
      %v1707 = vadd.f32 %v1435, %v1627
      %v1708 = vadd.f32 %v1436, %v1632
      %v1709 = vadd.f32 %v1437, %v1635
      %v1710 = vadd.f32 %v1438, %v1640
      %v1711 = vadd.f32 %v1439, %v1643
      %v1712 = vadd.f32 %v1440, %v1648
      %v1713 = vadd.f32 %v1441, %v1651
      %v1714 = vadd.f32 %v1442, %v1656
      %v1715 = vadd.f32 %v1443, %v1659
      %v1716 = vadd.f32 %v1444, %v1664
      %v1717 = vadd.f32 %v1445, %v1667
      %v1718 = vadd.f32 %v1446, %v1672
      %v1719 = vadd.f32 %v1447, %v1675
      %v1720 = vadd.f32 %v1448, %v1680
      %v1721 = vadd.f32 %v1449, %v1683
      %1722 = vst.msk [vmem:[#allocation4] sm:$0xff] %vm361, %v1686
      %1723 = vst.msk [vmem:[#allocation4 + $0x8] sm:$0xff] %vm361, %v1687
      %1724 = vst.msk [vmem:[#allocation4 + $0x10] sm:$0xff] %vm361, %v1688
      %1725 = vst.msk [vmem:[#allocation4 + $0x18] sm:$0xff] %vm361, %v1689
      %1726 = vst.msk [vmem:[#allocation4 + $0x20] sm:$0xff] %vm361, %v1690
      %1727 = vst.msk [vmem:[#allocation4 + $0x28] sm:$0xff] %vm361, %v1691
      %1728 = vst.msk [vmem:[#allocation4 + $0x30] sm:$0xff] %vm361, %v1692
      %1729 = vst.msk [vmem:[#allocation4 + $0x38] sm:$0xff] %vm361, %v1693
      %1730 = vst.msk [vmem:[#allocation4 + $0x40] sm:$0xff] %vm361, %v1694
      %1731 = vst.msk [vmem:[#allocation4 + $0x48] sm:$0xff] %vm361, %v1695
      %1732 = vst.msk [vmem:[#allocation4 + $0x50] sm:$0xff] %vm361, %v1696
      %1733 = vst.msk [vmem:[#allocation4 + $0x58] sm:$0xff] %vm361, %v1697
      %1734 = vst.msk [vmem:[#allocation4 + $0x60] sm:$0xff] %vm361, %v1698
      %1735 = vst.msk [vmem:[#allocation4 + $0x68] sm:$0xff] %vm361, %v1699
      %1736 = vst.msk [vmem:[#allocation4 + $0x70] sm:$0xff] %vm361, %v1700
      %1737 = vst.msk [vmem:[#allocation4 + $0x78] sm:$0xff] %vm361, %v1701
      %1738 = vst.msk [vmem:[#allocation4 + $0x80] sm:$0xff] %vm361, %v1702
      %1739 = vst.msk [vmem:[#allocation4 + $0x88] sm:$0xff] %vm361, %v1703
      %1740 = vst.msk [vmem:[#allocation4 + $0x90] sm:$0xff] %vm361, %v1704
      %1741 = vst.msk [vmem:[#allocation4 + $0x98] sm:$0xff] %vm361, %v1705
      %1742 = vst.msk [vmem:[#allocation4 + $0xa0] sm:$0xff] %vm361, %v1706
      %1743 = vst.msk [vmem:[#allocation4 + $0xa8] sm:$0xff] %vm361, %v1707
      %1744 = vst.msk [vmem:[#allocation4 + $0xb0] sm:$0xff] %vm361, %v1708
      %1745 = vst.msk [vmem:[#allocation4 + $0xb8] sm:$0xff] %vm361, %v1709
      %1746 = vst.msk [vmem:[#allocation4 + $0xc0] sm:$0xff] %vm361, %v1710
      %1747 = vst.msk [vmem:[#allocation4 + $0xc8] sm:$0xff] %vm361, %v1711
      %1748 = vst.msk [vmem:[#allocation4 + $0xd0] sm:$0xff] %vm361, %v1712
      %1749 = vst.msk [vmem:[#allocation4 + $0xd8] sm:$0xff] %vm361, %v1713
      %1750 = vst.msk [vmem:[#allocation4 + $0xe0] sm:$0xff] %vm361, %v1714
      %1751 = vst.msk [vmem:[#allocation4 + $0xe8] sm:$0xff] %vm361, %v1715
      %1752 = vst.msk [vmem:[#allocation4 + $0xf0] sm:$0xff] %vm361, %v1716
      %1753 = vst.msk [vmem:[#allocation4 + $0xf8] sm:$0xff] %vm361, %v1717
      %1754 = vst.msk [vmem:[#allocation4 + $0x100] sm:$0xff] %vm361, %v1718
      %1755 = vst.msk [vmem:[#allocation4 + $0x108] sm:$0xff] %vm361, %v1719
      %1756 = vst.msk [vmem:[#allocation4 + $0x110] sm:$0xff] %vm361, %v1720
      %1757 = vst.msk [vmem:[#allocation4 + $0x118] sm:$0xff] %vm361, %v1721
      %v1758 = vld [vmem:[#allocation2 + $0x12] sm:$0xff]
      %v1759 = vld [vmem:[#allocation2 + $0x1a] sm:$0xff]
      %v1760 = vld [vmem:[#allocation2 + $0x22] sm:$0xff]
      %v1761 = vld [vmem:[#allocation2 + $0x2a] sm:$0xff]
      %v1762 = vld [vmem:[#allocation2 + $0x32] sm:$0xff]
      %v1763 = vld [vmem:[#allocation2 + $0x3a] sm:$0xff]
      %v1764 = vld [vmem:[#allocation2 + $0x42] sm:$0xff]
      %v1765 = vld [vmem:[#allocation2 + $0x4a] sm:$0xff]
      %v1766 = vld [vmem:[#allocation2 + $0x52] sm:$0xff]
      %v1767 = vld [vmem:[#allocation2 + $0x5a] sm:$0xff]
      %v1768 = vld [vmem:[#allocation2 + $0x62] sm:$0xff]
      %v1769 = vld [vmem:[#allocation2 + $0x6a] sm:$0xff]
      %v1770 = vld [vmem:[#allocation2 + $0x72] sm:$0xff]
      %v1771 = vld [vmem:[#allocation2 + $0x7a] sm:$0xff]
      %v1772 = vld [vmem:[#allocation2 + $0x82] sm:$0xff]
      %v1773 = vld [vmem:[#allocation2 + $0x8a] sm:$0xff]
      %v1774 = vld [vmem:[#allocation2 + $0x92] sm:$0xff]
      %v1775 = vld [vmem:[#allocation2 + $0x9a] sm:$0xff]
      %v1776 = vld [vmem:[#allocation2 + $0xa2] sm:$0xff]
      %v1777 = vld [vmem:[#allocation2 + $0xaa] sm:$0xff]
      %v1778 = vld [vmem:[#allocation2 + $0xb2] sm:$0xff]
      %v1779 = vld [vmem:[#allocation2 + $0xba] sm:$0xff]
      %v1780 = vld [vmem:[#allocation2 + $0xc2] sm:$0xff]
      %v1781 = vld [vmem:[#allocation2 + $0xca] sm:$0xff]
      %v1782 = vld [vmem:[#allocation2 + $0xd2] sm:$0xff]
      %v1783 = vld [vmem:[#allocation2 + $0xda] sm:$0xff]
      %v1784 = vld [vmem:[#allocation2 + $0xe2] sm:$0xff]
      %v1785 = vld [vmem:[#allocation2 + $0xea] sm:$0xff]
      %v1786 = vld [vmem:[#allocation2 + $0xf2] sm:$0xff]
      %v1787 = vld [vmem:[#allocation2 + $0xfa] sm:$0xff]
      %v1788 = vld [vmem:[#allocation2 + $0x102] sm:$0xff]
      %v1789 = vld [vmem:[#allocation2 + $0x10a] sm:$0xff]
      %v1790 = vld [vmem:[#allocation2 + $0x112] sm:$0xff]
      %v1791 = vld [vmem:[#allocation2 + $0x11a] sm:$0xff]
      %v1792 = vld [vmem:[#allocation2 + $0x122] sm:$0xff]
      %v1793 = vld [vmem:[#allocation2 + $0x12a] sm:$0xff]
      %v1794 = vpack.c.bf16 %v1759, %v1758
      %v1795 = vpack.c.bf16 %v1761, %v1760
      %v1796 = vpack.c.bf16 %v1763, %v1762
      %v1797 = vpack.c.bf16 %v1765, %v1764
      %v1798 = vpack.c.bf16 %v1767, %v1766
      %v1799 = vpack.c.bf16 %v1769, %v1768
      %v1800 = vpack.c.bf16 %v1771, %v1770
      %v1801 = vpack.c.bf16 %v1773, %v1772
      %v1802 = vpack.c.bf16 %v1775, %v1774
      %v1803 = vpack.c.bf16 %v1777, %v1776
      %v1804 = vpack.c.bf16 %v1779, %v1778
      %v1805 = vpack.c.bf16 %v1781, %v1780
      %v1806 = vpack.c.bf16 %v1783, %v1782
      %v1807 = vpack.c.bf16 %v1785, %v1784
      %v1808 = vpack.c.bf16 %v1787, %v1786
      %v1809 = vpack.c.bf16 %v1789, %v1788
      %v1810 = vpack.c.bf16 %v1791, %v1790
      %v1811 = vpack.c.bf16 %v1793, %v1792
      %v1812 = vld [vmem:[#allocation4] sm:$0xff]
      %v1813 = vld [vmem:[#allocation4 + $0x8] sm:$0xff]
      %v1814 = vld [vmem:[#allocation4 + $0x10] sm:$0xff]
      %v1815 = vld [vmem:[#allocation4 + $0x18] sm:$0xff]
      %v1816 = vld [vmem:[#allocation4 + $0x20] sm:$0xff]
      %v1817 = vld [vmem:[#allocation4 + $0x28] sm:$0xff]
      %v1818 = vld [vmem:[#allocation4 + $0x30] sm:$0xff]
      %v1819 = vld [vmem:[#allocation4 + $0x38] sm:$0xff]
      %v1820 = vld [vmem:[#allocation4 + $0x40] sm:$0xff]
      %v1821 = vld [vmem:[#allocation4 + $0x48] sm:$0xff]
      %v1822 = vld [vmem:[#allocation4 + $0x50] sm:$0xff]
      %v1823 = vld [vmem:[#allocation4 + $0x58] sm:$0xff]
      %v1824 = vld [vmem:[#allocation4 + $0x60] sm:$0xff]
      %v1825 = vld [vmem:[#allocation4 + $0x68] sm:$0xff]
      %v1826 = vld [vmem:[#allocation4 + $0x70] sm:$0xff]
      %v1827 = vld [vmem:[#allocation4 + $0x78] sm:$0xff]
      %v1828 = vld [vmem:[#allocation4 + $0x80] sm:$0xff]
      %v1829 = vld [vmem:[#allocation4 + $0x88] sm:$0xff]
      %v1830 = vld [vmem:[#allocation4 + $0x90] sm:$0xff]
      %v1831 = vld [vmem:[#allocation4 + $0x98] sm:$0xff]
      %v1832 = vld [vmem:[#allocation4 + $0xa0] sm:$0xff]
      %v1833 = vld [vmem:[#allocation4 + $0xa8] sm:$0xff]
      %v1834 = vld [vmem:[#allocation4 + $0xb0] sm:$0xff]
      %v1835 = vld [vmem:[#allocation4 + $0xb8] sm:$0xff]
      %v1836 = vld [vmem:[#allocation4 + $0xc0] sm:$0xff]
      %v1837 = vld [vmem:[#allocation4 + $0xc8] sm:$0xff]
      %v1838 = vld [vmem:[#allocation4 + $0xd0] sm:$0xff]
      %v1839 = vld [vmem:[#allocation4 + $0xd8] sm:$0xff]
      %v1840 = vld [vmem:[#allocation4 + $0xe0] sm:$0xff]
      %v1841 = vld [vmem:[#allocation4 + $0xe8] sm:$0xff]
      %v1842 = vld [vmem:[#allocation4 + $0xf0] sm:$0xff]
      %v1843 = vld [vmem:[#allocation4 + $0xf8] sm:$0xff]
      %v1844 = vld [vmem:[#allocation4 + $0x100] sm:$0xff]
      %v1845 = vld [vmem:[#allocation4 + $0x108] sm:$0xff]
      %v1846 = vld [vmem:[#allocation4 + $0x110] sm:$0xff]
      %v1847 = vld [vmem:[#allocation4 + $0x118] sm:$0xff]
      %s1848 = scalar_lea.vmem %s2, 6
      %v1849 = vld [vmem:[%s1848] sm:$0x3]
      %v1851 = vsel %vm361, %v1794, 0
      %v1854 = vsel %vm361, %v1795, 0
      %v1857 = vsel %vm361, %v1796, 0
      %v1860 = vsel %vm361, %v1797, 0
      %v1863 = vsel %vm361, %v1798, 0
      %v1866 = vsel %vm361, %v1799, 0
      %v1869 = vsel %vm361, %v1800, 0
      %v1872 = vsel %vm361, %v1801, 0
      %v1875 = vsel %vm361, %v1802, 0
      %v1878 = vsel %vm361, %v1803, 0
      %v1881 = vsel %vm361, %v1804, 0
      %v1884 = vsel %vm361, %v1805, 0
      %v1887 = vsel %vm361, %v1806, 0
      %v1890 = vsel %vm361, %v1807, 0
      %v1893 = vsel %vm361, %v1808, 0
      %v1896 = vsel %vm361, %v1809, 0
      %v1899 = vsel %vm361, %v1810, 0
      %v1902 = vsel %vm361, %v1811, 0
      %v1905 = vsel %vm709, %v1849, 0
      %1907 = vmatprep.subr.bf16.mxu0 0
      %1908 = vmatpush1.bf16.msra.mxu0 %v1905
      %1909 = vmatprep.subr.bf16.mxu0 0
      %1910 = vmatpush1.bf16.msra.mxu0 0
      %1911 = vmatprep.subr.bf16.mxu0 0
      %1912 = vmatpush1.bf16.msra.mxu0 0
      %1913 = vmatprep.subr.bf16.mxu0 0
      %1914 = vmatpush1.bf16.msra.mxu0 0
      %1915 = vmatprep.subr.bf16.mxu0 0
      %1916 = vmatpush1.bf16.msra.mxu0 0
      %1917 = vmatprep.subr.bf16.mxu0 0
      %1918 = vmatpush1.bf16.msra.mxu0 0
      %1919 = vmatprep.subr.bf16.mxu0 0
      %1920 = vmatpush1.bf16.msra.mxu0 0
      %1921 = vmatprep.subr.bf16.mxu0 0
      %1922 = vmatpush1.bf16.msra.mxu0 0
      %1923 = vmatprep.subr.bf16.mxu0 0
      %1924 = vmatpush1.bf16.msra.mxu0 0
      %1925 = vmatprep.subr.bf16.mxu0 0
      %1926 = vmatpush1.bf16.msra.mxu0 0
      %1927 = vmatprep.subr.bf16.mxu0 0
      %1928 = vmatpush1.bf16.msra.mxu0 0
      %1929 = vmatprep.subr.bf16.mxu0 0
      %1930 = vmatpush1.bf16.msra.mxu0 0
      %1931 = vmatprep.subr.bf16.mxu0 0
      %1932 = vmatpush1.bf16.msra.mxu0 0
      %1933 = vmatprep.subr.bf16.mxu0 0
      %1934 = vmatpush1.bf16.msra.mxu0 0
      %1935 = vmatprep.subr.bf16.mxu0 0
      %1936 = vmatpush1.bf16.msra.mxu0 0
      %1937 = vmatprep.subr.bf16.mxu0 0
      %1938 = vmatpush1.bf16.msra.mxu0 0
      %1939 = vmatprep.mubr.bf16.mxu0 0
      %1940 = vmatmul.mubr.bf16.gmra.mrb[0].mxu0 %v1851
      %v1941 = vpop.f32.mrb[0].mxu0
      %v1942 = vadd.f32 0.0, %v1941
      %v1943 = vpop.f32.mrb[0].mxu0
      %v1944 = vpop.f32.mrb[0].mxu0
      %v1945 = vadd.f32 0.0, %v1944
      %v1946 = vpop.f32.mrb[0].mxu0
      %1947 = vmatprep.mubr.bf16.mxu0 0
      %1948 = vmatmul.mubr.bf16.gmra.mrb[0].mxu0 %v1854
      %v1949 = vpop.f32.mrb[0].mxu0
      %v1950 = vadd.f32 0.0, %v1949
      %v1951 = vpop.f32.mrb[0].mxu0
      %v1952 = vpop.f32.mrb[0].mxu0
      %v1953 = vadd.f32 0.0, %v1952
      %v1954 = vpop.f32.mrb[0].mxu0
      %1955 = vmatprep.mubr.bf16.mxu0 0
      %1956 = vmatmul.mubr.bf16.gmra.mrb[0].mxu0 %v1857
      %v1957 = vpop.f32.mrb[0].mxu0
      %v1958 = vadd.f32 0.0, %v1957
      %v1959 = vpop.f32.mrb[0].mxu0
      %v1960 = vpop.f32.mrb[0].mxu0
      %v1961 = vadd.f32 0.0, %v1960
      %v1962 = vpop.f32.mrb[0].mxu0
      %1963 = vmatprep.mubr.bf16.mxu0 0
      %1964 = vmatmul.mubr.bf16.gmra.mrb[0].mxu0 %v1860
      %v1965 = vpop.f32.mrb[0].mxu0
      %v1966 = vadd.f32 0.0, %v1965
      %v1967 = vpop.f32.mrb[0].mxu0
      %v1968 = vpop.f32.mrb[0].mxu0
      %v1969 = vadd.f32 0.0, %v1968
      %v1970 = vpop.f32.mrb[0].mxu0
      %1971 = vmatprep.mubr.bf16.mxu0 0
      %1972 = vmatmul.mubr.bf16.gmra.mrb[0].mxu0 %v1863
      %v1973 = vpop.f32.mrb[0].mxu0
      %v1974 = vadd.f32 0.0, %v1973
      %v1975 = vpop.f32.mrb[0].mxu0
      %v1976 = vpop.f32.mrb[0].mxu0
      %v1977 = vadd.f32 0.0, %v1976
      %v1978 = vpop.f32.mrb[0].mxu0
      %1979 = vmatprep.mubr.bf16.mxu0 0
      %1980 = vmatmul.mubr.bf16.gmra.mrb[0].mxu0 %v1866
      %v1981 = vpop.f32.mrb[0].mxu0
      %v1982 = vadd.f32 0.0, %v1981
      %v1983 = vpop.f32.mrb[0].mxu0
      %v1984 = vpop.f32.mrb[0].mxu0
      %v1985 = vadd.f32 0.0, %v1984
      %v1986 = vpop.f32.mrb[0].mxu0
      %1987 = vmatprep.mubr.bf16.mxu0 0
      %1988 = vmatmul.mubr.bf16.gmra.mrb[0].mxu0 %v1869
      %v1989 = vpop.f32.mrb[0].mxu0
      %v1990 = vadd.f32 0.0, %v1989
      %v1991 = vpop.f32.mrb[0].mxu0
      %v1992 = vpop.f32.mrb[0].mxu0
      %v1993 = vadd.f32 0.0, %v1992
      %v1994 = vpop.f32.mrb[0].mxu0
      %1995 = vmatprep.mubr.bf16.mxu0 0
      %1996 = vmatmul.mubr.bf16.gmra.mrb[0].mxu0 %v1872
      %v1997 = vpop.f32.mrb[0].mxu0
      %v1998 = vadd.f32 0.0, %v1997
      %v1999 = vpop.f32.mrb[0].mxu0
      %v2000 = vpop.f32.mrb[0].mxu0
      %v2001 = vadd.f32 0.0, %v2000
      %v2002 = vpop.f32.mrb[0].mxu0
      %2003 = vmatprep.mubr.bf16.mxu0 0
      %2004 = vmatmul.mubr.bf16.gmra.mrb[0].mxu0 %v1875
      %v2005 = vpop.f32.mrb[0].mxu0
      %v2006 = vadd.f32 0.0, %v2005
      %v2007 = vpop.f32.mrb[0].mxu0
      %v2008 = vpop.f32.mrb[0].mxu0
      %v2009 = vadd.f32 0.0, %v2008
      %v2010 = vpop.f32.mrb[0].mxu0
      %2011 = vmatprep.mubr.bf16.mxu0 0
      %2012 = vmatmul.mubr.bf16.gmra.mrb[0].mxu0 %v1878
      %v2013 = vpop.f32.mrb[0].mxu0
      %v2014 = vadd.f32 0.0, %v2013
      %v2015 = vpop.f32.mrb[0].mxu0
      %v2016 = vpop.f32.mrb[0].mxu0
      %v2017 = vadd.f32 0.0, %v2016
      %v2018 = vpop.f32.mrb[0].mxu0
      %2019 = vmatprep.mubr.bf16.mxu0 0
      %2020 = vmatmul.mubr.bf16.gmra.mrb[0].mxu0 %v1881
      %v2021 = vpop.f32.mrb[0].mxu0
      %v2022 = vadd.f32 0.0, %v2021
      %v2023 = vpop.f32.mrb[0].mxu0
      %v2024 = vpop.f32.mrb[0].mxu0
      %v2025 = vadd.f32 0.0, %v2024
      %v2026 = vpop.f32.mrb[0].mxu0
      %2027 = vmatprep.mubr.bf16.mxu0 0
      %2028 = vmatmul.mubr.bf16.gmra.mrb[0].mxu0 %v1884
      %v2029 = vpop.f32.mrb[0].mxu0
      %v2030 = vadd.f32 0.0, %v2029
      %v2031 = vpop.f32.mrb[0].mxu0
      %v2032 = vpop.f32.mrb[0].mxu0
      %v2033 = vadd.f32 0.0, %v2032
      %v2034 = vpop.f32.mrb[0].mxu0
      %2035 = vmatprep.mubr.bf16.mxu0 0
      %2036 = vmatmul.mubr.bf16.gmra.mrb[0].mxu0 %v1887
      %v2037 = vpop.f32.mrb[0].mxu0
      %v2038 = vadd.f32 0.0, %v2037
      %v2039 = vpop.f32.mrb[0].mxu0
      %v2040 = vpop.f32.mrb[0].mxu0
      %v2041 = vadd.f32 0.0, %v2040
      %v2042 = vpop.f32.mrb[0].mxu0
      %2043 = vmatprep.mubr.bf16.mxu0 0
      %2044 = vmatmul.mubr.bf16.gmra.mrb[0].mxu0 %v1890
      %v2045 = vpop.f32.mrb[0].mxu0
      %v2046 = vadd.f32 0.0, %v2045
      %v2047 = vpop.f32.mrb[0].mxu0
      %v2048 = vpop.f32.mrb[0].mxu0
      %v2049 = vadd.f32 0.0, %v2048
      %v2050 = vpop.f32.mrb[0].mxu0
      %2051 = vmatprep.mubr.bf16.mxu0 0
      %2052 = vmatmul.mubr.bf16.gmra.mrb[0].mxu0 %v1893
      %v2053 = vpop.f32.mrb[0].mxu0
      %v2054 = vadd.f32 0.0, %v2053
      %v2055 = vpop.f32.mrb[0].mxu0
      %v2056 = vpop.f32.mrb[0].mxu0
      %v2057 = vadd.f32 0.0, %v2056
      %v2058 = vpop.f32.mrb[0].mxu0
      %2059 = vmatprep.mubr.bf16.mxu0 0
      %2060 = vmatmul.mubr.bf16.gmra.mrb[0].mxu0 %v1896
      %v2061 = vpop.f32.mrb[0].mxu0
      %v2062 = vadd.f32 0.0, %v2061
      %v2063 = vpop.f32.mrb[0].mxu0
      %v2064 = vpop.f32.mrb[0].mxu0
      %v2065 = vadd.f32 0.0, %v2064
      %v2066 = vpop.f32.mrb[0].mxu0
      %2067 = vmatprep.mubr.bf16.mxu0 0
      %2068 = vmatmul.mubr.bf16.gmra.mrb[0].mxu0 %v1899
      %v2069 = vpop.f32.mrb[0].mxu0
      %v2070 = vadd.f32 0.0, %v2069
      %v2071 = vpop.f32.mrb[0].mxu0
      %v2072 = vpop.f32.mrb[0].mxu0
      %v2073 = vadd.f32 0.0, %v2072
      %v2074 = vpop.f32.mrb[0].mxu0
      %2075 = vmatprep.mubr.bf16.mxu0 0
      %2076 = vmatmul.mubr.bf16.gmra.mrb[0].mxu0 %v1902
      %v2077 = vpop.f32.mrb[0].mxu0
      %v2078 = vadd.f32 0.0, %v2077
      %v2079 = vpop.f32.mrb[0].mxu0
      %v2080 = vpop.f32.mrb[0].mxu0
      %v2081 = vadd.f32 0.0, %v2080
      %v2082 = vpop.f32.mrb[0].mxu0
      %2083 = vdwg.mxu0
      %v2084 = vadd.f32 %v1812, %v1942
      %v2085 = vadd.f32 %v1813, %v1945
      %v2086 = vadd.f32 %v1814, %v1950
      %v2087 = vadd.f32 %v1815, %v1953
      %v2088 = vadd.f32 %v1816, %v1958
      %v2089 = vadd.f32 %v1817, %v1961
      %v2090 = vadd.f32 %v1818, %v1966
      %v2091 = vadd.f32 %v1819, %v1969
      %v2092 = vadd.f32 %v1820, %v1974
      %v2093 = vadd.f32 %v1821, %v1977
      %v2094 = vadd.f32 %v1822, %v1982
      %v2095 = vadd.f32 %v1823, %v1985
      %v2096 = vadd.f32 %v1824, %v1990
      %v2097 = vadd.f32 %v1825, %v1993
      %v2098 = vadd.f32 %v1826, %v1998
      %v2099 = vadd.f32 %v1827, %v2001
      %v2100 = vadd.f32 %v1828, %v2006
      %v2101 = vadd.f32 %v1829, %v2009
      %v2102 = vadd.f32 %v1830, %v2014
      %v2103 = vadd.f32 %v1831, %v2017
      %v2104 = vadd.f32 %v1832, %v2022
      %v2105 = vadd.f32 %v1833, %v2025
      %v2106 = vadd.f32 %v1834, %v2030
      %v2107 = vadd.f32 %v1835, %v2033
      %v2108 = vadd.f32 %v1836, %v2038
      %v2109 = vadd.f32 %v1837, %v2041
      %v2110 = vadd.f32 %v1838, %v2046
      %v2111 = vadd.f32 %v1839, %v2049
      %v2112 = vadd.f32 %v1840, %v2054
      %v2113 = vadd.f32 %v1841, %v2057
      %v2114 = vadd.f32 %v1842, %v2062
      %v2115 = vadd.f32 %v1843, %v2065
      %v2116 = vadd.f32 %v1844, %v2070
      %v2117 = vadd.f32 %v1845, %v2073
      %v2118 = vadd.f32 %v1846, %v2078
      %v2119 = vadd.f32 %v1847, %v2081
      %2120 = vst.msk [vmem:[#allocation4] sm:$0xff] %vm361, %v2084
      %2121 = vst.msk [vmem:[#allocation4 + $0x8] sm:$0xff] %vm361, %v2085
      %2122 = vst.msk [vmem:[#allocation4 + $0x10] sm:$0xff] %vm361, %v2086
      %2123 = vst.msk [vmem:[#allocation4 + $0x18] sm:$0xff] %vm361, %v2087
      %2124 = vst.msk [vmem:[#allocation4 + $0x20] sm:$0xff] %vm361, %v2088
      %2125 = vst.msk [vmem:[#allocation4 + $0x28] sm:$0xff] %vm361, %v2089
      %2126 = vst.msk [vmem:[#allocation4 + $0x30] sm:$0xff] %vm361, %v2090
      %2127 = vst.msk [vmem:[#allocation4 + $0x38] sm:$0xff] %vm361, %v2091
      %2128 = vst.msk [vmem:[#allocation4 + $0x40] sm:$0xff] %vm361, %v2092
      %2129 = vst.msk [vmem:[#allocation4 + $0x48] sm:$0xff] %vm361, %v2093
      %2130 = vst.msk [vmem:[#allocation4 + $0x50] sm:$0xff] %vm361, %v2094
      %2131 = vst.msk [vmem:[#allocation4 + $0x58] sm:$0xff] %vm361, %v2095
      %2132 = vst.msk [vmem:[#allocation4 + $0x60] sm:$0xff] %vm361, %v2096
      %2133 = vst.msk [vmem:[#allocation4 + $0x68] sm:$0xff] %vm361, %v2097
      %2134 = vst.msk [vmem:[#allocation4 + $0x70] sm:$0xff] %vm361, %v2098
      %2135 = vst.msk [vmem:[#allocation4 + $0x78] sm:$0xff] %vm361, %v2099
      %2136 = vst.msk [vmem:[#allocation4 + $0x80] sm:$0xff] %vm361, %v2100
      %2137 = vst.msk [vmem:[#allocation4 + $0x88] sm:$0xff] %vm361, %v2101
      %2138 = vst.msk [vmem:[#allocation4 + $0x90] sm:$0xff] %vm361, %v2102
      %2139 = vst.msk [vmem:[#allocation4 + $0x98] sm:$0xff] %vm361, %v2103
      %2140 = vst.msk [vmem:[#allocation4 + $0xa0] sm:$0xff] %vm361, %v2104
      %2141 = vst.msk [vmem:[#allocation4 + $0xa8] sm:$0xff] %vm361, %v2105
      %2142 = vst.msk [vmem:[#allocation4 + $0xb0] sm:$0xff] %vm361, %v2106
      %2143 = vst.msk [vmem:[#allocation4 + $0xb8] sm:$0xff] %vm361, %v2107
      %2144 = vst.msk [vmem:[#allocation4 + $0xc0] sm:$0xff] %vm361, %v2108
      %2145 = vst.msk [vmem:[#allocation4 + $0xc8] sm:$0xff] %vm361, %v2109
      %2146 = vst.msk [vmem:[#allocation4 + $0xd0] sm:$0xff] %vm361, %v2110
      %2147 = vst.msk [vmem:[#allocation4 + $0xd8] sm:$0xff] %vm361, %v2111
      %2148 = vst.msk [vmem:[#allocation4 + $0xe0] sm:$0xff] %vm361, %v2112
      %2149 = vst.msk [vmem:[#allocation4 + $0xe8] sm:$0xff] %vm361, %v2113
      %2150 = vst.msk [vmem:[#allocation4 + $0xf0] sm:$0xff] %vm361, %v2114
      %2151 = vst.msk [vmem:[#allocation4 + $0xf8] sm:$0xff] %vm361, %v2115
      %2152 = vst.msk [vmem:[#allocation4 + $0x100] sm:$0xff] %vm361, %v2116
      %2153 = vst.msk [vmem:[#allocation4 + $0x108] sm:$0xff] %vm361, %v2117
      %2154 = vst.msk [vmem:[#allocation4 + $0x110] sm:$0xff] %vm361, %v2118
      %2155 = vst.msk [vmem:[#allocation4 + $0x118] sm:$0xff] %vm361, %v2119
      %v2156 = vld [vmem:[#allocation2 + $0x13] sm:$0xff]
      %v2157 = vld [vmem:[#allocation2 + $0x1b] sm:$0xff]
      %v2158 = vld [vmem:[#allocation2 + $0x23] sm:$0xff]
      %v2159 = vld [vmem:[#allocation2 + $0x2b] sm:$0xff]
      %v2160 = vld [vmem:[#allocation2 + $0x33] sm:$0xff]
      %v2161 = vld [vmem:[#allocation2 + $0x3b] sm:$0xff]
      %v2162 = vld [vmem:[#allocation2 + $0x43] sm:$0xff]
      %v2163 = vld [vmem:[#allocation2 + $0x4b] sm:$0xff]
      %v2164 = vld [vmem:[#allocation2 + $0x53] sm:$0xff]
      %v2165 = vld [vmem:[#allocation2 + $0x5b] sm:$0xff]
      %v2166 = vld [vmem:[#allocation2 + $0x63] sm:$0xff]
      %v2167 = vld [vmem:[#allocation2 + $0x6b] sm:$0xff]
      %v2168 = vld [vmem:[#allocation2 + $0x73] sm:$0xff]
      %v2169 = vld [vmem:[#allocation2 + $0x7b] sm:$0xff]
      %v2170 = vld [vmem:[#allocation2 + $0x83] sm:$0xff]
      %v2171 = vld [vmem:[#allocation2 + $0x8b] sm:$0xff]
      %v2172 = vld [vmem:[#allocation2 + $0x93] sm:$0xff]
      %v2173 = vld [vmem:[#allocation2 + $0x9b] sm:$0xff]
      %v2174 = vld [vmem:[#allocation2 + $0xa3] sm:$0xff]
      %v2175 = vld [vmem:[#allocation2 + $0xab] sm:$0xff]
      %v2176 = vld [vmem:[#allocation2 + $0xb3] sm:$0xff]
      %v2177 = vld [vmem:[#allocation2 + $0xbb] sm:$0xff]
      %v2178 = vld [vmem:[#allocation2 + $0xc3] sm:$0xff]
      %v2179 = vld [vmem:[#allocation2 + $0xcb] sm:$0xff]
      %v2180 = vld [vmem:[#allocation2 + $0xd3] sm:$0xff]
      %v2181 = vld [vmem:[#allocation2 + $0xdb] sm:$0xff]
      %v2182 = vld [vmem:[#allocation2 + $0xe3] sm:$0xff]
      %v2183 = vld [vmem:[#allocation2 + $0xeb] sm:$0xff]
      %v2184 = vld [vmem:[#allocation2 + $0xf3] sm:$0xff]
      %v2185 = vld [vmem:[#allocation2 + $0xfb] sm:$0xff]
      %v2186 = vld [vmem:[#allocation2 + $0x103] sm:$0xff]
      %v2187 = vld [vmem:[#allocation2 + $0x10b] sm:$0xff]
      %v2188 = vld [vmem:[#allocation2 + $0x113] sm:$0xff]
      %v2189 = vld [vmem:[#allocation2 + $0x11b] sm:$0xff]
      %v2190 = vld [vmem:[#allocation2 + $0x123] sm:$0xff]
      %v2191 = vld [vmem:[#allocation2 + $0x12b] sm:$0xff]
      %v2192 = vpack.c.bf16 %v2157, %v2156
      %v2193 = vpack.c.bf16 %v2159, %v2158
      %v2194 = vpack.c.bf16 %v2161, %v2160
      %v2195 = vpack.c.bf16 %v2163, %v2162
      %v2196 = vpack.c.bf16 %v2165, %v2164
      %v2197 = vpack.c.bf16 %v2167, %v2166
      %v2198 = vpack.c.bf16 %v2169, %v2168
      %v2199 = vpack.c.bf16 %v2171, %v2170
      %v2200 = vpack.c.bf16 %v2173, %v2172
      %v2201 = vpack.c.bf16 %v2175, %v2174
      %v2202 = vpack.c.bf16 %v2177, %v2176
      %v2203 = vpack.c.bf16 %v2179, %v2178
      %v2204 = vpack.c.bf16 %v2181, %v2180
      %v2205 = vpack.c.bf16 %v2183, %v2182
      %v2206 = vpack.c.bf16 %v2185, %v2184
      %v2207 = vpack.c.bf16 %v2187, %v2186
      %v2208 = vpack.c.bf16 %v2189, %v2188
      %v2209 = vpack.c.bf16 %v2191, %v2190
      %v2210 = vld [vmem:[#allocation4] sm:$0xff]
      %v2211 = vld [vmem:[#allocation4 + $0x8] sm:$0xff]
      %v2212 = vld [vmem:[#allocation4 + $0x10] sm:$0xff]
      %v2213 = vld [vmem:[#allocation4 + $0x18] sm:$0xff]
      %v2214 = vld [vmem:[#allocation4 + $0x20] sm:$0xff]
      %v2215 = vld [vmem:[#allocation4 + $0x28] sm:$0xff]
      %v2216 = vld [vmem:[#allocation4 + $0x30] sm:$0xff]
      %v2217 = vld [vmem:[#allocation4 + $0x38] sm:$0xff]
      %v2218 = vld [vmem:[#allocation4 + $0x40] sm:$0xff]
      %v2219 = vld [vmem:[#allocation4 + $0x48] sm:$0xff]
      %v2220 = vld [vmem:[#allocation4 + $0x50] sm:$0xff]
      %v2221 = vld [vmem:[#allocation4 + $0x58] sm:$0xff]
      %v2222 = vld [vmem:[#allocation4 + $0x60] sm:$0xff]
      %v2223 = vld [vmem:[#allocation4 + $0x68] sm:$0xff]
      %v2224 = vld [vmem:[#allocation4 + $0x70] sm:$0xff]
      %v2225 = vld [vmem:[#allocation4 + $0x78] sm:$0xff]
      %v2226 = vld [vmem:[#allocation4 + $0x80] sm:$0xff]
      %v2227 = vld [vmem:[#allocation4 + $0x88] sm:$0xff]
      %v2228 = vld [vmem:[#allocation4 + $0x90] sm:$0xff]
      %v2229 = vld [vmem:[#allocation4 + $0x98] sm:$0xff]
      %v2230 = vld [vmem:[#allocation4 + $0xa0] sm:$0xff]
      %v2231 = vld [vmem:[#allocation4 + $0xa8] sm:$0xff]
      %v2232 = vld [vmem:[#allocation4 + $0xb0] sm:$0xff]
      %v2233 = vld [vmem:[#allocation4 + $0xb8] sm:$0xff]
      %v2234 = vld [vmem:[#allocation4 + $0xc0] sm:$0xff]
      %v2235 = vld [vmem:[#allocation4 + $0xc8] sm:$0xff]
      %v2236 = vld [vmem:[#allocation4 + $0xd0] sm:$0xff]
      %v2237 = vld [vmem:[#allocation4 + $0xd8] sm:$0xff]
      %v2238 = vld [vmem:[#allocation4 + $0xe0] sm:$0xff]
      %v2239 = vld [vmem:[#allocation4 + $0xe8] sm:$0xff]
      %v2240 = vld [vmem:[#allocation4 + $0xf0] sm:$0xff]
      %v2241 = vld [vmem:[#allocation4 + $0xf8] sm:$0xff]
      %v2242 = vld [vmem:[#allocation4 + $0x100] sm:$0xff]
      %v2243 = vld [vmem:[#allocation4 + $0x108] sm:$0xff]
      %v2244 = vld [vmem:[#allocation4 + $0x110] sm:$0xff]
      %v2245 = vld [vmem:[#allocation4 + $0x118] sm:$0xff]
      %s2246 = scalar_lea.vmem %s2, 8
      %v2247 = vld [vmem:[%s2246] sm:$0x3]
      %v2249 = vsel %vm361, %v2192, 0
      %v2252 = vsel %vm361, %v2193, 0
      %v2255 = vsel %vm361, %v2194, 0
      %v2258 = vsel %vm361, %v2195, 0
      %v2261 = vsel %vm361, %v2196, 0
      %v2264 = vsel %vm361, %v2197, 0
      %v2267 = vsel %vm361, %v2198, 0
      %v2270 = vsel %vm361, %v2199, 0
      %v2273 = vsel %vm361, %v2200, 0
      %v2276 = vsel %vm361, %v2201, 0
      %v2279 = vsel %vm361, %v2202, 0
      %v2282 = vsel %vm361, %v2203, 0
      %v2285 = vsel %vm361, %v2204, 0
      %v2288 = vsel %vm361, %v2205, 0
      %v2291 = vsel %vm361, %v2206, 0
      %v2294 = vsel %vm361, %v2207, 0
      %v2297 = vsel %vm361, %v2208, 0
      %v2300 = vsel %vm361, %v2209, 0
      %v2303 = vsel %vm709, %v2247, 0
      %2305 = vmatprep.subr.bf16.mxu0 0
      %2306 = vmatpush1.bf16.msra.mxu0 %v2303
      %2307 = vmatprep.subr.bf16.mxu0 0
      %2308 = vmatpush1.bf16.msra.mxu0 0
      %2309 = vmatprep.subr.bf16.mxu0 0
      %2310 = vmatpush1.bf16.msra.mxu0 0
      %2311 = vmatprep.subr.bf16.mxu0 0
      %2312 = vmatpush1.bf16.msra.mxu0 0
      %2313 = vmatprep.subr.bf16.mxu0 0
      %2314 = vmatpush1.bf16.msra.mxu0 0
      %2315 = vmatprep.subr.bf16.mxu0 0
      %2316 = vmatpush1.bf16.msra.mxu0 0
      %2317 = vmatprep.subr.bf16.mxu0 0
      %2318 = vmatpush1.bf16.msra.mxu0 0
      %2319 = vmatprep.subr.bf16.mxu0 0
      %2320 = vmatpush1.bf16.msra.mxu0 0
      %2321 = vmatprep.subr.bf16.mxu0 0
      %2322 = vmatpush1.bf16.msra.mxu0 0
      %2323 = vmatprep.subr.bf16.mxu0 0
      %2324 = vmatpush1.bf16.msra.mxu0 0
      %2325 = vmatprep.subr.bf16.mxu0 0
      %2326 = vmatpush1.bf16.msra.mxu0 0
      %2327 = vmatprep.subr.bf16.mxu0 0
      %2328 = vmatpush1.bf16.msra.mxu0 0
      %2329 = vmatprep.subr.bf16.mxu0 0
      %2330 = vmatpush1.bf16.msra.mxu0 0
      %2331 = vmatprep.subr.bf16.mxu0 0
      %2332 = vmatpush1.bf16.msra.mxu0 0
      %2333 = vmatprep.subr.bf16.mxu0 0
      %2334 = vmatpush1.bf16.msra.mxu0 0
      %2335 = vmatprep.subr.bf16.mxu0 0
      %2336 = vmatpush1.bf16.msra.mxu0 0
      %2337 = vmatprep.mubr.bf16.mxu0 0
      %2338 = vmatmul.mubr.bf16.gmra.mrb[0].mxu0 %v2249
      %v2339 = vpop.f32.mrb[0].mxu0
      %v2340 = vadd.f32 0.0, %v2339
      %v2341 = vpop.f32.mrb[0].mxu0
      %v2342 = vpop.f32.mrb[0].mxu0
      %v2343 = vadd.f32 0.0, %v2342
      %v2344 = vpop.f32.mrb[0].mxu0
      %2345 = vmatprep.mubr.bf16.mxu0 0
      %2346 = vmatmul.mubr.bf16.gmra.mrb[0].mxu0 %v2252
      %v2347 = vpop.f32.mrb[0].mxu0
      %v2348 = vadd.f32 0.0, %v2347
      %v2349 = vpop.f32.mrb[0].mxu0
      %v2350 = vpop.f32.mrb[0].mxu0
      %v2351 = vadd.f32 0.0, %v2350
      %v2352 = vpop.f32.mrb[0].mxu0
      %2353 = vmatprep.mubr.bf16.mxu0 0
      %2354 = vmatmul.mubr.bf16.gmra.mrb[0].mxu0 %v2255
      %v2355 = vpop.f32.mrb[0].mxu0
      %v2356 = vadd.f32 0.0, %v2355
      %v2357 = vpop.f32.mrb[0].mxu0
      %v2358 = vpop.f32.mrb[0].mxu0
      %v2359 = vadd.f32 0.0, %v2358
      %v2360 = vpop.f32.mrb[0].mxu0
      %2361 = vmatprep.mubr.bf16.mxu0 0
      %2362 = vmatmul.mubr.bf16.gmra.mrb[0].mxu0 %v2258
      %v2363 = vpop.f32.mrb[0].mxu0
      %v2364 = vadd.f32 0.0, %v2363
      %v2365 = vpop.f32.mrb[0].mxu0
      %v2366 = vpop.f32.mrb[0].mxu0
      %v2367 = vadd.f32 0.0, %v2366
      %v2368 = vpop.f32.mrb[0].mxu0
      %2369 = vmatprep.mubr.bf16.mxu0 0
      %2370 = vmatmul.mubr.bf16.gmra.mrb[0].mxu0 %v2261
      %v2371 = vpop.f32.mrb[0].mxu0
      %v2372 = vadd.f32 0.0, %v2371
      %v2373 = vpop.f32.mrb[0].mxu0
      %v2374 = vpop.f32.mrb[0].mxu0
      %v2375 = vadd.f32 0.0, %v2374
      %v2376 = vpop.f32.mrb[0].mxu0
      %2377 = vmatprep.mubr.bf16.mxu0 0
      %2378 = vmatmul.mubr.bf16.gmra.mrb[0].mxu0 %v2264
      %v2379 = vpop.f32.mrb[0].mxu0
      %v2380 = vadd.f32 0.0, %v2379
      %v2381 = vpop.f32.mrb[0].mxu0
      %v2382 = vpop.f32.mrb[0].mxu0
      %v2383 = vadd.f32 0.0, %v2382
      %v2384 = vpop.f32.mrb[0].mxu0
      %2385 = vmatprep.mubr.bf16.mxu0 0
      %2386 = vmatmul.mubr.bf16.gmra.mrb[0].mxu0 %v2267
      %v2387 = vpop.f32.mrb[0].mxu0
      %v2388 = vadd.f32 0.0, %v2387
      %v2389 = vpop.f32.mrb[0].mxu0
      %v2390 = vpop.f32.mrb[0].mxu0
      %v2391 = vadd.f32 0.0, %v2390
      %v2392 = vpop.f32.mrb[0].mxu0
      %2393 = vmatprep.mubr.bf16.mxu0 0
      %2394 = vmatmul.mubr.bf16.gmra.mrb[0].mxu0 %v2270
      %v2395 = vpop.f32.mrb[0].mxu0
      %v2396 = vadd.f32 0.0, %v2395
      %v2397 = vpop.f32.mrb[0].mxu0
      %v2398 = vpop.f32.mrb[0].mxu0
      %v2399 = vadd.f32 0.0, %v2398
      %v2400 = vpop.f32.mrb[0].mxu0
      %2401 = vmatprep.mubr.bf16.mxu0 0
      %2402 = vmatmul.mubr.bf16.gmra.mrb[0].mxu0 %v2273
      %v2403 = vpop.f32.mrb[0].mxu0
      %v2404 = vadd.f32 0.0, %v2403
      %v2405 = vpop.f32.mrb[0].mxu0
      %v2406 = vpop.f32.mrb[0].mxu0
      %v2407 = vadd.f32 0.0, %v2406
      %v2408 = vpop.f32.mrb[0].mxu0
      %2409 = vmatprep.mubr.bf16.mxu0 0
      %2410 = vmatmul.mubr.bf16.gmra.mrb[0].mxu0 %v2276
      %v2411 = vpop.f32.mrb[0].mxu0
      %v2412 = vadd.f32 0.0, %v2411
      %v2413 = vpop.f32.mrb[0].mxu0
      %v2414 = vpop.f32.mrb[0].mxu0
      %v2415 = vadd.f32 0.0, %v2414
      %v2416 = vpop.f32.mrb[0].mxu0
      %2417 = vmatprep.mubr.bf16.mxu0 0
      %2418 = vmatmul.mubr.bf16.gmra.mrb[0].mxu0 %v2279
      %v2419 = vpop.f32.mrb[0].mxu0
      %v2420 = vadd.f32 0.0, %v2419
      %v2421 = vpop.f32.mrb[0].mxu0
      %v2422 = vpop.f32.mrb[0].mxu0
      %v2423 = vadd.f32 0.0, %v2422
      %v2424 = vpop.f32.mrb[0].mxu0
      %2425 = vmatprep.mubr.bf16.mxu0 0
      %2426 = vmatmul.mubr.bf16.gmra.mrb[0].mxu0 %v2282
      %v2427 = vpop.f32.mrb[0].mxu0
      %v2428 = vadd.f32 0.0, %v2427
      %v2429 = vpop.f32.mrb[0].mxu0
      %v2430 = vpop.f32.mrb[0].mxu0
      %v2431 = vadd.f32 0.0, %v2430
      %v2432 = vpop.f32.mrb[0].mxu0
      %2433 = vmatprep.mubr.bf16.mxu0 0
      %2434 = vmatmul.mubr.bf16.gmra.mrb[0].mxu0 %v2285
      %v2435 = vpop.f32.mrb[0].mxu0
      %v2436 = vadd.f32 0.0, %v2435
      %v2437 = vpop.f32.mrb[0].mxu0
      %v2438 = vpop.f32.mrb[0].mxu0
      %v2439 = vadd.f32 0.0, %v2438
      %v2440 = vpop.f32.mrb[0].mxu0
      %2441 = vmatprep.mubr.bf16.mxu0 0
      %2442 = vmatmul.mubr.bf16.gmra.mrb[0].mxu0 %v2288
      %v2443 = vpop.f32.mrb[0].mxu0
      %v2444 = vadd.f32 0.0, %v2443
      %v2445 = vpop.f32.mrb[0].mxu0
      %v2446 = vpop.f32.mrb[0].mxu0
      %v2447 = vadd.f32 0.0, %v2446
      %v2448 = vpop.f32.mrb[0].mxu0
      %2449 = vmatprep.mubr.bf16.mxu0 0
      %2450 = vmatmul.mubr.bf16.gmra.mrb[0].mxu0 %v2291
      %v2451 = vpop.f32.mrb[0].mxu0
      %v2452 = vadd.f32 0.0, %v2451
      %v2453 = vpop.f32.mrb[0].mxu0
      %v2454 = vpop.f32.mrb[0].mxu0
      %v2455 = vadd.f32 0.0, %v2454
      %v2456 = vpop.f32.mrb[0].mxu0
      %2457 = vmatprep.mubr.bf16.mxu0 0
      %2458 = vmatmul.mubr.bf16.gmra.mrb[0].mxu0 %v2294
      %v2459 = vpop.f32.mrb[0].mxu0
      %v2460 = vadd.f32 0.0, %v2459
      %v2461 = vpop.f32.mrb[0].mxu0
      %v2462 = vpop.f32.mrb[0].mxu0
      %v2463 = vadd.f32 0.0, %v2462
      %v2464 = vpop.f32.mrb[0].mxu0
      %2465 = vmatprep.mubr.bf16.mxu0 0
      %2466 = vmatmul.mubr.bf16.gmra.mrb[0].mxu0 %v2297
      %v2467 = vpop.f32.mrb[0].mxu0
      %v2468 = vadd.f32 0.0, %v2467
      %v2469 = vpop.f32.mrb[0].mxu0
      %v2470 = vpop.f32.mrb[0].mxu0
      %v2471 = vadd.f32 0.0, %v2470
      %v2472 = vpop.f32.mrb[0].mxu0
      %2473 = vmatprep.mubr.bf16.mxu0 0
      %2474 = vmatmul.mubr.bf16.gmra.mrb[0].mxu0 %v2300
      %v2475 = vpop.f32.mrb[0].mxu0
      %v2476 = vadd.f32 0.0, %v2475
      %v2477 = vpop.f32.mrb[0].mxu0
      %v2478 = vpop.f32.mrb[0].mxu0
      %v2479 = vadd.f32 0.0, %v2478
      %v2480 = vpop.f32.mrb[0].mxu0
      %2481 = vdwg.mxu0
      %v2482 = vadd.f32 %v2210, %v2340
      %v2483 = vadd.f32 %v2211, %v2343
      %v2484 = vadd.f32 %v2212, %v2348
      %v2485 = vadd.f32 %v2213, %v2351
      %v2486 = vadd.f32 %v2214, %v2356
      %v2487 = vadd.f32 %v2215, %v2359
      %v2488 = vadd.f32 %v2216, %v2364
      %v2489 = vadd.f32 %v2217, %v2367
      %v2490 = vadd.f32 %v2218, %v2372
      %v2491 = vadd.f32 %v2219, %v2375
      %v2492 = vadd.f32 %v2220, %v2380
      %v2493 = vadd.f32 %v2221, %v2383
      %v2494 = vadd.f32 %v2222, %v2388
      %v2495 = vadd.f32 %v2223, %v2391
      %v2496 = vadd.f32 %v2224, %v2396
      %v2497 = vadd.f32 %v2225, %v2399
      %v2498 = vadd.f32 %v2226, %v2404
      %v2499 = vadd.f32 %v2227, %v2407
      %v2500 = vadd.f32 %v2228, %v2412
      %v2501 = vadd.f32 %v2229, %v2415
      %v2502 = vadd.f32 %v2230, %v2420
      %v2503 = vadd.f32 %v2231, %v2423
      %v2504 = vadd.f32 %v2232, %v2428
      %v2505 = vadd.f32 %v2233, %v2431
      %v2506 = vadd.f32 %v2234, %v2436
      %v2507 = vadd.f32 %v2235, %v2439
      %v2508 = vadd.f32 %v2236, %v2444
      %v2509 = vadd.f32 %v2237, %v2447
      %v2510 = vadd.f32 %v2238, %v2452
      %v2511 = vadd.f32 %v2239, %v2455
      %v2512 = vadd.f32 %v2240, %v2460
      %v2513 = vadd.f32 %v2241, %v2463
      %v2514 = vadd.f32 %v2242, %v2468
      %v2515 = vadd.f32 %v2243, %v2471
      %v2516 = vadd.f32 %v2244, %v2476
      %v2517 = vadd.f32 %v2245, %v2479
      %2518 = vst.msk [vmem:[#allocation4] sm:$0xff] %vm361, %v2482
      %2519 = vst.msk [vmem:[#allocation4 + $0x8] sm:$0xff] %vm361, %v2483
      %2520 = vst.msk [vmem:[#allocation4 + $0x10] sm:$0xff] %vm361, %v2484
      %2521 = vst.msk [vmem:[#allocation4 + $0x18] sm:$0xff] %vm361, %v2485
      %2522 = vst.msk [vmem:[#allocation4 + $0x20] sm:$0xff] %vm361, %v2486
      %2523 = vst.msk [vmem:[#allocation4 + $0x28] sm:$0xff] %vm361, %v2487
      %2524 = vst.msk [vmem:[#allocation4 + $0x30] sm:$0xff] %vm361, %v2488
      %2525 = vst.msk [vmem:[#allocation4 + $0x38] sm:$0xff] %vm361, %v2489
      %2526 = vst.msk [vmem:[#allocation4 + $0x40] sm:$0xff] %vm361, %v2490
      %2527 = vst.msk [vmem:[#allocation4 + $0x48] sm:$0xff] %vm361, %v2491
      %2528 = vst.msk [vmem:[#allocation4 + $0x50] sm:$0xff] %vm361, %v2492
      %2529 = vst.msk [vmem:[#allocation4 + $0x58] sm:$0xff] %vm361, %v2493
      %2530 = vst.msk [vmem:[#allocation4 + $0x60] sm:$0xff] %vm361, %v2494
      %2531 = vst.msk [vmem:[#allocation4 + $0x68] sm:$0xff] %vm361, %v2495
      %2532 = vst.msk [vmem:[#allocation4 + $0x70] sm:$0xff] %vm361, %v2496
      %2533 = vst.msk [vmem:[#allocation4 + $0x78] sm:$0xff] %vm361, %v2497
      %2534 = vst.msk [vmem:[#allocation4 + $0x80] sm:$0xff] %vm361, %v2498
      %2535 = vst.msk [vmem:[#allocation4 + $0x88] sm:$0xff] %vm361, %v2499
      %2536 = vst.msk [vmem:[#allocation4 + $0x90] sm:$0xff] %vm361, %v2500
      %2537 = vst.msk [vmem:[#allocation4 + $0x98] sm:$0xff] %vm361, %v2501
      %2538 = vst.msk [vmem:[#allocation4 + $0xa0] sm:$0xff] %vm361, %v2502
      %2539 = vst.msk [vmem:[#allocation4 + $0xa8] sm:$0xff] %vm361, %v2503
      %2540 = vst.msk [vmem:[#allocation4 + $0xb0] sm:$0xff] %vm361, %v2504
      %2541 = vst.msk [vmem:[#allocation4 + $0xb8] sm:$0xff] %vm361, %v2505
      %2542 = vst.msk [vmem:[#allocation4 + $0xc0] sm:$0xff] %vm361, %v2506
      %2543 = vst.msk [vmem:[#allocation4 + $0xc8] sm:$0xff] %vm361, %v2507
      %2544 = vst.msk [vmem:[#allocation4 + $0xd0] sm:$0xff] %vm361, %v2508
      %2545 = vst.msk [vmem:[#allocation4 + $0xd8] sm:$0xff] %vm361, %v2509
      %2546 = vst.msk [vmem:[#allocation4 + $0xe0] sm:$0xff] %vm361, %v2510
      %2547 = vst.msk [vmem:[#allocation4 + $0xe8] sm:$0xff] %vm361, %v2511
      %2548 = vst.msk [vmem:[#allocation4 + $0xf0] sm:$0xff] %vm361, %v2512
      %2549 = vst.msk [vmem:[#allocation4 + $0xf8] sm:$0xff] %vm361, %v2513
      %2550 = vst.msk [vmem:[#allocation4 + $0x100] sm:$0xff] %vm361, %v2514
      %2551 = vst.msk [vmem:[#allocation4 + $0x108] sm:$0xff] %vm361, %v2515
      %2552 = vst.msk [vmem:[#allocation4 + $0x110] sm:$0xff] %vm361, %v2516
      %2553 = vst.msk [vmem:[#allocation4 + $0x118] sm:$0xff] %vm361, %v2517
      %v2554 = vld [vmem:[#allocation2 + $0x14] sm:$0xff]
      %v2555 = vld [vmem:[#allocation2 + $0x1c] sm:$0xff]
      %v2556 = vld [vmem:[#allocation2 + $0x24] sm:$0xff]
      %v2557 = vld [vmem:[#allocation2 + $0x2c] sm:$0xff]
      %v2558 = vld [vmem:[#allocation2 + $0x34] sm:$0xff]
      %v2559 = vld [vmem:[#allocation2 + $0x3c] sm:$0xff]
      %v2560 = vld [vmem:[#allocation2 + $0x44] sm:$0xff]
      %v2561 = vld [vmem:[#allocation2 + $0x4c] sm:$0xff]
      %v2562 = vld [vmem:[#allocation2 + $0x54] sm:$0xff]
      %v2563 = vld [vmem:[#allocation2 + $0x5c] sm:$0xff]
      %v2564 = vld [vmem:[#allocation2 + $0x64] sm:$0xff]
      %v2565 = vld [vmem:[#allocation2 + $0x6c] sm:$0xff]
      %v2566 = vld [vmem:[#allocation2 + $0x74] sm:$0xff]
      %v2567 = vld [vmem:[#allocation2 + $0x7c] sm:$0xff]
      %v2568 = vld [vmem:[#allocation2 + $0x84] sm:$0xff]
      %v2569 = vld [vmem:[#allocation2 + $0x8c] sm:$0xff]
      %v2570 = vld [vmem:[#allocation2 + $0x94] sm:$0xff]
      %v2571 = vld [vmem:[#allocation2 + $0x9c] sm:$0xff]
      %v2572 = vld [vmem:[#allocation2 + $0xa4] sm:$0xff]
      %v2573 = vld [vmem:[#allocation2 + $0xac] sm:$0xff]
      %v2574 = vld [vmem:[#allocation2 + $0xb4] sm:$0xff]
      %v2575 = vld [vmem:[#allocation2 + $0xbc] sm:$0xff]
      %v2576 = vld [vmem:[#allocation2 + $0xc4] sm:$0xff]
      %v2577 = vld [vmem:[#allocation2 + $0xcc] sm:$0xff]
      %v2578 = vld [vmem:[#allocation2 + $0xd4] sm:$0xff]
      %v2579 = vld [vmem:[#allocation2 + $0xdc] sm:$0xff]
      %v2580 = vld [vmem:[#allocation2 + $0xe4] sm:$0xff]
      %v2581 = vld [vmem:[#allocation2 + $0xec] sm:$0xff]
      %v2582 = vld [vmem:[#allocation2 + $0xf4] sm:$0xff]
      %v2583 = vld [vmem:[#allocation2 + $0xfc] sm:$0xff]
      %v2584 = vld [vmem:[#allocation2 + $0x104] sm:$0xff]
      %v2585 = vld [vmem:[#allocation2 + $0x10c] sm:$0xff]
      %v2586 = vld [vmem:[#allocation2 + $0x114] sm:$0xff]
      %v2587 = vld [vmem:[#allocation2 + $0x11c] sm:$0xff]
      %v2588 = vld [vmem:[#allocation2 + $0x124] sm:$0xff]
      %v2589 = vld [vmem:[#allocation2 + $0x12c] sm:$0xff]
      %v2590 = vpack.c.bf16 %v2555, %v2554
      %v2591 = vpack.c.bf16 %v2557, %v2556
      %v2592 = vpack.c.bf16 %v2559, %v2558
      %v2593 = vpack.c.bf16 %v2561, %v2560
      %v2594 = vpack.c.bf16 %v2563, %v2562
      %v2595 = vpack.c.bf16 %v2565, %v2564
      %v2596 = vpack.c.bf16 %v2567, %v2566
      %v2597 = vpack.c.bf16 %v2569, %v2568
      %v2598 = vpack.c.bf16 %v2571, %v2570
      %v2599 = vpack.c.bf16 %v2573, %v2572
      %v2600 = vpack.c.bf16 %v2575, %v2574
      %v2601 = vpack.c.bf16 %v2577, %v2576
      %v2602 = vpack.c.bf16 %v2579, %v2578
      %v2603 = vpack.c.bf16 %v2581, %v2580
      %v2604 = vpack.c.bf16 %v2583, %v2582
      %v2605 = vpack.c.bf16 %v2585, %v2584
      %v2606 = vpack.c.bf16 %v2587, %v2586
      %v2607 = vpack.c.bf16 %v2589, %v2588
      %v2608 = vld [vmem:[#allocation4] sm:$0xff]
      %v2609 = vld [vmem:[#allocation4 + $0x8] sm:$0xff]
      %v2610 = vld [vmem:[#allocation4 + $0x10] sm:$0xff]
      %v2611 = vld [vmem:[#allocation4 + $0x18] sm:$0xff]
      %v2612 = vld [vmem:[#allocation4 + $0x20] sm:$0xff]
      %v2613 = vld [vmem:[#allocation4 + $0x28] sm:$0xff]
      %v2614 = vld [vmem:[#allocation4 + $0x30] sm:$0xff]
      %v2615 = vld [vmem:[#allocation4 + $0x38] sm:$0xff]
      %v2616 = vld [vmem:[#allocation4 + $0x40] sm:$0xff]
      %v2617 = vld [vmem:[#allocation4 + $0x48] sm:$0xff]
      %v2618 = vld [vmem:[#allocation4 + $0x50] sm:$0xff]
      %v2619 = vld [vmem:[#allocation4 + $0x58] sm:$0xff]
      %v2620 = vld [vmem:[#allocation4 + $0x60] sm:$0xff]
      %v2621 = vld [vmem:[#allocation4 + $0x68] sm:$0xff]
      %v2622 = vld [vmem:[#allocation4 + $0x70] sm:$0xff]
      %v2623 = vld [vmem:[#allocation4 + $0x78] sm:$0xff]
      %v2624 = vld [vmem:[#allocation4 + $0x80] sm:$0xff]
      %v2625 = vld [vmem:[#allocation4 + $0x88] sm:$0xff]
      %v2626 = vld [vmem:[#allocation4 + $0x90] sm:$0xff]
      %v2627 = vld [vmem:[#allocation4 + $0x98] sm:$0xff]
      %v2628 = vld [vmem:[#allocation4 + $0xa0] sm:$0xff]
      %v2629 = vld [vmem:[#allocation4 + $0xa8] sm:$0xff]
      %v2630 = vld [vmem:[#allocation4 + $0xb0] sm:$0xff]
      %v2631 = vld [vmem:[#allocation4 + $0xb8] sm:$0xff]
      %v2632 = vld [vmem:[#allocation4 + $0xc0] sm:$0xff]
      %v2633 = vld [vmem:[#allocation4 + $0xc8] sm:$0xff]
      %v2634 = vld [vmem:[#allocation4 + $0xd0] sm:$0xff]
      %v2635 = vld [vmem:[#allocation4 + $0xd8] sm:$0xff]
      %v2636 = vld [vmem:[#allocation4 + $0xe0] sm:$0xff]
      %v2637 = vld [vmem:[#allocation4 + $0xe8] sm:$0xff]
      %v2638 = vld [vmem:[#allocation4 + $0xf0] sm:$0xff]
      %v2639 = vld [vmem:[#allocation4 + $0xf8] sm:$0xff]
      %v2640 = vld [vmem:[#allocation4 + $0x100] sm:$0xff]
      %v2641 = vld [vmem:[#allocation4 + $0x108] sm:$0xff]
      %v2642 = vld [vmem:[#allocation4 + $0x110] sm:$0xff]
      %v2643 = vld [vmem:[#allocation4 + $0x118] sm:$0xff]
      %s2644 = scalar_lea.vmem %s2, 10
      %v2645 = vld [vmem:[%s2644] sm:$0x3]
      %v2647 = vsel %vm361, %v2590, 0
      %v2650 = vsel %vm361, %v2591, 0
      %v2653 = vsel %vm361, %v2592, 0
      %v2656 = vsel %vm361, %v2593, 0
      %v2659 = vsel %vm361, %v2594, 0
      %v2662 = vsel %vm361, %v2595, 0
      %v2665 = vsel %vm361, %v2596, 0
      %v2668 = vsel %vm361, %v2597, 0
      %v2671 = vsel %vm361, %v2598, 0
      %v2674 = vsel %vm361, %v2599, 0
      %v2677 = vsel %vm361, %v2600, 0
      %v2680 = vsel %vm361, %v2601, 0
      %v2683 = vsel %vm361, %v2602, 0
      %v2686 = vsel %vm361, %v2603, 0
      %v2689 = vsel %vm361, %v2604, 0
      %v2692 = vsel %vm361, %v2605, 0
      %v2695 = vsel %vm361, %v2606, 0
      %v2698 = vsel %vm361, %v2607, 0
      %v2701 = vsel %vm709, %v2645, 0
      %2703 = vmatprep.subr.bf16.mxu0 0
      %2704 = vmatpush1.bf16.msra.mxu0 %v2701
      %2705 = vmatprep.subr.bf16.mxu0 0
      %2706 = vmatpush1.bf16.msra.mxu0 0
      %2707 = vmatprep.subr.bf16.mxu0 0
      %2708 = vmatpush1.bf16.msra.mxu0 0
      %2709 = vmatprep.subr.bf16.mxu0 0
      %2710 = vmatpush1.bf16.msra.mxu0 0
      %2711 = vmatprep.subr.bf16.mxu0 0
      %2712 = vmatpush1.bf16.msra.mxu0 0
      %2713 = vmatprep.subr.bf16.mxu0 0
      %2714 = vmatpush1.bf16.msra.mxu0 0
      %2715 = vmatprep.subr.bf16.mxu0 0
      %2716 = vmatpush1.bf16.msra.mxu0 0
      %2717 = vmatprep.subr.bf16.mxu0 0
      %2718 = vmatpush1.bf16.msra.mxu0 0
      %2719 = vmatprep.subr.bf16.mxu0 0
      %2720 = vmatpush1.bf16.msra.mxu0 0
      %2721 = vmatprep.subr.bf16.mxu0 0
      %2722 = vmatpush1.bf16.msra.mxu0 0
      %2723 = vmatprep.subr.bf16.mxu0 0
      %2724 = vmatpush1.bf16.msra.mxu0 0
      %2725 = vmatprep.subr.bf16.mxu0 0
      %2726 = vmatpush1.bf16.msra.mxu0 0
      %2727 = vmatprep.subr.bf16.mxu0 0
      %2728 = vmatpush1.bf16.msra.mxu0 0
      %2729 = vmatprep.subr.bf16.mxu0 0
      %2730 = vmatpush1.bf16.msra.mxu0 0
      %2731 = vmatprep.subr.bf16.mxu0 0
      %2732 = vmatpush1.bf16.msra.mxu0 0
      %2733 = vmatprep.subr.bf16.mxu0 0
      %2734 = vmatpush1.bf16.msra.mxu0 0
      %2735 = vmatprep.mubr.bf16.mxu0 0
      %2736 = vmatmul.mubr.bf16.gmra.mrb[0].mxu0 %v2647
      %v2737 = vpop.f32.mrb[0].mxu0
      %v2738 = vadd.f32 0.0, %v2737
      %v2739 = vpop.f32.mrb[0].mxu0
      %v2740 = vpop.f32.mrb[0].mxu0
      %v2741 = vadd.f32 0.0, %v2740
      %v2742 = vpop.f32.mrb[0].mxu0
      %2743 = vmatprep.mubr.bf16.mxu0 0
      %2744 = vmatmul.mubr.bf16.gmra.mrb[0].mxu0 %v2650
      %v2745 = vpop.f32.mrb[0].mxu0
      %v2746 = vadd.f32 0.0, %v2745
      %v2747 = vpop.f32.mrb[0].mxu0
      %v2748 = vpop.f32.mrb[0].mxu0
      %v2749 = vadd.f32 0.0, %v2748
      %v2750 = vpop.f32.mrb[0].mxu0
      %2751 = vmatprep.mubr.bf16.mxu0 0
      %2752 = vmatmul.mubr.bf16.gmra.mrb[0].mxu0 %v2653
      %v2753 = vpop.f32.mrb[0].mxu0
      %v2754 = vadd.f32 0.0, %v2753
      %v2755 = vpop.f32.mrb[0].mxu0
      %v2756 = vpop.f32.mrb[0].mxu0
      %v2757 = vadd.f32 0.0, %v2756
      %v2758 = vpop.f32.mrb[0].mxu0
      %2759 = vmatprep.mubr.bf16.mxu0 0
      %2760 = vmatmul.mubr.bf16.gmra.mrb[0].mxu0 %v2656
      %v2761 = vpop.f32.mrb[0].mxu0
      %v2762 = vadd.f32 0.0, %v2761
      %v2763 = vpop.f32.mrb[0].mxu0
      %v2764 = vpop.f32.mrb[0].mxu0
      %v2765 = vadd.f32 0.0, %v2764
      %v2766 = vpop.f32.mrb[0].mxu0
      %2767 = vmatprep.mubr.bf16.mxu0 0
      %2768 = vmatmul.mubr.bf16.gmra.mrb[0].mxu0 %v2659
      %v2769 = vpop.f32.mrb[0].mxu0
      %v2770 = vadd.f32 0.0, %v2769
      %v2771 = vpop.f32.mrb[0].mxu0
      %v2772 = vpop.f32.mrb[0].mxu0
      %v2773 = vadd.f32 0.0, %v2772
      %v2774 = vpop.f32.mrb[0].mxu0
      %2775 = vmatprep.mubr.bf16.mxu0 0
      %2776 = vmatmul.mubr.bf16.gmra.mrb[0].mxu0 %v2662
      %v2777 = vpop.f32.mrb[0].mxu0
      %v2778 = vadd.f32 0.0, %v2777
      %v2779 = vpop.f32.mrb[0].mxu0
      %v2780 = vpop.f32.mrb[0].mxu0
      %v2781 = vadd.f32 0.0, %v2780
      %v2782 = vpop.f32.mrb[0].mxu0
      %2783 = vmatprep.mubr.bf16.mxu0 0
      %2784 = vmatmul.mubr.bf16.gmra.mrb[0].mxu0 %v2665
      %v2785 = vpop.f32.mrb[0].mxu0
      %v2786 = vadd.f32 0.0, %v2785
      %v2787 = vpop.f32.mrb[0].mxu0
      %v2788 = vpop.f32.mrb[0].mxu0
      %v2789 = vadd.f32 0.0, %v2788
      %v2790 = vpop.f32.mrb[0].mxu0
      %2791 = vmatprep.mubr.bf16.mxu0 0
      %2792 = vmatmul.mubr.bf16.gmra.mrb[0].mxu0 %v2668
      %v2793 = vpop.f32.mrb[0].mxu0
      %v2794 = vadd.f32 0.0, %v2793
      %v2795 = vpop.f32.mrb[0].mxu0
      %v2796 = vpop.f32.mrb[0].mxu0
      %v2797 = vadd.f32 0.0, %v2796
      %v2798 = vpop.f32.mrb[0].mxu0
      %2799 = vmatprep.mubr.bf16.mxu0 0
      %2800 = vmatmul.mubr.bf16.gmra.mrb[0].mxu0 %v2671
      %v2801 = vpop.f32.mrb[0].mxu0
      %v2802 = vadd.f32 0.0, %v2801
      %v2803 = vpop.f32.mrb[0].mxu0
      %v2804 = vpop.f32.mrb[0].mxu0
      %v2805 = vadd.f32 0.0, %v2804
      %v2806 = vpop.f32.mrb[0].mxu0
      %2807 = vmatprep.mubr.bf16.mxu0 0
      %2808 = vmatmul.mubr.bf16.gmra.mrb[0].mxu0 %v2674
      %v2809 = vpop.f32.mrb[0].mxu0
      %v2810 = vadd.f32 0.0, %v2809
      %v2811 = vpop.f32.mrb[0].mxu0
      %v2812 = vpop.f32.mrb[0].mxu0
      %v2813 = vadd.f32 0.0, %v2812
      %v2814 = vpop.f32.mrb[0].mxu0
      %2815 = vmatprep.mubr.bf16.mxu0 0
      %2816 = vmatmul.mubr.bf16.gmra.mrb[0].mxu0 %v2677
      %v2817 = vpop.f32.mrb[0].mxu0
      %v2818 = vadd.f32 0.0, %v2817
      %v2819 = vpop.f32.mrb[0].mxu0
      %v2820 = vpop.f32.mrb[0].mxu0
      %v2821 = vadd.f32 0.0, %v2820
      %v2822 = vpop.f32.mrb[0].mxu0
      %2823 = vmatprep.mubr.bf16.mxu0 0
      %2824 = vmatmul.mubr.bf16.gmra.mrb[0].mxu0 %v2680
      %v2825 = vpop.f32.mrb[0].mxu0
      %v2826 = vadd.f32 0.0, %v2825
      %v2827 = vpop.f32.mrb[0].mxu0
      %v2828 = vpop.f32.mrb[0].mxu0
      %v2829 = vadd.f32 0.0, %v2828
      %v2830 = vpop.f32.mrb[0].mxu0
      %2831 = vmatprep.mubr.bf16.mxu0 0
      %2832 = vmatmul.mubr.bf16.gmra.mrb[0].mxu0 %v2683
      %v2833 = vpop.f32.mrb[0].mxu0
      %v2834 = vadd.f32 0.0, %v2833
      %v2835 = vpop.f32.mrb[0].mxu0
      %v2836 = vpop.f32.mrb[0].mxu0
      %v2837 = vadd.f32 0.0, %v2836
      %v2838 = vpop.f32.mrb[0].mxu0
      %2839 = vmatprep.mubr.bf16.mxu0 0
      %2840 = vmatmul.mubr.bf16.gmra.mrb[0].mxu0 %v2686
      %v2841 = vpop.f32.mrb[0].mxu0
      %v2842 = vadd.f32 0.0, %v2841
      %v2843 = vpop.f32.mrb[0].mxu0
      %v2844 = vpop.f32.mrb[0].mxu0
      %v2845 = vadd.f32 0.0, %v2844
      %v2846 = vpop.f32.mrb[0].mxu0
      %2847 = vmatprep.mubr.bf16.mxu0 0
      %2848 = vmatmul.mubr.bf16.gmra.mrb[0].mxu0 %v2689
      %v2849 = vpop.f32.mrb[0].mxu0
      %v2850 = vadd.f32 0.0, %v2849
      %v2851 = vpop.f32.mrb[0].mxu0
      %v2852 = vpop.f32.mrb[0].mxu0
      %v2853 = vadd.f32 0.0, %v2852
      %v2854 = vpop.f32.mrb[0].mxu0
      %2855 = vmatprep.mubr.bf16.mxu0 0
      %2856 = vmatmul.mubr.bf16.gmra.mrb[0].mxu0 %v2692
      %v2857 = vpop.f32.mrb[0].mxu0
      %v2858 = vadd.f32 0.0, %v2857
      %v2859 = vpop.f32.mrb[0].mxu0
      %v2860 = vpop.f32.mrb[0].mxu0
      %v2861 = vadd.f32 0.0, %v2860
      %v2862 = vpop.f32.mrb[0].mxu0
      %2863 = vmatprep.mubr.bf16.mxu0 0
      %2864 = vmatmul.mubr.bf16.gmra.mrb[0].mxu0 %v2695
      %v2865 = vpop.f32.mrb[0].mxu0
      %v2866 = vadd.f32 0.0, %v2865
      %v2867 = vpop.f32.mrb[0].mxu0
      %v2868 = vpop.f32.mrb[0].mxu0
      %v2869 = vadd.f32 0.0, %v2868
      %v2870 = vpop.f32.mrb[0].mxu0
      %2871 = vmatprep.mubr.bf16.mxu0 0
      %2872 = vmatmul.mubr.bf16.gmra.mrb[0].mxu0 %v2698
      %v2873 = vpop.f32.mrb[0].mxu0
      %v2874 = vadd.f32 0.0, %v2873
      %v2875 = vpop.f32.mrb[0].mxu0
      %v2876 = vpop.f32.mrb[0].mxu0
      %v2877 = vadd.f32 0.0, %v2876
      %v2878 = vpop.f32.mrb[0].mxu0
      %2879 = vdwg.mxu0
      %v2880 = vadd.f32 %v2608, %v2738
      %v2881 = vadd.f32 %v2609, %v2741
      %v2882 = vadd.f32 %v2610, %v2746
      %v2883 = vadd.f32 %v2611, %v2749
      %v2884 = vadd.f32 %v2612, %v2754
      %v2885 = vadd.f32 %v2613, %v2757
      %v2886 = vadd.f32 %v2614, %v2762
      %v2887 = vadd.f32 %v2615, %v2765
      %v2888 = vadd.f32 %v2616, %v2770
      %v2889 = vadd.f32 %v2617, %v2773
      %v2890 = vadd.f32 %v2618, %v2778
      %v2891 = vadd.f32 %v2619, %v2781
      %v2892 = vadd.f32 %v2620, %v2786
      %v2893 = vadd.f32 %v2621, %v2789
      %v2894 = vadd.f32 %v2622, %v2794
      %v2895 = vadd.f32 %v2623, %v2797
      %v2896 = vadd.f32 %v2624, %v2802
      %v2897 = vadd.f32 %v2625, %v2805
      %v2898 = vadd.f32 %v2626, %v2810
      %v2899 = vadd.f32 %v2627, %v2813
      %v2900 = vadd.f32 %v2628, %v2818
      %v2901 = vadd.f32 %v2629, %v2821
      %v2902 = vadd.f32 %v2630, %v2826
      %v2903 = vadd.f32 %v2631, %v2829
      %v2904 = vadd.f32 %v2632, %v2834
      %v2905 = vadd.f32 %v2633, %v2837
      %v2906 = vadd.f32 %v2634, %v2842
      %v2907 = vadd.f32 %v2635, %v2845
      %v2908 = vadd.f32 %v2636, %v2850
      %v2909 = vadd.f32 %v2637, %v2853
      %v2910 = vadd.f32 %v2638, %v2858
      %v2911 = vadd.f32 %v2639, %v2861
      %v2912 = vadd.f32 %v2640, %v2866
      %v2913 = vadd.f32 %v2641, %v2869
      %v2914 = vadd.f32 %v2642, %v2874
      %v2915 = vadd.f32 %v2643, %v2877
      %2916 = vst.msk [vmem:[#allocation4] sm:$0xff] %vm361, %v2880
      %2917 = vst.msk [vmem:[#allocation4 + $0x8] sm:$0xff] %vm361, %v2881
      %2918 = vst.msk [vmem:[#allocation4 + $0x10] sm:$0xff] %vm361, %v2882
      %2919 = vst.msk [vmem:[#allocation4 + $0x18] sm:$0xff] %vm361, %v2883
      %2920 = vst.msk [vmem:[#allocation4 + $0x20] sm:$0xff] %vm361, %v2884
      %2921 = vst.msk [vmem:[#allocation4 + $0x28] sm:$0xff] %vm361, %v2885
      %2922 = vst.msk [vmem:[#allocation4 + $0x30] sm:$0xff] %vm361, %v2886
      %2923 = vst.msk [vmem:[#allocation4 + $0x38] sm:$0xff] %vm361, %v2887
      %2924 = vst.msk [vmem:[#allocation4 + $0x40] sm:$0xff] %vm361, %v2888
      %2925 = vst.msk [vmem:[#allocation4 + $0x48] sm:$0xff] %vm361, %v2889
      %2926 = vst.msk [vmem:[#allocation4 + $0x50] sm:$0xff] %vm361, %v2890
      %2927 = vst.msk [vmem:[#allocation4 + $0x58] sm:$0xff] %vm361, %v2891
      %2928 = vst.msk [vmem:[#allocation4 + $0x60] sm:$0xff] %vm361, %v2892
      %2929 = vst.msk [vmem:[#allocation4 + $0x68] sm:$0xff] %vm361, %v2893
      %2930 = vst.msk [vmem:[#allocation4 + $0x70] sm:$0xff] %vm361, %v2894
      %2931 = vst.msk [vmem:[#allocation4 + $0x78] sm:$0xff] %vm361, %v2895
      %2932 = vst.msk [vmem:[#allocation4 + $0x80] sm:$0xff] %vm361, %v2896
      %2933 = vst.msk [vmem:[#allocation4 + $0x88] sm:$0xff] %vm361, %v2897
      %2934 = vst.msk [vmem:[#allocation4 + $0x90] sm:$0xff] %vm361, %v2898
      %2935 = vst.msk [vmem:[#allocation4 + $0x98] sm:$0xff] %vm361, %v2899
      %2936 = vst.msk [vmem:[#allocation4 + $0xa0] sm:$0xff] %vm361, %v2900
      %2937 = vst.msk [vmem:[#allocation4 + $0xa8] sm:$0xff] %vm361, %v2901
      %2938 = vst.msk [vmem:[#allocation4 + $0xb0] sm:$0xff] %vm361, %v2902
      %2939 = vst.msk [vmem:[#allocation4 + $0xb8] sm:$0xff] %vm361, %v2903
      %2940 = vst.msk [vmem:[#allocation4 + $0xc0] sm:$0xff] %vm361, %v2904
      %2941 = vst.msk [vmem:[#allocation4 + $0xc8] sm:$0xff] %vm361, %v2905
      %2942 = vst.msk [vmem:[#allocation4 + $0xd0] sm:$0xff] %vm361, %v2906
      %2943 = vst.msk [vmem:[#allocation4 + $0xd8] sm:$0xff] %vm361, %v2907
      %2944 = vst.msk [vmem:[#allocation4 + $0xe0] sm:$0xff] %vm361, %v2908
      %2945 = vst.msk [vmem:[#allocation4 + $0xe8] sm:$0xff] %vm361, %v2909
      %2946 = vst.msk [vmem:[#allocation4 + $0xf0] sm:$0xff] %vm361, %v2910
      %2947 = vst.msk [vmem:[#allocation4 + $0xf8] sm:$0xff] %vm361, %v2911
      %2948 = vst.msk [vmem:[#allocation4 + $0x100] sm:$0xff] %vm361, %v2912
      %2949 = vst.msk [vmem:[#allocation4 + $0x108] sm:$0xff] %vm361, %v2913
      %2950 = vst.msk [vmem:[#allocation4 + $0x110] sm:$0xff] %vm361, %v2914
      %2951 = vst.msk [vmem:[#allocation4 + $0x118] sm:$0xff] %vm361, %v2915
      %v2952 = vld [vmem:[#allocation2 + $0x24] sm:$0xff]
      %v2953 = vld [vmem:[#allocation2 + $0x2c] sm:$0xff]
      %v2954 = vld [vmem:[#allocation2 + $0x34] sm:$0xff]
      %v2955 = vld [vmem:[#allocation2 + $0x3c] sm:$0xff]
      %v2956 = vld [vmem:[#allocation2 + $0x44] sm:$0xff]
      %v2957 = vld [vmem:[#allocation2 + $0x4c] sm:$0xff]
      %v2958 = vld [vmem:[#allocation2 + $0x54] sm:$0xff]
      %v2959 = vld [vmem:[#allocation2 + $0x5c] sm:$0xff]
      %v2960 = vld [vmem:[#allocation2 + $0x64] sm:$0xff]
      %v2961 = vld [vmem:[#allocation2 + $0x6c] sm:$0xff]
      %v2962 = vld [vmem:[#allocation2 + $0x74] sm:$0xff]
      %v2963 = vld [vmem:[#allocation2 + $0x7c] sm:$0xff]
      %v2964 = vld [vmem:[#allocation2 + $0x84] sm:$0xff]
      %v2965 = vld [vmem:[#allocation2 + $0x8c] sm:$0xff]
      %v2966 = vld [vmem:[#allocation2 + $0x94] sm:$0xff]
      %v2967 = vld [vmem:[#allocation2 + $0x9c] sm:$0xff]
      %v2968 = vld [vmem:[#allocation2 + $0xa4] sm:$0xff]
      %v2969 = vld [vmem:[#allocation2 + $0xac] sm:$0xff]
      %v2970 = vld [vmem:[#allocation2 + $0xb4] sm:$0xff]
      %v2971 = vld [vmem:[#allocation2 + $0xbc] sm:$0xff]
      %v2972 = vld [vmem:[#allocation2 + $0xc4] sm:$0xff]
      %v2973 = vld [vmem:[#allocation2 + $0xcc] sm:$0xff]
      %v2974 = vld [vmem:[#allocation2 + $0xd4] sm:$0xff]
      %v2975 = vld [vmem:[#allocation2 + $0xdc] sm:$0xff]
      %v2976 = vld [vmem:[#allocation2 + $0xe4] sm:$0xff]
      %v2977 = vld [vmem:[#allocation2 + $0xec] sm:$0xff]
      %v2978 = vld [vmem:[#allocation2 + $0xf4] sm:$0xff]
      %v2979 = vld [vmem:[#allocation2 + $0xfc] sm:$0xff]
      %v2980 = vld [vmem:[#allocation2 + $0x104] sm:$0xff]
      %v2981 = vld [vmem:[#allocation2 + $0x10c] sm:$0xff]
      %v2982 = vld [vmem:[#allocation2 + $0x114] sm:$0xff]
      %v2983 = vld [vmem:[#allocation2 + $0x11c] sm:$0xff]
      %v2984 = vld [vmem:[#allocation2 + $0x124] sm:$0xff]
      %v2985 = vld [vmem:[#allocation2 + $0x12c] sm:$0xff]
      %v2986 = vld [vmem:[#allocation2 + $0x134] sm:$0xff]
      %v2987 = vld [vmem:[#allocation2 + $0x13c] sm:$0xff]
      %v2988 = vpack.c.bf16 %v2953, %v2952
      %v2989 = vpack.c.bf16 %v2955, %v2954
      %v2990 = vpack.c.bf16 %v2957, %v2956
      %v2991 = vpack.c.bf16 %v2959, %v2958
      %v2992 = vpack.c.bf16 %v2961, %v2960
      %v2993 = vpack.c.bf16 %v2963, %v2962
      %v2994 = vpack.c.bf16 %v2965, %v2964
      %v2995 = vpack.c.bf16 %v2967, %v2966
      %v2996 = vpack.c.bf16 %v2969, %v2968
      %v2997 = vpack.c.bf16 %v2971, %v2970
      %v2998 = vpack.c.bf16 %v2973, %v2972
      %v2999 = vpack.c.bf16 %v2975, %v2974
      %v3000 = vpack.c.bf16 %v2977, %v2976
      %v3001 = vpack.c.bf16 %v2979, %v2978
      %v3002 = vpack.c.bf16 %v2981, %v2980
      %v3003 = vpack.c.bf16 %v2983, %v2982
      %v3004 = vpack.c.bf16 %v2985, %v2984
      %v3005 = vpack.c.bf16 %v2987, %v2986
      %v3006 = vld [vmem:[#allocation4] sm:$0xff]
      %v3007 = vld [vmem:[#allocation4 + $0x8] sm:$0xff]
      %v3008 = vld [vmem:[#allocation4 + $0x10] sm:$0xff]
      %v3009 = vld [vmem:[#allocation4 + $0x18] sm:$0xff]
      %v3010 = vld [vmem:[#allocation4 + $0x20] sm:$0xff]
      %v3011 = vld [vmem:[#allocation4 + $0x28] sm:$0xff]
      %v3012 = vld [vmem:[#allocation4 + $0x30] sm:$0xff]
      %v3013 = vld [vmem:[#allocation4 + $0x38] sm:$0xff]
      %v3014 = vld [vmem:[#allocation4 + $0x40] sm:$0xff]
      %v3015 = vld [vmem:[#allocation4 + $0x48] sm:$0xff]
      %v3016 = vld [vmem:[#allocation4 + $0x50] sm:$0xff]
      %v3017 = vld [vmem:[#allocation4 + $0x58] sm:$0xff]
      %v3018 = vld [vmem:[#allocation4 + $0x60] sm:$0xff]
      %v3019 = vld [vmem:[#allocation4 + $0x68] sm:$0xff]
      %v3020 = vld [vmem:[#allocation4 + $0x70] sm:$0xff]
      %v3021 = vld [vmem:[#allocation4 + $0x78] sm:$0xff]
      %v3022 = vld [vmem:[#allocation4 + $0x80] sm:$0xff]
      %v3023 = vld [vmem:[#allocation4 + $0x88] sm:$0xff]
      %v3024 = vld [vmem:[#allocation4 + $0x90] sm:$0xff]
      %v3025 = vld [vmem:[#allocation4 + $0x98] sm:$0xff]
      %v3026 = vld [vmem:[#allocation4 + $0xa0] sm:$0xff]
      %v3027 = vld [vmem:[#allocation4 + $0xa8] sm:$0xff]
      %v3028 = vld [vmem:[#allocation4 + $0xb0] sm:$0xff]
      %v3029 = vld [vmem:[#allocation4 + $0xb8] sm:$0xff]
      %v3030 = vld [vmem:[#allocation4 + $0xc0] sm:$0xff]
      %v3031 = vld [vmem:[#allocation4 + $0xc8] sm:$0xff]
      %v3032 = vld [vmem:[#allocation4 + $0xd0] sm:$0xff]
      %v3033 = vld [vmem:[#allocation4 + $0xd8] sm:$0xff]
      %v3034 = vld [vmem:[#allocation4 + $0xe0] sm:$0xff]
      %v3035 = vld [vmem:[#allocation4 + $0xe8] sm:$0xff]
      %v3036 = vld [vmem:[#allocation4 + $0xf0] sm:$0xff]
      %v3037 = vld [vmem:[#allocation4 + $0xf8] sm:$0xff]
      %v3038 = vld [vmem:[#allocation4 + $0x100] sm:$0xff]
      %v3039 = vld [vmem:[#allocation4 + $0x108] sm:$0xff]
      %v3040 = vld [vmem:[#allocation4 + $0x110] sm:$0xff]
      %v3041 = vld [vmem:[#allocation4 + $0x118] sm:$0xff]
      %s3042 = scalar_lea.vmem %s2, 12
      %v3043 = vld [vmem:[%s3042] sm:$0x3]
      %v3045 = vsel %vm361, %v2988, 0
      %v3048 = vsel %vm361, %v2989, 0
      %v3051 = vsel %vm361, %v2990, 0
      %v3054 = vsel %vm361, %v2991, 0
      %v3057 = vsel %vm361, %v2992, 0
      %v3060 = vsel %vm361, %v2993, 0
      %v3063 = vsel %vm361, %v2994, 0
      %v3066 = vsel %vm361, %v2995, 0
      %v3069 = vsel %vm361, %v2996, 0
      %v3072 = vsel %vm361, %v2997, 0
      %v3075 = vsel %vm361, %v2998, 0
      %v3078 = vsel %vm361, %v2999, 0
      %v3081 = vsel %vm361, %v3000, 0
      %v3084 = vsel %vm361, %v3001, 0
      %v3087 = vsel %vm361, %v3002, 0
      %v3090 = vsel %vm361, %v3003, 0
      %v3093 = vsel %vm361, %v3004, 0
      %v3096 = vsel %vm361, %v3005, 0
      %v3099 = vsel %vm709, %v3043, 0
      %3101 = vmatprep.subr.bf16.mxu0 0
      %3102 = vmatpush1.bf16.msra.mxu0 %v3099
      %3103 = vmatprep.subr.bf16.mxu0 0
      %3104 = vmatpush1.bf16.msra.mxu0 0
      %3105 = vmatprep.subr.bf16.mxu0 0
      %3106 = vmatpush1.bf16.msra.mxu0 0
      %3107 = vmatprep.subr.bf16.mxu0 0
      %3108 = vmatpush1.bf16.msra.mxu0 0
      %3109 = vmatprep.subr.bf16.mxu0 0
      %3110 = vmatpush1.bf16.msra.mxu0 0
      %3111 = vmatprep.subr.bf16.mxu0 0
      %3112 = vmatpush1.bf16.msra.mxu0 0
      %3113 = vmatprep.subr.bf16.mxu0 0
      %3114 = vmatpush1.bf16.msra.mxu0 0
      %3115 = vmatprep.subr.bf16.mxu0 0
      %3116 = vmatpush1.bf16.msra.mxu0 0
      %3117 = vmatprep.subr.bf16.mxu0 0
      %3118 = vmatpush1.bf16.msra.mxu0 0
      %3119 = vmatprep.subr.bf16.mxu0 0
      %3120 = vmatpush1.bf16.msra.mxu0 0
      %3121 = vmatprep.subr.bf16.mxu0 0
      %3122 = vmatpush1.bf16.msra.mxu0 0
      %3123 = vmatprep.subr.bf16.mxu0 0
      %3124 = vmatpush1.bf16.msra.mxu0 0
      %3125 = vmatprep.subr.bf16.mxu0 0
      %3126 = vmatpush1.bf16.msra.mxu0 0
      %3127 = vmatprep.subr.bf16.mxu0 0
      %3128 = vmatpush1.bf16.msra.mxu0 0
      %3129 = vmatprep.subr.bf16.mxu0 0
      %3130 = vmatpush1.bf16.msra.mxu0 0
      %3131 = vmatprep.subr.bf16.mxu0 0
      %3132 = vmatpush1.bf16.msra.mxu0 0
      %3133 = vmatprep.mubr.bf16.mxu0 0
      %3134 = vmatmul.mubr.bf16.gmra.mrb[0].mxu0 %v3045
      %v3135 = vpop.f32.mrb[0].mxu0
      %v3136 = vadd.f32 0.0, %v3135
      %v3137 = vpop.f32.mrb[0].mxu0
      %v3138 = vpop.f32.mrb[0].mxu0
      %v3139 = vadd.f32 0.0, %v3138
      %v3140 = vpop.f32.mrb[0].mxu0
      %3141 = vmatprep.mubr.bf16.mxu0 0
      %3142 = vmatmul.mubr.bf16.gmra.mrb[0].mxu0 %v3048
      %v3143 = vpop.f32.mrb[0].mxu0
      %v3144 = vadd.f32 0.0, %v3143
      %v3145 = vpop.f32.mrb[0].mxu0
      %v3146 = vpop.f32.mrb[0].mxu0
      %v3147 = vadd.f32 0.0, %v3146
      %v3148 = vpop.f32.mrb[0].mxu0
      %3149 = vmatprep.mubr.bf16.mxu0 0
      %3150 = vmatmul.mubr.bf16.gmra.mrb[0].mxu0 %v3051
      %v3151 = vpop.f32.mrb[0].mxu0
      %v3152 = vadd.f32 0.0, %v3151
      %v3153 = vpop.f32.mrb[0].mxu0
      %v3154 = vpop.f32.mrb[0].mxu0
      %v3155 = vadd.f32 0.0, %v3154
      %v3156 = vpop.f32.mrb[0].mxu0
      %3157 = vmatprep.mubr.bf16.mxu0 0
      %3158 = vmatmul.mubr.bf16.gmra.mrb[0].mxu0 %v3054
      %v3159 = vpop.f32.mrb[0].mxu0
      %v3160 = vadd.f32 0.0, %v3159
      %v3161 = vpop.f32.mrb[0].mxu0
      %v3162 = vpop.f32.mrb[0].mxu0
      %v3163 = vadd.f32 0.0, %v3162
      %v3164 = vpop.f32.mrb[0].mxu0
      %3165 = vmatprep.mubr.bf16.mxu0 0
      %3166 = vmatmul.mubr.bf16.gmra.mrb[0].mxu0 %v3057
      %v3167 = vpop.f32.mrb[0].mxu0
      %v3168 = vadd.f32 0.0, %v3167
      %v3169 = vpop.f32.mrb[0].mxu0
      %v3170 = vpop.f32.mrb[0].mxu0
      %v3171 = vadd.f32 0.0, %v3170
      %v3172 = vpop.f32.mrb[0].mxu0
      %3173 = vmatprep.mubr.bf16.mxu0 0
      %3174 = vmatmul.mubr.bf16.gmra.mrb[0].mxu0 %v3060
      %v3175 = vpop.f32.mrb[0].mxu0
      %v3176 = vadd.f32 0.0, %v3175
      %v3177 = vpop.f32.mrb[0].mxu0
      %v3178 = vpop.f32.mrb[0].mxu0
      %v3179 = vadd.f32 0.0, %v3178
      %v3180 = vpop.f32.mrb[0].mxu0
      %3181 = vmatprep.mubr.bf16.mxu0 0
      %3182 = vmatmul.mubr.bf16.gmra.mrb[0].mxu0 %v3063
      %v3183 = vpop.f32.mrb[0].mxu0
      %v3184 = vadd.f32 0.0, %v3183
      %v3185 = vpop.f32.mrb[0].mxu0
      %v3186 = vpop.f32.mrb[0].mxu0
      %v3187 = vadd.f32 0.0, %v3186
      %v3188 = vpop.f32.mrb[0].mxu0
      %3189 = vmatprep.mubr.bf16.mxu0 0
      %3190 = vmatmul.mubr.bf16.gmra.mrb[0].mxu0 %v3066
      %v3191 = vpop.f32.mrb[0].mxu0
      %v3192 = vadd.f32 0.0, %v3191
      %v3193 = vpop.f32.mrb[0].mxu0
      %v3194 = vpop.f32.mrb[0].mxu0
      %v3195 = vadd.f32 0.0, %v3194
      %v3196 = vpop.f32.mrb[0].mxu0
      %3197 = vmatprep.mubr.bf16.mxu0 0
      %3198 = vmatmul.mubr.bf16.gmra.mrb[0].mxu0 %v3069
      %v3199 = vpop.f32.mrb[0].mxu0
      %v3200 = vadd.f32 0.0, %v3199
      %v3201 = vpop.f32.mrb[0].mxu0
      %v3202 = vpop.f32.mrb[0].mxu0
      %v3203 = vadd.f32 0.0, %v3202
      %v3204 = vpop.f32.mrb[0].mxu0
      %3205 = vmatprep.mubr.bf16.mxu0 0
      %3206 = vmatmul.mubr.bf16.gmra.mrb[0].mxu0 %v3072
      %v3207 = vpop.f32.mrb[0].mxu0
      %v3208 = vadd.f32 0.0, %v3207
      %v3209 = vpop.f32.mrb[0].mxu0
      %v3210 = vpop.f32.mrb[0].mxu0
      %v3211 = vadd.f32 0.0, %v3210
      %v3212 = vpop.f32.mrb[0].mxu0
      %3213 = vmatprep.mubr.bf16.mxu0 0
      %3214 = vmatmul.mubr.bf16.gmra.mrb[0].mxu0 %v3075
      %v3215 = vpop.f32.mrb[0].mxu0
      %v3216 = vadd.f32 0.0, %v3215
      %v3217 = vpop.f32.mrb[0].mxu0
      %v3218 = vpop.f32.mrb[0].mxu0
      %v3219 = vadd.f32 0.0, %v3218
      %v3220 = vpop.f32.mrb[0].mxu0
      %3221 = vmatprep.mubr.bf16.mxu0 0
      %3222 = vmatmul.mubr.bf16.gmra.mrb[0].mxu0 %v3078
      %v3223 = vpop.f32.mrb[0].mxu0
      %v3224 = vadd.f32 0.0, %v3223
      %v3225 = vpop.f32.mrb[0].mxu0
      %v3226 = vpop.f32.mrb[0].mxu0
      %v3227 = vadd.f32 0.0, %v3226
      %v3228 = vpop.f32.mrb[0].mxu0
      %3229 = vmatprep.mubr.bf16.mxu0 0
      %3230 = vmatmul.mubr.bf16.gmra.mrb[0].mxu0 %v3081
      %v3231 = vpop.f32.mrb[0].mxu0
      %v3232 = vadd.f32 0.0, %v3231
      %v3233 = vpop.f32.mrb[0].mxu0
      %v3234 = vpop.f32.mrb[0].mxu0
      %v3235 = vadd.f32 0.0, %v3234
      %v3236 = vpop.f32.mrb[0].mxu0
      %3237 = vmatprep.mubr.bf16.mxu0 0
      %3238 = vmatmul.mubr.bf16.gmra.mrb[0].mxu0 %v3084
      %v3239 = vpop.f32.mrb[0].mxu0
      %v3240 = vadd.f32 0.0, %v3239
      %v3241 = vpop.f32.mrb[0].mxu0
      %v3242 = vpop.f32.mrb[0].mxu0
      %v3243 = vadd.f32 0.0, %v3242
      %v3244 = vpop.f32.mrb[0].mxu0
      %3245 = vmatprep.mubr.bf16.mxu0 0
      %3246 = vmatmul.mubr.bf16.gmra.mrb[0].mxu0 %v3087
      %v3247 = vpop.f32.mrb[0].mxu0
      %v3248 = vadd.f32 0.0, %v3247
      %v3249 = vpop.f32.mrb[0].mxu0
      %v3250 = vpop.f32.mrb[0].mxu0
      %v3251 = vadd.f32 0.0, %v3250
      %v3252 = vpop.f32.mrb[0].mxu0
      %3253 = vmatprep.mubr.bf16.mxu0 0
      %3254 = vmatmul.mubr.bf16.gmra.mrb[0].mxu0 %v3090
      %v3255 = vpop.f32.mrb[0].mxu0
      %v3256 = vadd.f32 0.0, %v3255
      %v3257 = vpop.f32.mrb[0].mxu0
      %v3258 = vpop.f32.mrb[0].mxu0
      %v3259 = vadd.f32 0.0, %v3258
      %v3260 = vpop.f32.mrb[0].mxu0
      %3261 = vmatprep.mubr.bf16.mxu0 0
      %3262 = vmatmul.mubr.bf16.gmra.mrb[0].mxu0 %v3093
      %v3263 = vpop.f32.mrb[0].mxu0
      %v3264 = vadd.f32 0.0, %v3263
      %v3265 = vpop.f32.mrb[0].mxu0
      %v3266 = vpop.f32.mrb[0].mxu0
      %v3267 = vadd.f32 0.0, %v3266
      %v3268 = vpop.f32.mrb[0].mxu0
      %3269 = vmatprep.mubr.bf16.mxu0 0
      %3270 = vmatmul.mubr.bf16.gmra.mrb[0].mxu0 %v3096
      %v3271 = vpop.f32.mrb[0].mxu0
      %v3272 = vadd.f32 0.0, %v3271
      %v3273 = vpop.f32.mrb[0].mxu0
      %v3274 = vpop.f32.mrb[0].mxu0
      %v3275 = vadd.f32 0.0, %v3274
      %v3276 = vpop.f32.mrb[0].mxu0
      %3277 = vdwg.mxu0
      %v3278 = vadd.f32 %v3006, %v3136
      %v3279 = vadd.f32 %v3007, %v3139
      %v3280 = vadd.f32 %v3008, %v3144
      %v3281 = vadd.f32 %v3009, %v3147
      %v3282 = vadd.f32 %v3010, %v3152
      %v3283 = vadd.f32 %v3011, %v3155
      %v3284 = vadd.f32 %v3012, %v3160
      %v3285 = vadd.f32 %v3013, %v3163
      %v3286 = vadd.f32 %v3014, %v3168
      %v3287 = vadd.f32 %v3015, %v3171
      %v3288 = vadd.f32 %v3016, %v3176
      %v3289 = vadd.f32 %v3017, %v3179
      %v3290 = vadd.f32 %v3018, %v3184
      %v3291 = vadd.f32 %v3019, %v3187
      %v3292 = vadd.f32 %v3020, %v3192
      %v3293 = vadd.f32 %v3021, %v3195
      %v3294 = vadd.f32 %v3022, %v3200
      %v3295 = vadd.f32 %v3023, %v3203
      %v3296 = vadd.f32 %v3024, %v3208
      %v3297 = vadd.f32 %v3025, %v3211
      %v3298 = vadd.f32 %v3026, %v3216
      %v3299 = vadd.f32 %v3027, %v3219
      %v3300 = vadd.f32 %v3028, %v3224
      %v3301 = vadd.f32 %v3029, %v3227
      %v3302 = vadd.f32 %v3030, %v3232
      %v3303 = vadd.f32 %v3031, %v3235
      %v3304 = vadd.f32 %v3032, %v3240
      %v3305 = vadd.f32 %v3033, %v3243
      %v3306 = vadd.f32 %v3034, %v3248
      %v3307 = vadd.f32 %v3035, %v3251
      %v3308 = vadd.f32 %v3036, %v3256
      %v3309 = vadd.f32 %v3037, %v3259
      %v3310 = vadd.f32 %v3038, %v3264
      %v3311 = vadd.f32 %v3039, %v3267
      %v3312 = vadd.f32 %v3040, %v3272
      %v3313 = vadd.f32 %v3041, %v3275
      %3314 = vst.msk [vmem:[#allocation4] sm:$0xff] %vm361, %v3278
      %3315 = vst.msk [vmem:[#allocation4 + $0x8] sm:$0xff] %vm361, %v3279
      %3316 = vst.msk [vmem:[#allocation4 + $0x10] sm:$0xff] %vm361, %v3280
      %3317 = vst.msk [vmem:[#allocation4 + $0x18] sm:$0xff] %vm361, %v3281
      %3318 = vst.msk [vmem:[#allocation4 + $0x20] sm:$0xff] %vm361, %v3282
      %3319 = vst.msk [vmem:[#allocation4 + $0x28] sm:$0xff] %vm361, %v3283
      %3320 = vst.msk [vmem:[#allocation4 + $0x30] sm:$0xff] %vm361, %v3284
      %3321 = vst.msk [vmem:[#allocation4 + $0x38] sm:$0xff] %vm361, %v3285
      %3322 = vst.msk [vmem:[#allocation4 + $0x40] sm:$0xff] %vm361, %v3286
      %3323 = vst.msk [vmem:[#allocation4 + $0x48] sm:$0xff] %vm361, %v3287
      %3324 = vst.msk [vmem:[#allocation4 + $0x50] sm:$0xff] %vm361, %v3288
      %3325 = vst.msk [vmem:[#allocation4 + $0x58] sm:$0xff] %vm361, %v3289
      %3326 = vst.msk [vmem:[#allocation4 + $0x60] sm:$0xff] %vm361, %v3290
      %3327 = vst.msk [vmem:[#allocation4 + $0x68] sm:$0xff] %vm361, %v3291
      %3328 = vst.msk [vmem:[#allocation4 + $0x70] sm:$0xff] %vm361, %v3292
      %3329 = vst.msk [vmem:[#allocation4 + $0x78] sm:$0xff] %vm361, %v3293
      %3330 = vst.msk [vmem:[#allocation4 + $0x80] sm:$0xff] %vm361, %v3294
      %3331 = vst.msk [vmem:[#allocation4 + $0x88] sm:$0xff] %vm361, %v3295
      %3332 = vst.msk [vmem:[#allocation4 + $0x90] sm:$0xff] %vm361, %v3296
      %3333 = vst.msk [vmem:[#allocation4 + $0x98] sm:$0xff] %vm361, %v3297
      %3334 = vst.msk [vmem:[#allocation4 + $0xa0] sm:$0xff] %vm361, %v3298
      %3335 = vst.msk [vmem:[#allocation4 + $0xa8] sm:$0xff] %vm361, %v3299
      %3336 = vst.msk [vmem:[#allocation4 + $0xb0] sm:$0xff] %vm361, %v3300
      %3337 = vst.msk [vmem:[#allocation4 + $0xb8] sm:$0xff] %vm361, %v3301
      %3338 = vst.msk [vmem:[#allocation4 + $0xc0] sm:$0xff] %vm361, %v3302
      %3339 = vst.msk [vmem:[#allocation4 + $0xc8] sm:$0xff] %vm361, %v3303
      %3340 = vst.msk [vmem:[#allocation4 + $0xd0] sm:$0xff] %vm361, %v3304
      %3341 = vst.msk [vmem:[#allocation4 + $0xd8] sm:$0xff] %vm361, %v3305
      %3342 = vst.msk [vmem:[#allocation4 + $0xe0] sm:$0xff] %vm361, %v3306
      %3343 = vst.msk [vmem:[#allocation4 + $0xe8] sm:$0xff] %vm361, %v3307
      %3344 = vst.msk [vmem:[#allocation4 + $0xf0] sm:$0xff] %vm361, %v3308
      %3345 = vst.msk [vmem:[#allocation4 + $0xf8] sm:$0xff] %vm361, %v3309
      %3346 = vst.msk [vmem:[#allocation4 + $0x100] sm:$0xff] %vm361, %v3310
      %3347 = vst.msk [vmem:[#allocation4 + $0x108] sm:$0xff] %vm361, %v3311
      %3348 = vst.msk [vmem:[#allocation4 + $0x110] sm:$0xff] %vm361, %v3312
      %3349 = vst.msk [vmem:[#allocation4 + $0x118] sm:$0xff] %vm361, %v3313
      %v3350 = vld [vmem:[#allocation2 + $0x25] sm:$0xff]
      %v3351 = vld [vmem:[#allocation2 + $0x2d] sm:$0xff]
      %v3352 = vld [vmem:[#allocation2 + $0x35] sm:$0xff]
      %v3353 = vld [vmem:[#allocation2 + $0x3d] sm:$0xff]
      %v3354 = vld [vmem:[#allocation2 + $0x45] sm:$0xff]
      %v3355 = vld [vmem:[#allocation2 + $0x4d] sm:$0xff]
      %v3356 = vld [vmem:[#allocation2 + $0x55] sm:$0xff]
      %v3357 = vld [vmem:[#allocation2 + $0x5d] sm:$0xff]
      %v3358 = vld [vmem:[#allocation2 + $0x65] sm:$0xff]
      %v3359 = vld [vmem:[#allocation2 + $0x6d] sm:$0xff]
      %v3360 = vld [vmem:[#allocation2 + $0x75] sm:$0xff]
      %v3361 = vld [vmem:[#allocation2 + $0x7d] sm:$0xff]
      %v3362 = vld [vmem:[#allocation2 + $0x85] sm:$0xff]
      %v3363 = vld [vmem:[#allocation2 + $0x8d] sm:$0xff]
      %v3364 = vld [vmem:[#allocation2 + $0x95] sm:$0xff]
      %v3365 = vld [vmem:[#allocation2 + $0x9d] sm:$0xff]
      %v3366 = vld [vmem:[#allocation2 + $0xa5] sm:$0xff]
      %v3367 = vld [vmem:[#allocation2 + $0xad] sm:$0xff]
      %v3368 = vld [vmem:[#allocation2 + $0xb5] sm:$0xff]
      %v3369 = vld [vmem:[#allocation2 + $0xbd] sm:$0xff]
      %v3370 = vld [vmem:[#allocation2 + $0xc5] sm:$0xff]
      %v3371 = vld [vmem:[#allocation2 + $0xcd] sm:$0xff]
      %v3372 = vld [vmem:[#allocation2 + $0xd5] sm:$0xff]
      %v3373 = vld [vmem:[#allocation2 + $0xdd] sm:$0xff]
      %v3374 = vld [vmem:[#allocation2 + $0xe5] sm:$0xff]
      %v3375 = vld [vmem:[#allocation2 + $0xed] sm:$0xff]
      %v3376 = vld [vmem:[#allocation2 + $0xf5] sm:$0xff]
      %v3377 = vld [vmem:[#allocation2 + $0xfd] sm:$0xff]
      %v3378 = vld [vmem:[#allocation2 + $0x105] sm:$0xff]
      %v3379 = vld [vmem:[#allocation2 + $0x10d] sm:$0xff]
      %v3380 = vld [vmem:[#allocation2 + $0x115] sm:$0xff]
      %v3381 = vld [vmem:[#allocation2 + $0x11d] sm:$0xff]
      %v3382 = vld [vmem:[#allocation2 + $0x125] sm:$0xff]
      %v3383 = vld [vmem:[#allocation2 + $0x12d] sm:$0xff]
      %v3384 = vld [vmem:[#allocation2 + $0x135] sm:$0xff]
      %v3385 = vld [vmem:[#allocation2 + $0x13d] sm:$0xff]
      %v3386 = vpack.c.bf16 %v3351, %v3350
      %v3387 = vpack.c.bf16 %v3353, %v3352
      %v3388 = vpack.c.bf16 %v3355, %v3354
      %v3389 = vpack.c.bf16 %v3357, %v3356
      %v3390 = vpack.c.bf16 %v3359, %v3358
      %v3391 = vpack.c.bf16 %v3361, %v3360
      %v3392 = vpack.c.bf16 %v3363, %v3362
      %v3393 = vpack.c.bf16 %v3365, %v3364
      %v3394 = vpack.c.bf16 %v3367, %v3366
      %v3395 = vpack.c.bf16 %v3369, %v3368
      %v3396 = vpack.c.bf16 %v3371, %v3370
      %v3397 = vpack.c.bf16 %v3373, %v3372
      %v3398 = vpack.c.bf16 %v3375, %v3374
      %v3399 = vpack.c.bf16 %v3377, %v3376
      %v3400 = vpack.c.bf16 %v3379, %v3378
      %v3401 = vpack.c.bf16 %v3381, %v3380
      %v3402 = vpack.c.bf16 %v3383, %v3382
      %v3403 = vpack.c.bf16 %v3385, %v3384
      %v3404 = vld [vmem:[#allocation4] sm:$0xff]
      %v3405 = vld [vmem:[#allocation4 + $0x8] sm:$0xff]
      %v3406 = vld [vmem:[#allocation4 + $0x10] sm:$0xff]
      %v3407 = vld [vmem:[#allocation4 + $0x18] sm:$0xff]
      %v3408 = vld [vmem:[#allocation4 + $0x20] sm:$0xff]
      %v3409 = vld [vmem:[#allocation4 + $0x28] sm:$0xff]
      %v3410 = vld [vmem:[#allocation4 + $0x30] sm:$0xff]
      %v3411 = vld [vmem:[#allocation4 + $0x38] sm:$0xff]
      %v3412 = vld [vmem:[#allocation4 + $0x40] sm:$0xff]
      %v3413 = vld [vmem:[#allocation4 + $0x48] sm:$0xff]
      %v3414 = vld [vmem:[#allocation4 + $0x50] sm:$0xff]
      %v3415 = vld [vmem:[#allocation4 + $0x58] sm:$0xff]
      %v3416 = vld [vmem:[#allocation4 + $0x60] sm:$0xff]
      %v3417 = vld [vmem:[#allocation4 + $0x68] sm:$0xff]
      %v3418 = vld [vmem:[#allocation4 + $0x70] sm:$0xff]
      %v3419 = vld [vmem:[#allocation4 + $0x78] sm:$0xff]
      %v3420 = vld [vmem:[#allocation4 + $0x80] sm:$0xff]
      %v3421 = vld [vmem:[#allocation4 + $0x88] sm:$0xff]
      %v3422 = vld [vmem:[#allocation4 + $0x90] sm:$0xff]
      %v3423 = vld [vmem:[#allocation4 + $0x98] sm:$0xff]
      %v3424 = vld [vmem:[#allocation4 + $0xa0] sm:$0xff]
      %v3425 = vld [vmem:[#allocation4 + $0xa8] sm:$0xff]
      %v3426 = vld [vmem:[#allocation4 + $0xb0] sm:$0xff]
      %v3427 = vld [vmem:[#allocation4 + $0xb8] sm:$0xff]
      %v3428 = vld [vmem:[#allocation4 + $0xc0] sm:$0xff]
      %v3429 = vld [vmem:[#allocation4 + $0xc8] sm:$0xff]
      %v3430 = vld [vmem:[#allocation4 + $0xd0] sm:$0xff]
      %v3431 = vld [vmem:[#allocation4 + $0xd8] sm:$0xff]
      %v3432 = vld [vmem:[#allocation4 + $0xe0] sm:$0xff]
      %v3433 = vld [vmem:[#allocation4 + $0xe8] sm:$0xff]
      %v3434 = vld [vmem:[#allocation4 + $0xf0] sm:$0xff]
      %v3435 = vld [vmem:[#allocation4 + $0xf8] sm:$0xff]
      %v3436 = vld [vmem:[#allocation4 + $0x100] sm:$0xff]
      %v3437 = vld [vmem:[#allocation4 + $0x108] sm:$0xff]
      %v3438 = vld [vmem:[#allocation4 + $0x110] sm:$0xff]
      %v3439 = vld [vmem:[#allocation4 + $0x118] sm:$0xff]
      %s3440 = scalar_lea.vmem %s2, 14
      %v3441 = vld [vmem:[%s3440] sm:$0x3]
      %v3443 = vsel %vm361, %v3386, 0
      %v3446 = vsel %vm361, %v3387, 0
      %v3449 = vsel %vm361, %v3388, 0
      %v3452 = vsel %vm361, %v3389, 0
      %v3455 = vsel %vm361, %v3390, 0
      %v3458 = vsel %vm361, %v3391, 0
      %v3461 = vsel %vm361, %v3392, 0
      %v3464 = vsel %vm361, %v3393, 0
      %v3467 = vsel %vm361, %v3394, 0
      %v3470 = vsel %vm361, %v3395, 0
      %v3473 = vsel %vm361, %v3396, 0
      %v3476 = vsel %vm361, %v3397, 0
      %v3479 = vsel %vm361, %v3398, 0
      %v3482 = vsel %vm361, %v3399, 0
      %v3485 = vsel %vm361, %v3400, 0
      %v3488 = vsel %vm361, %v3401, 0
      %v3491 = vsel %vm361, %v3402, 0
      %v3494 = vsel %vm361, %v3403, 0
      %v3497 = vsel %vm709, %v3441, 0
      %3499 = vmatprep.subr.bf16.mxu0 0
      %3500 = vmatpush1.bf16.msra.mxu0 %v3497
      %3501 = vmatprep.subr.bf16.mxu0 0
      %3502 = vmatpush1.bf16.msra.mxu0 0
      %3503 = vmatprep.subr.bf16.mxu0 0
      %3504 = vmatpush1.bf16.msra.mxu0 0
      %3505 = vmatprep.subr.bf16.mxu0 0
      %3506 = vmatpush1.bf16.msra.mxu0 0
      %3507 = vmatprep.subr.bf16.mxu0 0
      %3508 = vmatpush1.bf16.msra.mxu0 0
      %3509 = vmatprep.subr.bf16.mxu0 0
      %3510 = vmatpush1.bf16.msra.mxu0 0
      %3511 = vmatprep.subr.bf16.mxu0 0
      %3512 = vmatpush1.bf16.msra.mxu0 0
      %3513 = vmatprep.subr.bf16.mxu0 0
      %3514 = vmatpush1.bf16.msra.mxu0 0
      %3515 = vmatprep.subr.bf16.mxu0 0
      %3516 = vmatpush1.bf16.msra.mxu0 0
      %3517 = vmatprep.subr.bf16.mxu0 0
      %3518 = vmatpush1.bf16.msra.mxu0 0
      %3519 = vmatprep.subr.bf16.mxu0 0
      %3520 = vmatpush1.bf16.msra.mxu0 0
      %3521 = vmatprep.subr.bf16.mxu0 0
      %3522 = vmatpush1.bf16.msra.mxu0 0
      %3523 = vmatprep.subr.bf16.mxu0 0
      %3524 = vmatpush1.bf16.msra.mxu0 0
      %3525 = vmatprep.subr.bf16.mxu0 0
      %3526 = vmatpush1.bf16.msra.mxu0 0
      %3527 = vmatprep.subr.bf16.mxu0 0
      %3528 = vmatpush1.bf16.msra.mxu0 0
      %3529 = vmatprep.subr.bf16.mxu0 0
      %3530 = vmatpush1.bf16.msra.mxu0 0
      %3531 = vmatprep.mubr.bf16.mxu0 0
      %3532 = vmatmul.mubr.bf16.gmra.mrb[0].mxu0 %v3443
      %v3533 = vpop.f32.mrb[0].mxu0
      %v3534 = vadd.f32 0.0, %v3533
      %v3535 = vpop.f32.mrb[0].mxu0
      %v3536 = vpop.f32.mrb[0].mxu0
      %v3537 = vadd.f32 0.0, %v3536
      %v3538 = vpop.f32.mrb[0].mxu0
      %3539 = vmatprep.mubr.bf16.mxu0 0
      %3540 = vmatmul.mubr.bf16.gmra.mrb[0].mxu0 %v3446
      %v3541 = vpop.f32.mrb[0].mxu0
      %v3542 = vadd.f32 0.0, %v3541
      %v3543 = vpop.f32.mrb[0].mxu0
      %v3544 = vpop.f32.mrb[0].mxu0
      %v3545 = vadd.f32 0.0, %v3544
      %v3546 = vpop.f32.mrb[0].mxu0
      %3547 = vmatprep.mubr.bf16.mxu0 0
      %3548 = vmatmul.mubr.bf16.gmra.mrb[0].mxu0 %v3449
      %v3549 = vpop.f32.mrb[0].mxu0
      %v3550 = vadd.f32 0.0, %v3549
      %v3551 = vpop.f32.mrb[0].mxu0
      %v3552 = vpop.f32.mrb[0].mxu0
      %v3553 = vadd.f32 0.0, %v3552
      %v3554 = vpop.f32.mrb[0].mxu0
      %3555 = vmatprep.mubr.bf16.mxu0 0
      %3556 = vmatmul.mubr.bf16.gmra.mrb[0].mxu0 %v3452
      %v3557 = vpop.f32.mrb[0].mxu0
      %v3558 = vadd.f32 0.0, %v3557
      %v3559 = vpop.f32.mrb[0].mxu0
      %v3560 = vpop.f32.mrb[0].mxu0
      %v3561 = vadd.f32 0.0, %v3560
      %v3562 = vpop.f32.mrb[0].mxu0
      %3563 = vmatprep.mubr.bf16.mxu0 0
      %3564 = vmatmul.mubr.bf16.gmra.mrb[0].mxu0 %v3455
      %v3565 = vpop.f32.mrb[0].mxu0
      %v3566 = vadd.f32 0.0, %v3565
      %v3567 = vpop.f32.mrb[0].mxu0
      %v3568 = vpop.f32.mrb[0].mxu0
      %v3569 = vadd.f32 0.0, %v3568
      %v3570 = vpop.f32.mrb[0].mxu0
      %3571 = vmatprep.mubr.bf16.mxu0 0
      %3572 = vmatmul.mubr.bf16.gmra.mrb[0].mxu0 %v3458
      %v3573 = vpop.f32.mrb[0].mxu0
      %v3574 = vadd.f32 0.0, %v3573
      %v3575 = vpop.f32.mrb[0].mxu0
      %v3576 = vpop.f32.mrb[0].mxu0
      %v3577 = vadd.f32 0.0, %v3576
      %v3578 = vpop.f32.mrb[0].mxu0
      %3579 = vmatprep.mubr.bf16.mxu0 0
      %3580 = vmatmul.mubr.bf16.gmra.mrb[0].mxu0 %v3461
      %v3581 = vpop.f32.mrb[0].mxu0
      %v3582 = vadd.f32 0.0, %v3581
      %v3583 = vpop.f32.mrb[0].mxu0
      %v3584 = vpop.f32.mrb[0].mxu0
      %v3585 = vadd.f32 0.0, %v3584
      %v3586 = vpop.f32.mrb[0].mxu0
      %3587 = vmatprep.mubr.bf16.mxu0 0
      %3588 = vmatmul.mubr.bf16.gmra.mrb[0].mxu0 %v3464
      %v3589 = vpop.f32.mrb[0].mxu0
      %v3590 = vadd.f32 0.0, %v3589
      %v3591 = vpop.f32.mrb[0].mxu0
      %v3592 = vpop.f32.mrb[0].mxu0
      %v3593 = vadd.f32 0.0, %v3592
      %v3594 = vpop.f32.mrb[0].mxu0
      %3595 = vmatprep.mubr.bf16.mxu0 0
      %3596 = vmatmul.mubr.bf16.gmra.mrb[0].mxu0 %v3467
      %v3597 = vpop.f32.mrb[0].mxu0
      %v3598 = vadd.f32 0.0, %v3597
      %v3599 = vpop.f32.mrb[0].mxu0
      %v3600 = vpop.f32.mrb[0].mxu0
      %v3601 = vadd.f32 0.0, %v3600
      %v3602 = vpop.f32.mrb[0].mxu0
      %3603 = vmatprep.mubr.bf16.mxu0 0
      %3604 = vmatmul.mubr.bf16.gmra.mrb[0].mxu0 %v3470
      %v3605 = vpop.f32.mrb[0].mxu0
      %v3606 = vadd.f32 0.0, %v3605
      %v3607 = vpop.f32.mrb[0].mxu0
      %v3608 = vpop.f32.mrb[0].mxu0
      %v3609 = vadd.f32 0.0, %v3608
      %v3610 = vpop.f32.mrb[0].mxu0
      %3611 = vmatprep.mubr.bf16.mxu0 0
      %3612 = vmatmul.mubr.bf16.gmra.mrb[0].mxu0 %v3473
      %v3613 = vpop.f32.mrb[0].mxu0
      %v3614 = vadd.f32 0.0, %v3613
      %v3615 = vpop.f32.mrb[0].mxu0
      %v3616 = vpop.f32.mrb[0].mxu0
      %v3617 = vadd.f32 0.0, %v3616
      %v3618 = vpop.f32.mrb[0].mxu0
      %3619 = vmatprep.mubr.bf16.mxu0 0
      %3620 = vmatmul.mubr.bf16.gmra.mrb[0].mxu0 %v3476
      %v3621 = vpop.f32.mrb[0].mxu0
      %v3622 = vadd.f32 0.0, %v3621
      %v3623 = vpop.f32.mrb[0].mxu0
      %v3624 = vpop.f32.mrb[0].mxu0
      %v3625 = vadd.f32 0.0, %v3624
      %v3626 = vpop.f32.mrb[0].mxu0
      %3627 = vmatprep.mubr.bf16.mxu0 0
      %3628 = vmatmul.mubr.bf16.gmra.mrb[0].mxu0 %v3479
      %v3629 = vpop.f32.mrb[0].mxu0
      %v3630 = vadd.f32 0.0, %v3629
      %v3631 = vpop.f32.mrb[0].mxu0
      %v3632 = vpop.f32.mrb[0].mxu0
      %v3633 = vadd.f32 0.0, %v3632
      %v3634 = vpop.f32.mrb[0].mxu0
      %3635 = vmatprep.mubr.bf16.mxu0 0
      %3636 = vmatmul.mubr.bf16.gmra.mrb[0].mxu0 %v3482
      %v3637 = vpop.f32.mrb[0].mxu0
      %v3638 = vadd.f32 0.0, %v3637
      %v3639 = vpop.f32.mrb[0].mxu0
      %v3640 = vpop.f32.mrb[0].mxu0
      %v3641 = vadd.f32 0.0, %v3640
      %v3642 = vpop.f32.mrb[0].mxu0
      %3643 = vmatprep.mubr.bf16.mxu0 0
      %3644 = vmatmul.mubr.bf16.gmra.mrb[0].mxu0 %v3485
      %v3645 = vpop.f32.mrb[0].mxu0
      %v3646 = vadd.f32 0.0, %v3645
      %v3647 = vpop.f32.mrb[0].mxu0
      %v3648 = vpop.f32.mrb[0].mxu0
      %v3649 = vadd.f32 0.0, %v3648
      %v3650 = vpop.f32.mrb[0].mxu0
      %3651 = vmatprep.mubr.bf16.mxu0 0
      %3652 = vmatmul.mubr.bf16.gmra.mrb[0].mxu0 %v3488
      %v3653 = vpop.f32.mrb[0].mxu0
      %v3654 = vadd.f32 0.0, %v3653
      %v3655 = vpop.f32.mrb[0].mxu0
      %v3656 = vpop.f32.mrb[0].mxu0
      %v3657 = vadd.f32 0.0, %v3656
      %v3658 = vpop.f32.mrb[0].mxu0
      %3659 = vmatprep.mubr.bf16.mxu0 0
      %3660 = vmatmul.mubr.bf16.gmra.mrb[0].mxu0 %v3491
      %v3661 = vpop.f32.mrb[0].mxu0
      %v3662 = vadd.f32 0.0, %v3661
      %v3663 = vpop.f32.mrb[0].mxu0
      %v3664 = vpop.f32.mrb[0].mxu0
      %v3665 = vadd.f32 0.0, %v3664
      %v3666 = vpop.f32.mrb[0].mxu0
      %3667 = vmatprep.mubr.bf16.mxu0 0
      %3668 = vmatmul.mubr.bf16.gmra.mrb[0].mxu0 %v3494
      %v3669 = vpop.f32.mrb[0].mxu0
      %v3670 = vadd.f32 0.0, %v3669
      %v3671 = vpop.f32.mrb[0].mxu0
      %v3672 = vpop.f32.mrb[0].mxu0
      %v3673 = vadd.f32 0.0, %v3672
      %v3674 = vpop.f32.mrb[0].mxu0
      %3675 = vdwg.mxu0
      %v3676 = vadd.f32 %v3404, %v3534
      %v3677 = vadd.f32 %v3405, %v3537
      %v3678 = vadd.f32 %v3406, %v3542
      %v3679 = vadd.f32 %v3407, %v3545
      %v3680 = vadd.f32 %v3408, %v3550
      %v3681 = vadd.f32 %v3409, %v3553
      %v3682 = vadd.f32 %v3410, %v3558
      %v3683 = vadd.f32 %v3411, %v3561
      %v3684 = vadd.f32 %v3412, %v3566
      %v3685 = vadd.f32 %v3413, %v3569
      %v3686 = vadd.f32 %v3414, %v3574
      %v3687 = vadd.f32 %v3415, %v3577
      %v3688 = vadd.f32 %v3416, %v3582
      %v3689 = vadd.f32 %v3417, %v3585
      %v3690 = vadd.f32 %v3418, %v3590
      %v3691 = vadd.f32 %v3419, %v3593
      %v3692 = vadd.f32 %v3420, %v3598
      %v3693 = vadd.f32 %v3421, %v3601
      %v3694 = vadd.f32 %v3422, %v3606
      %v3695 = vadd.f32 %v3423, %v3609
      %v3696 = vadd.f32 %v3424, %v3614
      %v3697 = vadd.f32 %v3425, %v3617
      %v3698 = vadd.f32 %v3426, %v3622
      %v3699 = vadd.f32 %v3427, %v3625
      %v3700 = vadd.f32 %v3428, %v3630
      %v3701 = vadd.f32 %v3429, %v3633
      %v3702 = vadd.f32 %v3430, %v3638
      %v3703 = vadd.f32 %v3431, %v3641
      %v3704 = vadd.f32 %v3432, %v3646
      %v3705 = vadd.f32 %v3433, %v3649
      %v3706 = vadd.f32 %v3434, %v3654
      %v3707 = vadd.f32 %v3435, %v3657
      %v3708 = vadd.f32 %v3436, %v3662
      %v3709 = vadd.f32 %v3437, %v3665
      %v3710 = vadd.f32 %v3438, %v3670
      %v3711 = vadd.f32 %v3439, %v3673
      %3712 = vst.msk [vmem:[#allocation4] sm:$0xff] %vm361, %v3676
      %3713 = vst.msk [vmem:[#allocation4 + $0x8] sm:$0xff] %vm361, %v3677
      %3714 = vst.msk [vmem:[#allocation4 + $0x10] sm:$0xff] %vm361, %v3678
      %3715 = vst.msk [vmem:[#allocation4 + $0x18] sm:$0xff] %vm361, %v3679
      %3716 = vst.msk [vmem:[#allocation4 + $0x20] sm:$0xff] %vm361, %v3680
      %3717 = vst.msk [vmem:[#allocation4 + $0x28] sm:$0xff] %vm361, %v3681
      %3718 = vst.msk [vmem:[#allocation4 + $0x30] sm:$0xff] %vm361, %v3682
      %3719 = vst.msk [vmem:[#allocation4 + $0x38] sm:$0xff] %vm361, %v3683
      %3720 = vst.msk [vmem:[#allocation4 + $0x40] sm:$0xff] %vm361, %v3684
      %3721 = vst.msk [vmem:[#allocation4 + $0x48] sm:$0xff] %vm361, %v3685
      %3722 = vst.msk [vmem:[#allocation4 + $0x50] sm:$0xff] %vm361, %v3686
      %3723 = vst.msk [vmem:[#allocation4 + $0x58] sm:$0xff] %vm361, %v3687
      %3724 = vst.msk [vmem:[#allocation4 + $0x60] sm:$0xff] %vm361, %v3688
      %3725 = vst.msk [vmem:[#allocation4 + $0x68] sm:$0xff] %vm361, %v3689
      %3726 = vst.msk [vmem:[#allocation4 + $0x70] sm:$0xff] %vm361, %v3690
      %3727 = vst.msk [vmem:[#allocation4 + $0x78] sm:$0xff] %vm361, %v3691
      %3728 = vst.msk [vmem:[#allocation4 + $0x80] sm:$0xff] %vm361, %v3692
      %3729 = vst.msk [vmem:[#allocation4 + $0x88] sm:$0xff] %vm361, %v3693
      %3730 = vst.msk [vmem:[#allocation4 + $0x90] sm:$0xff] %vm361, %v3694
      %3731 = vst.msk [vmem:[#allocation4 + $0x98] sm:$0xff] %vm361, %v3695
      %3732 = vst.msk [vmem:[#allocation4 + $0xa0] sm:$0xff] %vm361, %v3696
      %3733 = vst.msk [vmem:[#allocation4 + $0xa8] sm:$0xff] %vm361, %v3697
      %3734 = vst.msk [vmem:[#allocation4 + $0xb0] sm:$0xff] %vm361, %v3698
      %3735 = vst.msk [vmem:[#allocation4 + $0xb8] sm:$0xff] %vm361, %v3699
      %3736 = vst.msk [vmem:[#allocation4 + $0xc0] sm:$0xff] %vm361, %v3700
      %3737 = vst.msk [vmem:[#allocation4 + $0xc8] sm:$0xff] %vm361, %v3701
      %3738 = vst.msk [vmem:[#allocation4 + $0xd0] sm:$0xff] %vm361, %v3702
      %3739 = vst.msk [vmem:[#allocation4 + $0xd8] sm:$0xff] %vm361, %v3703
      %3740 = vst.msk [vmem:[#allocation4 + $0xe0] sm:$0xff] %vm361, %v3704
      %3741 = vst.msk [vmem:[#allocation4 + $0xe8] sm:$0xff] %vm361, %v3705
      %3742 = vst.msk [vmem:[#allocation4 + $0xf0] sm:$0xff] %vm361, %v3706
      %3743 = vst.msk [vmem:[#allocation4 + $0xf8] sm:$0xff] %vm361, %v3707
      %3744 = vst.msk [vmem:[#allocation4 + $0x100] sm:$0xff] %vm361, %v3708
      %3745 = vst.msk [vmem:[#allocation4 + $0x108] sm:$0xff] %vm361, %v3709
      %3746 = vst.msk [vmem:[#allocation4 + $0x110] sm:$0xff] %vm361, %v3710
      %3747 = vst.msk [vmem:[#allocation4 + $0x118] sm:$0xff] %vm361, %v3711
      %v3748 = vld [vmem:[#allocation2 + $0x26] sm:$0xff]
      %v3749 = vld [vmem:[#allocation2 + $0x2e] sm:$0xff]
      %v3750 = vld [vmem:[#allocation2 + $0x36] sm:$0xff]
      %v3751 = vld [vmem:[#allocation2 + $0x3e] sm:$0xff]
      %v3752 = vld [vmem:[#allocation2 + $0x46] sm:$0xff]
      %v3753 = vld [vmem:[#allocation2 + $0x4e] sm:$0xff]
      %v3754 = vld [vmem:[#allocation2 + $0x56] sm:$0xff]
      %v3755 = vld [vmem:[#allocation2 + $0x5e] sm:$0xff]
      %v3756 = vld [vmem:[#allocation2 + $0x66] sm:$0xff]
      %v3757 = vld [vmem:[#allocation2 + $0x6e] sm:$0xff]
      %v3758 = vld [vmem:[#allocation2 + $0x76] sm:$0xff]
      %v3759 = vld [vmem:[#allocation2 + $0x7e] sm:$0xff]
      %v3760 = vld [vmem:[#allocation2 + $0x86] sm:$0xff]
      %v3761 = vld [vmem:[#allocation2 + $0x8e] sm:$0xff]
      %v3762 = vld [vmem:[#allocation2 + $0x96] sm:$0xff]
      %v3763 = vld [vmem:[#allocation2 + $0x9e] sm:$0xff]
      %v3764 = vld [vmem:[#allocation2 + $0xa6] sm:$0xff]
      %v3765 = vld [vmem:[#allocation2 + $0xae] sm:$0xff]
      %v3766 = vld [vmem:[#allocation2 + $0xb6] sm:$0xff]
      %v3767 = vld [vmem:[#allocation2 + $0xbe] sm:$0xff]
      %v3768 = vld [vmem:[#allocation2 + $0xc6] sm:$0xff]
      %v3769 = vld [vmem:[#allocation2 + $0xce] sm:$0xff]
      %v3770 = vld [vmem:[#allocation2 + $0xd6] sm:$0xff]
      %v3771 = vld [vmem:[#allocation2 + $0xde] sm:$0xff]
      %v3772 = vld [vmem:[#allocation2 + $0xe6] sm:$0xff]
      %v3773 = vld [vmem:[#allocation2 + $0xee] sm:$0xff]
      %v3774 = vld [vmem:[#allocation2 + $0xf6] sm:$0xff]
      %v3775 = vld [vmem:[#allocation2 + $0xfe] sm:$0xff]
      %v3776 = vld [vmem:[#allocation2 + $0x106] sm:$0xff]
      %v3777 = vld [vmem:[#allocation2 + $0x10e] sm:$0xff]
      %v3778 = vld [vmem:[#allocation2 + $0x116] sm:$0xff]
      %v3779 = vld [vmem:[#allocation2 + $0x11e] sm:$0xff]
      %v3780 = vld [vmem:[#allocation2 + $0x126] sm:$0xff]
      %v3781 = vld [vmem:[#allocation2 + $0x12e] sm:$0xff]
      %v3782 = vld [vmem:[#allocation2 + $0x136] sm:$0xff]
      %v3783 = vld [vmem:[#allocation2 + $0x13e] sm:$0xff]
      %v3784 = vpack.c.bf16 %v3749, %v3748
      %v3785 = vpack.c.bf16 %v3751, %v3750
      %v3786 = vpack.c.bf16 %v3753, %v3752
      %v3787 = vpack.c.bf16 %v3755, %v3754
      %v3788 = vpack.c.bf16 %v3757, %v3756
      %v3789 = vpack.c.bf16 %v3759, %v3758
      %v3790 = vpack.c.bf16 %v3761, %v3760
      %v3791 = vpack.c.bf16 %v3763, %v3762
      %v3792 = vpack.c.bf16 %v3765, %v3764
      %v3793 = vpack.c.bf16 %v3767, %v3766
      %v3794 = vpack.c.bf16 %v3769, %v3768
      %v3795 = vpack.c.bf16 %v3771, %v3770
      %v3796 = vpack.c.bf16 %v3773, %v3772
      %v3797 = vpack.c.bf16 %v3775, %v3774
      %v3798 = vpack.c.bf16 %v3777, %v3776
      %v3799 = vpack.c.bf16 %v3779, %v3778
      %v3800 = vpack.c.bf16 %v3781, %v3780
      %v3801 = vpack.c.bf16 %v3783, %v3782
      %v3802 = vld [vmem:[#allocation4] sm:$0xff]
      %v3803 = vld [vmem:[#allocation4 + $0x8] sm:$0xff]
      %v3804 = vld [vmem:[#allocation4 + $0x10] sm:$0xff]
      %v3805 = vld [vmem:[#allocation4 + $0x18] sm:$0xff]
      %v3806 = vld [vmem:[#allocation4 + $0x20] sm:$0xff]
      %v3807 = vld [vmem:[#allocation4 + $0x28] sm:$0xff]
      %v3808 = vld [vmem:[#allocation4 + $0x30] sm:$0xff]
      %v3809 = vld [vmem:[#allocation4 + $0x38] sm:$0xff]
      %v3810 = vld [vmem:[#allocation4 + $0x40] sm:$0xff]
      %v3811 = vld [vmem:[#allocation4 + $0x48] sm:$0xff]
      %v3812 = vld [vmem:[#allocation4 + $0x50] sm:$0xff]
      %v3813 = vld [vmem:[#allocation4 + $0x58] sm:$0xff]
      %v3814 = vld [vmem:[#allocation4 + $0x60] sm:$0xff]
      %v3815 = vld [vmem:[#allocation4 + $0x68] sm:$0xff]
      %v3816 = vld [vmem:[#allocation4 + $0x70] sm:$0xff]
      %v3817 = vld [vmem:[#allocation4 + $0x78] sm:$0xff]
      %v3818 = vld [vmem:[#allocation4 + $0x80] sm:$0xff]
      %v3819 = vld [vmem:[#allocation4 + $0x88] sm:$0xff]
      %v3820 = vld [vmem:[#allocation4 + $0x90] sm:$0xff]
      %v3821 = vld [vmem:[#allocation4 + $0x98] sm:$0xff]
      %v3822 = vld [vmem:[#allocation4 + $0xa0] sm:$0xff]
      %v3823 = vld [vmem:[#allocation4 + $0xa8] sm:$0xff]
      %v3824 = vld [vmem:[#allocation4 + $0xb0] sm:$0xff]
      %v3825 = vld [vmem:[#allocation4 + $0xb8] sm:$0xff]
      %v3826 = vld [vmem:[#allocation4 + $0xc0] sm:$0xff]
      %v3827 = vld [vmem:[#allocation4 + $0xc8] sm:$0xff]
      %v3828 = vld [vmem:[#allocation4 + $0xd0] sm:$0xff]
      %v3829 = vld [vmem:[#allocation4 + $0xd8] sm:$0xff]
      %v3830 = vld [vmem:[#allocation4 + $0xe0] sm:$0xff]
      %v3831 = vld [vmem:[#allocation4 + $0xe8] sm:$0xff]
      %v3832 = vld [vmem:[#allocation4 + $0xf0] sm:$0xff]
      %v3833 = vld [vmem:[#allocation4 + $0xf8] sm:$0xff]
      %v3834 = vld [vmem:[#allocation4 + $0x100] sm:$0xff]
      %v3835 = vld [vmem:[#allocation4 + $0x108] sm:$0xff]
      %v3836 = vld [vmem:[#allocation4 + $0x110] sm:$0xff]
      %v3837 = vld [vmem:[#allocation4 + $0x118] sm:$0xff]
      %s3838 = scalar_lea.vmem %s2, 16
      %v3839 = vld [vmem:[%s3838] sm:$0x3]
      %v3841 = vsel %vm361, %v3784, 0
      %v3844 = vsel %vm361, %v3785, 0
      %v3847 = vsel %vm361, %v3786, 0
      %v3850 = vsel %vm361, %v3787, 0
      %v3853 = vsel %vm361, %v3788, 0
      %v3856 = vsel %vm361, %v3789, 0
      %v3859 = vsel %vm361, %v3790, 0
      %v3862 = vsel %vm361, %v3791, 0
      %v3865 = vsel %vm361, %v3792, 0
      %v3868 = vsel %vm361, %v3793, 0
      %v3871 = vsel %vm361, %v3794, 0
      %v3874 = vsel %vm361, %v3795, 0
      %v3877 = vsel %vm361, %v3796, 0
      %v3880 = vsel %vm361, %v3797, 0
      %v3883 = vsel %vm361, %v3798, 0
      %v3886 = vsel %vm361, %v3799, 0
      %v3889 = vsel %vm361, %v3800, 0
      %v3892 = vsel %vm361, %v3801, 0
      %v3895 = vsel %vm709, %v3839, 0
      %3897 = vmatprep.subr.bf16.mxu0 0
      %3898 = vmatpush1.bf16.msra.mxu0 %v3895
      %3899 = vmatprep.subr.bf16.mxu0 0
      %3900 = vmatpush1.bf16.msra.mxu0 0
      %3901 = vmatprep.subr.bf16.mxu0 0
      %3902 = vmatpush1.bf16.msra.mxu0 0
      %3903 = vmatprep.subr.bf16.mxu0 0
      %3904 = vmatpush1.bf16.msra.mxu0 0
      %3905 = vmatprep.subr.bf16.mxu0 0
      %3906 = vmatpush1.bf16.msra.mxu0 0
      %3907 = vmatprep.subr.bf16.mxu0 0
      %3908 = vmatpush1.bf16.msra.mxu0 0
      %3909 = vmatprep.subr.bf16.mxu0 0
      %3910 = vmatpush1.bf16.msra.mxu0 0
      %3911 = vmatprep.subr.bf16.mxu0 0
      %3912 = vmatpush1.bf16.msra.mxu0 0
      %3913 = vmatprep.subr.bf16.mxu0 0
      %3914 = vmatpush1.bf16.msra.mxu0 0
      %3915 = vmatprep.subr.bf16.mxu0 0
      %3916 = vmatpush1.bf16.msra.mxu0 0
      %3917 = vmatprep.subr.bf16.mxu0 0
      %3918 = vmatpush1.bf16.msra.mxu0 0
      %3919 = vmatprep.subr.bf16.mxu0 0
      %3920 = vmatpush1.bf16.msra.mxu0 0
      %3921 = vmatprep.subr.bf16.mxu0 0
      %3922 = vmatpush1.bf16.msra.mxu0 0
      %3923 = vmatprep.subr.bf16.mxu0 0
      %3924 = vmatpush1.bf16.msra.mxu0 0
      %3925 = vmatprep.subr.bf16.mxu0 0
      %3926 = vmatpush1.bf16.msra.mxu0 0
      %3927 = vmatprep.subr.bf16.mxu0 0
      %3928 = vmatpush1.bf16.msra.mxu0 0
      %3929 = vmatprep.mubr.bf16.mxu0 0
      %3930 = vmatmul.mubr.bf16.gmra.mrb[0].mxu0 %v3841
      %v3931 = vpop.f32.mrb[0].mxu0
      %v3932 = vadd.f32 0.0, %v3931
      %v3933 = vpop.f32.mrb[0].mxu0
      %v3934 = vpop.f32.mrb[0].mxu0
      %v3935 = vadd.f32 0.0, %v3934
      %v3936 = vpop.f32.mrb[0].mxu0
      %3937 = vmatprep.mubr.bf16.mxu0 0
      %3938 = vmatmul.mubr.bf16.gmra.mrb[0].mxu0 %v3844
      %v3939 = vpop.f32.mrb[0].mxu0
      %v3940 = vadd.f32 0.0, %v3939
      %v3941 = vpop.f32.mrb[0].mxu0
      %v3942 = vpop.f32.mrb[0].mxu0
      %v3943 = vadd.f32 0.0, %v3942
      %v3944 = vpop.f32.mrb[0].mxu0
      %3945 = vmatprep.mubr.bf16.mxu0 0
      %3946 = vmatmul.mubr.bf16.gmra.mrb[0].mxu0 %v3847
      %v3947 = vpop.f32.mrb[0].mxu0
      %v3948 = vadd.f32 0.0, %v3947
      %v3949 = vpop.f32.mrb[0].mxu0
      %v3950 = vpop.f32.mrb[0].mxu0
      %v3951 = vadd.f32 0.0, %v3950
      %v3952 = vpop.f32.mrb[0].mxu0
      %3953 = vmatprep.mubr.bf16.mxu0 0
      %3954 = vmatmul.mubr.bf16.gmra.mrb[0].mxu0 %v3850
      %v3955 = vpop.f32.mrb[0].mxu0
      %v3956 = vadd.f32 0.0, %v3955
      %v3957 = vpop.f32.mrb[0].mxu0
      %v3958 = vpop.f32.mrb[0].mxu0
      %v3959 = vadd.f32 0.0, %v3958
      %v3960 = vpop.f32.mrb[0].mxu0
      %3961 = vmatprep.mubr.bf16.mxu0 0
      %3962 = vmatmul.mubr.bf16.gmra.mrb[0].mxu0 %v3853
      %v3963 = vpop.f32.mrb[0].mxu0
      %v3964 = vadd.f32 0.0, %v3963
      %v3965 = vpop.f32.mrb[0].mxu0
      %v3966 = vpop.f32.mrb[0].mxu0
      %v3967 = vadd.f32 0.0, %v3966
      %v3968 = vpop.f32.mrb[0].mxu0
      %3969 = vmatprep.mubr.bf16.mxu0 0
      %3970 = vmatmul.mubr.bf16.gmra.mrb[0].mxu0 %v3856
      %v3971 = vpop.f32.mrb[0].mxu0
      %v3972 = vadd.f32 0.0, %v3971
      %v3973 = vpop.f32.mrb[0].mxu0
      %v3974 = vpop.f32.mrb[0].mxu0
      %v3975 = vadd.f32 0.0, %v3974
      %v3976 = vpop.f32.mrb[0].mxu0
      %3977 = vmatprep.mubr.bf16.mxu0 0
      %3978 = vmatmul.mubr.bf16.gmra.mrb[0].mxu0 %v3859
      %v3979 = vpop.f32.mrb[0].mxu0
      %v3980 = vadd.f32 0.0, %v3979
      %v3981 = vpop.f32.mrb[0].mxu0
      %v3982 = vpop.f32.mrb[0].mxu0
      %v3983 = vadd.f32 0.0, %v3982
      %v3984 = vpop.f32.mrb[0].mxu0
      %3985 = vmatprep.mubr.bf16.mxu0 0
      %3986 = vmatmul.mubr.bf16.gmra.mrb[0].mxu0 %v3862
      %v3987 = vpop.f32.mrb[0].mxu0
      %v3988 = vadd.f32 0.0, %v3987
      %v3989 = vpop.f32.mrb[0].mxu0
      %v3990 = vpop.f32.mrb[0].mxu0
      %v3991 = vadd.f32 0.0, %v3990
      %v3992 = vpop.f32.mrb[0].mxu0
      %3993 = vmatprep.mubr.bf16.mxu0 0
      %3994 = vmatmul.mubr.bf16.gmra.mrb[0].mxu0 %v3865
      %v3995 = vpop.f32.mrb[0].mxu0
      %v3996 = vadd.f32 0.0, %v3995
      %v3997 = vpop.f32.mrb[0].mxu0
      %v3998 = vpop.f32.mrb[0].mxu0
      %v3999 = vadd.f32 0.0, %v3998
      %v4000 = vpop.f32.mrb[0].mxu0
      %4001 = vmatprep.mubr.bf16.mxu0 0
      %4002 = vmatmul.mubr.bf16.gmra.mrb[0].mxu0 %v3868
      %v4003 = vpop.f32.mrb[0].mxu0
      %v4004 = vadd.f32 0.0, %v4003
      %v4005 = vpop.f32.mrb[0].mxu0
      %v4006 = vpop.f32.mrb[0].mxu0
      %v4007 = vadd.f32 0.0, %v4006
      %v4008 = vpop.f32.mrb[0].mxu0
      %4009 = vmatprep.mubr.bf16.mxu0 0
      %4010 = vmatmul.mubr.bf16.gmra.mrb[0].mxu0 %v3871
      %v4011 = vpop.f32.mrb[0].mxu0
      %v4012 = vadd.f32 0.0, %v4011
      %v4013 = vpop.f32.mrb[0].mxu0
      %v4014 = vpop.f32.mrb[0].mxu0
      %v4015 = vadd.f32 0.0, %v4014
      %v4016 = vpop.f32.mrb[0].mxu0
      %4017 = vmatprep.mubr.bf16.mxu0 0
      %4018 = vmatmul.mubr.bf16.gmra.mrb[0].mxu0 %v3874
      %v4019 = vpop.f32.mrb[0].mxu0
      %v4020 = vadd.f32 0.0, %v4019
      %v4021 = vpop.f32.mrb[0].mxu0
      %v4022 = vpop.f32.mrb[0].mxu0
      %v4023 = vadd.f32 0.0, %v4022
      %v4024 = vpop.f32.mrb[0].mxu0
      %4025 = vmatprep.mubr.bf16.mxu0 0
      %4026 = vmatmul.mubr.bf16.gmra.mrb[0].mxu0 %v3877
      %v4027 = vpop.f32.mrb[0].mxu0
      %v4028 = vadd.f32 0.0, %v4027
      %v4029 = vpop.f32.mrb[0].mxu0
      %v4030 = vpop.f32.mrb[0].mxu0
      %v4031 = vadd.f32 0.0, %v4030
      %v4032 = vpop.f32.mrb[0].mxu0
      %4033 = vmatprep.mubr.bf16.mxu0 0
      %4034 = vmatmul.mubr.bf16.gmra.mrb[0].mxu0 %v3880
      %v4035 = vpop.f32.mrb[0].mxu0
      %v4036 = vadd.f32 0.0, %v4035
      %v4037 = vpop.f32.mrb[0].mxu0
      %v4038 = vpop.f32.mrb[0].mxu0
      %v4039 = vadd.f32 0.0, %v4038
      %v4040 = vpop.f32.mrb[0].mxu0
      %4041 = vmatprep.mubr.bf16.mxu0 0
      %4042 = vmatmul.mubr.bf16.gmra.mrb[0].mxu0 %v3883
      %v4043 = vpop.f32.mrb[0].mxu0
      %v4044 = vadd.f32 0.0, %v4043
      %v4045 = vpop.f32.mrb[0].mxu0
      %v4046 = vpop.f32.mrb[0].mxu0
      %v4047 = vadd.f32 0.0, %v4046
      %v4048 = vpop.f32.mrb[0].mxu0
      %4049 = vmatprep.mubr.bf16.mxu0 0
      %4050 = vmatmul.mubr.bf16.gmra.mrb[0].mxu0 %v3886
      %v4051 = vpop.f32.mrb[0].mxu0
      %v4052 = vadd.f32 0.0, %v4051
      %v4053 = vpop.f32.mrb[0].mxu0
      %v4054 = vpop.f32.mrb[0].mxu0
      %v4055 = vadd.f32 0.0, %v4054
      %v4056 = vpop.f32.mrb[0].mxu0
      %4057 = vmatprep.mubr.bf16.mxu0 0
      %4058 = vmatmul.mubr.bf16.gmra.mrb[0].mxu0 %v3889
      %v4059 = vpop.f32.mrb[0].mxu0
      %v4060 = vadd.f32 0.0, %v4059
      %v4061 = vpop.f32.mrb[0].mxu0
      %v4062 = vpop.f32.mrb[0].mxu0
      %v4063 = vadd.f32 0.0, %v4062
      %v4064 = vpop.f32.mrb[0].mxu0
      %4065 = vmatprep.mubr.bf16.mxu0 0
      %4066 = vmatmul.mubr.bf16.gmra.mrb[0].mxu0 %v3892
      %v4067 = vpop.f32.mrb[0].mxu0
      %v4068 = vadd.f32 0.0, %v4067
      %v4069 = vpop.f32.mrb[0].mxu0
      %v4070 = vpop.f32.mrb[0].mxu0
      %v4071 = vadd.f32 0.0, %v4070
      %v4072 = vpop.f32.mrb[0].mxu0
      %4073 = vdwg.mxu0
      %v4074 = vadd.f32 %v3802, %v3932
      %v4075 = vadd.f32 %v3803, %v3935
      %v4076 = vadd.f32 %v3804, %v3940
      %v4077 = vadd.f32 %v3805, %v3943
      %v4078 = vadd.f32 %v3806, %v3948
      %v4079 = vadd.f32 %v3807, %v3951
      %v4080 = vadd.f32 %v3808, %v3956
      %v4081 = vadd.f32 %v3809, %v3959
      %v4082 = vadd.f32 %v3810, %v3964
      %v4083 = vadd.f32 %v3811, %v3967
      %v4084 = vadd.f32 %v3812, %v3972
      %v4085 = vadd.f32 %v3813, %v3975
      %v4086 = vadd.f32 %v3814, %v3980
      %v4087 = vadd.f32 %v3815, %v3983
      %v4088 = vadd.f32 %v3816, %v3988
      %v4089 = vadd.f32 %v3817, %v3991
      %v4090 = vadd.f32 %v3818, %v3996
      %v4091 = vadd.f32 %v3819, %v3999
      %v4092 = vadd.f32 %v3820, %v4004
      %v4093 = vadd.f32 %v3821, %v4007
      %v4094 = vadd.f32 %v3822, %v4012
      %v4095 = vadd.f32 %v3823, %v4015
      %v4096 = vadd.f32 %v3824, %v4020
      %v4097 = vadd.f32 %v3825, %v4023
      %v4098 = vadd.f32 %v3826, %v4028
      %v4099 = vadd.f32 %v3827, %v4031
      %v4100 = vadd.f32 %v3828, %v4036
      %v4101 = vadd.f32 %v3829, %v4039
      %v4102 = vadd.f32 %v3830, %v4044
      %v4103 = vadd.f32 %v3831, %v4047
      %v4104 = vadd.f32 %v3832, %v4052
      %v4105 = vadd.f32 %v3833, %v4055
      %v4106 = vadd.f32 %v3834, %v4060
      %v4107 = vadd.f32 %v3835, %v4063
      %v4108 = vadd.f32 %v3836, %v4068
      %v4109 = vadd.f32 %v3837, %v4071
      %4110 = vst.msk [vmem:[#allocation4] sm:$0xff] %vm361, %v4074
      %4111 = vst.msk [vmem:[#allocation4 + $0x8] sm:$0xff] %vm361, %v4075
      %4112 = vst.msk [vmem:[#allocation4 + $0x10] sm:$0xff] %vm361, %v4076
      %4113 = vst.msk [vmem:[#allocation4 + $0x18] sm:$0xff] %vm361, %v4077
      %4114 = vst.msk [vmem:[#allocation4 + $0x20] sm:$0xff] %vm361, %v4078
      %4115 = vst.msk [vmem:[#allocation4 + $0x28] sm:$0xff] %vm361, %v4079
      %4116 = vst.msk [vmem:[#allocation4 + $0x30] sm:$0xff] %vm361, %v4080
      %4117 = vst.msk [vmem:[#allocation4 + $0x38] sm:$0xff] %vm361, %v4081
      %4118 = vst.msk [vmem:[#allocation4 + $0x40] sm:$0xff] %vm361, %v4082
      %4119 = vst.msk [vmem:[#allocation4 + $0x48] sm:$0xff] %vm361, %v4083
      %4120 = vst.msk [vmem:[#allocation4 + $0x50] sm:$0xff] %vm361, %v4084
      %4121 = vst.msk [vmem:[#allocation4 + $0x58] sm:$0xff] %vm361, %v4085
      %4122 = vst.msk [vmem:[#allocation4 + $0x60] sm:$0xff] %vm361, %v4086
      %4123 = vst.msk [vmem:[#allocation4 + $0x68] sm:$0xff] %vm361, %v4087
      %4124 = vst.msk [vmem:[#allocation4 + $0x70] sm:$0xff] %vm361, %v4088
      %4125 = vst.msk [vmem:[#allocation4 + $0x78] sm:$0xff] %vm361, %v4089
      %4126 = vst.msk [vmem:[#allocation4 + $0x80] sm:$0xff] %vm361, %v4090
      %4127 = vst.msk [vmem:[#allocation4 + $0x88] sm:$0xff] %vm361, %v4091
      %4128 = vst.msk [vmem:[#allocation4 + $0x90] sm:$0xff] %vm361, %v4092
      %4129 = vst.msk [vmem:[#allocation4 + $0x98] sm:$0xff] %vm361, %v4093
      %4130 = vst.msk [vmem:[#allocation4 + $0xa0] sm:$0xff] %vm361, %v4094
      %4131 = vst.msk [vmem:[#allocation4 + $0xa8] sm:$0xff] %vm361, %v4095
      %4132 = vst.msk [vmem:[#allocation4 + $0xb0] sm:$0xff] %vm361, %v4096
      %4133 = vst.msk [vmem:[#allocation4 + $0xb8] sm:$0xff] %vm361, %v4097
      %4134 = vst.msk [vmem:[#allocation4 + $0xc0] sm:$0xff] %vm361, %v4098
      %4135 = vst.msk [vmem:[#allocation4 + $0xc8] sm:$0xff] %vm361, %v4099
      %4136 = vst.msk [vmem:[#allocation4 + $0xd0] sm:$0xff] %vm361, %v4100
      %4137 = vst.msk [vmem:[#allocation4 + $0xd8] sm:$0xff] %vm361, %v4101
      %4138 = vst.msk [vmem:[#allocation4 + $0xe0] sm:$0xff] %vm361, %v4102
      %4139 = vst.msk [vmem:[#allocation4 + $0xe8] sm:$0xff] %vm361, %v4103
      %4140 = vst.msk [vmem:[#allocation4 + $0xf0] sm:$0xff] %vm361, %v4104
      %4141 = vst.msk [vmem:[#allocation4 + $0xf8] sm:$0xff] %vm361, %v4105
      %4142 = vst.msk [vmem:[#allocation4 + $0x100] sm:$0xff] %vm361, %v4106
      %4143 = vst.msk [vmem:[#allocation4 + $0x108] sm:$0xff] %vm361, %v4107
      %4144 = vst.msk [vmem:[#allocation4 + $0x110] sm:$0xff] %vm361, %v4108
      %4145 = vst.msk [vmem:[#allocation4 + $0x118] sm:$0xff] %vm361, %v4109
      %v4146 = vld [vmem:[#allocation4] sm:$0xff]
      %v4147 = vld [vmem:[#allocation4 + $0x8] sm:$0xff]
      %v4148 = vld [vmem:[#allocation4 + $0x10] sm:$0xff]
      %v4149 = vld [vmem:[#allocation4 + $0x18] sm:$0xff]
      %v4150 = vld [vmem:[#allocation4 + $0x20] sm:$0xff]
      %v4151 = vld [vmem:[#allocation4 + $0x28] sm:$0xff]
      %v4152 = vld [vmem:[#allocation4 + $0x30] sm:$0xff]
      %v4153 = vld [vmem:[#allocation4 + $0x38] sm:$0xff]
      %v4154 = vld [vmem:[#allocation4 + $0x40] sm:$0xff]
      %v4155 = vld [vmem:[#allocation4 + $0x48] sm:$0xff]
      %v4156 = vld [vmem:[#allocation4 + $0x50] sm:$0xff]
      %v4157 = vld [vmem:[#allocation4 + $0x58] sm:$0xff]
      %v4158 = vld [vmem:[#allocation4 + $0x60] sm:$0xff]
      %v4159 = vld [vmem:[#allocation4 + $0x68] sm:$0xff]
      %v4160 = vld [vmem:[#allocation4 + $0x70] sm:$0xff]
      %v4161 = vld [vmem:[#allocation4 + $0x78] sm:$0xff]
      %v4162 = vld [vmem:[#allocation4 + $0x80] sm:$0xff]
      %v4163 = vld [vmem:[#allocation4 + $0x88] sm:$0xff]
      %v4164 = vld [vmem:[#allocation4 + $0x90] sm:$0xff]
      %v4165 = vld [vmem:[#allocation4 + $0x98] sm:$0xff]
      %v4166 = vld [vmem:[#allocation4 + $0xa0] sm:$0xff]
      %v4167 = vld [vmem:[#allocation4 + $0xa8] sm:$0xff]
      %v4168 = vld [vmem:[#allocation4 + $0xb0] sm:$0xff]
      %v4169 = vld [vmem:[#allocation4 + $0xb8] sm:$0xff]
      %v4170 = vld [vmem:[#allocation4 + $0xc0] sm:$0xff]
      %v4171 = vld [vmem:[#allocation4 + $0xc8] sm:$0xff]
      %v4172 = vld [vmem:[#allocation4 + $0xd0] sm:$0xff]
      %v4173 = vld [vmem:[#allocation4 + $0xd8] sm:$0xff]
      %v4174 = vld [vmem:[#allocation4 + $0xe0] sm:$0xff]
      %v4175 = vld [vmem:[#allocation4 + $0xe8] sm:$0xff]
      %v4176 = vld [vmem:[#allocation4 + $0xf0] sm:$0xff]
      %v4177 = vld [vmem:[#allocation4 + $0xf8] sm:$0xff]
      %v4178 = vld [vmem:[#allocation4 + $0x100] sm:$0xff]
      %v4179 = vld [vmem:[#allocation4 + $0x108] sm:$0xff]
      %v4180 = vld [vmem:[#allocation4 + $0x110] sm:$0xff]
      %v4181 = vld [vmem:[#allocation4 + $0x118] sm:$0xff]
      %v4182 = vld [vmem:[%s3] sm:$0x1]
      %v4184 = vlaneseq
      %v4185 = vshrl.u32 %v4184, 7
      %v4186 = vsub.s32 0, %v4185
      %v4187 = vrot.slane %v4182, %v4186
      %v4189 = vadd.f32 %v4146, %v4187
      %v4190 = vadd.f32 %v4147, %v4187
      %v4191 = vadd.f32 %v4148, %v4187
      %v4192 = vadd.f32 %v4149, %v4187
      %v4193 = vadd.f32 %v4150, %v4187
      %v4194 = vadd.f32 %v4151, %v4187
      %v4195 = vadd.f32 %v4152, %v4187
      %v4196 = vadd.f32 %v4153, %v4187
      %v4197 = vadd.f32 %v4154, %v4187
      %v4198 = vadd.f32 %v4155, %v4187
      %v4199 = vadd.f32 %v4156, %v4187
      %v4200 = vadd.f32 %v4157, %v4187
      %v4201 = vadd.f32 %v4158, %v4187
      %v4202 = vadd.f32 %v4159, %v4187
      %v4203 = vadd.f32 %v4160, %v4187
      %v4204 = vadd.f32 %v4161, %v4187
      %v4205 = vadd.f32 %v4162, %v4187
      %v4206 = vadd.f32 %v4163, %v4187
      %v4207 = vadd.f32 %v4164, %v4187
      %v4208 = vadd.f32 %v4165, %v4187
      %v4209 = vadd.f32 %v4166, %v4187
      %v4210 = vadd.f32 %v4167, %v4187
      %v4211 = vadd.f32 %v4168, %v4187
      %v4212 = vadd.f32 %v4169, %v4187
      %v4213 = vadd.f32 %v4170, %v4187
      %v4214 = vadd.f32 %v4171, %v4187
      %v4215 = vadd.f32 %v4172, %v4187
      %v4216 = vadd.f32 %v4173, %v4187
      %v4217 = vadd.f32 %v4174, %v4187
      %v4218 = vadd.f32 %v4175, %v4187
      %v4219 = vadd.f32 %v4176, %v4187
      %v4220 = vadd.f32 %v4177, %v4187
      %v4221 = vadd.f32 %v4178, %v4187
      %v4222 = vadd.f32 %v4179, %v4187
      %v4223 = vadd.f32 %v4180, %v4187
      %v4224 = vadd.f32 %v4181, %v4187
      %v4225 = vmax.f32 %v4189, 0.0
      %v4226 = vmax.f32 %v4190, 0.0
      %v4227 = vmax.f32 %v4191, 0.0
      %v4228 = vmax.f32 %v4192, 0.0
      %v4229 = vmax.f32 %v4193, 0.0
      %v4230 = vmax.f32 %v4194, 0.0
      %v4231 = vmax.f32 %v4195, 0.0
      %v4232 = vmax.f32 %v4196, 0.0
      %v4233 = vmax.f32 %v4197, 0.0
      %v4234 = vmax.f32 %v4198, 0.0
      %v4235 = vmax.f32 %v4199, 0.0
      %v4236 = vmax.f32 %v4200, 0.0
      %v4237 = vmax.f32 %v4201, 0.0
      %v4238 = vmax.f32 %v4202, 0.0
      %v4239 = vmax.f32 %v4203, 0.0
      %v4240 = vmax.f32 %v4204, 0.0
      %v4241 = vmax.f32 %v4205, 0.0
      %v4242 = vmax.f32 %v4206, 0.0
      %v4243 = vmax.f32 %v4207, 0.0
      %v4244 = vmax.f32 %v4208, 0.0
      %v4245 = vmax.f32 %v4209, 0.0
      %v4246 = vmax.f32 %v4210, 0.0
      %v4247 = vmax.f32 %v4211, 0.0
      %v4248 = vmax.f32 %v4212, 0.0
      %v4249 = vmax.f32 %v4213, 0.0
      %v4250 = vmax.f32 %v4214, 0.0
      %v4251 = vmax.f32 %v4215, 0.0
      %v4252 = vmax.f32 %v4216, 0.0
      %v4253 = vmax.f32 %v4217, 0.0
      %v4254 = vmax.f32 %v4218, 0.0
      %v4255 = vmax.f32 %v4219, 0.0
      %v4256 = vmax.f32 %v4220, 0.0
      %v4257 = vmax.f32 %v4221, 0.0
      %v4258 = vmax.f32 %v4222, 0.0
      %v4259 = vmax.f32 %v4223, 0.0
      %v4260 = vmax.f32 %v4224, 0.0
      %v4261 = vld [vmem:[%s1] sm:$0xff]
      %v4262 = vld [vmem:[%s1 + $0x8] sm:$0xff]
      %v4263 = vld [vmem:[%s1 + $0x10] sm:$0xff]
      %v4264 = vld [vmem:[%s1 + $0x18] sm:$0xff]
      %v4265 = vld [vmem:[%s1 + $0x20] sm:$0xff]
      %v4266 = vld [vmem:[%s1 + $0x28] sm:$0xff]
      %v4267 = vld [vmem:[%s1 + $0x30] sm:$0xff]
      %v4268 = vld [vmem:[%s1 + $0x38] sm:$0xff]
      %v4269 = vld [vmem:[%s1 + $0x40] sm:$0xff]
      %v4270 = vld [vmem:[%s1 + $0x48] sm:$0xff]
      %v4271 = vld [vmem:[%s1 + $0x50] sm:$0xff]
      %v4272 = vld [vmem:[%s1 + $0x58] sm:$0xff]
      %v4273 = vld [vmem:[%s1 + $0x60] sm:$0xff]
      %v4274 = vld [vmem:[%s1 + $0x68] sm:$0xff]
      %v4275 = vld [vmem:[%s1 + $0x70] sm:$0xff]
      %v4276 = vld [vmem:[%s1 + $0x78] sm:$0xff]
      %v4277 = vld [vmem:[%s1 + $0x80] sm:$0xff]
      %v4278 = vld [vmem:[%s1 + $0x88] sm:$0xff]
      %v4279 = vld [vmem:[%s1 + $0x90] sm:$0xff]
      %v4280 = vld [vmem:[%s1 + $0x98] sm:$0xff]
      %v4281 = vld [vmem:[%s1 + $0xa0] sm:$0xff]
      %v4282 = vld [vmem:[%s1 + $0xa8] sm:$0xff]
      %v4283 = vld [vmem:[%s1 + $0xb0] sm:$0xff]
      %v4284 = vld [vmem:[%s1 + $0xb8] sm:$0xff]
      %v4285 = vld [vmem:[%s1 + $0xc0] sm:$0xff]
      %v4286 = vld [vmem:[%s1 + $0xc8] sm:$0xff]
      %v4287 = vld [vmem:[%s1 + $0xd0] sm:$0xff]
      %v4288 = vld [vmem:[%s1 + $0xd8] sm:$0xff]
      %v4289 = vld [vmem:[%s1 + $0xe0] sm:$0xff]
      %v4290 = vld [vmem:[%s1 + $0xe8] sm:$0xff]
      %v4291 = vld [vmem:[%s1 + $0xf0] sm:$0xff]
      %v4292 = vld [vmem:[%s1 + $0xf8] sm:$0xff]
      %v4293 = vld [vmem:[%s1 + $0x100] sm:$0xff]
      %v4294 = vld [vmem:[%s1 + $0x108] sm:$0xff]
      %v4295 = vld [vmem:[%s1 + $0x110] sm:$0xff]
      %v4296 = vld [vmem:[%s1 + $0x118] sm:$0xff]
      %4298 = vset.pattern.permute.xlu0 0
      %4299 = vperm.xlu0 %4298, %v4261
      %v4300 = vpop.permute.xlu0 %4299
      %4303 = vset.pattern.permute.xlu0 0
      %4304 = vperm.xlu0 %4303, %v4262
      %v4305 = vpop.permute.xlu0 %4304
      %4308 = vset.pattern.permute.xlu0 0
      %4309 = vperm.xlu0 %4308, %v4263
      %v4310 = vpop.permute.xlu0 %4309
      %4313 = vset.pattern.permute.xlu0 0
      %4314 = vperm.xlu0 %4313, %v4264
      %v4315 = vpop.permute.xlu0 %4314
      %4318 = vset.pattern.permute.xlu0 0
      %4319 = vperm.xlu0 %4318, %v4265
      %v4320 = vpop.permute.xlu0 %4319
      %4323 = vset.pattern.permute.xlu0 0
      %4324 = vperm.xlu0 %4323, %v4266
      %v4325 = vpop.permute.xlu0 %4324
      %4328 = vset.pattern.permute.xlu0 0
      %4329 = vperm.xlu0 %4328, %v4267
      %v4330 = vpop.permute.xlu0 %4329
      %4333 = vset.pattern.permute.xlu0 0
      %4334 = vperm.xlu0 %4333, %v4268
      %v4335 = vpop.permute.xlu0 %4334
      %4338 = vset.pattern.permute.xlu0 0
      %4339 = vperm.xlu0 %4338, %v4269
      %v4340 = vpop.permute.xlu0 %4339
      %4343 = vset.pattern.permute.xlu0 0
      %4344 = vperm.xlu0 %4343, %v4270
      %v4345 = vpop.permute.xlu0 %4344
      %4348 = vset.pattern.permute.xlu0 0
      %4349 = vperm.xlu0 %4348, %v4271
      %v4350 = vpop.permute.xlu0 %4349
      %4353 = vset.pattern.permute.xlu0 0
      %4354 = vperm.xlu0 %4353, %v4272
      %v4355 = vpop.permute.xlu0 %4354
      %4358 = vset.pattern.permute.xlu0 0
      %4359 = vperm.xlu0 %4358, %v4273
      %v4360 = vpop.permute.xlu0 %4359
      %4363 = vset.pattern.permute.xlu0 0
      %4364 = vperm.xlu0 %4363, %v4274
      %v4365 = vpop.permute.xlu0 %4364
      %4368 = vset.pattern.permute.xlu0 0
      %4369 = vperm.xlu0 %4368, %v4275
      %v4370 = vpop.permute.xlu0 %4369
      %4373 = vset.pattern.permute.xlu0 0
      %4374 = vperm.xlu0 %4373, %v4276
      %v4375 = vpop.permute.xlu0 %4374
      %4378 = vset.pattern.permute.xlu0 0
      %4379 = vperm.xlu0 %4378, %v4277
      %v4380 = vpop.permute.xlu0 %4379
      %4383 = vset.pattern.permute.xlu0 0
      %4384 = vperm.xlu0 %4383, %v4278
      %v4385 = vpop.permute.xlu0 %4384
      %4388 = vset.pattern.permute.xlu0 0
      %4389 = vperm.xlu0 %4388, %v4279
      %v4390 = vpop.permute.xlu0 %4389
      %4393 = vset.pattern.permute.xlu0 0
      %4394 = vperm.xlu0 %4393, %v4280
      %v4395 = vpop.permute.xlu0 %4394
      %4398 = vset.pattern.permute.xlu0 0
      %4399 = vperm.xlu0 %4398, %v4281
      %v4400 = vpop.permute.xlu0 %4399
      %4403 = vset.pattern.permute.xlu0 0
      %4404 = vperm.xlu0 %4403, %v4282
      %v4405 = vpop.permute.xlu0 %4404
      %4408 = vset.pattern.permute.xlu0 0
      %4409 = vperm.xlu0 %4408, %v4283
      %v4410 = vpop.permute.xlu0 %4409
      %4413 = vset.pattern.permute.xlu0 0
      %4414 = vperm.xlu0 %4413, %v4284
      %v4415 = vpop.permute.xlu0 %4414
      %4418 = vset.pattern.permute.xlu0 0
      %4419 = vperm.xlu0 %4418, %v4285
      %v4420 = vpop.permute.xlu0 %4419
      %4423 = vset.pattern.permute.xlu0 0
      %4424 = vperm.xlu0 %4423, %v4286
      %v4425 = vpop.permute.xlu0 %4424
      %4428 = vset.pattern.permute.xlu0 0
      %4429 = vperm.xlu0 %4428, %v4287
      %v4430 = vpop.permute.xlu0 %4429
      %4433 = vset.pattern.permute.xlu0 0
      %4434 = vperm.xlu0 %4433, %v4288
      %v4435 = vpop.permute.xlu0 %4434
      %4438 = vset.pattern.permute.xlu0 0
      %4439 = vperm.xlu0 %4438, %v4289
      %v4440 = vpop.permute.xlu0 %4439
      %4443 = vset.pattern.permute.xlu0 0
      %4444 = vperm.xlu0 %4443, %v4290
      %v4445 = vpop.permute.xlu0 %4444
      %4448 = vset.pattern.permute.xlu0 0
      %4449 = vperm.xlu0 %4448, %v4291
      %v4450 = vpop.permute.xlu0 %4449
      %4453 = vset.pattern.permute.xlu0 0
      %4454 = vperm.xlu0 %4453, %v4292
      %v4455 = vpop.permute.xlu0 %4454
      %4458 = vset.pattern.permute.xlu0 0
      %4459 = vperm.xlu0 %4458, %v4293
      %v4460 = vpop.permute.xlu0 %4459
      %4463 = vset.pattern.permute.xlu0 0
      %4464 = vperm.xlu0 %4463, %v4294
      %v4465 = vpop.permute.xlu0 %4464
      %4468 = vset.pattern.permute.xlu0 0
      %4469 = vperm.xlu0 %4468, %v4295
      %v4470 = vpop.permute.xlu0 %4469
      %4473 = vset.pattern.permute.xlu0 0
      %4474 = vperm.xlu0 %4473, %v4296
      %v4475 = vpop.permute.xlu0 %4474
      %v4477 = vmul.f32 %v4225, %v4300
      %v4478 = vmul.f32 %v4226, %v4305
      %v4479 = vmul.f32 %v4227, %v4310
      %v4480 = vmul.f32 %v4228, %v4315
      %v4481 = vmul.f32 %v4229, %v4320
      %v4482 = vmul.f32 %v4230, %v4325
      %v4483 = vmul.f32 %v4231, %v4330
      %v4484 = vmul.f32 %v4232, %v4335
      %v4485 = vmul.f32 %v4233, %v4340
      %v4486 = vmul.f32 %v4234, %v4345
      %v4487 = vmul.f32 %v4235, %v4350
      %v4488 = vmul.f32 %v4236, %v4355
      %v4489 = vmul.f32 %v4237, %v4360
      %v4490 = vmul.f32 %v4238, %v4365
      %v4491 = vmul.f32 %v4239, %v4370
      %v4492 = vmul.f32 %v4240, %v4375
      %v4493 = vmul.f32 %v4241, %v4380
      %v4494 = vmul.f32 %v4242, %v4385
      %v4495 = vmul.f32 %v4243, %v4390
      %v4496 = vmul.f32 %v4244, %v4395
      %v4497 = vmul.f32 %v4245, %v4400
      %v4498 = vmul.f32 %v4246, %v4405
      %v4499 = vmul.f32 %v4247, %v4410
      %v4500 = vmul.f32 %v4248, %v4415
      %v4501 = vmul.f32 %v4249, %v4420
      %v4502 = vmul.f32 %v4250, %v4425
      %v4503 = vmul.f32 %v4251, %v4430
      %v4504 = vmul.f32 %v4252, %v4435
      %v4505 = vmul.f32 %v4253, %v4440
      %v4506 = vmul.f32 %v4254, %v4445
      %v4507 = vmul.f32 %v4255, %v4450
      %v4508 = vmul.f32 %v4256, %v4455
      %v4509 = vmul.f32 %v4257, %v4460
      %v4510 = vmul.f32 %v4258, %v4465
      %v4511 = vmul.f32 %v4259, %v4470
      %v4512 = vmul.f32 %v4260, %v4475
      %4513 = vst.msk [vmem:[#allocation3 + $0x13] sm:$0xff] %vm361, %v4477
      %4514 = vst.msk [vmem:[#allocation3 + $0x1b] sm:$0xff] %vm361, %v4478
      %4515 = vst.msk [vmem:[#allocation3 + $0x23] sm:$0xff] %vm361, %v4479
      %4516 = vst.msk [vmem:[#allocation3 + $0x2b] sm:$0xff] %vm361, %v4480
      %4517 = vst.msk [vmem:[#allocation3 + $0x33] sm:$0xff] %vm361, %v4481
      %4518 = vst.msk [vmem:[#allocation3 + $0x3b] sm:$0xff] %vm361, %v4482
      %4519 = vst.msk [vmem:[#allocation3 + $0x43] sm:$0xff] %vm361, %v4483
      %4520 = vst.msk [vmem:[#allocation3 + $0x4b] sm:$0xff] %vm361, %v4484
      %4521 = vst.msk [vmem:[#allocation3 + $0x53] sm:$0xff] %vm361, %v4485
      %4522 = vst.msk [vmem:[#allocation3 + $0x5b] sm:$0xff] %vm361, %v4486
      %4523 = vst.msk [vmem:[#allocation3 + $0x63] sm:$0xff] %vm361, %v4487
      %4524 = vst.msk [vmem:[#allocation3 + $0x6b] sm:$0xff] %vm361, %v4488
      %4525 = vst.msk [vmem:[#allocation3 + $0x73] sm:$0xff] %vm361, %v4489
      %4526 = vst.msk [vmem:[#allocation3 + $0x7b] sm:$0xff] %vm361, %v4490
      %4527 = vst.msk [vmem:[#allocation3 + $0x83] sm:$0xff] %vm361, %v4491
      %4528 = vst.msk [vmem:[#allocation3 + $0x8b] sm:$0xff] %vm361, %v4492
      %4529 = vst.msk [vmem:[#allocation3 + $0x93] sm:$0xff] %vm361, %v4493
      %4530 = vst.msk [vmem:[#allocation3 + $0x9b] sm:$0xff] %vm361, %v4494
      %4531 = vst.msk [vmem:[#allocation3 + $0xa3] sm:$0xff] %vm361, %v4495
      %4532 = vst.msk [vmem:[#allocation3 + $0xab] sm:$0xff] %vm361, %v4496
      %4533 = vst.msk [vmem:[#allocation3 + $0xb3] sm:$0xff] %vm361, %v4497
      %4534 = vst.msk [vmem:[#allocation3 + $0xbb] sm:$0xff] %vm361, %v4498
      %4535 = vst.msk [vmem:[#allocation3 + $0xc3] sm:$0xff] %vm361, %v4499
      %4536 = vst.msk [vmem:[#allocation3 + $0xcb] sm:$0xff] %vm361, %v4500
      %4537 = vst.msk [vmem:[#allocation3 + $0xd3] sm:$0xff] %vm361, %v4501
      %4538 = vst.msk [vmem:[#allocation3 + $0xdb] sm:$0xff] %vm361, %v4502
      %4539 = vst.msk [vmem:[#allocation3 + $0xe3] sm:$0xff] %vm361, %v4503
      %4540 = vst.msk [vmem:[#allocation3 + $0xeb] sm:$0xff] %vm361, %v4504
      %4541 = vst.msk [vmem:[#allocation3 + $0xf3] sm:$0xff] %vm361, %v4505
      %4542 = vst.msk [vmem:[#allocation3 + $0xfb] sm:$0xff] %vm361, %v4506
      %4543 = vst.msk [vmem:[#allocation3 + $0x103] sm:$0xff] %vm361, %v4507
      %4544 = vst.msk [vmem:[#allocation3 + $0x10b] sm:$0xff] %vm361, %v4508
      %4545 = vst.msk [vmem:[#allocation3 + $0x113] sm:$0xff] %vm361, %v4509
      %4546 = vst.msk [vmem:[#allocation3 + $0x11b] sm:$0xff] %vm361, %v4510
      %4547 = vst.msk [vmem:[#allocation3 + $0x123] sm:$0xff] %vm361, %v4511
      %4548 = vst.msk [vmem:[#allocation3 + $0x12b] sm:$0xff] %vm361, %v4512
      %4549 = vst.msk [vmem:[#allocation4] sm:$0xff] %vm361, 0.0
      %4550 = vst.msk [vmem:[#allocation4 + $0x8] sm:$0xff] %vm361, 0.0
      %4551 = vst.msk [vmem:[#allocation4 + $0x10] sm:$0xff] %vm361, 0.0
      %4552 = vst.msk [vmem:[#allocation4 + $0x18] sm:$0xff] %vm361, 0.0
      %4553 = vst.msk [vmem:[#allocation4 + $0x20] sm:$0xff] %vm361, 0.0
      %4554 = vst.msk [vmem:[#allocation4 + $0x28] sm:$0xff] %vm361, 0.0
      %4555 = vst.msk [vmem:[#allocation4 + $0x30] sm:$0xff] %vm361, 0.0
      %4556 = vst.msk [vmem:[#allocation4 + $0x38] sm:$0xff] %vm361, 0.0
      %4557 = vst.msk [vmem:[#allocation4 + $0x40] sm:$0xff] %vm361, 0.0
      %4558 = vst.msk [vmem:[#allocation4 + $0x48] sm:$0xff] %vm361, 0.0
      %4559 = vst.msk [vmem:[#allocation4 + $0x50] sm:$0xff] %vm361, 0.0
      %4560 = vst.msk [vmem:[#allocation4 + $0x58] sm:$0xff] %vm361, 0.0
      %4561 = vst.msk [vmem:[#allocation4 + $0x60] sm:$0xff] %vm361, 0.0
      %4562 = vst.msk [vmem:[#allocation4 + $0x68] sm:$0xff] %vm361, 0.0
      %4563 = vst.msk [vmem:[#allocation4 + $0x70] sm:$0xff] %vm361, 0.0
      %4564 = vst.msk [vmem:[#allocation4 + $0x78] sm:$0xff] %vm361, 0.0
      %4565 = vst.msk [vmem:[#allocation4 + $0x80] sm:$0xff] %vm361, 0.0
      %4566 = vst.msk [vmem:[#allocation4 + $0x88] sm:$0xff] %vm361, 0.0
      %4567 = vst.msk [vmem:[#allocation4 + $0x90] sm:$0xff] %vm361, 0.0
      %4568 = vst.msk [vmem:[#allocation4 + $0x98] sm:$0xff] %vm361, 0.0
      %4569 = vst.msk [vmem:[#allocation4 + $0xa0] sm:$0xff] %vm361, 0.0
      %4570 = vst.msk [vmem:[#allocation4 + $0xa8] sm:$0xff] %vm361, 0.0
      %4571 = vst.msk [vmem:[#allocation4 + $0xb0] sm:$0xff] %vm361, 0.0
      %4572 = vst.msk [vmem:[#allocation4 + $0xb8] sm:$0xff] %vm361, 0.0
      %4573 = vst.msk [vmem:[#allocation4 + $0xc0] sm:$0xff] %vm361, 0.0
      %4574 = vst.msk [vmem:[#allocation4 + $0xc8] sm:$0xff] %vm361, 0.0
      %4575 = vst.msk [vmem:[#allocation4 + $0xd0] sm:$0xff] %vm361, 0.0
      %4576 = vst.msk [vmem:[#allocation4 + $0xd8] sm:$0xff] %vm361, 0.0
      %4577 = vst.msk [vmem:[#allocation4 + $0xe0] sm:$0xff] %vm361, 0.0
      %4578 = vst.msk [vmem:[#allocation4 + $0xe8] sm:$0xff] %vm361, 0.0
      %4579 = vst.msk [vmem:[#allocation4 + $0xf0] sm:$0xff] %vm361, 0.0
      %4580 = vst.msk [vmem:[#allocation4 + $0xf8] sm:$0xff] %vm361, 0.0
      %4581 = vst.msk [vmem:[#allocation4 + $0x100] sm:$0xff] %vm361, 0.0
      %4582 = vst.msk [vmem:[#allocation4 + $0x108] sm:$0xff] %vm361, 0.0
      %4583 = vst.msk [vmem:[#allocation4 + $0x110] sm:$0xff] %vm361, 0.0
      %4584 = vst.msk [vmem:[#allocation4 + $0x118] sm:$0xff] %vm361, 0.0
      %v4585 = vld [vmem:[#allocation3] sm:$0xff]
      %v4586 = vld [vmem:[#allocation3 + $0x8] sm:$0xff]
      %v4587 = vld [vmem:[#allocation3 + $0x10] sm:$0xff]
      %v4588 = vld [vmem:[#allocation3 + $0x18] sm:$0xff]
      %v4589 = vld [vmem:[#allocation3 + $0x20] sm:$0xff]
      %v4590 = vld [vmem:[#allocation3 + $0x28] sm:$0xff]
      %v4591 = vld [vmem:[#allocation3 + $0x30] sm:$0xff]
      %v4592 = vld [vmem:[#allocation3 + $0x38] sm:$0xff]
      %v4593 = vld [vmem:[#allocation3 + $0x40] sm:$0xff]
      %v4594 = vld [vmem:[#allocation3 + $0x48] sm:$0xff]
      %v4595 = vld [vmem:[#allocation3 + $0x50] sm:$0xff]
      %v4596 = vld [vmem:[#allocation3 + $0x58] sm:$0xff]
      %v4597 = vld [vmem:[#allocation3 + $0x60] sm:$0xff]
      %v4598 = vld [vmem:[#allocation3 + $0x68] sm:$0xff]
      %v4599 = vld [vmem:[#allocation3 + $0x70] sm:$0xff]
      %v4600 = vld [vmem:[#allocation3 + $0x78] sm:$0xff]
      %v4601 = vld [vmem:[#allocation3 + $0x80] sm:$0xff]
      %v4602 = vld [vmem:[#allocation3 + $0x88] sm:$0xff]
      %v4603 = vld [vmem:[#allocation3 + $0x90] sm:$0xff]
      %v4604 = vld [vmem:[#allocation3 + $0x98] sm:$0xff]
      %v4605 = vld [vmem:[#allocation3 + $0xa0] sm:$0xff]
      %v4606 = vld [vmem:[#allocation3 + $0xa8] sm:$0xff]
      %v4607 = vld [vmem:[#allocation3 + $0xb0] sm:$0xff]
      %v4608 = vld [vmem:[#allocation3 + $0xb8] sm:$0xff]
      %v4609 = vld [vmem:[#allocation3 + $0xc0] sm:$0xff]
      %v4610 = vld [vmem:[#allocation3 + $0xc8] sm:$0xff]
      %v4611 = vld [vmem:[#allocation3 + $0xd0] sm:$0xff]
      %v4612 = vld [vmem:[#allocation3 + $0xd8] sm:$0xff]
      %v4613 = vld [vmem:[#allocation3 + $0xe0] sm:$0xff]
      %v4614 = vld [vmem:[#allocation3 + $0xe8] sm:$0xff]
      %v4615 = vld [vmem:[#allocation3 + $0xf0] sm:$0xff]
      %v4616 = vld [vmem:[#allocation3 + $0xf8] sm:$0xff]
      %v4617 = vld [vmem:[#allocation3 + $0x100] sm:$0xff]
      %v4618 = vld [vmem:[#allocation3 + $0x108] sm:$0xff]
      %v4619 = vld [vmem:[#allocation3 + $0x110] sm:$0xff]
      %v4620 = vld [vmem:[#allocation3 + $0x118] sm:$0xff]
      %v4621 = vpack.c.bf16 %v4586, %v4585
      %v4622 = vpack.c.bf16 %v4588, %v4587
      %v4623 = vpack.c.bf16 %v4590, %v4589
      %v4624 = vpack.c.bf16 %v4592, %v4591
      %v4625 = vpack.c.bf16 %v4594, %v4593
      %v4626 = vpack.c.bf16 %v4596, %v4595
      %v4627 = vpack.c.bf16 %v4598, %v4597
      %v4628 = vpack.c.bf16 %v4600, %v4599
      %v4629 = vpack.c.bf16 %v4602, %v4601
      %v4630 = vpack.c.bf16 %v4604, %v4603
      %v4631 = vpack.c.bf16 %v4606, %v4605
      %v4632 = vpack.c.bf16 %v4608, %v4607
      %v4633 = vpack.c.bf16 %v4610, %v4609
      %v4634 = vpack.c.bf16 %v4612, %v4611
      %v4635 = vpack.c.bf16 %v4614, %v4613
      %v4636 = vpack.c.bf16 %v4616, %v4615
      %v4637 = vpack.c.bf16 %v4618, %v4617
      %v4638 = vpack.c.bf16 %v4620, %v4619
      %v4639 = vld [vmem:[#allocation4] sm:$0xff]
      %v4640 = vld [vmem:[#allocation4 + $0x8] sm:$0xff]
      %v4641 = vld [vmem:[#allocation4 + $0x10] sm:$0xff]
      %v4642 = vld [vmem:[#allocation4 + $0x18] sm:$0xff]
      %v4643 = vld [vmem:[#allocation4 + $0x20] sm:$0xff]
      %v4644 = vld [vmem:[#allocation4 + $0x28] sm:$0xff]
      %v4645 = vld [vmem:[#allocation4 + $0x30] sm:$0xff]
      %v4646 = vld [vmem:[#allocation4 + $0x38] sm:$0xff]
      %v4647 = vld [vmem:[#allocation4 + $0x40] sm:$0xff]
      %v4648 = vld [vmem:[#allocation4 + $0x48] sm:$0xff]
      %v4649 = vld [vmem:[#allocation4 + $0x50] sm:$0xff]
      %v4650 = vld [vmem:[#allocation4 + $0x58] sm:$0xff]
      %v4651 = vld [vmem:[#allocation4 + $0x60] sm:$0xff]
      %v4652 = vld [vmem:[#allocation4 + $0x68] sm:$0xff]
      %v4653 = vld [vmem:[#allocation4 + $0x70] sm:$0xff]
      %v4654 = vld [vmem:[#allocation4 + $0x78] sm:$0xff]
      %v4655 = vld [vmem:[#allocation4 + $0x80] sm:$0xff]
      %v4656 = vld [vmem:[#allocation4 + $0x88] sm:$0xff]
      %v4657 = vld [vmem:[#allocation4 + $0x90] sm:$0xff]
      %v4658 = vld [vmem:[#allocation4 + $0x98] sm:$0xff]
      %v4659 = vld [vmem:[#allocation4 + $0xa0] sm:$0xff]
      %v4660 = vld [vmem:[#allocation4 + $0xa8] sm:$0xff]
      %v4661 = vld [vmem:[#allocation4 + $0xb0] sm:$0xff]
      %v4662 = vld [vmem:[#allocation4 + $0xb8] sm:$0xff]
      %v4663 = vld [vmem:[#allocation4 + $0xc0] sm:$0xff]
      %v4664 = vld [vmem:[#allocation4 + $0xc8] sm:$0xff]
      %v4665 = vld [vmem:[#allocation4 + $0xd0] sm:$0xff]
      %v4666 = vld [vmem:[#allocation4 + $0xd8] sm:$0xff]
      %v4667 = vld [vmem:[#allocation4 + $0xe0] sm:$0xff]
      %v4668 = vld [vmem:[#allocation4 + $0xe8] sm:$0xff]
      %v4669 = vld [vmem:[#allocation4 + $0xf0] sm:$0xff]
      %v4670 = vld [vmem:[#allocation4 + $0xf8] sm:$0xff]
      %v4671 = vld [vmem:[#allocation4 + $0x100] sm:$0xff]
      %v4672 = vld [vmem:[#allocation4 + $0x108] sm:$0xff]
      %v4673 = vld [vmem:[#allocation4 + $0x110] sm:$0xff]
      %v4674 = vld [vmem:[#allocation4 + $0x118] sm:$0xff]
      %v4675 = vld [vmem:[%s4] sm:$0x3]
      %v4677 = vsel %vm361, %v4621, 0
      %v4680 = vsel %vm361, %v4622, 0
      %v4683 = vsel %vm361, %v4623, 0
      %v4686 = vsel %vm361, %v4624, 0
      %v4689 = vsel %vm361, %v4625, 0
      %v4692 = vsel %vm361, %v4626, 0
      %v4695 = vsel %vm361, %v4627, 0
      %v4698 = vsel %vm361, %v4628, 0
      %v4701 = vsel %vm361, %v4629, 0
      %v4704 = vsel %vm361, %v4630, 0
      %v4707 = vsel %vm361, %v4631, 0
      %v4710 = vsel %vm361, %v4632, 0
      %v4713 = vsel %vm361, %v4633, 0
      %v4716 = vsel %vm361, %v4634, 0
      %v4719 = vsel %vm361, %v4635, 0
      %v4722 = vsel %vm361, %v4636, 0
      %v4725 = vsel %vm361, %v4637, 0
      %v4728 = vsel %vm361, %v4638, 0
      %v4731 = vsel %vm709, %v4675, 0
      %4733 = vmatprep.subr.bf16.mxu0 0
      %4734 = vmatpush1.bf16.msra.mxu0 %v4731
      %4735 = vmatprep.subr.bf16.mxu0 0
      %4736 = vmatpush1.bf16.msra.mxu0 0
      %4737 = vmatprep.subr.bf16.mxu0 0
      %4738 = vmatpush1.bf16.msra.mxu0 0
      %4739 = vmatprep.subr.bf16.mxu0 0
      %4740 = vmatpush1.bf16.msra.mxu0 0
      %4741 = vmatprep.subr.bf16.mxu0 0
      %4742 = vmatpush1.bf16.msra.mxu0 0
      %4743 = vmatprep.subr.bf16.mxu0 0
      %4744 = vmatpush1.bf16.msra.mxu0 0
      %4745 = vmatprep.subr.bf16.mxu0 0
      %4746 = vmatpush1.bf16.msra.mxu0 0
      %4747 = vmatprep.subr.bf16.mxu0 0
      %4748 = vmatpush1.bf16.msra.mxu0 0
      %4749 = vmatprep.subr.bf16.mxu0 0
      %4750 = vmatpush1.bf16.msra.mxu0 0
      %4751 = vmatprep.subr.bf16.mxu0 0
      %4752 = vmatpush1.bf16.msra.mxu0 0
      %4753 = vmatprep.subr.bf16.mxu0 0
      %4754 = vmatpush1.bf16.msra.mxu0 0
      %4755 = vmatprep.subr.bf16.mxu0 0
      %4756 = vmatpush1.bf16.msra.mxu0 0
      %4757 = vmatprep.subr.bf16.mxu0 0
      %4758 = vmatpush1.bf16.msra.mxu0 0
      %4759 = vmatprep.subr.bf16.mxu0 0
      %4760 = vmatpush1.bf16.msra.mxu0 0
      %4761 = vmatprep.subr.bf16.mxu0 0
      %4762 = vmatpush1.bf16.msra.mxu0 0
      %4763 = vmatprep.subr.bf16.mxu0 0
      %4764 = vmatpush1.bf16.msra.mxu0 0
      %4765 = vmatprep.mubr.bf16.mxu0 0
      %4766 = vmatmul.mubr.bf16.gmra.mrb[0].mxu0 %v4677
      %v4767 = vpop.f32.mrb[0].mxu0
      %v4768 = vadd.f32 0.0, %v4767
      %v4769 = vpop.f32.mrb[0].mxu0
      %v4770 = vpop.f32.mrb[0].mxu0
      %v4771 = vadd.f32 0.0, %v4770
      %v4772 = vpop.f32.mrb[0].mxu0
      %4773 = vmatprep.mubr.bf16.mxu0 0
      %4774 = vmatmul.mubr.bf16.gmra.mrb[0].mxu0 %v4680
      %v4775 = vpop.f32.mrb[0].mxu0
      %v4776 = vadd.f32 0.0, %v4775
      %v4777 = vpop.f32.mrb[0].mxu0
      %v4778 = vpop.f32.mrb[0].mxu0
      %v4779 = vadd.f32 0.0, %v4778
      %v4780 = vpop.f32.mrb[0].mxu0
      %4781 = vmatprep.mubr.bf16.mxu0 0
      %4782 = vmatmul.mubr.bf16.gmra.mrb[0].mxu0 %v4683
      %v4783 = vpop.f32.mrb[0].mxu0
      %v4784 = vadd.f32 0.0, %v4783
      %v4785 = vpop.f32.mrb[0].mxu0
      %v4786 = vpop.f32.mrb[0].mxu0
      %v4787 = vadd.f32 0.0, %v4786
      %v4788 = vpop.f32.mrb[0].mxu0
      %4789 = vmatprep.mubr.bf16.mxu0 0
      %4790 = vmatmul.mubr.bf16.gmra.mrb[0].mxu0 %v4686
      %v4791 = vpop.f32.mrb[0].mxu0
      %v4792 = vadd.f32 0.0, %v4791
      %v4793 = vpop.f32.mrb[0].mxu0
      %v4794 = vpop.f32.mrb[0].mxu0
      %v4795 = vadd.f32 0.0, %v4794
      %v4796 = vpop.f32.mrb[0].mxu0
      %4797 = vmatprep.mubr.bf16.mxu0 0
      %4798 = vmatmul.mubr.bf16.gmra.mrb[0].mxu0 %v4689
      %v4799 = vpop.f32.mrb[0].mxu0
      %v4800 = vadd.f32 0.0, %v4799
      %v4801 = vpop.f32.mrb[0].mxu0
      %v4802 = vpop.f32.mrb[0].mxu0
      %v4803 = vadd.f32 0.0, %v4802
      %v4804 = vpop.f32.mrb[0].mxu0
      %4805 = vmatprep.mubr.bf16.mxu0 0
      %4806 = vmatmul.mubr.bf16.gmra.mrb[0].mxu0 %v4692
      %v4807 = vpop.f32.mrb[0].mxu0
      %v4808 = vadd.f32 0.0, %v4807
      %v4809 = vpop.f32.mrb[0].mxu0
      %v4810 = vpop.f32.mrb[0].mxu0
      %v4811 = vadd.f32 0.0, %v4810
      %v4812 = vpop.f32.mrb[0].mxu0
      %4813 = vmatprep.mubr.bf16.mxu0 0
      %4814 = vmatmul.mubr.bf16.gmra.mrb[0].mxu0 %v4695
      %v4815 = vpop.f32.mrb[0].mxu0
      %v4816 = vadd.f32 0.0, %v4815
      %v4817 = vpop.f32.mrb[0].mxu0
      %v4818 = vpop.f32.mrb[0].mxu0
      %v4819 = vadd.f32 0.0, %v4818
      %v4820 = vpop.f32.mrb[0].mxu0
      %4821 = vmatprep.mubr.bf16.mxu0 0
      %4822 = vmatmul.mubr.bf16.gmra.mrb[0].mxu0 %v4698
      %v4823 = vpop.f32.mrb[0].mxu0
      %v4824 = vadd.f32 0.0, %v4823
      %v4825 = vpop.f32.mrb[0].mxu0
      %v4826 = vpop.f32.mrb[0].mxu0
      %v4827 = vadd.f32 0.0, %v4826
      %v4828 = vpop.f32.mrb[0].mxu0
      %4829 = vmatprep.mubr.bf16.mxu0 0
      %4830 = vmatmul.mubr.bf16.gmra.mrb[0].mxu0 %v4701
      %v4831 = vpop.f32.mrb[0].mxu0
      %v4832 = vadd.f32 0.0, %v4831
      %v4833 = vpop.f32.mrb[0].mxu0
      %v4834 = vpop.f32.mrb[0].mxu0
      %v4835 = vadd.f32 0.0, %v4834
      %v4836 = vpop.f32.mrb[0].mxu0
      %4837 = vmatprep.mubr.bf16.mxu0 0
      %4838 = vmatmul.mubr.bf16.gmra.mrb[0].mxu0 %v4704
      %v4839 = vpop.f32.mrb[0].mxu0
      %v4840 = vadd.f32 0.0, %v4839
      %v4841 = vpop.f32.mrb[0].mxu0
      %v4842 = vpop.f32.mrb[0].mxu0
      %v4843 = vadd.f32 0.0, %v4842
      %v4844 = vpop.f32.mrb[0].mxu0
      %4845 = vmatprep.mubr.bf16.mxu0 0
      %4846 = vmatmul.mubr.bf16.gmra.mrb[0].mxu0 %v4707
      %v4847 = vpop.f32.mrb[0].mxu0
      %v4848 = vadd.f32 0.0, %v4847
      %v4849 = vpop.f32.mrb[0].mxu0
      %v4850 = vpop.f32.mrb[0].mxu0
      %v4851 = vadd.f32 0.0, %v4850
      %v4852 = vpop.f32.mrb[0].mxu0
      %4853 = vmatprep.mubr.bf16.mxu0 0
      %4854 = vmatmul.mubr.bf16.gmra.mrb[0].mxu0 %v4710
      %v4855 = vpop.f32.mrb[0].mxu0
      %v4856 = vadd.f32 0.0, %v4855
      %v4857 = vpop.f32.mrb[0].mxu0
      %v4858 = vpop.f32.mrb[0].mxu0
      %v4859 = vadd.f32 0.0, %v4858
      %v4860 = vpop.f32.mrb[0].mxu0
      %4861 = vmatprep.mubr.bf16.mxu0 0
      %4862 = vmatmul.mubr.bf16.gmra.mrb[0].mxu0 %v4713
      %v4863 = vpop.f32.mrb[0].mxu0
      %v4864 = vadd.f32 0.0, %v4863
      %v4865 = vpop.f32.mrb[0].mxu0
      %v4866 = vpop.f32.mrb[0].mxu0
      %v4867 = vadd.f32 0.0, %v4866
      %v4868 = vpop.f32.mrb[0].mxu0
      %4869 = vmatprep.mubr.bf16.mxu0 0
      %4870 = vmatmul.mubr.bf16.gmra.mrb[0].mxu0 %v4716
      %v4871 = vpop.f32.mrb[0].mxu0
      %v4872 = vadd.f32 0.0, %v4871
      %v4873 = vpop.f32.mrb[0].mxu0
      %v4874 = vpop.f32.mrb[0].mxu0
      %v4875 = vadd.f32 0.0, %v4874
      %v4876 = vpop.f32.mrb[0].mxu0
      %4877 = vmatprep.mubr.bf16.mxu0 0
      %4878 = vmatmul.mubr.bf16.gmra.mrb[0].mxu0 %v4719
      %v4879 = vpop.f32.mrb[0].mxu0
      %v4880 = vadd.f32 0.0, %v4879
      %v4881 = vpop.f32.mrb[0].mxu0
      %v4882 = vpop.f32.mrb[0].mxu0
      %v4883 = vadd.f32 0.0, %v4882
      %v4884 = vpop.f32.mrb[0].mxu0
      %4885 = vmatprep.mubr.bf16.mxu0 0
      %4886 = vmatmul.mubr.bf16.gmra.mrb[0].mxu0 %v4722
      %v4887 = vpop.f32.mrb[0].mxu0
      %v4888 = vadd.f32 0.0, %v4887
      %v4889 = vpop.f32.mrb[0].mxu0
      %v4890 = vpop.f32.mrb[0].mxu0
      %v4891 = vadd.f32 0.0, %v4890
      %v4892 = vpop.f32.mrb[0].mxu0
      %4893 = vmatprep.mubr.bf16.mxu0 0
      %4894 = vmatmul.mubr.bf16.gmra.mrb[0].mxu0 %v4725
      %v4895 = vpop.f32.mrb[0].mxu0
      %v4896 = vadd.f32 0.0, %v4895
      %v4897 = vpop.f32.mrb[0].mxu0
      %v4898 = vpop.f32.mrb[0].mxu0
      %v4899 = vadd.f32 0.0, %v4898
      %v4900 = vpop.f32.mrb[0].mxu0
      %4901 = vmatprep.mubr.bf16.mxu0 0
      %4902 = vmatmul.mubr.bf16.gmra.mrb[0].mxu0 %v4728
      %v4903 = vpop.f32.mrb[0].mxu0
      %v4904 = vadd.f32 0.0, %v4903
      %v4905 = vpop.f32.mrb[0].mxu0
      %v4906 = vpop.f32.mrb[0].mxu0
      %v4907 = vadd.f32 0.0, %v4906
      %v4908 = vpop.f32.mrb[0].mxu0
      %4909 = vdwg.mxu0
      %v4910 = vadd.f32 %v4639, %v4768
      %v4911 = vadd.f32 %v4640, %v4771
      %v4912 = vadd.f32 %v4641, %v4776
      %v4913 = vadd.f32 %v4642, %v4779
      %v4914 = vadd.f32 %v4643, %v4784
      %v4915 = vadd.f32 %v4644, %v4787
      %v4916 = vadd.f32 %v4645, %v4792
      %v4917 = vadd.f32 %v4646, %v4795
      %v4918 = vadd.f32 %v4647, %v4800
      %v4919 = vadd.f32 %v4648, %v4803
      %v4920 = vadd.f32 %v4649, %v4808
      %v4921 = vadd.f32 %v4650, %v4811
      %v4922 = vadd.f32 %v4651, %v4816
      %v4923 = vadd.f32 %v4652, %v4819
      %v4924 = vadd.f32 %v4653, %v4824
      %v4925 = vadd.f32 %v4654, %v4827
      %v4926 = vadd.f32 %v4655, %v4832
      %v4927 = vadd.f32 %v4656, %v4835
      %v4928 = vadd.f32 %v4657, %v4840
      %v4929 = vadd.f32 %v4658, %v4843
      %v4930 = vadd.f32 %v4659, %v4848
      %v4931 = vadd.f32 %v4660, %v4851
      %v4932 = vadd.f32 %v4661, %v4856
      %v4933 = vadd.f32 %v4662, %v4859
      %v4934 = vadd.f32 %v4663, %v4864
      %v4935 = vadd.f32 %v4664, %v4867
      %v4936 = vadd.f32 %v4665, %v4872
      %v4937 = vadd.f32 %v4666, %v4875
      %v4938 = vadd.f32 %v4667, %v4880
      %v4939 = vadd.f32 %v4668, %v4883
      %v4940 = vadd.f32 %v4669, %v4888
      %v4941 = vadd.f32 %v4670, %v4891
      %v4942 = vadd.f32 %v4671, %v4896
      %v4943 = vadd.f32 %v4672, %v4899
      %v4944 = vadd.f32 %v4673, %v4904
      %v4945 = vadd.f32 %v4674, %v4907
      %4946 = vst.msk [vmem:[#allocation4] sm:$0xff] %vm361, %v4910
      %4947 = vst.msk [vmem:[#allocation4 + $0x8] sm:$0xff] %vm361, %v4911
      %4948 = vst.msk [vmem:[#allocation4 + $0x10] sm:$0xff] %vm361, %v4912
      %4949 = vst.msk [vmem:[#allocation4 + $0x18] sm:$0xff] %vm361, %v4913
      %4950 = vst.msk [vmem:[#allocation4 + $0x20] sm:$0xff] %vm361, %v4914
      %4951 = vst.msk [vmem:[#allocation4 + $0x28] sm:$0xff] %vm361, %v4915
      %4952 = vst.msk [vmem:[#allocation4 + $0x30] sm:$0xff] %vm361, %v4916
      %4953 = vst.msk [vmem:[#allocation4 + $0x38] sm:$0xff] %vm361, %v4917
      %4954 = vst.msk [vmem:[#allocation4 + $0x40] sm:$0xff] %vm361, %v4918
      %4955 = vst.msk [vmem:[#allocation4 + $0x48] sm:$0xff] %vm361, %v4919
      %4956 = vst.msk [vmem:[#allocation4 + $0x50] sm:$0xff] %vm361, %v4920
      %4957 = vst.msk [vmem:[#allocation4 + $0x58] sm:$0xff] %vm361, %v4921
      %4958 = vst.msk [vmem:[#allocation4 + $0x60] sm:$0xff] %vm361, %v4922
      %4959 = vst.msk [vmem:[#allocation4 + $0x68] sm:$0xff] %vm361, %v4923
      %4960 = vst.msk [vmem:[#allocation4 + $0x70] sm:$0xff] %vm361, %v4924
      %4961 = vst.msk [vmem:[#allocation4 + $0x78] sm:$0xff] %vm361, %v4925
      %4962 = vst.msk [vmem:[#allocation4 + $0x80] sm:$0xff] %vm361, %v4926
      %4963 = vst.msk [vmem:[#allocation4 + $0x88] sm:$0xff] %vm361, %v4927
      %4964 = vst.msk [vmem:[#allocation4 + $0x90] sm:$0xff] %vm361, %v4928
      %4965 = vst.msk [vmem:[#allocation4 + $0x98] sm:$0xff] %vm361, %v4929
      %4966 = vst.msk [vmem:[#allocation4 + $0xa0] sm:$0xff] %vm361, %v4930
      %4967 = vst.msk [vmem:[#allocation4 + $0xa8] sm:$0xff] %vm361, %v4931
      %4968 = vst.msk [vmem:[#allocation4 + $0xb0] sm:$0xff] %vm361, %v4932
      %4969 = vst.msk [vmem:[#allocation4 + $0xb8] sm:$0xff] %vm361, %v4933
      %4970 = vst.msk [vmem:[#allocation4 + $0xc0] sm:$0xff] %vm361, %v4934
      %4971 = vst.msk [vmem:[#allocation4 + $0xc8] sm:$0xff] %vm361, %v4935
      %4972 = vst.msk [vmem:[#allocation4 + $0xd0] sm:$0xff] %vm361, %v4936
      %4973 = vst.msk [vmem:[#allocation4 + $0xd8] sm:$0xff] %vm361, %v4937
      %4974 = vst.msk [vmem:[#allocation4 + $0xe0] sm:$0xff] %vm361, %v4938
      %4975 = vst.msk [vmem:[#allocation4 + $0xe8] sm:$0xff] %vm361, %v4939
      %4976 = vst.msk [vmem:[#allocation4 + $0xf0] sm:$0xff] %vm361, %v4940
      %4977 = vst.msk [vmem:[#allocation4 + $0xf8] sm:$0xff] %vm361, %v4941
      %4978 = vst.msk [vmem:[#allocation4 + $0x100] sm:$0xff] %vm361, %v4942
      %4979 = vst.msk [vmem:[#allocation4 + $0x108] sm:$0xff] %vm361, %v4943
      %4980 = vst.msk [vmem:[#allocation4 + $0x110] sm:$0xff] %vm361, %v4944
      %4981 = vst.msk [vmem:[#allocation4 + $0x118] sm:$0xff] %vm361, %v4945
      %v4982 = vld [vmem:[#allocation3 + $0x1] sm:$0xff]
      %v4983 = vld [vmem:[#allocation3 + $0x9] sm:$0xff]
      %v4984 = vld [vmem:[#allocation3 + $0x11] sm:$0xff]
      %v4985 = vld [vmem:[#allocation3 + $0x19] sm:$0xff]
      %v4986 = vld [vmem:[#allocation3 + $0x21] sm:$0xff]
      %v4987 = vld [vmem:[#allocation3 + $0x29] sm:$0xff]
      %v4988 = vld [vmem:[#allocation3 + $0x31] sm:$0xff]
      %v4989 = vld [vmem:[#allocation3 + $0x39] sm:$0xff]
      %v4990 = vld [vmem:[#allocation3 + $0x41] sm:$0xff]
      %v4991 = vld [vmem:[#allocation3 + $0x49] sm:$0xff]
      %v4992 = vld [vmem:[#allocation3 + $0x51] sm:$0xff]
      %v4993 = vld [vmem:[#allocation3 + $0x59] sm:$0xff]
      %v4994 = vld [vmem:[#allocation3 + $0x61] sm:$0xff]
      %v4995 = vld [vmem:[#allocation3 + $0x69] sm:$0xff]
      %v4996 = vld [vmem:[#allocation3 + $0x71] sm:$0xff]
      %v4997 = vld [vmem:[#allocation3 + $0x79] sm:$0xff]
      %v4998 = vld [vmem:[#allocation3 + $0x81] sm:$0xff]
      %v4999 = vld [vmem:[#allocation3 + $0x89] sm:$0xff]
      %v5000 = vld [vmem:[#allocation3 + $0x91] sm:$0xff]
      %v5001 = vld [vmem:[#allocation3 + $0x99] sm:$0xff]
      %v5002 = vld [vmem:[#allocation3 + $0xa1] sm:$0xff]
      %v5003 = vld [vmem:[#allocation3 + $0xa9] sm:$0xff]
      %v5004 = vld [vmem:[#allocation3 + $0xb1] sm:$0xff]
      %v5005 = vld [vmem:[#allocation3 + $0xb9] sm:$0xff]
      %v5006 = vld [vmem:[#allocation3 + $0xc1] sm:$0xff]
      %v5007 = vld [vmem:[#allocation3 + $0xc9] sm:$0xff]
      %v5008 = vld [vmem:[#allocation3 + $0xd1] sm:$0xff]
      %v5009 = vld [vmem:[#allocation3 + $0xd9] sm:$0xff]
      %v5010 = vld [vmem:[#allocation3 + $0xe1] sm:$0xff]
      %v5011 = vld [vmem:[#allocation3 + $0xe9] sm:$0xff]
      %v5012 = vld [vmem:[#allocation3 + $0xf1] sm:$0xff]
      %v5013 = vld [vmem:[#allocation3 + $0xf9] sm:$0xff]
      %v5014 = vld [vmem:[#allocation3 + $0x101] sm:$0xff]
      %v5015 = vld [vmem:[#allocation3 + $0x109] sm:$0xff]
      %v5016 = vld [vmem:[#allocation3 + $0x111] sm:$0xff]
      %v5017 = vld [vmem:[#allocation3 + $0x119] sm:$0xff]
      %v5018 = vpack.c.bf16 %v4983, %v4982
      %v5019 = vpack.c.bf16 %v4985, %v4984
      %v5020 = vpack.c.bf16 %v4987, %v4986
      %v5021 = vpack.c.bf16 %v4989, %v4988
      %v5022 = vpack.c.bf16 %v4991, %v4990
      %v5023 = vpack.c.bf16 %v4993, %v4992
      %v5024 = vpack.c.bf16 %v4995, %v4994
      %v5025 = vpack.c.bf16 %v4997, %v4996
      %v5026 = vpack.c.bf16 %v4999, %v4998
      %v5027 = vpack.c.bf16 %v5001, %v5000
      %v5028 = vpack.c.bf16 %v5003, %v5002
      %v5029 = vpack.c.bf16 %v5005, %v5004
      %v5030 = vpack.c.bf16 %v5007, %v5006
      %v5031 = vpack.c.bf16 %v5009, %v5008
      %v5032 = vpack.c.bf16 %v5011, %v5010
      %v5033 = vpack.c.bf16 %v5013, %v5012
      %v5034 = vpack.c.bf16 %v5015, %v5014
      %v5035 = vpack.c.bf16 %v5017, %v5016
      %v5036 = vld [vmem:[#allocation4] sm:$0xff]
      %v5037 = vld [vmem:[#allocation4 + $0x8] sm:$0xff]
      %v5038 = vld [vmem:[#allocation4 + $0x10] sm:$0xff]
      %v5039 = vld [vmem:[#allocation4 + $0x18] sm:$0xff]
      %v5040 = vld [vmem:[#allocation4 + $0x20] sm:$0xff]
      %v5041 = vld [vmem:[#allocation4 + $0x28] sm:$0xff]
      %v5042 = vld [vmem:[#allocation4 + $0x30] sm:$0xff]
      %v5043 = vld [vmem:[#allocation4 + $0x38] sm:$0xff]
      %v5044 = vld [vmem:[#allocation4 + $0x40] sm:$0xff]
      %v5045 = vld [vmem:[#allocation4 + $0x48] sm:$0xff]
      %v5046 = vld [vmem:[#allocation4 + $0x50] sm:$0xff]
      %v5047 = vld [vmem:[#allocation4 + $0x58] sm:$0xff]
      %v5048 = vld [vmem:[#allocation4 + $0x60] sm:$0xff]
      %v5049 = vld [vmem:[#allocation4 + $0x68] sm:$0xff]
      %v5050 = vld [vmem:[#allocation4 + $0x70] sm:$0xff]
      %v5051 = vld [vmem:[#allocation4 + $0x78] sm:$0xff]
      %v5052 = vld [vmem:[#allocation4 + $0x80] sm:$0xff]
      %v5053 = vld [vmem:[#allocation4 + $0x88] sm:$0xff]
      %v5054 = vld [vmem:[#allocation4 + $0x90] sm:$0xff]
      %v5055 = vld [vmem:[#allocation4 + $0x98] sm:$0xff]
      %v5056 = vld [vmem:[#allocation4 + $0xa0] sm:$0xff]
      %v5057 = vld [vmem:[#allocation4 + $0xa8] sm:$0xff]
      %v5058 = vld [vmem:[#allocation4 + $0xb0] sm:$0xff]
      %v5059 = vld [vmem:[#allocation4 + $0xb8] sm:$0xff]
      %v5060 = vld [vmem:[#allocation4 + $0xc0] sm:$0xff]
      %v5061 = vld [vmem:[#allocation4 + $0xc8] sm:$0xff]
      %v5062 = vld [vmem:[#allocation4 + $0xd0] sm:$0xff]
      %v5063 = vld [vmem:[#allocation4 + $0xd8] sm:$0xff]
      %v5064 = vld [vmem:[#allocation4 + $0xe0] sm:$0xff]
      %v5065 = vld [vmem:[#allocation4 + $0xe8] sm:$0xff]
      %v5066 = vld [vmem:[#allocation4 + $0xf0] sm:$0xff]
      %v5067 = vld [vmem:[#allocation4 + $0xf8] sm:$0xff]
      %v5068 = vld [vmem:[#allocation4 + $0x100] sm:$0xff]
      %v5069 = vld [vmem:[#allocation4 + $0x108] sm:$0xff]
      %v5070 = vld [vmem:[#allocation4 + $0x110] sm:$0xff]
      %v5071 = vld [vmem:[#allocation4 + $0x118] sm:$0xff]
      %s5072 = scalar_lea.vmem %s4, 2
      %v5073 = vld [vmem:[%s5072] sm:$0x3]
      %v5075 = vsel %vm361, %v5018, 0
      %v5078 = vsel %vm361, %v5019, 0
      %v5081 = vsel %vm361, %v5020, 0
      %v5084 = vsel %vm361, %v5021, 0
      %v5087 = vsel %vm361, %v5022, 0
      %v5090 = vsel %vm361, %v5023, 0
      %v5093 = vsel %vm361, %v5024, 0
      %v5096 = vsel %vm361, %v5025, 0
      %v5099 = vsel %vm361, %v5026, 0
      %v5102 = vsel %vm361, %v5027, 0
      %v5105 = vsel %vm361, %v5028, 0
      %v5108 = vsel %vm361, %v5029, 0
      %v5111 = vsel %vm361, %v5030, 0
      %v5114 = vsel %vm361, %v5031, 0
      %v5117 = vsel %vm361, %v5032, 0
      %v5120 = vsel %vm361, %v5033, 0
      %v5123 = vsel %vm361, %v5034, 0
      %v5126 = vsel %vm361, %v5035, 0
      %v5129 = vsel %vm709, %v5073, 0
      %5131 = vmatprep.subr.bf16.mxu0 0
      %5132 = vmatpush1.bf16.msra.mxu0 %v5129
      %5133 = vmatprep.subr.bf16.mxu0 0
      %5134 = vmatpush1.bf16.msra.mxu0 0
      %5135 = vmatprep.subr.bf16.mxu0 0
      %5136 = vmatpush1.bf16.msra.mxu0 0
      %5137 = vmatprep.subr.bf16.mxu0 0
      %5138 = vmatpush1.bf16.msra.mxu0 0
      %5139 = vmatprep.subr.bf16.mxu0 0
      %5140 = vmatpush1.bf16.msra.mxu0 0
      %5141 = vmatprep.subr.bf16.mxu0 0
      %5142 = vmatpush1.bf16.msra.mxu0 0
      %5143 = vmatprep.subr.bf16.mxu0 0
      %5144 = vmatpush1.bf16.msra.mxu0 0
      %5145 = vmatprep.subr.bf16.mxu0 0
      %5146 = vmatpush1.bf16.msra.mxu0 0
      %5147 = vmatprep.subr.bf16.mxu0 0
      %5148 = vmatpush1.bf16.msra.mxu0 0
      %5149 = vmatprep.subr.bf16.mxu0 0
      %5150 = vmatpush1.bf16.msra.mxu0 0
      %5151 = vmatprep.subr.bf16.mxu0 0
      %5152 = vmatpush1.bf16.msra.mxu0 0
      %5153 = vmatprep.subr.bf16.mxu0 0
      %5154 = vmatpush1.bf16.msra.mxu0 0
      %5155 = vmatprep.subr.bf16.mxu0 0
      %5156 = vmatpush1.bf16.msra.mxu0 0
      %5157 = vmatprep.subr.bf16.mxu0 0
      %5158 = vmatpush1.bf16.msra.mxu0 0
      %5159 = vmatprep.subr.bf16.mxu0 0
      %5160 = vmatpush1.bf16.msra.mxu0 0
      %5161 = vmatprep.subr.bf16.mxu0 0
      %5162 = vmatpush1.bf16.msra.mxu0 0
      %5163 = vmatprep.mubr.bf16.mxu0 0
      %5164 = vmatmul.mubr.bf16.gmra.mrb[0].mxu0 %v5075
      %v5165 = vpop.f32.mrb[0].mxu0
      %v5166 = vadd.f32 0.0, %v5165
      %v5167 = vpop.f32.mrb[0].mxu0
      %v5168 = vpop.f32.mrb[0].mxu0
      %v5169 = vadd.f32 0.0, %v5168
      %v5170 = vpop.f32.mrb[0].mxu0
      %5171 = vmatprep.mubr.bf16.mxu0 0
      %5172 = vmatmul.mubr.bf16.gmra.mrb[0].mxu0 %v5078
      %v5173 = vpop.f32.mrb[0].mxu0
      %v5174 = vadd.f32 0.0, %v5173
      %v5175 = vpop.f32.mrb[0].mxu0
      %v5176 = vpop.f32.mrb[0].mxu0
      %v5177 = vadd.f32 0.0, %v5176
      %v5178 = vpop.f32.mrb[0].mxu0
      %5179 = vmatprep.mubr.bf16.mxu0 0
      %5180 = vmatmul.mubr.bf16.gmra.mrb[0].mxu0 %v5081
      %v5181 = vpop.f32.mrb[0].mxu0
      %v5182 = vadd.f32 0.0, %v5181
      %v5183 = vpop.f32.mrb[0].mxu0
      %v5184 = vpop.f32.mrb[0].mxu0
      %v5185 = vadd.f32 0.0, %v5184
      %v5186 = vpop.f32.mrb[0].mxu0
      %5187 = vmatprep.mubr.bf16.mxu0 0
      %5188 = vmatmul.mubr.bf16.gmra.mrb[0].mxu0 %v5084
      %v5189 = vpop.f32.mrb[0].mxu0
      %v5190 = vadd.f32 0.0, %v5189
      %v5191 = vpop.f32.mrb[0].mxu0
      %v5192 = vpop.f32.mrb[0].mxu0
      %v5193 = vadd.f32 0.0, %v5192
      %v5194 = vpop.f32.mrb[0].mxu0
      %5195 = vmatprep.mubr.bf16.mxu0 0
      %5196 = vmatmul.mubr.bf16.gmra.mrb[0].mxu0 %v5087
      %v5197 = vpop.f32.mrb[0].mxu0
      %v5198 = vadd.f32 0.0, %v5197
      %v5199 = vpop.f32.mrb[0].mxu0
      %v5200 = vpop.f32.mrb[0].mxu0
      %v5201 = vadd.f32 0.0, %v5200
      %v5202 = vpop.f32.mrb[0].mxu0
      %5203 = vmatprep.mubr.bf16.mxu0 0
      %5204 = vmatmul.mubr.bf16.gmra.mrb[0].mxu0 %v5090
      %v5205 = vpop.f32.mrb[0].mxu0
      %v5206 = vadd.f32 0.0, %v5205
      %v5207 = vpop.f32.mrb[0].mxu0
      %v5208 = vpop.f32.mrb[0].mxu0
      %v5209 = vadd.f32 0.0, %v5208
      %v5210 = vpop.f32.mrb[0].mxu0
      %5211 = vmatprep.mubr.bf16.mxu0 0
      %5212 = vmatmul.mubr.bf16.gmra.mrb[0].mxu0 %v5093
      %v5213 = vpop.f32.mrb[0].mxu0
      %v5214 = vadd.f32 0.0, %v5213
      %v5215 = vpop.f32.mrb[0].mxu0
      %v5216 = vpop.f32.mrb[0].mxu0
      %v5217 = vadd.f32 0.0, %v5216
      %v5218 = vpop.f32.mrb[0].mxu0
      %5219 = vmatprep.mubr.bf16.mxu0 0
      %5220 = vmatmul.mubr.bf16.gmra.mrb[0].mxu0 %v5096
      %v5221 = vpop.f32.mrb[0].mxu0
      %v5222 = vadd.f32 0.0, %v5221
      %v5223 = vpop.f32.mrb[0].mxu0
      %v5224 = vpop.f32.mrb[0].mxu0
      %v5225 = vadd.f32 0.0, %v5224
      %v5226 = vpop.f32.mrb[0].mxu0
      %5227 = vmatprep.mubr.bf16.mxu0 0
      %5228 = vmatmul.mubr.bf16.gmra.mrb[0].mxu0 %v5099
      %v5229 = vpop.f32.mrb[0].mxu0
      %v5230 = vadd.f32 0.0, %v5229
      %v5231 = vpop.f32.mrb[0].mxu0
      %v5232 = vpop.f32.mrb[0].mxu0
      %v5233 = vadd.f32 0.0, %v5232
      %v5234 = vpop.f32.mrb[0].mxu0
      %5235 = vmatprep.mubr.bf16.mxu0 0
      %5236 = vmatmul.mubr.bf16.gmra.mrb[0].mxu0 %v5102
      %v5237 = vpop.f32.mrb[0].mxu0
      %v5238 = vadd.f32 0.0, %v5237
      %v5239 = vpop.f32.mrb[0].mxu0
      %v5240 = vpop.f32.mrb[0].mxu0
      %v5241 = vadd.f32 0.0, %v5240
      %v5242 = vpop.f32.mrb[0].mxu0
      %5243 = vmatprep.mubr.bf16.mxu0 0
      %5244 = vmatmul.mubr.bf16.gmra.mrb[0].mxu0 %v5105
      %v5245 = vpop.f32.mrb[0].mxu0
      %v5246 = vadd.f32 0.0, %v5245
      %v5247 = vpop.f32.mrb[0].mxu0
      %v5248 = vpop.f32.mrb[0].mxu0
      %v5249 = vadd.f32 0.0, %v5248
      %v5250 = vpop.f32.mrb[0].mxu0
      %5251 = vmatprep.mubr.bf16.mxu0 0
      %5252 = vmatmul.mubr.bf16.gmra.mrb[0].mxu0 %v5108
      %v5253 = vpop.f32.mrb[0].mxu0
      %v5254 = vadd.f32 0.0, %v5253
      %v5255 = vpop.f32.mrb[0].mxu0
      %v5256 = vpop.f32.mrb[0].mxu0
      %v5257 = vadd.f32 0.0, %v5256
      %v5258 = vpop.f32.mrb[0].mxu0
      %5259 = vmatprep.mubr.bf16.mxu0 0
      %5260 = vmatmul.mubr.bf16.gmra.mrb[0].mxu0 %v5111
      %v5261 = vpop.f32.mrb[0].mxu0
      %v5262 = vadd.f32 0.0, %v5261
      %v5263 = vpop.f32.mrb[0].mxu0
      %v5264 = vpop.f32.mrb[0].mxu0
      %v5265 = vadd.f32 0.0, %v5264
      %v5266 = vpop.f32.mrb[0].mxu0
      %5267 = vmatprep.mubr.bf16.mxu0 0
      %5268 = vmatmul.mubr.bf16.gmra.mrb[0].mxu0 %v5114
      %v5269 = vpop.f32.mrb[0].mxu0
      %v5270 = vadd.f32 0.0, %v5269
      %v5271 = vpop.f32.mrb[0].mxu0
      %v5272 = vpop.f32.mrb[0].mxu0
      %v5273 = vadd.f32 0.0, %v5272
      %v5274 = vpop.f32.mrb[0].mxu0
      %5275 = vmatprep.mubr.bf16.mxu0 0
      %5276 = vmatmul.mubr.bf16.gmra.mrb[0].mxu0 %v5117
      %v5277 = vpop.f32.mrb[0].mxu0
      %v5278 = vadd.f32 0.0, %v5277
      %v5279 = vpop.f32.mrb[0].mxu0
      %v5280 = vpop.f32.mrb[0].mxu0
      %v5281 = vadd.f32 0.0, %v5280
      %v5282 = vpop.f32.mrb[0].mxu0
      %5283 = vmatprep.mubr.bf16.mxu0 0
      %5284 = vmatmul.mubr.bf16.gmra.mrb[0].mxu0 %v5120
      %v5285 = vpop.f32.mrb[0].mxu0
      %v5286 = vadd.f32 0.0, %v5285
      %v5287 = vpop.f32.mrb[0].mxu0
      %v5288 = vpop.f32.mrb[0].mxu0
      %v5289 = vadd.f32 0.0, %v5288
      %v5290 = vpop.f32.mrb[0].mxu0
      %5291 = vmatprep.mubr.bf16.mxu0 0
      %5292 = vmatmul.mubr.bf16.gmra.mrb[0].mxu0 %v5123
      %v5293 = vpop.f32.mrb[0].mxu0
      %v5294 = vadd.f32 0.0, %v5293
      %v5295 = vpop.f32.mrb[0].mxu0
      %v5296 = vpop.f32.mrb[0].mxu0
      %v5297 = vadd.f32 0.0, %v5296
      %v5298 = vpop.f32.mrb[0].mxu0
      %5299 = vmatprep.mubr.bf16.mxu0 0
      %5300 = vmatmul.mubr.bf16.gmra.mrb[0].mxu0 %v5126
      %v5301 = vpop.f32.mrb[0].mxu0
      %v5302 = vadd.f32 0.0, %v5301
      %v5303 = vpop.f32.mrb[0].mxu0
      %v5304 = vpop.f32.mrb[0].mxu0
      %v5305 = vadd.f32 0.0, %v5304
      %v5306 = vpop.f32.mrb[0].mxu0
      %5307 = vdwg.mxu0
      %v5308 = vadd.f32 %v5036, %v5166
      %v5309 = vadd.f32 %v5037, %v5169
      %v5310 = vadd.f32 %v5038, %v5174
      %v5311 = vadd.f32 %v5039, %v5177
      %v5312 = vadd.f32 %v5040, %v5182
      %v5313 = vadd.f32 %v5041, %v5185
      %v5314 = vadd.f32 %v5042, %v5190
      %v5315 = vadd.f32 %v5043, %v5193
      %v5316 = vadd.f32 %v5044, %v5198
      %v5317 = vadd.f32 %v5045, %v5201
      %v5318 = vadd.f32 %v5046, %v5206
      %v5319 = vadd.f32 %v5047, %v5209
      %v5320 = vadd.f32 %v5048, %v5214
      %v5321 = vadd.f32 %v5049, %v5217
      %v5322 = vadd.f32 %v5050, %v5222
      %v5323 = vadd.f32 %v5051, %v5225
      %v5324 = vadd.f32 %v5052, %v5230
      %v5325 = vadd.f32 %v5053, %v5233
      %v5326 = vadd.f32 %v5054, %v5238
      %v5327 = vadd.f32 %v5055, %v5241
      %v5328 = vadd.f32 %v5056, %v5246
      %v5329 = vadd.f32 %v5057, %v5249
      %v5330 = vadd.f32 %v5058, %v5254
      %v5331 = vadd.f32 %v5059, %v5257
      %v5332 = vadd.f32 %v5060, %v5262
      %v5333 = vadd.f32 %v5061, %v5265
      %v5334 = vadd.f32 %v5062, %v5270
      %v5335 = vadd.f32 %v5063, %v5273
      %v5336 = vadd.f32 %v5064, %v5278
      %v5337 = vadd.f32 %v5065, %v5281
      %v5338 = vadd.f32 %v5066, %v5286
      %v5339 = vadd.f32 %v5067, %v5289
      %v5340 = vadd.f32 %v5068, %v5294
      %v5341 = vadd.f32 %v5069, %v5297
      %v5342 = vadd.f32 %v5070, %v5302
      %v5343 = vadd.f32 %v5071, %v5305
      %5344 = vst.msk [vmem:[#allocation4] sm:$0xff] %vm361, %v5308
      %5345 = vst.msk [vmem:[#allocation4 + $0x8] sm:$0xff] %vm361, %v5309
      %5346 = vst.msk [vmem:[#allocation4 + $0x10] sm:$0xff] %vm361, %v5310
      %5347 = vst.msk [vmem:[#allocation4 + $0x18] sm:$0xff] %vm361, %v5311
      %5348 = vst.msk [vmem:[#allocation4 + $0x20] sm:$0xff] %vm361, %v5312
      %5349 = vst.msk [vmem:[#allocation4 + $0x28] sm:$0xff] %vm361, %v5313
      %5350 = vst.msk [vmem:[#allocation4 + $0x30] sm:$0xff] %vm361, %v5314
      %5351 = vst.msk [vmem:[#allocation4 + $0x38] sm:$0xff] %vm361, %v5315
      %5352 = vst.msk [vmem:[#allocation4 + $0x40] sm:$0xff] %vm361, %v5316
      %5353 = vst.msk [vmem:[#allocation4 + $0x48] sm:$0xff] %vm361, %v5317
      %5354 = vst.msk [vmem:[#allocation4 + $0x50] sm:$0xff] %vm361, %v5318
      %5355 = vst.msk [vmem:[#allocation4 + $0x58] sm:$0xff] %vm361, %v5319
      %5356 = vst.msk [vmem:[#allocation4 + $0x60] sm:$0xff] %vm361, %v5320
      %5357 = vst.msk [vmem:[#allocation4 + $0x68] sm:$0xff] %vm361, %v5321
      %5358 = vst.msk [vmem:[#allocation4 + $0x70] sm:$0xff] %vm361, %v5322
      %5359 = vst.msk [vmem:[#allocation4 + $0x78] sm:$0xff] %vm361, %v5323
      %5360 = vst.msk [vmem:[#allocation4 + $0x80] sm:$0xff] %vm361, %v5324
      %5361 = vst.msk [vmem:[#allocation4 + $0x88] sm:$0xff] %vm361, %v5325
      %5362 = vst.msk [vmem:[#allocation4 + $0x90] sm:$0xff] %vm361, %v5326
      %5363 = vst.msk [vmem:[#allocation4 + $0x98] sm:$0xff] %vm361, %v5327
      %5364 = vst.msk [vmem:[#allocation4 + $0xa0] sm:$0xff] %vm361, %v5328
      %5365 = vst.msk [vmem:[#allocation4 + $0xa8] sm:$0xff] %vm361, %v5329
      %5366 = vst.msk [vmem:[#allocation4 + $0xb0] sm:$0xff] %vm361, %v5330
      %5367 = vst.msk [vmem:[#allocation4 + $0xb8] sm:$0xff] %vm361, %v5331
      %5368 = vst.msk [vmem:[#allocation4 + $0xc0] sm:$0xff] %vm361, %v5332
      %5369 = vst.msk [vmem:[#allocation4 + $0xc8] sm:$0xff] %vm361, %v5333
      %5370 = vst.msk [vmem:[#allocation4 + $0xd0] sm:$0xff] %vm361, %v5334
      %5371 = vst.msk [vmem:[#allocation4 + $0xd8] sm:$0xff] %vm361, %v5335
      %5372 = vst.msk [vmem:[#allocation4 + $0xe0] sm:$0xff] %vm361, %v5336
      %5373 = vst.msk [vmem:[#allocation4 + $0xe8] sm:$0xff] %vm361, %v5337
      %5374 = vst.msk [vmem:[#allocation4 + $0xf0] sm:$0xff] %vm361, %v5338
      %5375 = vst.msk [vmem:[#allocation4 + $0xf8] sm:$0xff] %vm361, %v5339
      %5376 = vst.msk [vmem:[#allocation4 + $0x100] sm:$0xff] %vm361, %v5340
      %5377 = vst.msk [vmem:[#allocation4 + $0x108] sm:$0xff] %vm361, %v5341
      %5378 = vst.msk [vmem:[#allocation4 + $0x110] sm:$0xff] %vm361, %v5342
      %5379 = vst.msk [vmem:[#allocation4 + $0x118] sm:$0xff] %vm361, %v5343
      %v5380 = vld [vmem:[#allocation3 + $0x2] sm:$0xff]
      %v5381 = vld [vmem:[#allocation3 + $0xa] sm:$0xff]
      %v5382 = vld [vmem:[#allocation3 + $0x12] sm:$0xff]
      %v5383 = vld [vmem:[#allocation3 + $0x1a] sm:$0xff]
      %v5384 = vld [vmem:[#allocation3 + $0x22] sm:$0xff]
      %v5385 = vld [vmem:[#allocation3 + $0x2a] sm:$0xff]
      %v5386 = vld [vmem:[#allocation3 + $0x32] sm:$0xff]
      %v5387 = vld [vmem:[#allocation3 + $0x3a] sm:$0xff]
      %v5388 = vld [vmem:[#allocation3 + $0x42] sm:$0xff]
      %v5389 = vld [vmem:[#allocation3 + $0x4a] sm:$0xff]
      %v5390 = vld [vmem:[#allocation3 + $0x52] sm:$0xff]
      %v5391 = vld [vmem:[#allocation3 + $0x5a] sm:$0xff]
      %v5392 = vld [vmem:[#allocation3 + $0x62] sm:$0xff]
      %v5393 = vld [vmem:[#allocation3 + $0x6a] sm:$0xff]
      %v5394 = vld [vmem:[#allocation3 + $0x72] sm:$0xff]
      %v5395 = vld [vmem:[#allocation3 + $0x7a] sm:$0xff]
      %v5396 = vld [vmem:[#allocation3 + $0x82] sm:$0xff]
      %v5397 = vld [vmem:[#allocation3 + $0x8a] sm:$0xff]
      %v5398 = vld [vmem:[#allocation3 + $0x92] sm:$0xff]
      %v5399 = vld [vmem:[#allocation3 + $0x9a] sm:$0xff]
      %v5400 = vld [vmem:[#allocation3 + $0xa2] sm:$0xff]
      %v5401 = vld [vmem:[#allocation3 + $0xaa] sm:$0xff]
      %v5402 = vld [vmem:[#allocation3 + $0xb2] sm:$0xff]
      %v5403 = vld [vmem:[#allocation3 + $0xba] sm:$0xff]
      %v5404 = vld [vmem:[#allocation3 + $0xc2] sm:$0xff]
      %v5405 = vld [vmem:[#allocation3 + $0xca] sm:$0xff]
      %v5406 = vld [vmem:[#allocation3 + $0xd2] sm:$0xff]
      %v5407 = vld [vmem:[#allocation3 + $0xda] sm:$0xff]
      %v5408 = vld [vmem:[#allocation3 + $0xe2] sm:$0xff]
      %v5409 = vld [vmem:[#allocation3 + $0xea] sm:$0xff]
      %v5410 = vld [vmem:[#allocation3 + $0xf2] sm:$0xff]
      %v5411 = vld [vmem:[#allocation3 + $0xfa] sm:$0xff]
      %v5412 = vld [vmem:[#allocation3 + $0x102] sm:$0xff]
      %v5413 = vld [vmem:[#allocation3 + $0x10a] sm:$0xff]
      %v5414 = vld [vmem:[#allocation3 + $0x112] sm:$0xff]
      %v5415 = vld [vmem:[#allocation3 + $0x11a] sm:$0xff]
      %v5416 = vpack.c.bf16 %v5381, %v5380
      %v5417 = vpack.c.bf16 %v5383, %v5382
      %v5418 = vpack.c.bf16 %v5385, %v5384
      %v5419 = vpack.c.bf16 %v5387, %v5386
      %v5420 = vpack.c.bf16 %v5389, %v5388
      %v5421 = vpack.c.bf16 %v5391, %v5390
      %v5422 = vpack.c.bf16 %v5393, %v5392
      %v5423 = vpack.c.bf16 %v5395, %v5394
      %v5424 = vpack.c.bf16 %v5397, %v5396
      %v5425 = vpack.c.bf16 %v5399, %v5398
      %v5426 = vpack.c.bf16 %v5401, %v5400
      %v5427 = vpack.c.bf16 %v5403, %v5402
      %v5428 = vpack.c.bf16 %v5405, %v5404
      %v5429 = vpack.c.bf16 %v5407, %v5406
      %v5430 = vpack.c.bf16 %v5409, %v5408
      %v5431 = vpack.c.bf16 %v5411, %v5410
      %v5432 = vpack.c.bf16 %v5413, %v5412
      %v5433 = vpack.c.bf16 %v5415, %v5414
      %v5434 = vld [vmem:[#allocation4] sm:$0xff]
      %v5435 = vld [vmem:[#allocation4 + $0x8] sm:$0xff]
      %v5436 = vld [vmem:[#allocation4 + $0x10] sm:$0xff]
      %v5437 = vld [vmem:[#allocation4 + $0x18] sm:$0xff]
      %v5438 = vld [vmem:[#allocation4 + $0x20] sm:$0xff]
      %v5439 = vld [vmem:[#allocation4 + $0x28] sm:$0xff]
      %v5440 = vld [vmem:[#allocation4 + $0x30] sm:$0xff]
      %v5441 = vld [vmem:[#allocation4 + $0x38] sm:$0xff]
      %v5442 = vld [vmem:[#allocation4 + $0x40] sm:$0xff]
      %v5443 = vld [vmem:[#allocation4 + $0x48] sm:$0xff]
      %v5444 = vld [vmem:[#allocation4 + $0x50] sm:$0xff]
      %v5445 = vld [vmem:[#allocation4 + $0x58] sm:$0xff]
      %v5446 = vld [vmem:[#allocation4 + $0x60] sm:$0xff]
      %v5447 = vld [vmem:[#allocation4 + $0x68] sm:$0xff]
      %v5448 = vld [vmem:[#allocation4 + $0x70] sm:$0xff]
      %v5449 = vld [vmem:[#allocation4 + $0x78] sm:$0xff]
      %v5450 = vld [vmem:[#allocation4 + $0x80] sm:$0xff]
      %v5451 = vld [vmem:[#allocation4 + $0x88] sm:$0xff]
      %v5452 = vld [vmem:[#allocation4 + $0x90] sm:$0xff]
      %v5453 = vld [vmem:[#allocation4 + $0x98] sm:$0xff]
      %v5454 = vld [vmem:[#allocation4 + $0xa0] sm:$0xff]
      %v5455 = vld [vmem:[#allocation4 + $0xa8] sm:$0xff]
      %v5456 = vld [vmem:[#allocation4 + $0xb0] sm:$0xff]
      %v5457 = vld [vmem:[#allocation4 + $0xb8] sm:$0xff]
      %v5458 = vld [vmem:[#allocation4 + $0xc0] sm:$0xff]
      %v5459 = vld [vmem:[#allocation4 + $0xc8] sm:$0xff]
      %v5460 = vld [vmem:[#allocation4 + $0xd0] sm:$0xff]
      %v5461 = vld [vmem:[#allocation4 + $0xd8] sm:$0xff]
      %v5462 = vld [vmem:[#allocation4 + $0xe0] sm:$0xff]
      %v5463 = vld [vmem:[#allocation4 + $0xe8] sm:$0xff]
      %v5464 = vld [vmem:[#allocation4 + $0xf0] sm:$0xff]
      %v5465 = vld [vmem:[#allocation4 + $0xf8] sm:$0xff]
      %v5466 = vld [vmem:[#allocation4 + $0x100] sm:$0xff]
      %v5467 = vld [vmem:[#allocation4 + $0x108] sm:$0xff]
      %v5468 = vld [vmem:[#allocation4 + $0x110] sm:$0xff]
      %v5469 = vld [vmem:[#allocation4 + $0x118] sm:$0xff]
      %s5470 = scalar_lea.vmem %s4, 4
      %v5471 = vld [vmem:[%s5470] sm:$0x3]
      %v5473 = vsel %vm361, %v5416, 0
      %v5476 = vsel %vm361, %v5417, 0
      %v5479 = vsel %vm361, %v5418, 0
      %v5482 = vsel %vm361, %v5419, 0
      %v5485 = vsel %vm361, %v5420, 0
      %v5488 = vsel %vm361, %v5421, 0
      %v5491 = vsel %vm361, %v5422, 0
      %v5494 = vsel %vm361, %v5423, 0
      %v5497 = vsel %vm361, %v5424, 0
      %v5500 = vsel %vm361, %v5425, 0
      %v5503 = vsel %vm361, %v5426, 0
      %v5506 = vsel %vm361, %v5427, 0
      %v5509 = vsel %vm361, %v5428, 0
      %v5512 = vsel %vm361, %v5429, 0
      %v5515 = vsel %vm361, %v5430, 0
      %v5518 = vsel %vm361, %v5431, 0
      %v5521 = vsel %vm361, %v5432, 0
      %v5524 = vsel %vm361, %v5433, 0
      %v5527 = vsel %vm709, %v5471, 0
      %5529 = vmatprep.subr.bf16.mxu0 0
      %5530 = vmatpush1.bf16.msra.mxu0 %v5527
      %5531 = vmatprep.subr.bf16.mxu0 0
      %5532 = vmatpush1.bf16.msra.mxu0 0
      %5533 = vmatprep.subr.bf16.mxu0 0
      %5534 = vmatpush1.bf16.msra.mxu0 0
      %5535 = vmatprep.subr.bf16.mxu0 0
      %5536 = vmatpush1.bf16.msra.mxu0 0
      %5537 = vmatprep.subr.bf16.mxu0 0
      %5538 = vmatpush1.bf16.msra.mxu0 0
      %5539 = vmatprep.subr.bf16.mxu0 0
      %5540 = vmatpush1.bf16.msra.mxu0 0
      %5541 = vmatprep.subr.bf16.mxu0 0
      %5542 = vmatpush1.bf16.msra.mxu0 0
      %5543 = vmatprep.subr.bf16.mxu0 0
      %5544 = vmatpush1.bf16.msra.mxu0 0
      %5545 = vmatprep.subr.bf16.mxu0 0
      %5546 = vmatpush1.bf16.msra.mxu0 0
      %5547 = vmatprep.subr.bf16.mxu0 0
      %5548 = vmatpush1.bf16.msra.mxu0 0
      %5549 = vmatprep.subr.bf16.mxu0 0
      %5550 = vmatpush1.bf16.msra.mxu0 0
      %5551 = vmatprep.subr.bf16.mxu0 0
      %5552 = vmatpush1.bf16.msra.mxu0 0
      %5553 = vmatprep.subr.bf16.mxu0 0
      %5554 = vmatpush1.bf16.msra.mxu0 0
      %5555 = vmatprep.subr.bf16.mxu0 0
      %5556 = vmatpush1.bf16.msra.mxu0 0
      %5557 = vmatprep.subr.bf16.mxu0 0
      %5558 = vmatpush1.bf16.msra.mxu0 0
      %5559 = vmatprep.subr.bf16.mxu0 0
      %5560 = vmatpush1.bf16.msra.mxu0 0
      %5561 = vmatprep.mubr.bf16.mxu0 0
      %5562 = vmatmul.mubr.bf16.gmra.mrb[0].mxu0 %v5473
      %v5563 = vpop.f32.mrb[0].mxu0
      %v5564 = vadd.f32 0.0, %v5563
      %v5565 = vpop.f32.mrb[0].mxu0
      %v5566 = vpop.f32.mrb[0].mxu0
      %v5567 = vadd.f32 0.0, %v5566
      %v5568 = vpop.f32.mrb[0].mxu0
      %5569 = vmatprep.mubr.bf16.mxu0 0
      %5570 = vmatmul.mubr.bf16.gmra.mrb[0].mxu0 %v5476
      %v5571 = vpop.f32.mrb[0].mxu0
      %v5572 = vadd.f32 0.0, %v5571
      %v5573 = vpop.f32.mrb[0].mxu0
      %v5574 = vpop.f32.mrb[0].mxu0
      %v5575 = vadd.f32 0.0, %v5574
      %v5576 = vpop.f32.mrb[0].mxu0
      %5577 = vmatprep.mubr.bf16.mxu0 0
      %5578 = vmatmul.mubr.bf16.gmra.mrb[0].mxu0 %v5479
      %v5579 = vpop.f32.mrb[0].mxu0
      %v5580 = vadd.f32 0.0, %v5579
      %v5581 = vpop.f32.mrb[0].mxu0
      %v5582 = vpop.f32.mrb[0].mxu0
      %v5583 = vadd.f32 0.0, %v5582
      %v5584 = vpop.f32.mrb[0].mxu0
      %5585 = vmatprep.mubr.bf16.mxu0 0
      %5586 = vmatmul.mubr.bf16.gmra.mrb[0].mxu0 %v5482
      %v5587 = vpop.f32.mrb[0].mxu0
      %v5588 = vadd.f32 0.0, %v5587
      %v5589 = vpop.f32.mrb[0].mxu0
      %v5590 = vpop.f32.mrb[0].mxu0
      %v5591 = vadd.f32 0.0, %v5590
      %v5592 = vpop.f32.mrb[0].mxu0
      %5593 = vmatprep.mubr.bf16.mxu0 0
      %5594 = vmatmul.mubr.bf16.gmra.mrb[0].mxu0 %v5485
      %v5595 = vpop.f32.mrb[0].mxu0
      %v5596 = vadd.f32 0.0, %v5595
      %v5597 = vpop.f32.mrb[0].mxu0
      %v5598 = vpop.f32.mrb[0].mxu0
      %v5599 = vadd.f32 0.0, %v5598
      %v5600 = vpop.f32.mrb[0].mxu0
      %5601 = vmatprep.mubr.bf16.mxu0 0
      %5602 = vmatmul.mubr.bf16.gmra.mrb[0].mxu0 %v5488
      %v5603 = vpop.f32.mrb[0].mxu0
      %v5604 = vadd.f32 0.0, %v5603
      %v5605 = vpop.f32.mrb[0].mxu0
      %v5606 = vpop.f32.mrb[0].mxu0
      %v5607 = vadd.f32 0.0, %v5606
      %v5608 = vpop.f32.mrb[0].mxu0
      %5609 = vmatprep.mubr.bf16.mxu0 0
      %5610 = vmatmul.mubr.bf16.gmra.mrb[0].mxu0 %v5491
      %v5611 = vpop.f32.mrb[0].mxu0
      %v5612 = vadd.f32 0.0, %v5611
      %v5613 = vpop.f32.mrb[0].mxu0
      %v5614 = vpop.f32.mrb[0].mxu0
      %v5615 = vadd.f32 0.0, %v5614
      %v5616 = vpop.f32.mrb[0].mxu0
      %5617 = vmatprep.mubr.bf16.mxu0 0
      %5618 = vmatmul.mubr.bf16.gmra.mrb[0].mxu0 %v5494
      %v5619 = vpop.f32.mrb[0].mxu0
      %v5620 = vadd.f32 0.0, %v5619
      %v5621 = vpop.f32.mrb[0].mxu0
      %v5622 = vpop.f32.mrb[0].mxu0
      %v5623 = vadd.f32 0.0, %v5622
      %v5624 = vpop.f32.mrb[0].mxu0
      %5625 = vmatprep.mubr.bf16.mxu0 0
      %5626 = vmatmul.mubr.bf16.gmra.mrb[0].mxu0 %v5497
      %v5627 = vpop.f32.mrb[0].mxu0
      %v5628 = vadd.f32 0.0, %v5627
      %v5629 = vpop.f32.mrb[0].mxu0
      %v5630 = vpop.f32.mrb[0].mxu0
      %v5631 = vadd.f32 0.0, %v5630
      %v5632 = vpop.f32.mrb[0].mxu0
      %5633 = vmatprep.mubr.bf16.mxu0 0
      %5634 = vmatmul.mubr.bf16.gmra.mrb[0].mxu0 %v5500
      %v5635 = vpop.f32.mrb[0].mxu0
      %v5636 = vadd.f32 0.0, %v5635
      %v5637 = vpop.f32.mrb[0].mxu0
      %v5638 = vpop.f32.mrb[0].mxu0
      %v5639 = vadd.f32 0.0, %v5638
      %v5640 = vpop.f32.mrb[0].mxu0
      %5641 = vmatprep.mubr.bf16.mxu0 0
      %5642 = vmatmul.mubr.bf16.gmra.mrb[0].mxu0 %v5503
      %v5643 = vpop.f32.mrb[0].mxu0
      %v5644 = vadd.f32 0.0, %v5643
      %v5645 = vpop.f32.mrb[0].mxu0
      %v5646 = vpop.f32.mrb[0].mxu0
      %v5647 = vadd.f32 0.0, %v5646
      %v5648 = vpop.f32.mrb[0].mxu0
      %5649 = vmatprep.mubr.bf16.mxu0 0
      %5650 = vmatmul.mubr.bf16.gmra.mrb[0].mxu0 %v5506
      %v5651 = vpop.f32.mrb[0].mxu0
      %v5652 = vadd.f32 0.0, %v5651
      %v5653 = vpop.f32.mrb[0].mxu0
      %v5654 = vpop.f32.mrb[0].mxu0
      %v5655 = vadd.f32 0.0, %v5654
      %v5656 = vpop.f32.mrb[0].mxu0
      %5657 = vmatprep.mubr.bf16.mxu0 0
      %5658 = vmatmul.mubr.bf16.gmra.mrb[0].mxu0 %v5509
      %v5659 = vpop.f32.mrb[0].mxu0
      %v5660 = vadd.f32 0.0, %v5659
      %v5661 = vpop.f32.mrb[0].mxu0
      %v5662 = vpop.f32.mrb[0].mxu0
      %v5663 = vadd.f32 0.0, %v5662
      %v5664 = vpop.f32.mrb[0].mxu0
      %5665 = vmatprep.mubr.bf16.mxu0 0
      %5666 = vmatmul.mubr.bf16.gmra.mrb[0].mxu0 %v5512
      %v5667 = vpop.f32.mrb[0].mxu0
      %v5668 = vadd.f32 0.0, %v5667
      %v5669 = vpop.f32.mrb[0].mxu0
      %v5670 = vpop.f32.mrb[0].mxu0
      %v5671 = vadd.f32 0.0, %v5670
      %v5672 = vpop.f32.mrb[0].mxu0
      %5673 = vmatprep.mubr.bf16.mxu0 0
      %5674 = vmatmul.mubr.bf16.gmra.mrb[0].mxu0 %v5515
      %v5675 = vpop.f32.mrb[0].mxu0
      %v5676 = vadd.f32 0.0, %v5675
      %v5677 = vpop.f32.mrb[0].mxu0
      %v5678 = vpop.f32.mrb[0].mxu0
      %v5679 = vadd.f32 0.0, %v5678
      %v5680 = vpop.f32.mrb[0].mxu0
      %5681 = vmatprep.mubr.bf16.mxu0 0
      %5682 = vmatmul.mubr.bf16.gmra.mrb[0].mxu0 %v5518
      %v5683 = vpop.f32.mrb[0].mxu0
      %v5684 = vadd.f32 0.0, %v5683
      %v5685 = vpop.f32.mrb[0].mxu0
      %v5686 = vpop.f32.mrb[0].mxu0
      %v5687 = vadd.f32 0.0, %v5686
      %v5688 = vpop.f32.mrb[0].mxu0
      %5689 = vmatprep.mubr.bf16.mxu0 0
      %5690 = vmatmul.mubr.bf16.gmra.mrb[0].mxu0 %v5521
      %v5691 = vpop.f32.mrb[0].mxu0
      %v5692 = vadd.f32 0.0, %v5691
      %v5693 = vpop.f32.mrb[0].mxu0
      %v5694 = vpop.f32.mrb[0].mxu0
      %v5695 = vadd.f32 0.0, %v5694
      %v5696 = vpop.f32.mrb[0].mxu0
      %5697 = vmatprep.mubr.bf16.mxu0 0
      %5698 = vmatmul.mubr.bf16.gmra.mrb[0].mxu0 %v5524
      %v5699 = vpop.f32.mrb[0].mxu0
      %v5700 = vadd.f32 0.0, %v5699
      %v5701 = vpop.f32.mrb[0].mxu0
      %v5702 = vpop.f32.mrb[0].mxu0
      %v5703 = vadd.f32 0.0, %v5702
      %v5704 = vpop.f32.mrb[0].mxu0
      %5705 = vdwg.mxu0
      %v5706 = vadd.f32 %v5434, %v5564
      %v5707 = vadd.f32 %v5435, %v5567
      %v5708 = vadd.f32 %v5436, %v5572
      %v5709 = vadd.f32 %v5437, %v5575
      %v5710 = vadd.f32 %v5438, %v5580
      %v5711 = vadd.f32 %v5439, %v5583
      %v5712 = vadd.f32 %v5440, %v5588
      %v5713 = vadd.f32 %v5441, %v5591
      %v5714 = vadd.f32 %v5442, %v5596
      %v5715 = vadd.f32 %v5443, %v5599
      %v5716 = vadd.f32 %v5444, %v5604
      %v5717 = vadd.f32 %v5445, %v5607
      %v5718 = vadd.f32 %v5446, %v5612
      %v5719 = vadd.f32 %v5447, %v5615
      %v5720 = vadd.f32 %v5448, %v5620
      %v5721 = vadd.f32 %v5449, %v5623
      %v5722 = vadd.f32 %v5450, %v5628
      %v5723 = vadd.f32 %v5451, %v5631
      %v5724 = vadd.f32 %v5452, %v5636
      %v5725 = vadd.f32 %v5453, %v5639
      %v5726 = vadd.f32 %v5454, %v5644
      %v5727 = vadd.f32 %v5455, %v5647
      %v5728 = vadd.f32 %v5456, %v5652
      %v5729 = vadd.f32 %v5457, %v5655
      %v5730 = vadd.f32 %v5458, %v5660
      %v5731 = vadd.f32 %v5459, %v5663
      %v5732 = vadd.f32 %v5460, %v5668
      %v5733 = vadd.f32 %v5461, %v5671
      %v5734 = vadd.f32 %v5462, %v5676
      %v5735 = vadd.f32 %v5463, %v5679
      %v5736 = vadd.f32 %v5464, %v5684
      %v5737 = vadd.f32 %v5465, %v5687
      %v5738 = vadd.f32 %v5466, %v5692
      %v5739 = vadd.f32 %v5467, %v5695
      %v5740 = vadd.f32 %v5468, %v5700
      %v5741 = vadd.f32 %v5469, %v5703
      %5742 = vst.msk [vmem:[#allocation4] sm:$0xff] %vm361, %v5706
      %5743 = vst.msk [vmem:[#allocation4 + $0x8] sm:$0xff] %vm361, %v5707
      %5744 = vst.msk [vmem:[#allocation4 + $0x10] sm:$0xff] %vm361, %v5708
      %5745 = vst.msk [vmem:[#allocation4 + $0x18] sm:$0xff] %vm361, %v5709
      %5746 = vst.msk [vmem:[#allocation4 + $0x20] sm:$0xff] %vm361, %v5710
      %5747 = vst.msk [vmem:[#allocation4 + $0x28] sm:$0xff] %vm361, %v5711
      %5748 = vst.msk [vmem:[#allocation4 + $0x30] sm:$0xff] %vm361, %v5712
      %5749 = vst.msk [vmem:[#allocation4 + $0x38] sm:$0xff] %vm361, %v5713
      %5750 = vst.msk [vmem:[#allocation4 + $0x40] sm:$0xff] %vm361, %v5714
      %5751 = vst.msk [vmem:[#allocation4 + $0x48] sm:$0xff] %vm361, %v5715
      %5752 = vst.msk [vmem:[#allocation4 + $0x50] sm:$0xff] %vm361, %v5716
      %5753 = vst.msk [vmem:[#allocation4 + $0x58] sm:$0xff] %vm361, %v5717
      %5754 = vst.msk [vmem:[#allocation4 + $0x60] sm:$0xff] %vm361, %v5718
      %5755 = vst.msk [vmem:[#allocation4 + $0x68] sm:$0xff] %vm361, %v5719
      %5756 = vst.msk [vmem:[#allocation4 + $0x70] sm:$0xff] %vm361, %v5720
      %5757 = vst.msk [vmem:[#allocation4 + $0x78] sm:$0xff] %vm361, %v5721
      %5758 = vst.msk [vmem:[#allocation4 + $0x80] sm:$0xff] %vm361, %v5722
      %5759 = vst.msk [vmem:[#allocation4 + $0x88] sm:$0xff] %vm361, %v5723
      %5760 = vst.msk [vmem:[#allocation4 + $0x90] sm:$0xff] %vm361, %v5724
      %5761 = vst.msk [vmem:[#allocation4 + $0x98] sm:$0xff] %vm361, %v5725
      %5762 = vst.msk [vmem:[#allocation4 + $0xa0] sm:$0xff] %vm361, %v5726
      %5763 = vst.msk [vmem:[#allocation4 + $0xa8] sm:$0xff] %vm361, %v5727
      %5764 = vst.msk [vmem:[#allocation4 + $0xb0] sm:$0xff] %vm361, %v5728
      %5765 = vst.msk [vmem:[#allocation4 + $0xb8] sm:$0xff] %vm361, %v5729
      %5766 = vst.msk [vmem:[#allocation4 + $0xc0] sm:$0xff] %vm361, %v5730
      %5767 = vst.msk [vmem:[#allocation4 + $0xc8] sm:$0xff] %vm361, %v5731
      %5768 = vst.msk [vmem:[#allocation4 + $0xd0] sm:$0xff] %vm361, %v5732
      %5769 = vst.msk [vmem:[#allocation4 + $0xd8] sm:$0xff] %vm361, %v5733
      %5770 = vst.msk [vmem:[#allocation4 + $0xe0] sm:$0xff] %vm361, %v5734
      %5771 = vst.msk [vmem:[#allocation4 + $0xe8] sm:$0xff] %vm361, %v5735
      %5772 = vst.msk [vmem:[#allocation4 + $0xf0] sm:$0xff] %vm361, %v5736
      %5773 = vst.msk [vmem:[#allocation4 + $0xf8] sm:$0xff] %vm361, %v5737
      %5774 = vst.msk [vmem:[#allocation4 + $0x100] sm:$0xff] %vm361, %v5738
      %5775 = vst.msk [vmem:[#allocation4 + $0x108] sm:$0xff] %vm361, %v5739
      %5776 = vst.msk [vmem:[#allocation4 + $0x110] sm:$0xff] %vm361, %v5740
      %5777 = vst.msk [vmem:[#allocation4 + $0x118] sm:$0xff] %vm361, %v5741
      %v5778 = vld [vmem:[#allocation3 + $0x12] sm:$0xff]
      %v5779 = vld [vmem:[#allocation3 + $0x1a] sm:$0xff]
      %v5780 = vld [vmem:[#allocation3 + $0x22] sm:$0xff]
      %v5781 = vld [vmem:[#allocation3 + $0x2a] sm:$0xff]
      %v5782 = vld [vmem:[#allocation3 + $0x32] sm:$0xff]
      %v5783 = vld [vmem:[#allocation3 + $0x3a] sm:$0xff]
      %v5784 = vld [vmem:[#allocation3 + $0x42] sm:$0xff]
      %v5785 = vld [vmem:[#allocation3 + $0x4a] sm:$0xff]
      %v5786 = vld [vmem:[#allocation3 + $0x52] sm:$0xff]
      %v5787 = vld [vmem:[#allocation3 + $0x5a] sm:$0xff]
      %v5788 = vld [vmem:[#allocation3 + $0x62] sm:$0xff]
      %v5789 = vld [vmem:[#allocation3 + $0x6a] sm:$0xff]
      %v5790 = vld [vmem:[#allocation3 + $0x72] sm:$0xff]
      %v5791 = vld [vmem:[#allocation3 + $0x7a] sm:$0xff]
      %v5792 = vld [vmem:[#allocation3 + $0x82] sm:$0xff]
      %v5793 = vld [vmem:[#allocation3 + $0x8a] sm:$0xff]
      %v5794 = vld [vmem:[#allocation3 + $0x92] sm:$0xff]
      %v5795 = vld [vmem:[#allocation3 + $0x9a] sm:$0xff]
      %v5796 = vld [vmem:[#allocation3 + $0xa2] sm:$0xff]
      %v5797 = vld [vmem:[#allocation3 + $0xaa] sm:$0xff]
      %v5798 = vld [vmem:[#allocation3 + $0xb2] sm:$0xff]
      %v5799 = vld [vmem:[#allocation3 + $0xba] sm:$0xff]
      %v5800 = vld [vmem:[#allocation3 + $0xc2] sm:$0xff]
      %v5801 = vld [vmem:[#allocation3 + $0xca] sm:$0xff]
      %v5802 = vld [vmem:[#allocation3 + $0xd2] sm:$0xff]
      %v5803 = vld [vmem:[#allocation3 + $0xda] sm:$0xff]
      %v5804 = vld [vmem:[#allocation3 + $0xe2] sm:$0xff]
      %v5805 = vld [vmem:[#allocation3 + $0xea] sm:$0xff]
      %v5806 = vld [vmem:[#allocation3 + $0xf2] sm:$0xff]
      %v5807 = vld [vmem:[#allocation3 + $0xfa] sm:$0xff]
      %v5808 = vld [vmem:[#allocation3 + $0x102] sm:$0xff]
      %v5809 = vld [vmem:[#allocation3 + $0x10a] sm:$0xff]
      %v5810 = vld [vmem:[#allocation3 + $0x112] sm:$0xff]
      %v5811 = vld [vmem:[#allocation3 + $0x11a] sm:$0xff]
      %v5812 = vld [vmem:[#allocation3 + $0x122] sm:$0xff]
      %v5813 = vld [vmem:[#allocation3 + $0x12a] sm:$0xff]
      %v5814 = vpack.c.bf16 %v5779, %v5778
      %v5815 = vpack.c.bf16 %v5781, %v5780
      %v5816 = vpack.c.bf16 %v5783, %v5782
      %v5817 = vpack.c.bf16 %v5785, %v5784
      %v5818 = vpack.c.bf16 %v5787, %v5786
      %v5819 = vpack.c.bf16 %v5789, %v5788
      %v5820 = vpack.c.bf16 %v5791, %v5790
      %v5821 = vpack.c.bf16 %v5793, %v5792
      %v5822 = vpack.c.bf16 %v5795, %v5794
      %v5823 = vpack.c.bf16 %v5797, %v5796
      %v5824 = vpack.c.bf16 %v5799, %v5798
      %v5825 = vpack.c.bf16 %v5801, %v5800
      %v5826 = vpack.c.bf16 %v5803, %v5802
      %v5827 = vpack.c.bf16 %v5805, %v5804
      %v5828 = vpack.c.bf16 %v5807, %v5806
      %v5829 = vpack.c.bf16 %v5809, %v5808
      %v5830 = vpack.c.bf16 %v5811, %v5810
      %v5831 = vpack.c.bf16 %v5813, %v5812
      %v5832 = vld [vmem:[#allocation4] sm:$0xff]
      %v5833 = vld [vmem:[#allocation4 + $0x8] sm:$0xff]
      %v5834 = vld [vmem:[#allocation4 + $0x10] sm:$0xff]
      %v5835 = vld [vmem:[#allocation4 + $0x18] sm:$0xff]
      %v5836 = vld [vmem:[#allocation4 + $0x20] sm:$0xff]
      %v5837 = vld [vmem:[#allocation4 + $0x28] sm:$0xff]
      %v5838 = vld [vmem:[#allocation4 + $0x30] sm:$0xff]
      %v5839 = vld [vmem:[#allocation4 + $0x38] sm:$0xff]
      %v5840 = vld [vmem:[#allocation4 + $0x40] sm:$0xff]
      %v5841 = vld [vmem:[#allocation4 + $0x48] sm:$0xff]
      %v5842 = vld [vmem:[#allocation4 + $0x50] sm:$0xff]
      %v5843 = vld [vmem:[#allocation4 + $0x58] sm:$0xff]
      %v5844 = vld [vmem:[#allocation4 + $0x60] sm:$0xff]
      %v5845 = vld [vmem:[#allocation4 + $0x68] sm:$0xff]
      %v5846 = vld [vmem:[#allocation4 + $0x70] sm:$0xff]
      %v5847 = vld [vmem:[#allocation4 + $0x78] sm:$0xff]
      %v5848 = vld [vmem:[#allocation4 + $0x80] sm:$0xff]
      %v5849 = vld [vmem:[#allocation4 + $0x88] sm:$0xff]
      %v5850 = vld [vmem:[#allocation4 + $0x90] sm:$0xff]
      %v5851 = vld [vmem:[#allocation4 + $0x98] sm:$0xff]
      %v5852 = vld [vmem:[#allocation4 + $0xa0] sm:$0xff]
      %v5853 = vld [vmem:[#allocation4 + $0xa8] sm:$0xff]
      %v5854 = vld [vmem:[#allocation4 + $0xb0] sm:$0xff]
      %v5855 = vld [vmem:[#allocation4 + $0xb8] sm:$0xff]
      %v5856 = vld [vmem:[#allocation4 + $0xc0] sm:$0xff]
      %v5857 = vld [vmem:[#allocation4 + $0xc8] sm:$0xff]
      %v5858 = vld [vmem:[#allocation4 + $0xd0] sm:$0xff]
      %v5859 = vld [vmem:[#allocation4 + $0xd8] sm:$0xff]
      %v5860 = vld [vmem:[#allocation4 + $0xe0] sm:$0xff]
      %v5861 = vld [vmem:[#allocation4 + $0xe8] sm:$0xff]
      %v5862 = vld [vmem:[#allocation4 + $0xf0] sm:$0xff]
      %v5863 = vld [vmem:[#allocation4 + $0xf8] sm:$0xff]
      %v5864 = vld [vmem:[#allocation4 + $0x100] sm:$0xff]
      %v5865 = vld [vmem:[#allocation4 + $0x108] sm:$0xff]
      %v5866 = vld [vmem:[#allocation4 + $0x110] sm:$0xff]
      %v5867 = vld [vmem:[#allocation4 + $0x118] sm:$0xff]
      %s5868 = scalar_lea.vmem %s4, 6
      %v5869 = vld [vmem:[%s5868] sm:$0x3]
      %v5871 = vsel %vm361, %v5814, 0
      %v5874 = vsel %vm361, %v5815, 0
      %v5877 = vsel %vm361, %v5816, 0
      %v5880 = vsel %vm361, %v5817, 0
      %v5883 = vsel %vm361, %v5818, 0
      %v5886 = vsel %vm361, %v5819, 0
      %v5889 = vsel %vm361, %v5820, 0
      %v5892 = vsel %vm361, %v5821, 0
      %v5895 = vsel %vm361, %v5822, 0
      %v5898 = vsel %vm361, %v5823, 0
      %v5901 = vsel %vm361, %v5824, 0
      %v5904 = vsel %vm361, %v5825, 0
      %v5907 = vsel %vm361, %v5826, 0
      %v5910 = vsel %vm361, %v5827, 0
      %v5913 = vsel %vm361, %v5828, 0
      %v5916 = vsel %vm361, %v5829, 0
      %v5919 = vsel %vm361, %v5830, 0
      %v5922 = vsel %vm361, %v5831, 0
      %v5925 = vsel %vm709, %v5869, 0
      %5927 = vmatprep.subr.bf16.mxu0 0
      %5928 = vmatpush1.bf16.msra.mxu0 %v5925
      %5929 = vmatprep.subr.bf16.mxu0 0
      %5930 = vmatpush1.bf16.msra.mxu0 0
      %5931 = vmatprep.subr.bf16.mxu0 0
      %5932 = vmatpush1.bf16.msra.mxu0 0
      %5933 = vmatprep.subr.bf16.mxu0 0
      %5934 = vmatpush1.bf16.msra.mxu0 0
      %5935 = vmatprep.subr.bf16.mxu0 0
      %5936 = vmatpush1.bf16.msra.mxu0 0
      %5937 = vmatprep.subr.bf16.mxu0 0
      %5938 = vmatpush1.bf16.msra.mxu0 0
      %5939 = vmatprep.subr.bf16.mxu0 0
      %5940 = vmatpush1.bf16.msra.mxu0 0
      %5941 = vmatprep.subr.bf16.mxu0 0
      %5942 = vmatpush1.bf16.msra.mxu0 0
      %5943 = vmatprep.subr.bf16.mxu0 0
      %5944 = vmatpush1.bf16.msra.mxu0 0
      %5945 = vmatprep.subr.bf16.mxu0 0
      %5946 = vmatpush1.bf16.msra.mxu0 0
      %5947 = vmatprep.subr.bf16.mxu0 0
      %5948 = vmatpush1.bf16.msra.mxu0 0
      %5949 = vmatprep.subr.bf16.mxu0 0
      %5950 = vmatpush1.bf16.msra.mxu0 0
      %5951 = vmatprep.subr.bf16.mxu0 0
      %5952 = vmatpush1.bf16.msra.mxu0 0
      %5953 = vmatprep.subr.bf16.mxu0 0
      %5954 = vmatpush1.bf16.msra.mxu0 0
      %5955 = vmatprep.subr.bf16.mxu0 0
      %5956 = vmatpush1.bf16.msra.mxu0 0
      %5957 = vmatprep.subr.bf16.mxu0 0
      %5958 = vmatpush1.bf16.msra.mxu0 0
      %5959 = vmatprep.mubr.bf16.mxu0 0
      %5960 = vmatmul.mubr.bf16.gmra.mrb[0].mxu0 %v5871
      %v5961 = vpop.f32.mrb[0].mxu0
      %v5962 = vadd.f32 0.0, %v5961
      %v5963 = vpop.f32.mrb[0].mxu0
      %v5964 = vpop.f32.mrb[0].mxu0
      %v5965 = vadd.f32 0.0, %v5964
      %v5966 = vpop.f32.mrb[0].mxu0
      %5967 = vmatprep.mubr.bf16.mxu0 0
      %5968 = vmatmul.mubr.bf16.gmra.mrb[0].mxu0 %v5874
      %v5969 = vpop.f32.mrb[0].mxu0
      %v5970 = vadd.f32 0.0, %v5969
      %v5971 = vpop.f32.mrb[0].mxu0
      %v5972 = vpop.f32.mrb[0].mxu0
      %v5973 = vadd.f32 0.0, %v5972
      %v5974 = vpop.f32.mrb[0].mxu0
      %5975 = vmatprep.mubr.bf16.mxu0 0
      %5976 = vmatmul.mubr.bf16.gmra.mrb[0].mxu0 %v5877
      %v5977 = vpop.f32.mrb[0].mxu0
      %v5978 = vadd.f32 0.0, %v5977
      %v5979 = vpop.f32.mrb[0].mxu0
      %v5980 = vpop.f32.mrb[0].mxu0
      %v5981 = vadd.f32 0.0, %v5980
      %v5982 = vpop.f32.mrb[0].mxu0
      %5983 = vmatprep.mubr.bf16.mxu0 0
      %5984 = vmatmul.mubr.bf16.gmra.mrb[0].mxu0 %v5880
      %v5985 = vpop.f32.mrb[0].mxu0
      %v5986 = vadd.f32 0.0, %v5985
      %v5987 = vpop.f32.mrb[0].mxu0
      %v5988 = vpop.f32.mrb[0].mxu0
      %v5989 = vadd.f32 0.0, %v5988
      %v5990 = vpop.f32.mrb[0].mxu0
      %5991 = vmatprep.mubr.bf16.mxu0 0
      %5992 = vmatmul.mubr.bf16.gmra.mrb[0].mxu0 %v5883
      %v5993 = vpop.f32.mrb[0].mxu0
      %v5994 = vadd.f32 0.0, %v5993
      %v5995 = vpop.f32.mrb[0].mxu0
      %v5996 = vpop.f32.mrb[0].mxu0
      %v5997 = vadd.f32 0.0, %v5996
      %v5998 = vpop.f32.mrb[0].mxu0
      %5999 = vmatprep.mubr.bf16.mxu0 0
      %6000 = vmatmul.mubr.bf16.gmra.mrb[0].mxu0 %v5886
      %v6001 = vpop.f32.mrb[0].mxu0
      %v6002 = vadd.f32 0.0, %v6001
      %v6003 = vpop.f32.mrb[0].mxu0
      %v6004 = vpop.f32.mrb[0].mxu0
      %v6005 = vadd.f32 0.0, %v6004
      %v6006 = vpop.f32.mrb[0].mxu0
      %6007 = vmatprep.mubr.bf16.mxu0 0
      %6008 = vmatmul.mubr.bf16.gmra.mrb[0].mxu0 %v5889
      %v6009 = vpop.f32.mrb[0].mxu0
      %v6010 = vadd.f32 0.0, %v6009
      %v6011 = vpop.f32.mrb[0].mxu0
      %v6012 = vpop.f32.mrb[0].mxu0
      %v6013 = vadd.f32 0.0, %v6012
      %v6014 = vpop.f32.mrb[0].mxu0
      %6015 = vmatprep.mubr.bf16.mxu0 0
      %6016 = vmatmul.mubr.bf16.gmra.mrb[0].mxu0 %v5892
      %v6017 = vpop.f32.mrb[0].mxu0
      %v6018 = vadd.f32 0.0, %v6017
      %v6019 = vpop.f32.mrb[0].mxu0
      %v6020 = vpop.f32.mrb[0].mxu0
      %v6021 = vadd.f32 0.0, %v6020
      %v6022 = vpop.f32.mrb[0].mxu0
      %6023 = vmatprep.mubr.bf16.mxu0 0
      %6024 = vmatmul.mubr.bf16.gmra.mrb[0].mxu0 %v5895
      %v6025 = vpop.f32.mrb[0].mxu0
      %v6026 = vadd.f32 0.0, %v6025
      %v6027 = vpop.f32.mrb[0].mxu0
      %v6028 = vpop.f32.mrb[0].mxu0
      %v6029 = vadd.f32 0.0, %v6028
      %v6030 = vpop.f32.mrb[0].mxu0
      %6031 = vmatprep.mubr.bf16.mxu0 0
      %6032 = vmatmul.mubr.bf16.gmra.mrb[0].mxu0 %v5898
      %v6033 = vpop.f32.mrb[0].mxu0
      %v6034 = vadd.f32 0.0, %v6033
      %v6035 = vpop.f32.mrb[0].mxu0
      %v6036 = vpop.f32.mrb[0].mxu0
      %v6037 = vadd.f32 0.0, %v6036
      %v6038 = vpop.f32.mrb[0].mxu0
      %6039 = vmatprep.mubr.bf16.mxu0 0
      %6040 = vmatmul.mubr.bf16.gmra.mrb[0].mxu0 %v5901
      %v6041 = vpop.f32.mrb[0].mxu0
      %v6042 = vadd.f32 0.0, %v6041
      %v6043 = vpop.f32.mrb[0].mxu0
      %v6044 = vpop.f32.mrb[0].mxu0
      %v6045 = vadd.f32 0.0, %v6044
      %v6046 = vpop.f32.mrb[0].mxu0
      %6047 = vmatprep.mubr.bf16.mxu0 0
      %6048 = vmatmul.mubr.bf16.gmra.mrb[0].mxu0 %v5904
      %v6049 = vpop.f32.mrb[0].mxu0
      %v6050 = vadd.f32 0.0, %v6049
      %v6051 = vpop.f32.mrb[0].mxu0
      %v6052 = vpop.f32.mrb[0].mxu0
      %v6053 = vadd.f32 0.0, %v6052
      %v6054 = vpop.f32.mrb[0].mxu0
      %6055 = vmatprep.mubr.bf16.mxu0 0
      %6056 = vmatmul.mubr.bf16.gmra.mrb[0].mxu0 %v5907
      %v6057 = vpop.f32.mrb[0].mxu0
      %v6058 = vadd.f32 0.0, %v6057
      %v6059 = vpop.f32.mrb[0].mxu0
      %v6060 = vpop.f32.mrb[0].mxu0
      %v6061 = vadd.f32 0.0, %v6060
      %v6062 = vpop.f32.mrb[0].mxu0
      %6063 = vmatprep.mubr.bf16.mxu0 0
      %6064 = vmatmul.mubr.bf16.gmra.mrb[0].mxu0 %v5910
      %v6065 = vpop.f32.mrb[0].mxu0
      %v6066 = vadd.f32 0.0, %v6065
      %v6067 = vpop.f32.mrb[0].mxu0
      %v6068 = vpop.f32.mrb[0].mxu0
      %v6069 = vadd.f32 0.0, %v6068
      %v6070 = vpop.f32.mrb[0].mxu0
      %6071 = vmatprep.mubr.bf16.mxu0 0
      %6072 = vmatmul.mubr.bf16.gmra.mrb[0].mxu0 %v5913
      %v6073 = vpop.f32.mrb[0].mxu0
      %v6074 = vadd.f32 0.0, %v6073
      %v6075 = vpop.f32.mrb[0].mxu0
      %v6076 = vpop.f32.mrb[0].mxu0
      %v6077 = vadd.f32 0.0, %v6076
      %v6078 = vpop.f32.mrb[0].mxu0
      %6079 = vmatprep.mubr.bf16.mxu0 0
      %6080 = vmatmul.mubr.bf16.gmra.mrb[0].mxu0 %v5916
      %v6081 = vpop.f32.mrb[0].mxu0
      %v6082 = vadd.f32 0.0, %v6081
      %v6083 = vpop.f32.mrb[0].mxu0
      %v6084 = vpop.f32.mrb[0].mxu0
      %v6085 = vadd.f32 0.0, %v6084
      %v6086 = vpop.f32.mrb[0].mxu0
      %6087 = vmatprep.mubr.bf16.mxu0 0
      %6088 = vmatmul.mubr.bf16.gmra.mrb[0].mxu0 %v5919
      %v6089 = vpop.f32.mrb[0].mxu0
      %v6090 = vadd.f32 0.0, %v6089
      %v6091 = vpop.f32.mrb[0].mxu0
      %v6092 = vpop.f32.mrb[0].mxu0
      %v6093 = vadd.f32 0.0, %v6092
      %v6094 = vpop.f32.mrb[0].mxu0
      %6095 = vmatprep.mubr.bf16.mxu0 0
      %6096 = vmatmul.mubr.bf16.gmra.mrb[0].mxu0 %v5922
      %v6097 = vpop.f32.mrb[0].mxu0
      %v6098 = vadd.f32 0.0, %v6097
      %v6099 = vpop.f32.mrb[0].mxu0
      %v6100 = vpop.f32.mrb[0].mxu0
      %v6101 = vadd.f32 0.0, %v6100
      %v6102 = vpop.f32.mrb[0].mxu0
      %6103 = vdwg.mxu0
      %v6104 = vadd.f32 %v5832, %v5962
      %v6105 = vadd.f32 %v5833, %v5965
      %v6106 = vadd.f32 %v5834, %v5970
      %v6107 = vadd.f32 %v5835, %v5973
      %v6108 = vadd.f32 %v5836, %v5978
      %v6109 = vadd.f32 %v5837, %v5981
      %v6110 = vadd.f32 %v5838, %v5986
      %v6111 = vadd.f32 %v5839, %v5989
      %v6112 = vadd.f32 %v5840, %v5994
      %v6113 = vadd.f32 %v5841, %v5997
      %v6114 = vadd.f32 %v5842, %v6002
      %v6115 = vadd.f32 %v5843, %v6005
      %v6116 = vadd.f32 %v5844, %v6010
      %v6117 = vadd.f32 %v5845, %v6013
      %v6118 = vadd.f32 %v5846, %v6018
      %v6119 = vadd.f32 %v5847, %v6021
      %v6120 = vadd.f32 %v5848, %v6026
      %v6121 = vadd.f32 %v5849, %v6029
      %v6122 = vadd.f32 %v5850, %v6034
      %v6123 = vadd.f32 %v5851, %v6037
      %v6124 = vadd.f32 %v5852, %v6042
      %v6125 = vadd.f32 %v5853, %v6045
      %v6126 = vadd.f32 %v5854, %v6050
      %v6127 = vadd.f32 %v5855, %v6053
      %v6128 = vadd.f32 %v5856, %v6058
      %v6129 = vadd.f32 %v5857, %v6061
      %v6130 = vadd.f32 %v5858, %v6066
      %v6131 = vadd.f32 %v5859, %v6069
      %v6132 = vadd.f32 %v5860, %v6074
      %v6133 = vadd.f32 %v5861, %v6077
      %v6134 = vadd.f32 %v5862, %v6082
      %v6135 = vadd.f32 %v5863, %v6085
      %v6136 = vadd.f32 %v5864, %v6090
      %v6137 = vadd.f32 %v5865, %v6093
      %v6138 = vadd.f32 %v5866, %v6098
      %v6139 = vadd.f32 %v5867, %v6101
      %6140 = vst.msk [vmem:[#allocation4] sm:$0xff] %vm361, %v6104
      %6141 = vst.msk [vmem:[#allocation4 + $0x8] sm:$0xff] %vm361, %v6105
      %6142 = vst.msk [vmem:[#allocation4 + $0x10] sm:$0xff] %vm361, %v6106
      %6143 = vst.msk [vmem:[#allocation4 + $0x18] sm:$0xff] %vm361, %v6107
      %6144 = vst.msk [vmem:[#allocation4 + $0x20] sm:$0xff] %vm361, %v6108
      %6145 = vst.msk [vmem:[#allocation4 + $0x28] sm:$0xff] %vm361, %v6109
      %6146 = vst.msk [vmem:[#allocation4 + $0x30] sm:$0xff] %vm361, %v6110
      %6147 = vst.msk [vmem:[#allocation4 + $0x38] sm:$0xff] %vm361, %v6111
      %6148 = vst.msk [vmem:[#allocation4 + $0x40] sm:$0xff] %vm361, %v6112
      %6149 = vst.msk [vmem:[#allocation4 + $0x48] sm:$0xff] %vm361, %v6113
      %6150 = vst.msk [vmem:[#allocation4 + $0x50] sm:$0xff] %vm361, %v6114
      %6151 = vst.msk [vmem:[#allocation4 + $0x58] sm:$0xff] %vm361, %v6115
      %6152 = vst.msk [vmem:[#allocation4 + $0x60] sm:$0xff] %vm361, %v6116
      %6153 = vst.msk [vmem:[#allocation4 + $0x68] sm:$0xff] %vm361, %v6117
      %6154 = vst.msk [vmem:[#allocation4 + $0x70] sm:$0xff] %vm361, %v6118
      %6155 = vst.msk [vmem:[#allocation4 + $0x78] sm:$0xff] %vm361, %v6119
      %6156 = vst.msk [vmem:[#allocation4 + $0x80] sm:$0xff] %vm361, %v6120
      %6157 = vst.msk [vmem:[#allocation4 + $0x88] sm:$0xff] %vm361, %v6121
      %6158 = vst.msk [vmem:[#allocation4 + $0x90] sm:$0xff] %vm361, %v6122
      %6159 = vst.msk [vmem:[#allocation4 + $0x98] sm:$0xff] %vm361, %v6123
      %6160 = vst.msk [vmem:[#allocation4 + $0xa0] sm:$0xff] %vm361, %v6124
      %6161 = vst.msk [vmem:[#allocation4 + $0xa8] sm:$0xff] %vm361, %v6125
      %6162 = vst.msk [vmem:[#allocation4 + $0xb0] sm:$0xff] %vm361, %v6126
      %6163 = vst.msk [vmem:[#allocation4 + $0xb8] sm:$0xff] %vm361, %v6127
      %6164 = vst.msk [vmem:[#allocation4 + $0xc0] sm:$0xff] %vm361, %v6128
      %6165 = vst.msk [vmem:[#allocation4 + $0xc8] sm:$0xff] %vm361, %v6129
      %6166 = vst.msk [vmem:[#allocation4 + $0xd0] sm:$0xff] %vm361, %v6130
      %6167 = vst.msk [vmem:[#allocation4 + $0xd8] sm:$0xff] %vm361, %v6131
      %6168 = vst.msk [vmem:[#allocation4 + $0xe0] sm:$0xff] %vm361, %v6132
      %6169 = vst.msk [vmem:[#allocation4 + $0xe8] sm:$0xff] %vm361, %v6133
      %6170 = vst.msk [vmem:[#allocation4 + $0xf0] sm:$0xff] %vm361, %v6134
      %6171 = vst.msk [vmem:[#allocation4 + $0xf8] sm:$0xff] %vm361, %v6135
      %6172 = vst.msk [vmem:[#allocation4 + $0x100] sm:$0xff] %vm361, %v6136
      %6173 = vst.msk [vmem:[#allocation4 + $0x108] sm:$0xff] %vm361, %v6137
      %6174 = vst.msk [vmem:[#allocation4 + $0x110] sm:$0xff] %vm361, %v6138
      %6175 = vst.msk [vmem:[#allocation4 + $0x118] sm:$0xff] %vm361, %v6139
      %v6176 = vld [vmem:[#allocation3 + $0x13] sm:$0xff]
      %v6177 = vld [vmem:[#allocation3 + $0x1b] sm:$0xff]
      %v6178 = vld [vmem:[#allocation3 + $0x23] sm:$0xff]
      %v6179 = vld [vmem:[#allocation3 + $0x2b] sm:$0xff]
      %v6180 = vld [vmem:[#allocation3 + $0x33] sm:$0xff]
      %v6181 = vld [vmem:[#allocation3 + $0x3b] sm:$0xff]
      %v6182 = vld [vmem:[#allocation3 + $0x43] sm:$0xff]
      %v6183 = vld [vmem:[#allocation3 + $0x4b] sm:$0xff]
      %v6184 = vld [vmem:[#allocation3 + $0x53] sm:$0xff]
      %v6185 = vld [vmem:[#allocation3 + $0x5b] sm:$0xff]
      %v6186 = vld [vmem:[#allocation3 + $0x63] sm:$0xff]
      %v6187 = vld [vmem:[#allocation3 + $0x6b] sm:$0xff]
      %v6188 = vld [vmem:[#allocation3 + $0x73] sm:$0xff]
      %v6189 = vld [vmem:[#allocation3 + $0x7b] sm:$0xff]
      %v6190 = vld [vmem:[#allocation3 + $0x83] sm:$0xff]
      %v6191 = vld [vmem:[#allocation3 + $0x8b] sm:$0xff]
      %v6192 = vld [vmem:[#allocation3 + $0x93] sm:$0xff]
      %v6193 = vld [vmem:[#allocation3 + $0x9b] sm:$0xff]
      %v6194 = vld [vmem:[#allocation3 + $0xa3] sm:$0xff]
      %v6195 = vld [vmem:[#allocation3 + $0xab] sm:$0xff]
      %v6196 = vld [vmem:[#allocation3 + $0xb3] sm:$0xff]
      %v6197 = vld [vmem:[#allocation3 + $0xbb] sm:$0xff]
      %v6198 = vld [vmem:[#allocation3 + $0xc3] sm:$0xff]
      %v6199 = vld [vmem:[#allocation3 + $0xcb] sm:$0xff]
      %v6200 = vld [vmem:[#allocation3 + $0xd3] sm:$0xff]
      %v6201 = vld [vmem:[#allocation3 + $0xdb] sm:$0xff]
      %v6202 = vld [vmem:[#allocation3 + $0xe3] sm:$0xff]
      %v6203 = vld [vmem:[#allocation3 + $0xeb] sm:$0xff]
      %v6204 = vld [vmem:[#allocation3 + $0xf3] sm:$0xff]
      %v6205 = vld [vmem:[#allocation3 + $0xfb] sm:$0xff]
      %v6206 = vld [vmem:[#allocation3 + $0x103] sm:$0xff]
      %v6207 = vld [vmem:[#allocation3 + $0x10b] sm:$0xff]
      %v6208 = vld [vmem:[#allocation3 + $0x113] sm:$0xff]
      %v6209 = vld [vmem:[#allocation3 + $0x11b] sm:$0xff]
      %v6210 = vld [vmem:[#allocation3 + $0x123] sm:$0xff]
      %v6211 = vld [vmem:[#allocation3 + $0x12b] sm:$0xff]
      %v6212 = vpack.c.bf16 %v6177, %v6176
      %v6213 = vpack.c.bf16 %v6179, %v6178
      %v6214 = vpack.c.bf16 %v6181, %v6180
      %v6215 = vpack.c.bf16 %v6183, %v6182
      %v6216 = vpack.c.bf16 %v6185, %v6184
      %v6217 = vpack.c.bf16 %v6187, %v6186
      %v6218 = vpack.c.bf16 %v6189, %v6188
      %v6219 = vpack.c.bf16 %v6191, %v6190
      %v6220 = vpack.c.bf16 %v6193, %v6192
      %v6221 = vpack.c.bf16 %v6195, %v6194
      %v6222 = vpack.c.bf16 %v6197, %v6196
      %v6223 = vpack.c.bf16 %v6199, %v6198
      %v6224 = vpack.c.bf16 %v6201, %v6200
      %v6225 = vpack.c.bf16 %v6203, %v6202
      %v6226 = vpack.c.bf16 %v6205, %v6204
      %v6227 = vpack.c.bf16 %v6207, %v6206
      %v6228 = vpack.c.bf16 %v6209, %v6208
      %v6229 = vpack.c.bf16 %v6211, %v6210
      %v6230 = vld [vmem:[#allocation4] sm:$0xff]
      %v6231 = vld [vmem:[#allocation4 + $0x8] sm:$0xff]
      %v6232 = vld [vmem:[#allocation4 + $0x10] sm:$0xff]
      %v6233 = vld [vmem:[#allocation4 + $0x18] sm:$0xff]
      %v6234 = vld [vmem:[#allocation4 + $0x20] sm:$0xff]
      %v6235 = vld [vmem:[#allocation4 + $0x28] sm:$0xff]
      %v6236 = vld [vmem:[#allocation4 + $0x30] sm:$0xff]
      %v6237 = vld [vmem:[#allocation4 + $0x38] sm:$0xff]
      %v6238 = vld [vmem:[#allocation4 + $0x40] sm:$0xff]
      %v6239 = vld [vmem:[#allocation4 + $0x48] sm:$0xff]
      %v6240 = vld [vmem:[#allocation4 + $0x50] sm:$0xff]
      %v6241 = vld [vmem:[#allocation4 + $0x58] sm:$0xff]
      %v6242 = vld [vmem:[#allocation4 + $0x60] sm:$0xff]
      %v6243 = vld [vmem:[#allocation4 + $0x68] sm:$0xff]
      %v6244 = vld [vmem:[#allocation4 + $0x70] sm:$0xff]
      %v6245 = vld [vmem:[#allocation4 + $0x78] sm:$0xff]
      %v6246 = vld [vmem:[#allocation4 + $0x80] sm:$0xff]
      %v6247 = vld [vmem:[#allocation4 + $0x88] sm:$0xff]
      %v6248 = vld [vmem:[#allocation4 + $0x90] sm:$0xff]
      %v6249 = vld [vmem:[#allocation4 + $0x98] sm:$0xff]
      %v6250 = vld [vmem:[#allocation4 + $0xa0] sm:$0xff]
      %v6251 = vld [vmem:[#allocation4 + $0xa8] sm:$0xff]
      %v6252 = vld [vmem:[#allocation4 + $0xb0] sm:$0xff]
      %v6253 = vld [vmem:[#allocation4 + $0xb8] sm:$0xff]
      %v6254 = vld [vmem:[#allocation4 + $0xc0] sm:$0xff]
      %v6255 = vld [vmem:[#allocation4 + $0xc8] sm:$0xff]
      %v6256 = vld [vmem:[#allocation4 + $0xd0] sm:$0xff]
      %v6257 = vld [vmem:[#allocation4 + $0xd8] sm:$0xff]
      %v6258 = vld [vmem:[#allocation4 + $0xe0] sm:$0xff]
      %v6259 = vld [vmem:[#allocation4 + $0xe8] sm:$0xff]
      %v6260 = vld [vmem:[#allocation4 + $0xf0] sm:$0xff]
      %v6261 = vld [vmem:[#allocation4 + $0xf8] sm:$0xff]
      %v6262 = vld [vmem:[#allocation4 + $0x100] sm:$0xff]
      %v6263 = vld [vmem:[#allocation4 + $0x108] sm:$0xff]
      %v6264 = vld [vmem:[#allocation4 + $0x110] sm:$0xff]
      %v6265 = vld [vmem:[#allocation4 + $0x118] sm:$0xff]
      %s6266 = scalar_lea.vmem %s4, 8
      %v6267 = vld [vmem:[%s6266] sm:$0x3]
      %v6269 = vsel %vm361, %v6212, 0
      %v6272 = vsel %vm361, %v6213, 0
      %v6275 = vsel %vm361, %v6214, 0
      %v6278 = vsel %vm361, %v6215, 0
      %v6281 = vsel %vm361, %v6216, 0
      %v6284 = vsel %vm361, %v6217, 0
      %v6287 = vsel %vm361, %v6218, 0
      %v6290 = vsel %vm361, %v6219, 0
      %v6293 = vsel %vm361, %v6220, 0
      %v6296 = vsel %vm361, %v6221, 0
      %v6299 = vsel %vm361, %v6222, 0
      %v6302 = vsel %vm361, %v6223, 0
      %v6305 = vsel %vm361, %v6224, 0
      %v6308 = vsel %vm361, %v6225, 0
      %v6311 = vsel %vm361, %v6226, 0
      %v6314 = vsel %vm361, %v6227, 0
      %v6317 = vsel %vm361, %v6228, 0
      %v6320 = vsel %vm361, %v6229, 0
      %v6323 = vsel %vm709, %v6267, 0
      %6325 = vmatprep.subr.bf16.mxu0 0
      %6326 = vmatpush1.bf16.msra.mxu0 %v6323
      %6327 = vmatprep.subr.bf16.mxu0 0
      %6328 = vmatpush1.bf16.msra.mxu0 0
      %6329 = vmatprep.subr.bf16.mxu0 0
      %6330 = vmatpush1.bf16.msra.mxu0 0
      %6331 = vmatprep.subr.bf16.mxu0 0
      %6332 = vmatpush1.bf16.msra.mxu0 0
      %6333 = vmatprep.subr.bf16.mxu0 0
      %6334 = vmatpush1.bf16.msra.mxu0 0
      %6335 = vmatprep.subr.bf16.mxu0 0
      %6336 = vmatpush1.bf16.msra.mxu0 0
      %6337 = vmatprep.subr.bf16.mxu0 0
      %6338 = vmatpush1.bf16.msra.mxu0 0
      %6339 = vmatprep.subr.bf16.mxu0 0
      %6340 = vmatpush1.bf16.msra.mxu0 0
      %6341 = vmatprep.subr.bf16.mxu0 0
      %6342 = vmatpush1.bf16.msra.mxu0 0
      %6343 = vmatprep.subr.bf16.mxu0 0
      %6344 = vmatpush1.bf16.msra.mxu0 0
      %6345 = vmatprep.subr.bf16.mxu0 0
      %6346 = vmatpush1.bf16.msra.mxu0 0
      %6347 = vmatprep.subr.bf16.mxu0 0
      %6348 = vmatpush1.bf16.msra.mxu0 0
      %6349 = vmatprep.subr.bf16.mxu0 0
      %6350 = vmatpush1.bf16.msra.mxu0 0
      %6351 = vmatprep.subr.bf16.mxu0 0
      %6352 = vmatpush1.bf16.msra.mxu0 0
      %6353 = vmatprep.subr.bf16.mxu0 0
      %6354 = vmatpush1.bf16.msra.mxu0 0
      %6355 = vmatprep.subr.bf16.mxu0 0
      %6356 = vmatpush1.bf16.msra.mxu0 0
      %6357 = vmatprep.mubr.bf16.mxu0 0
      %6358 = vmatmul.mubr.bf16.gmra.mrb[0].mxu0 %v6269
      %v6359 = vpop.f32.mrb[0].mxu0
      %v6360 = vadd.f32 0.0, %v6359
      %v6361 = vpop.f32.mrb[0].mxu0
      %v6362 = vpop.f32.mrb[0].mxu0
      %v6363 = vadd.f32 0.0, %v6362
      %v6364 = vpop.f32.mrb[0].mxu0
      %6365 = vmatprep.mubr.bf16.mxu0 0
      %6366 = vmatmul.mubr.bf16.gmra.mrb[0].mxu0 %v6272
      %v6367 = vpop.f32.mrb[0].mxu0
      %v6368 = vadd.f32 0.0, %v6367
      %v6369 = vpop.f32.mrb[0].mxu0
      %v6370 = vpop.f32.mrb[0].mxu0
      %v6371 = vadd.f32 0.0, %v6370
      %v6372 = vpop.f32.mrb[0].mxu0
      %6373 = vmatprep.mubr.bf16.mxu0 0
      %6374 = vmatmul.mubr.bf16.gmra.mrb[0].mxu0 %v6275
      %v6375 = vpop.f32.mrb[0].mxu0
      %v6376 = vadd.f32 0.0, %v6375
      %v6377 = vpop.f32.mrb[0].mxu0
      %v6378 = vpop.f32.mrb[0].mxu0
      %v6379 = vadd.f32 0.0, %v6378
      %v6380 = vpop.f32.mrb[0].mxu0
      %6381 = vmatprep.mubr.bf16.mxu0 0
      %6382 = vmatmul.mubr.bf16.gmra.mrb[0].mxu0 %v6278
      %v6383 = vpop.f32.mrb[0].mxu0
      %v6384 = vadd.f32 0.0, %v6383
      %v6385 = vpop.f32.mrb[0].mxu0
      %v6386 = vpop.f32.mrb[0].mxu0
      %v6387 = vadd.f32 0.0, %v6386
      %v6388 = vpop.f32.mrb[0].mxu0
      %6389 = vmatprep.mubr.bf16.mxu0 0
      %6390 = vmatmul.mubr.bf16.gmra.mrb[0].mxu0 %v6281
      %v6391 = vpop.f32.mrb[0].mxu0
      %v6392 = vadd.f32 0.0, %v6391
      %v6393 = vpop.f32.mrb[0].mxu0
      %v6394 = vpop.f32.mrb[0].mxu0
      %v6395 = vadd.f32 0.0, %v6394
      %v6396 = vpop.f32.mrb[0].mxu0
      %6397 = vmatprep.mubr.bf16.mxu0 0
      %6398 = vmatmul.mubr.bf16.gmra.mrb[0].mxu0 %v6284
      %v6399 = vpop.f32.mrb[0].mxu0
      %v6400 = vadd.f32 0.0, %v6399
      %v6401 = vpop.f32.mrb[0].mxu0
      %v6402 = vpop.f32.mrb[0].mxu0
      %v6403 = vadd.f32 0.0, %v6402
      %v6404 = vpop.f32.mrb[0].mxu0
      %6405 = vmatprep.mubr.bf16.mxu0 0
      %6406 = vmatmul.mubr.bf16.gmra.mrb[0].mxu0 %v6287
      %v6407 = vpop.f32.mrb[0].mxu0
      %v6408 = vadd.f32 0.0, %v6407
      %v6409 = vpop.f32.mrb[0].mxu0
      %v6410 = vpop.f32.mrb[0].mxu0
      %v6411 = vadd.f32 0.0, %v6410
      %v6412 = vpop.f32.mrb[0].mxu0
      %6413 = vmatprep.mubr.bf16.mxu0 0
      %6414 = vmatmul.mubr.bf16.gmra.mrb[0].mxu0 %v6290
      %v6415 = vpop.f32.mrb[0].mxu0
      %v6416 = vadd.f32 0.0, %v6415
      %v6417 = vpop.f32.mrb[0].mxu0
      %v6418 = vpop.f32.mrb[0].mxu0
      %v6419 = vadd.f32 0.0, %v6418
      %v6420 = vpop.f32.mrb[0].mxu0
      %6421 = vmatprep.mubr.bf16.mxu0 0
      %6422 = vmatmul.mubr.bf16.gmra.mrb[0].mxu0 %v6293
      %v6423 = vpop.f32.mrb[0].mxu0
      %v6424 = vadd.f32 0.0, %v6423
      %v6425 = vpop.f32.mrb[0].mxu0
      %v6426 = vpop.f32.mrb[0].mxu0
      %v6427 = vadd.f32 0.0, %v6426
      %v6428 = vpop.f32.mrb[0].mxu0
      %6429 = vmatprep.mubr.bf16.mxu0 0
      %6430 = vmatmul.mubr.bf16.gmra.mrb[0].mxu0 %v6296
      %v6431 = vpop.f32.mrb[0].mxu0
      %v6432 = vadd.f32 0.0, %v6431
      %v6433 = vpop.f32.mrb[0].mxu0
      %v6434 = vpop.f32.mrb[0].mxu0
      %v6435 = vadd.f32 0.0, %v6434
      %v6436 = vpop.f32.mrb[0].mxu0
      %6437 = vmatprep.mubr.bf16.mxu0 0
      %6438 = vmatmul.mubr.bf16.gmra.mrb[0].mxu0 %v6299
      %v6439 = vpop.f32.mrb[0].mxu0
      %v6440 = vadd.f32 0.0, %v6439
      %v6441 = vpop.f32.mrb[0].mxu0
      %v6442 = vpop.f32.mrb[0].mxu0
      %v6443 = vadd.f32 0.0, %v6442
      %v6444 = vpop.f32.mrb[0].mxu0
      %6445 = vmatprep.mubr.bf16.mxu0 0
      %6446 = vmatmul.mubr.bf16.gmra.mrb[0].mxu0 %v6302
      %v6447 = vpop.f32.mrb[0].mxu0
      %v6448 = vadd.f32 0.0, %v6447
      %v6449 = vpop.f32.mrb[0].mxu0
      %v6450 = vpop.f32.mrb[0].mxu0
      %v6451 = vadd.f32 0.0, %v6450
      %v6452 = vpop.f32.mrb[0].mxu0
      %6453 = vmatprep.mubr.bf16.mxu0 0
      %6454 = vmatmul.mubr.bf16.gmra.mrb[0].mxu0 %v6305
      %v6455 = vpop.f32.mrb[0].mxu0
      %v6456 = vadd.f32 0.0, %v6455
      %v6457 = vpop.f32.mrb[0].mxu0
      %v6458 = vpop.f32.mrb[0].mxu0
      %v6459 = vadd.f32 0.0, %v6458
      %v6460 = vpop.f32.mrb[0].mxu0
      %6461 = vmatprep.mubr.bf16.mxu0 0
      %6462 = vmatmul.mubr.bf16.gmra.mrb[0].mxu0 %v6308
      %v6463 = vpop.f32.mrb[0].mxu0
      %v6464 = vadd.f32 0.0, %v6463
      %v6465 = vpop.f32.mrb[0].mxu0
      %v6466 = vpop.f32.mrb[0].mxu0
      %v6467 = vadd.f32 0.0, %v6466
      %v6468 = vpop.f32.mrb[0].mxu0
      %6469 = vmatprep.mubr.bf16.mxu0 0
      %6470 = vmatmul.mubr.bf16.gmra.mrb[0].mxu0 %v6311
      %v6471 = vpop.f32.mrb[0].mxu0
      %v6472 = vadd.f32 0.0, %v6471
      %v6473 = vpop.f32.mrb[0].mxu0
      %v6474 = vpop.f32.mrb[0].mxu0
      %v6475 = vadd.f32 0.0, %v6474
      %v6476 = vpop.f32.mrb[0].mxu0
      %6477 = vmatprep.mubr.bf16.mxu0 0
      %6478 = vmatmul.mubr.bf16.gmra.mrb[0].mxu0 %v6314
      %v6479 = vpop.f32.mrb[0].mxu0
      %v6480 = vadd.f32 0.0, %v6479
      %v6481 = vpop.f32.mrb[0].mxu0
      %v6482 = vpop.f32.mrb[0].mxu0
      %v6483 = vadd.f32 0.0, %v6482
      %v6484 = vpop.f32.mrb[0].mxu0
      %6485 = vmatprep.mubr.bf16.mxu0 0
      %6486 = vmatmul.mubr.bf16.gmra.mrb[0].mxu0 %v6317
      %v6487 = vpop.f32.mrb[0].mxu0
      %v6488 = vadd.f32 0.0, %v6487
      %v6489 = vpop.f32.mrb[0].mxu0
      %v6490 = vpop.f32.mrb[0].mxu0
      %v6491 = vadd.f32 0.0, %v6490
      %v6492 = vpop.f32.mrb[0].mxu0
      %6493 = vmatprep.mubr.bf16.mxu0 0
      %6494 = vmatmul.mubr.bf16.gmra.mrb[0].mxu0 %v6320
      %v6495 = vpop.f32.mrb[0].mxu0
      %v6496 = vadd.f32 0.0, %v6495
      %v6497 = vpop.f32.mrb[0].mxu0
      %v6498 = vpop.f32.mrb[0].mxu0
      %v6499 = vadd.f32 0.0, %v6498
      %v6500 = vpop.f32.mrb[0].mxu0
      %6501 = vdwg.mxu0
      %v6502 = vadd.f32 %v6230, %v6360
      %v6503 = vadd.f32 %v6231, %v6363
      %v6504 = vadd.f32 %v6232, %v6368
      %v6505 = vadd.f32 %v6233, %v6371
      %v6506 = vadd.f32 %v6234, %v6376
      %v6507 = vadd.f32 %v6235, %v6379
      %v6508 = vadd.f32 %v6236, %v6384
      %v6509 = vadd.f32 %v6237, %v6387
      %v6510 = vadd.f32 %v6238, %v6392
      %v6511 = vadd.f32 %v6239, %v6395
      %v6512 = vadd.f32 %v6240, %v6400
      %v6513 = vadd.f32 %v6241, %v6403
      %v6514 = vadd.f32 %v6242, %v6408
      %v6515 = vadd.f32 %v6243, %v6411
      %v6516 = vadd.f32 %v6244, %v6416
      %v6517 = vadd.f32 %v6245, %v6419
      %v6518 = vadd.f32 %v6246, %v6424
      %v6519 = vadd.f32 %v6247, %v6427
      %v6520 = vadd.f32 %v6248, %v6432
      %v6521 = vadd.f32 %v6249, %v6435
      %v6522 = vadd.f32 %v6250, %v6440
      %v6523 = vadd.f32 %v6251, %v6443
      %v6524 = vadd.f32 %v6252, %v6448
      %v6525 = vadd.f32 %v6253, %v6451
      %v6526 = vadd.f32 %v6254, %v6456
      %v6527 = vadd.f32 %v6255, %v6459
      %v6528 = vadd.f32 %v6256, %v6464
      %v6529 = vadd.f32 %v6257, %v6467
      %v6530 = vadd.f32 %v6258, %v6472
      %v6531 = vadd.f32 %v6259, %v6475
      %v6532 = vadd.f32 %v6260, %v6480
      %v6533 = vadd.f32 %v6261, %v6483
      %v6534 = vadd.f32 %v6262, %v6488
      %v6535 = vadd.f32 %v6263, %v6491
      %v6536 = vadd.f32 %v6264, %v6496
      %v6537 = vadd.f32 %v6265, %v6499
      %6538 = vst.msk [vmem:[#allocation4] sm:$0xff] %vm361, %v6502
      %6539 = vst.msk [vmem:[#allocation4 + $0x8] sm:$0xff] %vm361, %v6503
      %6540 = vst.msk [vmem:[#allocation4 + $0x10] sm:$0xff] %vm361, %v6504
      %6541 = vst.msk [vmem:[#allocation4 + $0x18] sm:$0xff] %vm361, %v6505
      %6542 = vst.msk [vmem:[#allocation4 + $0x20] sm:$0xff] %vm361, %v6506
      %6543 = vst.msk [vmem:[#allocation4 + $0x28] sm:$0xff] %vm361, %v6507
      %6544 = vst.msk [vmem:[#allocation4 + $0x30] sm:$0xff] %vm361, %v6508
      %6545 = vst.msk [vmem:[#allocation4 + $0x38] sm:$0xff] %vm361, %v6509
      %6546 = vst.msk [vmem:[#allocation4 + $0x40] sm:$0xff] %vm361, %v6510
      %6547 = vst.msk [vmem:[#allocation4 + $0x48] sm:$0xff] %vm361, %v6511
      %6548 = vst.msk [vmem:[#allocation4 + $0x50] sm:$0xff] %vm361, %v6512
      %6549 = vst.msk [vmem:[#allocation4 + $0x58] sm:$0xff] %vm361, %v6513
      %6550 = vst.msk [vmem:[#allocation4 + $0x60] sm:$0xff] %vm361, %v6514
      %6551 = vst.msk [vmem:[#allocation4 + $0x68] sm:$0xff] %vm361, %v6515
      %6552 = vst.msk [vmem:[#allocation4 + $0x70] sm:$0xff] %vm361, %v6516
      %6553 = vst.msk [vmem:[#allocation4 + $0x78] sm:$0xff] %vm361, %v6517
      %6554 = vst.msk [vmem:[#allocation4 + $0x80] sm:$0xff] %vm361, %v6518
      %6555 = vst.msk [vmem:[#allocation4 + $0x88] sm:$0xff] %vm361, %v6519
      %6556 = vst.msk [vmem:[#allocation4 + $0x90] sm:$0xff] %vm361, %v6520
      %6557 = vst.msk [vmem:[#allocation4 + $0x98] sm:$0xff] %vm361, %v6521
      %6558 = vst.msk [vmem:[#allocation4 + $0xa0] sm:$0xff] %vm361, %v6522
      %6559 = vst.msk [vmem:[#allocation4 + $0xa8] sm:$0xff] %vm361, %v6523
      %6560 = vst.msk [vmem:[#allocation4 + $0xb0] sm:$0xff] %vm361, %v6524
      %6561 = vst.msk [vmem:[#allocation4 + $0xb8] sm:$0xff] %vm361, %v6525
      %6562 = vst.msk [vmem:[#allocation4 + $0xc0] sm:$0xff] %vm361, %v6526
      %6563 = vst.msk [vmem:[#allocation4 + $0xc8] sm:$0xff] %vm361, %v6527
      %6564 = vst.msk [vmem:[#allocation4 + $0xd0] sm:$0xff] %vm361, %v6528
      %6565 = vst.msk [vmem:[#allocation4 + $0xd8] sm:$0xff] %vm361, %v6529
      %6566 = vst.msk [vmem:[#allocation4 + $0xe0] sm:$0xff] %vm361, %v6530
      %6567 = vst.msk [vmem:[#allocation4 + $0xe8] sm:$0xff] %vm361, %v6531
      %6568 = vst.msk [vmem:[#allocation4 + $0xf0] sm:$0xff] %vm361, %v6532
      %6569 = vst.msk [vmem:[#allocation4 + $0xf8] sm:$0xff] %vm361, %v6533
      %6570 = vst.msk [vmem:[#allocation4 + $0x100] sm:$0xff] %vm361, %v6534
      %6571 = vst.msk [vmem:[#allocation4 + $0x108] sm:$0xff] %vm361, %v6535
      %6572 = vst.msk [vmem:[#allocation4 + $0x110] sm:$0xff] %vm361, %v6536
      %6573 = vst.msk [vmem:[#allocation4 + $0x118] sm:$0xff] %vm361, %v6537
      %v6574 = vld [vmem:[#allocation3 + $0x14] sm:$0xff]
      %v6575 = vld [vmem:[#allocation3 + $0x1c] sm:$0xff]
      %v6576 = vld [vmem:[#allocation3 + $0x24] sm:$0xff]
      %v6577 = vld [vmem:[#allocation3 + $0x2c] sm:$0xff]
      %v6578 = vld [vmem:[#allocation3 + $0x34] sm:$0xff]
      %v6579 = vld [vmem:[#allocation3 + $0x3c] sm:$0xff]
      %v6580 = vld [vmem:[#allocation3 + $0x44] sm:$0xff]
      %v6581 = vld [vmem:[#allocation3 + $0x4c] sm:$0xff]
      %v6582 = vld [vmem:[#allocation3 + $0x54] sm:$0xff]
      %v6583 = vld [vmem:[#allocation3 + $0x5c] sm:$0xff]
      %v6584 = vld [vmem:[#allocation3 + $0x64] sm:$0xff]
      %v6585 = vld [vmem:[#allocation3 + $0x6c] sm:$0xff]
      %v6586 = vld [vmem:[#allocation3 + $0x74] sm:$0xff]
      %v6587 = vld [vmem:[#allocation3 + $0x7c] sm:$0xff]
      %v6588 = vld [vmem:[#allocation3 + $0x84] sm:$0xff]
      %v6589 = vld [vmem:[#allocation3 + $0x8c] sm:$0xff]
      %v6590 = vld [vmem:[#allocation3 + $0x94] sm:$0xff]
      %v6591 = vld [vmem:[#allocation3 + $0x9c] sm:$0xff]
      %v6592 = vld [vmem:[#allocation3 + $0xa4] sm:$0xff]
      %v6593 = vld [vmem:[#allocation3 + $0xac] sm:$0xff]
      %v6594 = vld [vmem:[#allocation3 + $0xb4] sm:$0xff]
      %v6595 = vld [vmem:[#allocation3 + $0xbc] sm:$0xff]
      %v6596 = vld [vmem:[#allocation3 + $0xc4] sm:$0xff]
      %v6597 = vld [vmem:[#allocation3 + $0xcc] sm:$0xff]
      %v6598 = vld [vmem:[#allocation3 + $0xd4] sm:$0xff]
      %v6599 = vld [vmem:[#allocation3 + $0xdc] sm:$0xff]
      %v6600 = vld [vmem:[#allocation3 + $0xe4] sm:$0xff]
      %v6601 = vld [vmem:[#allocation3 + $0xec] sm:$0xff]
      %v6602 = vld [vmem:[#allocation3 + $0xf4] sm:$0xff]
      %v6603 = vld [vmem:[#allocation3 + $0xfc] sm:$0xff]
      %v6604 = vld [vmem:[#allocation3 + $0x104] sm:$0xff]
      %v6605 = vld [vmem:[#allocation3 + $0x10c] sm:$0xff]
      %v6606 = vld [vmem:[#allocation3 + $0x114] sm:$0xff]
      %v6607 = vld [vmem:[#allocation3 + $0x11c] sm:$0xff]
      %v6608 = vld [vmem:[#allocation3 + $0x124] sm:$0xff]
      %v6609 = vld [vmem:[#allocation3 + $0x12c] sm:$0xff]
      %v6610 = vpack.c.bf16 %v6575, %v6574
      %v6611 = vpack.c.bf16 %v6577, %v6576
      %v6612 = vpack.c.bf16 %v6579, %v6578
      %v6613 = vpack.c.bf16 %v6581, %v6580
      %v6614 = vpack.c.bf16 %v6583, %v6582
      %v6615 = vpack.c.bf16 %v6585, %v6584
      %v6616 = vpack.c.bf16 %v6587, %v6586
      %v6617 = vpack.c.bf16 %v6589, %v6588
      %v6618 = vpack.c.bf16 %v6591, %v6590
      %v6619 = vpack.c.bf16 %v6593, %v6592
      %v6620 = vpack.c.bf16 %v6595, %v6594
      %v6621 = vpack.c.bf16 %v6597, %v6596
      %v6622 = vpack.c.bf16 %v6599, %v6598
      %v6623 = vpack.c.bf16 %v6601, %v6600
      %v6624 = vpack.c.bf16 %v6603, %v6602
      %v6625 = vpack.c.bf16 %v6605, %v6604
      %v6626 = vpack.c.bf16 %v6607, %v6606
      %v6627 = vpack.c.bf16 %v6609, %v6608
      %v6628 = vld [vmem:[#allocation4] sm:$0xff]
      %v6629 = vld [vmem:[#allocation4 + $0x8] sm:$0xff]
      %v6630 = vld [vmem:[#allocation4 + $0x10] sm:$0xff]
      %v6631 = vld [vmem:[#allocation4 + $0x18] sm:$0xff]
      %v6632 = vld [vmem:[#allocation4 + $0x20] sm:$0xff]
      %v6633 = vld [vmem:[#allocation4 + $0x28] sm:$0xff]
      %v6634 = vld [vmem:[#allocation4 + $0x30] sm:$0xff]
      %v6635 = vld [vmem:[#allocation4 + $0x38] sm:$0xff]
      %v6636 = vld [vmem:[#allocation4 + $0x40] sm:$0xff]
      %v6637 = vld [vmem:[#allocation4 + $0x48] sm:$0xff]
      %v6638 = vld [vmem:[#allocation4 + $0x50] sm:$0xff]
      %v6639 = vld [vmem:[#allocation4 + $0x58] sm:$0xff]
      %v6640 = vld [vmem:[#allocation4 + $0x60] sm:$0xff]
      %v6641 = vld [vmem:[#allocation4 + $0x68] sm:$0xff]
      %v6642 = vld [vmem:[#allocation4 + $0x70] sm:$0xff]
      %v6643 = vld [vmem:[#allocation4 + $0x78] sm:$0xff]
      %v6644 = vld [vmem:[#allocation4 + $0x80] sm:$0xff]
      %v6645 = vld [vmem:[#allocation4 + $0x88] sm:$0xff]
      %v6646 = vld [vmem:[#allocation4 + $0x90] sm:$0xff]
      %v6647 = vld [vmem:[#allocation4 + $0x98] sm:$0xff]
      %v6648 = vld [vmem:[#allocation4 + $0xa0] sm:$0xff]
      %v6649 = vld [vmem:[#allocation4 + $0xa8] sm:$0xff]
      %v6650 = vld [vmem:[#allocation4 + $0xb0] sm:$0xff]
      %v6651 = vld [vmem:[#allocation4 + $0xb8] sm:$0xff]
      %v6652 = vld [vmem:[#allocation4 + $0xc0] sm:$0xff]
      %v6653 = vld [vmem:[#allocation4 + $0xc8] sm:$0xff]
      %v6654 = vld [vmem:[#allocation4 + $0xd0] sm:$0xff]
      %v6655 = vld [vmem:[#allocation4 + $0xd8] sm:$0xff]
      %v6656 = vld [vmem:[#allocation4 + $0xe0] sm:$0xff]
      %v6657 = vld [vmem:[#allocation4 + $0xe8] sm:$0xff]
      %v6658 = vld [vmem:[#allocation4 + $0xf0] sm:$0xff]
      %v6659 = vld [vmem:[#allocation4 + $0xf8] sm:$0xff]
      %v6660 = vld [vmem:[#allocation4 + $0x100] sm:$0xff]
      %v6661 = vld [vmem:[#allocation4 + $0x108] sm:$0xff]
      %v6662 = vld [vmem:[#allocation4 + $0x110] sm:$0xff]
      %v6663 = vld [vmem:[#allocation4 + $0x118] sm:$0xff]
      %s6664 = scalar_lea.vmem %s4, 10
      %v6665 = vld [vmem:[%s6664] sm:$0x3]
      %v6667 = vsel %vm361, %v6610, 0
      %v6670 = vsel %vm361, %v6611, 0
      %v6673 = vsel %vm361, %v6612, 0
      %v6676 = vsel %vm361, %v6613, 0
      %v6679 = vsel %vm361, %v6614, 0
      %v6682 = vsel %vm361, %v6615, 0
      %v6685 = vsel %vm361, %v6616, 0
      %v6688 = vsel %vm361, %v6617, 0
      %v6691 = vsel %vm361, %v6618, 0
      %v6694 = vsel %vm361, %v6619, 0
      %v6697 = vsel %vm361, %v6620, 0
      %v6700 = vsel %vm361, %v6621, 0
      %v6703 = vsel %vm361, %v6622, 0
      %v6706 = vsel %vm361, %v6623, 0
      %v6709 = vsel %vm361, %v6624, 0
      %v6712 = vsel %vm361, %v6625, 0
      %v6715 = vsel %vm361, %v6626, 0
      %v6718 = vsel %vm361, %v6627, 0
      %v6721 = vsel %vm709, %v6665, 0
      %6723 = vmatprep.subr.bf16.mxu0 0
      %6724 = vmatpush1.bf16.msra.mxu0 %v6721
      %6725 = vmatprep.subr.bf16.mxu0 0
      %6726 = vmatpush1.bf16.msra.mxu0 0
      %6727 = vmatprep.subr.bf16.mxu0 0
      %6728 = vmatpush1.bf16.msra.mxu0 0
      %6729 = vmatprep.subr.bf16.mxu0 0
      %6730 = vmatpush1.bf16.msra.mxu0 0
      %6731 = vmatprep.subr.bf16.mxu0 0
      %6732 = vmatpush1.bf16.msra.mxu0 0
      %6733 = vmatprep.subr.bf16.mxu0 0
      %6734 = vmatpush1.bf16.msra.mxu0 0
      %6735 = vmatprep.subr.bf16.mxu0 0
      %6736 = vmatpush1.bf16.msra.mxu0 0
      %6737 = vmatprep.subr.bf16.mxu0 0
      %6738 = vmatpush1.bf16.msra.mxu0 0
      %6739 = vmatprep.subr.bf16.mxu0 0
      %6740 = vmatpush1.bf16.msra.mxu0 0
      %6741 = vmatprep.subr.bf16.mxu0 0
      %6742 = vmatpush1.bf16.msra.mxu0 0
      %6743 = vmatprep.subr.bf16.mxu0 0
      %6744 = vmatpush1.bf16.msra.mxu0 0
      %6745 = vmatprep.subr.bf16.mxu0 0
      %6746 = vmatpush1.bf16.msra.mxu0 0
      %6747 = vmatprep.subr.bf16.mxu0 0
      %6748 = vmatpush1.bf16.msra.mxu0 0
      %6749 = vmatprep.subr.bf16.mxu0 0
      %6750 = vmatpush1.bf16.msra.mxu0 0
      %6751 = vmatprep.subr.bf16.mxu0 0
      %6752 = vmatpush1.bf16.msra.mxu0 0
      %6753 = vmatprep.subr.bf16.mxu0 0
      %6754 = vmatpush1.bf16.msra.mxu0 0
      %6755 = vmatprep.mubr.bf16.mxu0 0
      %6756 = vmatmul.mubr.bf16.gmra.mrb[0].mxu0 %v6667
      %v6757 = vpop.f32.mrb[0].mxu0
      %v6758 = vadd.f32 0.0, %v6757
      %v6759 = vpop.f32.mrb[0].mxu0
      %v6760 = vpop.f32.mrb[0].mxu0
      %v6761 = vadd.f32 0.0, %v6760
      %v6762 = vpop.f32.mrb[0].mxu0
      %6763 = vmatprep.mubr.bf16.mxu0 0
      %6764 = vmatmul.mubr.bf16.gmra.mrb[0].mxu0 %v6670
      %v6765 = vpop.f32.mrb[0].mxu0
      %v6766 = vadd.f32 0.0, %v6765
      %v6767 = vpop.f32.mrb[0].mxu0
      %v6768 = vpop.f32.mrb[0].mxu0
      %v6769 = vadd.f32 0.0, %v6768
      %v6770 = vpop.f32.mrb[0].mxu0
      %6771 = vmatprep.mubr.bf16.mxu0 0
      %6772 = vmatmul.mubr.bf16.gmra.mrb[0].mxu0 %v6673
      %v6773 = vpop.f32.mrb[0].mxu0
      %v6774 = vadd.f32 0.0, %v6773
      %v6775 = vpop.f32.mrb[0].mxu0
      %v6776 = vpop.f32.mrb[0].mxu0
      %v6777 = vadd.f32 0.0, %v6776
      %v6778 = vpop.f32.mrb[0].mxu0
      %6779 = vmatprep.mubr.bf16.mxu0 0
      %6780 = vmatmul.mubr.bf16.gmra.mrb[0].mxu0 %v6676
      %v6781 = vpop.f32.mrb[0].mxu0
      %v6782 = vadd.f32 0.0, %v6781
      %v6783 = vpop.f32.mrb[0].mxu0
      %v6784 = vpop.f32.mrb[0].mxu0
      %v6785 = vadd.f32 0.0, %v6784
      %v6786 = vpop.f32.mrb[0].mxu0
      %6787 = vmatprep.mubr.bf16.mxu0 0
      %6788 = vmatmul.mubr.bf16.gmra.mrb[0].mxu0 %v6679
      %v6789 = vpop.f32.mrb[0].mxu0
      %v6790 = vadd.f32 0.0, %v6789
      %v6791 = vpop.f32.mrb[0].mxu0
      %v6792 = vpop.f32.mrb[0].mxu0
      %v6793 = vadd.f32 0.0, %v6792
      %v6794 = vpop.f32.mrb[0].mxu0
      %6795 = vmatprep.mubr.bf16.mxu0 0
      %6796 = vmatmul.mubr.bf16.gmra.mrb[0].mxu0 %v6682
      %v6797 = vpop.f32.mrb[0].mxu0
      %v6798 = vadd.f32 0.0, %v6797
      %v6799 = vpop.f32.mrb[0].mxu0
      %v6800 = vpop.f32.mrb[0].mxu0
      %v6801 = vadd.f32 0.0, %v6800
      %v6802 = vpop.f32.mrb[0].mxu0
      %6803 = vmatprep.mubr.bf16.mxu0 0
      %6804 = vmatmul.mubr.bf16.gmra.mrb[0].mxu0 %v6685
      %v6805 = vpop.f32.mrb[0].mxu0
      %v6806 = vadd.f32 0.0, %v6805
      %v6807 = vpop.f32.mrb[0].mxu0
      %v6808 = vpop.f32.mrb[0].mxu0
      %v6809 = vadd.f32 0.0, %v6808
      %v6810 = vpop.f32.mrb[0].mxu0
      %6811 = vmatprep.mubr.bf16.mxu0 0
      %6812 = vmatmul.mubr.bf16.gmra.mrb[0].mxu0 %v6688
      %v6813 = vpop.f32.mrb[0].mxu0
      %v6814 = vadd.f32 0.0, %v6813
      %v6815 = vpop.f32.mrb[0].mxu0
      %v6816 = vpop.f32.mrb[0].mxu0
      %v6817 = vadd.f32 0.0, %v6816
      %v6818 = vpop.f32.mrb[0].mxu0
      %6819 = vmatprep.mubr.bf16.mxu0 0
      %6820 = vmatmul.mubr.bf16.gmra.mrb[0].mxu0 %v6691
      %v6821 = vpop.f32.mrb[0].mxu0
      %v6822 = vadd.f32 0.0, %v6821
      %v6823 = vpop.f32.mrb[0].mxu0
      %v6824 = vpop.f32.mrb[0].mxu0
      %v6825 = vadd.f32 0.0, %v6824
      %v6826 = vpop.f32.mrb[0].mxu0
      %6827 = vmatprep.mubr.bf16.mxu0 0
      %6828 = vmatmul.mubr.bf16.gmra.mrb[0].mxu0 %v6694
      %v6829 = vpop.f32.mrb[0].mxu0
      %v6830 = vadd.f32 0.0, %v6829
      %v6831 = vpop.f32.mrb[0].mxu0
      %v6832 = vpop.f32.mrb[0].mxu0
      %v6833 = vadd.f32 0.0, %v6832
      %v6834 = vpop.f32.mrb[0].mxu0
      %6835 = vmatprep.mubr.bf16.mxu0 0
      %6836 = vmatmul.mubr.bf16.gmra.mrb[0].mxu0 %v6697
      %v6837 = vpop.f32.mrb[0].mxu0
      %v6838 = vadd.f32 0.0, %v6837
      %v6839 = vpop.f32.mrb[0].mxu0
      %v6840 = vpop.f32.mrb[0].mxu0
      %v6841 = vadd.f32 0.0, %v6840
      %v6842 = vpop.f32.mrb[0].mxu0
      %6843 = vmatprep.mubr.bf16.mxu0 0
      %6844 = vmatmul.mubr.bf16.gmra.mrb[0].mxu0 %v6700
      %v6845 = vpop.f32.mrb[0].mxu0
      %v6846 = vadd.f32 0.0, %v6845
      %v6847 = vpop.f32.mrb[0].mxu0
      %v6848 = vpop.f32.mrb[0].mxu0
      %v6849 = vadd.f32 0.0, %v6848
      %v6850 = vpop.f32.mrb[0].mxu0
      %6851 = vmatprep.mubr.bf16.mxu0 0
      %6852 = vmatmul.mubr.bf16.gmra.mrb[0].mxu0 %v6703
      %v6853 = vpop.f32.mrb[0].mxu0
      %v6854 = vadd.f32 0.0, %v6853
      %v6855 = vpop.f32.mrb[0].mxu0
      %v6856 = vpop.f32.mrb[0].mxu0
      %v6857 = vadd.f32 0.0, %v6856
      %v6858 = vpop.f32.mrb[0].mxu0
      %6859 = vmatprep.mubr.bf16.mxu0 0
      %6860 = vmatmul.mubr.bf16.gmra.mrb[0].mxu0 %v6706
      %v6861 = vpop.f32.mrb[0].mxu0
      %v6862 = vadd.f32 0.0, %v6861
      %v6863 = vpop.f32.mrb[0].mxu0
      %v6864 = vpop.f32.mrb[0].mxu0
      %v6865 = vadd.f32 0.0, %v6864
      %v6866 = vpop.f32.mrb[0].mxu0
      %6867 = vmatprep.mubr.bf16.mxu0 0
      %6868 = vmatmul.mubr.bf16.gmra.mrb[0].mxu0 %v6709
      %v6869 = vpop.f32.mrb[0].mxu0
      %v6870 = vadd.f32 0.0, %v6869
      %v6871 = vpop.f32.mrb[0].mxu0
      %v6872 = vpop.f32.mrb[0].mxu0
      %v6873 = vadd.f32 0.0, %v6872
      %v6874 = vpop.f32.mrb[0].mxu0
      %6875 = vmatprep.mubr.bf16.mxu0 0
      %6876 = vmatmul.mubr.bf16.gmra.mrb[0].mxu0 %v6712
      %v6877 = vpop.f32.mrb[0].mxu0
      %v6878 = vadd.f32 0.0, %v6877
      %v6879 = vpop.f32.mrb[0].mxu0
      %v6880 = vpop.f32.mrb[0].mxu0
      %v6881 = vadd.f32 0.0, %v6880
      %v6882 = vpop.f32.mrb[0].mxu0
      %6883 = vmatprep.mubr.bf16.mxu0 0
      %6884 = vmatmul.mubr.bf16.gmra.mrb[0].mxu0 %v6715
      %v6885 = vpop.f32.mrb[0].mxu0
      %v6886 = vadd.f32 0.0, %v6885
      %v6887 = vpop.f32.mrb[0].mxu0
      %v6888 = vpop.f32.mrb[0].mxu0
      %v6889 = vadd.f32 0.0, %v6888
      %v6890 = vpop.f32.mrb[0].mxu0
      %6891 = vmatprep.mubr.bf16.mxu0 0
      %6892 = vmatmul.mubr.bf16.gmra.mrb[0].mxu0 %v6718
      %v6893 = vpop.f32.mrb[0].mxu0
      %v6894 = vadd.f32 0.0, %v6893
      %v6895 = vpop.f32.mrb[0].mxu0
      %v6896 = vpop.f32.mrb[0].mxu0
      %v6897 = vadd.f32 0.0, %v6896
      %v6898 = vpop.f32.mrb[0].mxu0
      %6899 = vdwg.mxu0
      %v6900 = vadd.f32 %v6628, %v6758
      %v6901 = vadd.f32 %v6629, %v6761
      %v6902 = vadd.f32 %v6630, %v6766
      %v6903 = vadd.f32 %v6631, %v6769
      %v6904 = vadd.f32 %v6632, %v6774
      %v6905 = vadd.f32 %v6633, %v6777
      %v6906 = vadd.f32 %v6634, %v6782
      %v6907 = vadd.f32 %v6635, %v6785
      %v6908 = vadd.f32 %v6636, %v6790
      %v6909 = vadd.f32 %v6637, %v6793
      %v6910 = vadd.f32 %v6638, %v6798
      %v6911 = vadd.f32 %v6639, %v6801
      %v6912 = vadd.f32 %v6640, %v6806
      %v6913 = vadd.f32 %v6641, %v6809
      %v6914 = vadd.f32 %v6642, %v6814
      %v6915 = vadd.f32 %v6643, %v6817
      %v6916 = vadd.f32 %v6644, %v6822
      %v6917 = vadd.f32 %v6645, %v6825
      %v6918 = vadd.f32 %v6646, %v6830
      %v6919 = vadd.f32 %v6647, %v6833
      %v6920 = vadd.f32 %v6648, %v6838
      %v6921 = vadd.f32 %v6649, %v6841
      %v6922 = vadd.f32 %v6650, %v6846
      %v6923 = vadd.f32 %v6651, %v6849
      %v6924 = vadd.f32 %v6652, %v6854
      %v6925 = vadd.f32 %v6653, %v6857
      %v6926 = vadd.f32 %v6654, %v6862
      %v6927 = vadd.f32 %v6655, %v6865
      %v6928 = vadd.f32 %v6656, %v6870
      %v6929 = vadd.f32 %v6657, %v6873
      %v6930 = vadd.f32 %v6658, %v6878
      %v6931 = vadd.f32 %v6659, %v6881
      %v6932 = vadd.f32 %v6660, %v6886
      %v6933 = vadd.f32 %v6661, %v6889
      %v6934 = vadd.f32 %v6662, %v6894
      %v6935 = vadd.f32 %v6663, %v6897
      %6936 = vst.msk [vmem:[#allocation4] sm:$0xff] %vm361, %v6900
      %6937 = vst.msk [vmem:[#allocation4 + $0x8] sm:$0xff] %vm361, %v6901
      %6938 = vst.msk [vmem:[#allocation4 + $0x10] sm:$0xff] %vm361, %v6902
      %6939 = vst.msk [vmem:[#allocation4 + $0x18] sm:$0xff] %vm361, %v6903
      %6940 = vst.msk [vmem:[#allocation4 + $0x20] sm:$0xff] %vm361, %v6904
      %6941 = vst.msk [vmem:[#allocation4 + $0x28] sm:$0xff] %vm361, %v6905
      %6942 = vst.msk [vmem:[#allocation4 + $0x30] sm:$0xff] %vm361, %v6906
      %6943 = vst.msk [vmem:[#allocation4 + $0x38] sm:$0xff] %vm361, %v6907
      %6944 = vst.msk [vmem:[#allocation4 + $0x40] sm:$0xff] %vm361, %v6908
      %6945 = vst.msk [vmem:[#allocation4 + $0x48] sm:$0xff] %vm361, %v6909
      %6946 = vst.msk [vmem:[#allocation4 + $0x50] sm:$0xff] %vm361, %v6910
      %6947 = vst.msk [vmem:[#allocation4 + $0x58] sm:$0xff] %vm361, %v6911
      %6948 = vst.msk [vmem:[#allocation4 + $0x60] sm:$0xff] %vm361, %v6912
      %6949 = vst.msk [vmem:[#allocation4 + $0x68] sm:$0xff] %vm361, %v6913
      %6950 = vst.msk [vmem:[#allocation4 + $0x70] sm:$0xff] %vm361, %v6914
      %6951 = vst.msk [vmem:[#allocation4 + $0x78] sm:$0xff] %vm361, %v6915
      %6952 = vst.msk [vmem:[#allocation4 + $0x80] sm:$0xff] %vm361, %v6916
      %6953 = vst.msk [vmem:[#allocation4 + $0x88] sm:$0xff] %vm361, %v6917
      %6954 = vst.msk [vmem:[#allocation4 + $0x90] sm:$0xff] %vm361, %v6918
      %6955 = vst.msk [vmem:[#allocation4 + $0x98] sm:$0xff] %vm361, %v6919
      %6956 = vst.msk [vmem:[#allocation4 + $0xa0] sm:$0xff] %vm361, %v6920
      %6957 = vst.msk [vmem:[#allocation4 + $0xa8] sm:$0xff] %vm361, %v6921
      %6958 = vst.msk [vmem:[#allocation4 + $0xb0] sm:$0xff] %vm361, %v6922
      %6959 = vst.msk [vmem:[#allocation4 + $0xb8] sm:$0xff] %vm361, %v6923
      %6960 = vst.msk [vmem:[#allocation4 + $0xc0] sm:$0xff] %vm361, %v6924
      %6961 = vst.msk [vmem:[#allocation4 + $0xc8] sm:$0xff] %vm361, %v6925
      %6962 = vst.msk [vmem:[#allocation4 + $0xd0] sm:$0xff] %vm361, %v6926
      %6963 = vst.msk [vmem:[#allocation4 + $0xd8] sm:$0xff] %vm361, %v6927
      %6964 = vst.msk [vmem:[#allocation4 + $0xe0] sm:$0xff] %vm361, %v6928
      %6965 = vst.msk [vmem:[#allocation4 + $0xe8] sm:$0xff] %vm361, %v6929
      %6966 = vst.msk [vmem:[#allocation4 + $0xf0] sm:$0xff] %vm361, %v6930
      %6967 = vst.msk [vmem:[#allocation4 + $0xf8] sm:$0xff] %vm361, %v6931
      %6968 = vst.msk [vmem:[#allocation4 + $0x100] sm:$0xff] %vm361, %v6932
      %6969 = vst.msk [vmem:[#allocation4 + $0x108] sm:$0xff] %vm361, %v6933
      %6970 = vst.msk [vmem:[#allocation4 + $0x110] sm:$0xff] %vm361, %v6934
      %6971 = vst.msk [vmem:[#allocation4 + $0x118] sm:$0xff] %vm361, %v6935
      %v6972 = vld [vmem:[#allocation3 + $0x24] sm:$0xff]
      %v6973 = vld [vmem:[#allocation3 + $0x2c] sm:$0xff]
      %v6974 = vld [vmem:[#allocation3 + $0x34] sm:$0xff]
      %v6975 = vld [vmem:[#allocation3 + $0x3c] sm:$0xff]
      %v6976 = vld [vmem:[#allocation3 + $0x44] sm:$0xff]
      %v6977 = vld [vmem:[#allocation3 + $0x4c] sm:$0xff]
      %v6978 = vld [vmem:[#allocation3 + $0x54] sm:$0xff]
      %v6979 = vld [vmem:[#allocation3 + $0x5c] sm:$0xff]
      %v6980 = vld [vmem:[#allocation3 + $0x64] sm:$0xff]
      %v6981 = vld [vmem:[#allocation3 + $0x6c] sm:$0xff]
      %v6982 = vld [vmem:[#allocation3 + $0x74] sm:$0xff]
      %v6983 = vld [vmem:[#allocation3 + $0x7c] sm:$0xff]
      %v6984 = vld [vmem:[#allocation3 + $0x84] sm:$0xff]
      %v6985 = vld [vmem:[#allocation3 + $0x8c] sm:$0xff]
      %v6986 = vld [vmem:[#allocation3 + $0x94] sm:$0xff]
      %v6987 = vld [vmem:[#allocation3 + $0x9c] sm:$0xff]
      %v6988 = vld [vmem:[#allocation3 + $0xa4] sm:$0xff]
      %v6989 = vld [vmem:[#allocation3 + $0xac] sm:$0xff]
      %v6990 = vld [vmem:[#allocation3 + $0xb4] sm:$0xff]
      %v6991 = vld [vmem:[#allocation3 + $0xbc] sm:$0xff]
      %v6992 = vld [vmem:[#allocation3 + $0xc4] sm:$0xff]
      %v6993 = vld [vmem:[#allocation3 + $0xcc] sm:$0xff]
      %v6994 = vld [vmem:[#allocation3 + $0xd4] sm:$0xff]
      %v6995 = vld [vmem:[#allocation3 + $0xdc] sm:$0xff]
      %v6996 = vld [vmem:[#allocation3 + $0xe4] sm:$0xff]
      %v6997 = vld [vmem:[#allocation3 + $0xec] sm:$0xff]
      %v6998 = vld [vmem:[#allocation3 + $0xf4] sm:$0xff]
      %v6999 = vld [vmem:[#allocation3 + $0xfc] sm:$0xff]
      %v7000 = vld [vmem:[#allocation3 + $0x104] sm:$0xff]
      %v7001 = vld [vmem:[#allocation3 + $0x10c] sm:$0xff]
      %v7002 = vld [vmem:[#allocation3 + $0x114] sm:$0xff]
      %v7003 = vld [vmem:[#allocation3 + $0x11c] sm:$0xff]
      %v7004 = vld [vmem:[#allocation3 + $0x124] sm:$0xff]
      %v7005 = vld [vmem:[#allocation3 + $0x12c] sm:$0xff]
      %v7006 = vld [vmem:[#allocation3 + $0x134] sm:$0xff]
      %v7007 = vld [vmem:[#allocation3 + $0x13c] sm:$0xff]
      %v7008 = vpack.c.bf16 %v6973, %v6972
      %v7009 = vpack.c.bf16 %v6975, %v6974
      %v7010 = vpack.c.bf16 %v6977, %v6976
      %v7011 = vpack.c.bf16 %v6979, %v6978
      %v7012 = vpack.c.bf16 %v6981, %v6980
      %v7013 = vpack.c.bf16 %v6983, %v6982
      %v7014 = vpack.c.bf16 %v6985, %v6984
      %v7015 = vpack.c.bf16 %v6987, %v6986
      %v7016 = vpack.c.bf16 %v6989, %v6988
      %v7017 = vpack.c.bf16 %v6991, %v6990
      %v7018 = vpack.c.bf16 %v6993, %v6992
      %v7019 = vpack.c.bf16 %v6995, %v6994
      %v7020 = vpack.c.bf16 %v6997, %v6996
      %v7021 = vpack.c.bf16 %v6999, %v6998
      %v7022 = vpack.c.bf16 %v7001, %v7000
      %v7023 = vpack.c.bf16 %v7003, %v7002
      %v7024 = vpack.c.bf16 %v7005, %v7004
      %v7025 = vpack.c.bf16 %v7007, %v7006
      %v7026 = vld [vmem:[#allocation4] sm:$0xff]
      %v7027 = vld [vmem:[#allocation4 + $0x8] sm:$0xff]
      %v7028 = vld [vmem:[#allocation4 + $0x10] sm:$0xff]
      %v7029 = vld [vmem:[#allocation4 + $0x18] sm:$0xff]
      %v7030 = vld [vmem:[#allocation4 + $0x20] sm:$0xff]
      %v7031 = vld [vmem:[#allocation4 + $0x28] sm:$0xff]
      %v7032 = vld [vmem:[#allocation4 + $0x30] sm:$0xff]
      %v7033 = vld [vmem:[#allocation4 + $0x38] sm:$0xff]
      %v7034 = vld [vmem:[#allocation4 + $0x40] sm:$0xff]
      %v7035 = vld [vmem:[#allocation4 + $0x48] sm:$0xff]
      %v7036 = vld [vmem:[#allocation4 + $0x50] sm:$0xff]
      %v7037 = vld [vmem:[#allocation4 + $0x58] sm:$0xff]
      %v7038 = vld [vmem:[#allocation4 + $0x60] sm:$0xff]
      %v7039 = vld [vmem:[#allocation4 + $0x68] sm:$0xff]
      %v7040 = vld [vmem:[#allocation4 + $0x70] sm:$0xff]
      %v7041 = vld [vmem:[#allocation4 + $0x78] sm:$0xff]
      %v7042 = vld [vmem:[#allocation4 + $0x80] sm:$0xff]
      %v7043 = vld [vmem:[#allocation4 + $0x88] sm:$0xff]
      %v7044 = vld [vmem:[#allocation4 + $0x90] sm:$0xff]
      %v7045 = vld [vmem:[#allocation4 + $0x98] sm:$0xff]
      %v7046 = vld [vmem:[#allocation4 + $0xa0] sm:$0xff]
      %v7047 = vld [vmem:[#allocation4 + $0xa8] sm:$0xff]
      %v7048 = vld [vmem:[#allocation4 + $0xb0] sm:$0xff]
      %v7049 = vld [vmem:[#allocation4 + $0xb8] sm:$0xff]
      %v7050 = vld [vmem:[#allocation4 + $0xc0] sm:$0xff]
      %v7051 = vld [vmem:[#allocation4 + $0xc8] sm:$0xff]
      %v7052 = vld [vmem:[#allocation4 + $0xd0] sm:$0xff]
      %v7053 = vld [vmem:[#allocation4 + $0xd8] sm:$0xff]
      %v7054 = vld [vmem:[#allocation4 + $0xe0] sm:$0xff]
      %v7055 = vld [vmem:[#allocation4 + $0xe8] sm:$0xff]
      %v7056 = vld [vmem:[#allocation4 + $0xf0] sm:$0xff]
      %v7057 = vld [vmem:[#allocation4 + $0xf8] sm:$0xff]
      %v7058 = vld [vmem:[#allocation4 + $0x100] sm:$0xff]
      %v7059 = vld [vmem:[#allocation4 + $0x108] sm:$0xff]
      %v7060 = vld [vmem:[#allocation4 + $0x110] sm:$0xff]
      %v7061 = vld [vmem:[#allocation4 + $0x118] sm:$0xff]
      %s7062 = scalar_lea.vmem %s4, 12
      %v7063 = vld [vmem:[%s7062] sm:$0x3]
      %v7065 = vsel %vm361, %v7008, 0
      %v7068 = vsel %vm361, %v7009, 0
      %v7071 = vsel %vm361, %v7010, 0
      %v7074 = vsel %vm361, %v7011, 0
      %v7077 = vsel %vm361, %v7012, 0
      %v7080 = vsel %vm361, %v7013, 0
      %v7083 = vsel %vm361, %v7014, 0
      %v7086 = vsel %vm361, %v7015, 0
      %v7089 = vsel %vm361, %v7016, 0
      %v7092 = vsel %vm361, %v7017, 0
      %v7095 = vsel %vm361, %v7018, 0
      %v7098 = vsel %vm361, %v7019, 0
      %v7101 = vsel %vm361, %v7020, 0
      %v7104 = vsel %vm361, %v7021, 0
      %v7107 = vsel %vm361, %v7022, 0
      %v7110 = vsel %vm361, %v7023, 0
      %v7113 = vsel %vm361, %v7024, 0
      %v7116 = vsel %vm361, %v7025, 0
      %v7119 = vsel %vm709, %v7063, 0
      %7121 = vmatprep.subr.bf16.mxu0 0
      %7122 = vmatpush1.bf16.msra.mxu0 %v7119
      %7123 = vmatprep.subr.bf16.mxu0 0
      %7124 = vmatpush1.bf16.msra.mxu0 0
      %7125 = vmatprep.subr.bf16.mxu0 0
      %7126 = vmatpush1.bf16.msra.mxu0 0
      %7127 = vmatprep.subr.bf16.mxu0 0
      %7128 = vmatpush1.bf16.msra.mxu0 0
      %7129 = vmatprep.subr.bf16.mxu0 0
      %7130 = vmatpush1.bf16.msra.mxu0 0
      %7131 = vmatprep.subr.bf16.mxu0 0
      %7132 = vmatpush1.bf16.msra.mxu0 0
      %7133 = vmatprep.subr.bf16.mxu0 0
      %7134 = vmatpush1.bf16.msra.mxu0 0
      %7135 = vmatprep.subr.bf16.mxu0 0
      %7136 = vmatpush1.bf16.msra.mxu0 0
      %7137 = vmatprep.subr.bf16.mxu0 0
      %7138 = vmatpush1.bf16.msra.mxu0 0
      %7139 = vmatprep.subr.bf16.mxu0 0
      %7140 = vmatpush1.bf16.msra.mxu0 0
      %7141 = vmatprep.subr.bf16.mxu0 0
      %7142 = vmatpush1.bf16.msra.mxu0 0
      %7143 = vmatprep.subr.bf16.mxu0 0
      %7144 = vmatpush1.bf16.msra.mxu0 0
      %7145 = vmatprep.subr.bf16.mxu0 0
      %7146 = vmatpush1.bf16.msra.mxu0 0
      %7147 = vmatprep.subr.bf16.mxu0 0
      %7148 = vmatpush1.bf16.msra.mxu0 0
      %7149 = vmatprep.subr.bf16.mxu0 0
      %7150 = vmatpush1.bf16.msra.mxu0 0
      %7151 = vmatprep.subr.bf16.mxu0 0
      %7152 = vmatpush1.bf16.msra.mxu0 0
      %7153 = vmatprep.mubr.bf16.mxu0 0
      %7154 = vmatmul.mubr.bf16.gmra.mrb[0].mxu0 %v7065
      %v7155 = vpop.f32.mrb[0].mxu0
      %v7156 = vadd.f32 0.0, %v7155
      %v7157 = vpop.f32.mrb[0].mxu0
      %v7158 = vpop.f32.mrb[0].mxu0
      %v7159 = vadd.f32 0.0, %v7158
      %v7160 = vpop.f32.mrb[0].mxu0
      %7161 = vmatprep.mubr.bf16.mxu0 0
      %7162 = vmatmul.mubr.bf16.gmra.mrb[0].mxu0 %v7068
      %v7163 = vpop.f32.mrb[0].mxu0
      %v7164 = vadd.f32 0.0, %v7163
      %v7165 = vpop.f32.mrb[0].mxu0
      %v7166 = vpop.f32.mrb[0].mxu0
      %v7167 = vadd.f32 0.0, %v7166
      %v7168 = vpop.f32.mrb[0].mxu0
      %7169 = vmatprep.mubr.bf16.mxu0 0
      %7170 = vmatmul.mubr.bf16.gmra.mrb[0].mxu0 %v7071
      %v7171 = vpop.f32.mrb[0].mxu0
      %v7172 = vadd.f32 0.0, %v7171
      %v7173 = vpop.f32.mrb[0].mxu0
      %v7174 = vpop.f32.mrb[0].mxu0
      %v7175 = vadd.f32 0.0, %v7174
      %v7176 = vpop.f32.mrb[0].mxu0
      %7177 = vmatprep.mubr.bf16.mxu0 0
      %7178 = vmatmul.mubr.bf16.gmra.mrb[0].mxu0 %v7074
      %v7179 = vpop.f32.mrb[0].mxu0
      %v7180 = vadd.f32 0.0, %v7179
      %v7181 = vpop.f32.mrb[0].mxu0
      %v7182 = vpop.f32.mrb[0].mxu0
      %v7183 = vadd.f32 0.0, %v7182
      %v7184 = vpop.f32.mrb[0].mxu0
      %7185 = vmatprep.mubr.bf16.mxu0 0
      %7186 = vmatmul.mubr.bf16.gmra.mrb[0].mxu0 %v7077
      %v7187 = vpop.f32.mrb[0].mxu0
      %v7188 = vadd.f32 0.0, %v7187
      %v7189 = vpop.f32.mrb[0].mxu0
      %v7190 = vpop.f32.mrb[0].mxu0
      %v7191 = vadd.f32 0.0, %v7190
      %v7192 = vpop.f32.mrb[0].mxu0
      %7193 = vmatprep.mubr.bf16.mxu0 0
      %7194 = vmatmul.mubr.bf16.gmra.mrb[0].mxu0 %v7080
      %v7195 = vpop.f32.mrb[0].mxu0
      %v7196 = vadd.f32 0.0, %v7195
      %v7197 = vpop.f32.mrb[0].mxu0
      %v7198 = vpop.f32.mrb[0].mxu0
      %v7199 = vadd.f32 0.0, %v7198
      %v7200 = vpop.f32.mrb[0].mxu0
      %7201 = vmatprep.mubr.bf16.mxu0 0
      %7202 = vmatmul.mubr.bf16.gmra.mrb[0].mxu0 %v7083
      %v7203 = vpop.f32.mrb[0].mxu0
      %v7204 = vadd.f32 0.0, %v7203
      %v7205 = vpop.f32.mrb[0].mxu0
      %v7206 = vpop.f32.mrb[0].mxu0
      %v7207 = vadd.f32 0.0, %v7206
      %v7208 = vpop.f32.mrb[0].mxu0
      %7209 = vmatprep.mubr.bf16.mxu0 0
      %7210 = vmatmul.mubr.bf16.gmra.mrb[0].mxu0 %v7086
      %v7211 = vpop.f32.mrb[0].mxu0
      %v7212 = vadd.f32 0.0, %v7211
      %v7213 = vpop.f32.mrb[0].mxu0
      %v7214 = vpop.f32.mrb[0].mxu0
      %v7215 = vadd.f32 0.0, %v7214
      %v7216 = vpop.f32.mrb[0].mxu0
      %7217 = vmatprep.mubr.bf16.mxu0 0
      %7218 = vmatmul.mubr.bf16.gmra.mrb[0].mxu0 %v7089
      %v7219 = vpop.f32.mrb[0].mxu0
      %v7220 = vadd.f32 0.0, %v7219
      %v7221 = vpop.f32.mrb[0].mxu0
      %v7222 = vpop.f32.mrb[0].mxu0
      %v7223 = vadd.f32 0.0, %v7222
      %v7224 = vpop.f32.mrb[0].mxu0
      %7225 = vmatprep.mubr.bf16.mxu0 0
      %7226 = vmatmul.mubr.bf16.gmra.mrb[0].mxu0 %v7092
      %v7227 = vpop.f32.mrb[0].mxu0
      %v7228 = vadd.f32 0.0, %v7227
      %v7229 = vpop.f32.mrb[0].mxu0
      %v7230 = vpop.f32.mrb[0].mxu0
      %v7231 = vadd.f32 0.0, %v7230
      %v7232 = vpop.f32.mrb[0].mxu0
      %7233 = vmatprep.mubr.bf16.mxu0 0
      %7234 = vmatmul.mubr.bf16.gmra.mrb[0].mxu0 %v7095
      %v7235 = vpop.f32.mrb[0].mxu0
      %v7236 = vadd.f32 0.0, %v7235
      %v7237 = vpop.f32.mrb[0].mxu0
      %v7238 = vpop.f32.mrb[0].mxu0
      %v7239 = vadd.f32 0.0, %v7238
      %v7240 = vpop.f32.mrb[0].mxu0
      %7241 = vmatprep.mubr.bf16.mxu0 0
      %7242 = vmatmul.mubr.bf16.gmra.mrb[0].mxu0 %v7098
      %v7243 = vpop.f32.mrb[0].mxu0
      %v7244 = vadd.f32 0.0, %v7243
      %v7245 = vpop.f32.mrb[0].mxu0
      %v7246 = vpop.f32.mrb[0].mxu0
      %v7247 = vadd.f32 0.0, %v7246
      %v7248 = vpop.f32.mrb[0].mxu0
      %7249 = vmatprep.mubr.bf16.mxu0 0
      %7250 = vmatmul.mubr.bf16.gmra.mrb[0].mxu0 %v7101
      %v7251 = vpop.f32.mrb[0].mxu0
      %v7252 = vadd.f32 0.0, %v7251
      %v7253 = vpop.f32.mrb[0].mxu0
      %v7254 = vpop.f32.mrb[0].mxu0
      %v7255 = vadd.f32 0.0, %v7254
      %v7256 = vpop.f32.mrb[0].mxu0
      %7257 = vmatprep.mubr.bf16.mxu0 0
      %7258 = vmatmul.mubr.bf16.gmra.mrb[0].mxu0 %v7104
      %v7259 = vpop.f32.mrb[0].mxu0
      %v7260 = vadd.f32 0.0, %v7259
      %v7261 = vpop.f32.mrb[0].mxu0
      %v7262 = vpop.f32.mrb[0].mxu0
      %v7263 = vadd.f32 0.0, %v7262
      %v7264 = vpop.f32.mrb[0].mxu0
      %7265 = vmatprep.mubr.bf16.mxu0 0
      %7266 = vmatmul.mubr.bf16.gmra.mrb[0].mxu0 %v7107
      %v7267 = vpop.f32.mrb[0].mxu0
      %v7268 = vadd.f32 0.0, %v7267
      %v7269 = vpop.f32.mrb[0].mxu0
      %v7270 = vpop.f32.mrb[0].mxu0
      %v7271 = vadd.f32 0.0, %v7270
      %v7272 = vpop.f32.mrb[0].mxu0
      %7273 = vmatprep.mubr.bf16.mxu0 0
      %7274 = vmatmul.mubr.bf16.gmra.mrb[0].mxu0 %v7110
      %v7275 = vpop.f32.mrb[0].mxu0
      %v7276 = vadd.f32 0.0, %v7275
      %v7277 = vpop.f32.mrb[0].mxu0
      %v7278 = vpop.f32.mrb[0].mxu0
      %v7279 = vadd.f32 0.0, %v7278
      %v7280 = vpop.f32.mrb[0].mxu0
      %7281 = vmatprep.mubr.bf16.mxu0 0
      %7282 = vmatmul.mubr.bf16.gmra.mrb[0].mxu0 %v7113
      %v7283 = vpop.f32.mrb[0].mxu0
      %v7284 = vadd.f32 0.0, %v7283
      %v7285 = vpop.f32.mrb[0].mxu0
      %v7286 = vpop.f32.mrb[0].mxu0
      %v7287 = vadd.f32 0.0, %v7286
      %v7288 = vpop.f32.mrb[0].mxu0
      %7289 = vmatprep.mubr.bf16.mxu0 0
      %7290 = vmatmul.mubr.bf16.gmra.mrb[0].mxu0 %v7116
      %v7291 = vpop.f32.mrb[0].mxu0
      %v7292 = vadd.f32 0.0, %v7291
      %v7293 = vpop.f32.mrb[0].mxu0
      %v7294 = vpop.f32.mrb[0].mxu0
      %v7295 = vadd.f32 0.0, %v7294
      %v7296 = vpop.f32.mrb[0].mxu0
      %7297 = vdwg.mxu0
      %v7298 = vadd.f32 %v7026, %v7156
      %v7299 = vadd.f32 %v7027, %v7159
      %v7300 = vadd.f32 %v7028, %v7164
      %v7301 = vadd.f32 %v7029, %v7167
      %v7302 = vadd.f32 %v7030, %v7172
      %v7303 = vadd.f32 %v7031, %v7175
      %v7304 = vadd.f32 %v7032, %v7180
      %v7305 = vadd.f32 %v7033, %v7183
      %v7306 = vadd.f32 %v7034, %v7188
      %v7307 = vadd.f32 %v7035, %v7191
      %v7308 = vadd.f32 %v7036, %v7196
      %v7309 = vadd.f32 %v7037, %v7199
      %v7310 = vadd.f32 %v7038, %v7204
      %v7311 = vadd.f32 %v7039, %v7207
      %v7312 = vadd.f32 %v7040, %v7212
      %v7313 = vadd.f32 %v7041, %v7215
      %v7314 = vadd.f32 %v7042, %v7220
      %v7315 = vadd.f32 %v7043, %v7223
      %v7316 = vadd.f32 %v7044, %v7228
      %v7317 = vadd.f32 %v7045, %v7231
      %v7318 = vadd.f32 %v7046, %v7236
      %v7319 = vadd.f32 %v7047, %v7239
      %v7320 = vadd.f32 %v7048, %v7244
      %v7321 = vadd.f32 %v7049, %v7247
      %v7322 = vadd.f32 %v7050, %v7252
      %v7323 = vadd.f32 %v7051, %v7255
      %v7324 = vadd.f32 %v7052, %v7260
      %v7325 = vadd.f32 %v7053, %v7263
      %v7326 = vadd.f32 %v7054, %v7268
      %v7327 = vadd.f32 %v7055, %v7271
      %v7328 = vadd.f32 %v7056, %v7276
      %v7329 = vadd.f32 %v7057, %v7279
      %v7330 = vadd.f32 %v7058, %v7284
      %v7331 = vadd.f32 %v7059, %v7287
      %v7332 = vadd.f32 %v7060, %v7292
      %v7333 = vadd.f32 %v7061, %v7295
      %7334 = vst.msk [vmem:[#allocation4] sm:$0xff] %vm361, %v7298
      %7335 = vst.msk [vmem:[#allocation4 + $0x8] sm:$0xff] %vm361, %v7299
      %7336 = vst.msk [vmem:[#allocation4 + $0x10] sm:$0xff] %vm361, %v7300
      %7337 = vst.msk [vmem:[#allocation4 + $0x18] sm:$0xff] %vm361, %v7301
      %7338 = vst.msk [vmem:[#allocation4 + $0x20] sm:$0xff] %vm361, %v7302
      %7339 = vst.msk [vmem:[#allocation4 + $0x28] sm:$0xff] %vm361, %v7303
      %7340 = vst.msk [vmem:[#allocation4 + $0x30] sm:$0xff] %vm361, %v7304
      %7341 = vst.msk [vmem:[#allocation4 + $0x38] sm:$0xff] %vm361, %v7305
      %7342 = vst.msk [vmem:[#allocation4 + $0x40] sm:$0xff] %vm361, %v7306
      %7343 = vst.msk [vmem:[#allocation4 + $0x48] sm:$0xff] %vm361, %v7307
      %7344 = vst.msk [vmem:[#allocation4 + $0x50] sm:$0xff] %vm361, %v7308
      %7345 = vst.msk [vmem:[#allocation4 + $0x58] sm:$0xff] %vm361, %v7309
      %7346 = vst.msk [vmem:[#allocation4 + $0x60] sm:$0xff] %vm361, %v7310
      %7347 = vst.msk [vmem:[#allocation4 + $0x68] sm:$0xff] %vm361, %v7311
      %7348 = vst.msk [vmem:[#allocation4 + $0x70] sm:$0xff] %vm361, %v7312
      %7349 = vst.msk [vmem:[#allocation4 + $0x78] sm:$0xff] %vm361, %v7313
      %7350 = vst.msk [vmem:[#allocation4 + $0x80] sm:$0xff] %vm361, %v7314
      %7351 = vst.msk [vmem:[#allocation4 + $0x88] sm:$0xff] %vm361, %v7315
      %7352 = vst.msk [vmem:[#allocation4 + $0x90] sm:$0xff] %vm361, %v7316
      %7353 = vst.msk [vmem:[#allocation4 + $0x98] sm:$0xff] %vm361, %v7317
      %7354 = vst.msk [vmem:[#allocation4 + $0xa0] sm:$0xff] %vm361, %v7318
      %7355 = vst.msk [vmem:[#allocation4 + $0xa8] sm:$0xff] %vm361, %v7319
      %7356 = vst.msk [vmem:[#allocation4 + $0xb0] sm:$0xff] %vm361, %v7320
      %7357 = vst.msk [vmem:[#allocation4 + $0xb8] sm:$0xff] %vm361, %v7321
      %7358 = vst.msk [vmem:[#allocation4 + $0xc0] sm:$0xff] %vm361, %v7322
      %7359 = vst.msk [vmem:[#allocation4 + $0xc8] sm:$0xff] %vm361, %v7323
      %7360 = vst.msk [vmem:[#allocation4 + $0xd0] sm:$0xff] %vm361, %v7324
      %7361 = vst.msk [vmem:[#allocation4 + $0xd8] sm:$0xff] %vm361, %v7325
      %7362 = vst.msk [vmem:[#allocation4 + $0xe0] sm:$0xff] %vm361, %v7326
      %7363 = vst.msk [vmem:[#allocation4 + $0xe8] sm:$0xff] %vm361, %v7327
      %7364 = vst.msk [vmem:[#allocation4 + $0xf0] sm:$0xff] %vm361, %v7328
      %7365 = vst.msk [vmem:[#allocation4 + $0xf8] sm:$0xff] %vm361, %v7329
      %7366 = vst.msk [vmem:[#allocation4 + $0x100] sm:$0xff] %vm361, %v7330
      %7367 = vst.msk [vmem:[#allocation4 + $0x108] sm:$0xff] %vm361, %v7331
      %7368 = vst.msk [vmem:[#allocation4 + $0x110] sm:$0xff] %vm361, %v7332
      %7369 = vst.msk [vmem:[#allocation4 + $0x118] sm:$0xff] %vm361, %v7333
      %v7370 = vld [vmem:[#allocation3 + $0x25] sm:$0xff]
      %v7371 = vld [vmem:[#allocation3 + $0x2d] sm:$0xff]
      %v7372 = vld [vmem:[#allocation3 + $0x35] sm:$0xff]
      %v7373 = vld [vmem:[#allocation3 + $0x3d] sm:$0xff]
      %v7374 = vld [vmem:[#allocation3 + $0x45] sm:$0xff]
      %v7375 = vld [vmem:[#allocation3 + $0x4d] sm:$0xff]
      %v7376 = vld [vmem:[#allocation3 + $0x55] sm:$0xff]
      %v7377 = vld [vmem:[#allocation3 + $0x5d] sm:$0xff]
      %v7378 = vld [vmem:[#allocation3 + $0x65] sm:$0xff]
      %v7379 = vld [vmem:[#allocation3 + $0x6d] sm:$0xff]
      %v7380 = vld [vmem:[#allocation3 + $0x75] sm:$0xff]
      %v7381 = vld [vmem:[#allocation3 + $0x7d] sm:$0xff]
      %v7382 = vld [vmem:[#allocation3 + $0x85] sm:$0xff]
      %v7383 = vld [vmem:[#allocation3 + $0x8d] sm:$0xff]
      %v7384 = vld [vmem:[#allocation3 + $0x95] sm:$0xff]
      %v7385 = vld [vmem:[#allocation3 + $0x9d] sm:$0xff]
      %v7386 = vld [vmem:[#allocation3 + $0xa5] sm:$0xff]
      %v7387 = vld [vmem:[#allocation3 + $0xad] sm:$0xff]
      %v7388 = vld [vmem:[#allocation3 + $0xb5] sm:$0xff]
      %v7389 = vld [vmem:[#allocation3 + $0xbd] sm:$0xff]
      %v7390 = vld [vmem:[#allocation3 + $0xc5] sm:$0xff]
      %v7391 = vld [vmem:[#allocation3 + $0xcd] sm:$0xff]
      %v7392 = vld [vmem:[#allocation3 + $0xd5] sm:$0xff]
      %v7393 = vld [vmem:[#allocation3 + $0xdd] sm:$0xff]
      %v7394 = vld [vmem:[#allocation3 + $0xe5] sm:$0xff]
      %v7395 = vld [vmem:[#allocation3 + $0xed] sm:$0xff]
      %v7396 = vld [vmem:[#allocation3 + $0xf5] sm:$0xff]
      %v7397 = vld [vmem:[#allocation3 + $0xfd] sm:$0xff]
      %v7398 = vld [vmem:[#allocation3 + $0x105] sm:$0xff]
      %v7399 = vld [vmem:[#allocation3 + $0x10d] sm:$0xff]
      %v7400 = vld [vmem:[#allocation3 + $0x115] sm:$0xff]
      %v7401 = vld [vmem:[#allocation3 + $0x11d] sm:$0xff]
      %v7402 = vld [vmem:[#allocation3 + $0x125] sm:$0xff]
      %v7403 = vld [vmem:[#allocation3 + $0x12d] sm:$0xff]
      %v7404 = vld [vmem:[#allocation3 + $0x135] sm:$0xff]
      %v7405 = vld [vmem:[#allocation3 + $0x13d] sm:$0xff]
      %v7406 = vpack.c.bf16 %v7371, %v7370
      %v7407 = vpack.c.bf16 %v7373, %v7372
      %v7408 = vpack.c.bf16 %v7375, %v7374
      %v7409 = vpack.c.bf16 %v7377, %v7376
      %v7410 = vpack.c.bf16 %v7379, %v7378
      %v7411 = vpack.c.bf16 %v7381, %v7380
      %v7412 = vpack.c.bf16 %v7383, %v7382
      %v7413 = vpack.c.bf16 %v7385, %v7384
      %v7414 = vpack.c.bf16 %v7387, %v7386
      %v7415 = vpack.c.bf16 %v7389, %v7388
      %v7416 = vpack.c.bf16 %v7391, %v7390
      %v7417 = vpack.c.bf16 %v7393, %v7392
      %v7418 = vpack.c.bf16 %v7395, %v7394
      %v7419 = vpack.c.bf16 %v7397, %v7396
      %v7420 = vpack.c.bf16 %v7399, %v7398
      %v7421 = vpack.c.bf16 %v7401, %v7400
      %v7422 = vpack.c.bf16 %v7403, %v7402
      %v7423 = vpack.c.bf16 %v7405, %v7404
      %v7424 = vld [vmem:[#allocation4] sm:$0xff]
      %v7425 = vld [vmem:[#allocation4 + $0x8] sm:$0xff]
      %v7426 = vld [vmem:[#allocation4 + $0x10] sm:$0xff]
      %v7427 = vld [vmem:[#allocation4 + $0x18] sm:$0xff]
      %v7428 = vld [vmem:[#allocation4 + $0x20] sm:$0xff]
      %v7429 = vld [vmem:[#allocation4 + $0x28] sm:$0xff]
      %v7430 = vld [vmem:[#allocation4 + $0x30] sm:$0xff]
      %v7431 = vld [vmem:[#allocation4 + $0x38] sm:$0xff]
      %v7432 = vld [vmem:[#allocation4 + $0x40] sm:$0xff]
      %v7433 = vld [vmem:[#allocation4 + $0x48] sm:$0xff]
      %v7434 = vld [vmem:[#allocation4 + $0x50] sm:$0xff]
      %v7435 = vld [vmem:[#allocation4 + $0x58] sm:$0xff]
      %v7436 = vld [vmem:[#allocation4 + $0x60] sm:$0xff]
      %v7437 = vld [vmem:[#allocation4 + $0x68] sm:$0xff]
      %v7438 = vld [vmem:[#allocation4 + $0x70] sm:$0xff]
      %v7439 = vld [vmem:[#allocation4 + $0x78] sm:$0xff]
      %v7440 = vld [vmem:[#allocation4 + $0x80] sm:$0xff]
      %v7441 = vld [vmem:[#allocation4 + $0x88] sm:$0xff]
      %v7442 = vld [vmem:[#allocation4 + $0x90] sm:$0xff]
      %v7443 = vld [vmem:[#allocation4 + $0x98] sm:$0xff]
      %v7444 = vld [vmem:[#allocation4 + $0xa0] sm:$0xff]
      %v7445 = vld [vmem:[#allocation4 + $0xa8] sm:$0xff]
      %v7446 = vld [vmem:[#allocation4 + $0xb0] sm:$0xff]
      %v7447 = vld [vmem:[#allocation4 + $0xb8] sm:$0xff]
      %v7448 = vld [vmem:[#allocation4 + $0xc0] sm:$0xff]
      %v7449 = vld [vmem:[#allocation4 + $0xc8] sm:$0xff]
      %v7450 = vld [vmem:[#allocation4 + $0xd0] sm:$0xff]
      %v7451 = vld [vmem:[#allocation4 + $0xd8] sm:$0xff]
      %v7452 = vld [vmem:[#allocation4 + $0xe0] sm:$0xff]
      %v7453 = vld [vmem:[#allocation4 + $0xe8] sm:$0xff]
      %v7454 = vld [vmem:[#allocation4 + $0xf0] sm:$0xff]
      %v7455 = vld [vmem:[#allocation4 + $0xf8] sm:$0xff]
      %v7456 = vld [vmem:[#allocation4 + $0x100] sm:$0xff]
      %v7457 = vld [vmem:[#allocation4 + $0x108] sm:$0xff]
      %v7458 = vld [vmem:[#allocation4 + $0x110] sm:$0xff]
      %v7459 = vld [vmem:[#allocation4 + $0x118] sm:$0xff]
      %s7460 = scalar_lea.vmem %s4, 14
      %v7461 = vld [vmem:[%s7460] sm:$0x3]
      %v7463 = vsel %vm361, %v7406, 0
      %v7466 = vsel %vm361, %v7407, 0
      %v7469 = vsel %vm361, %v7408, 0
      %v7472 = vsel %vm361, %v7409, 0
      %v7475 = vsel %vm361, %v7410, 0
      %v7478 = vsel %vm361, %v7411, 0
      %v7481 = vsel %vm361, %v7412, 0
      %v7484 = vsel %vm361, %v7413, 0
      %v7487 = vsel %vm361, %v7414, 0
      %v7490 = vsel %vm361, %v7415, 0
      %v7493 = vsel %vm361, %v7416, 0
      %v7496 = vsel %vm361, %v7417, 0
      %v7499 = vsel %vm361, %v7418, 0
      %v7502 = vsel %vm361, %v7419, 0
      %v7505 = vsel %vm361, %v7420, 0
      %v7508 = vsel %vm361, %v7421, 0
      %v7511 = vsel %vm361, %v7422, 0
      %v7514 = vsel %vm361, %v7423, 0
      %v7517 = vsel %vm709, %v7461, 0
      %7519 = vmatprep.subr.bf16.mxu0 0
      %7520 = vmatpush1.bf16.msra.mxu0 %v7517
      %7521 = vmatprep.subr.bf16.mxu0 0
      %7522 = vmatpush1.bf16.msra.mxu0 0
      %7523 = vmatprep.subr.bf16.mxu0 0
      %7524 = vmatpush1.bf16.msra.mxu0 0
      %7525 = vmatprep.subr.bf16.mxu0 0
      %7526 = vmatpush1.bf16.msra.mxu0 0
      %7527 = vmatprep.subr.bf16.mxu0 0
      %7528 = vmatpush1.bf16.msra.mxu0 0
      %7529 = vmatprep.subr.bf16.mxu0 0
      %7530 = vmatpush1.bf16.msra.mxu0 0
      %7531 = vmatprep.subr.bf16.mxu0 0
      %7532 = vmatpush1.bf16.msra.mxu0 0
      %7533 = vmatprep.subr.bf16.mxu0 0
      %7534 = vmatpush1.bf16.msra.mxu0 0
      %7535 = vmatprep.subr.bf16.mxu0 0
      %7536 = vmatpush1.bf16.msra.mxu0 0
      %7537 = vmatprep.subr.bf16.mxu0 0
      %7538 = vmatpush1.bf16.msra.mxu0 0
      %7539 = vmatprep.subr.bf16.mxu0 0
      %7540 = vmatpush1.bf16.msra.mxu0 0
      %7541 = vmatprep.subr.bf16.mxu0 0
      %7542 = vmatpush1.bf16.msra.mxu0 0
      %7543 = vmatprep.subr.bf16.mxu0 0
      %7544 = vmatpush1.bf16.msra.mxu0 0
      %7545 = vmatprep.subr.bf16.mxu0 0
      %7546 = vmatpush1.bf16.msra.mxu0 0
      %7547 = vmatprep.subr.bf16.mxu0 0
      %7548 = vmatpush1.bf16.msra.mxu0 0
      %7549 = vmatprep.subr.bf16.mxu0 0
      %7550 = vmatpush1.bf16.msra.mxu0 0
      %7551 = vmatprep.mubr.bf16.mxu0 0
      %7552 = vmatmul.mubr.bf16.gmra.mrb[0].mxu0 %v7463
      %v7553 = vpop.f32.mrb[0].mxu0
      %v7554 = vadd.f32 0.0, %v7553
      %v7555 = vpop.f32.mrb[0].mxu0
      %v7556 = vpop.f32.mrb[0].mxu0
      %v7557 = vadd.f32 0.0, %v7556
      %v7558 = vpop.f32.mrb[0].mxu0
      %7559 = vmatprep.mubr.bf16.mxu0 0
      %7560 = vmatmul.mubr.bf16.gmra.mrb[0].mxu0 %v7466
      %v7561 = vpop.f32.mrb[0].mxu0
      %v7562 = vadd.f32 0.0, %v7561
      %v7563 = vpop.f32.mrb[0].mxu0
      %v7564 = vpop.f32.mrb[0].mxu0
      %v7565 = vadd.f32 0.0, %v7564
      %v7566 = vpop.f32.mrb[0].mxu0
      %7567 = vmatprep.mubr.bf16.mxu0 0
      %7568 = vmatmul.mubr.bf16.gmra.mrb[0].mxu0 %v7469
      %v7569 = vpop.f32.mrb[0].mxu0
      %v7570 = vadd.f32 0.0, %v7569
      %v7571 = vpop.f32.mrb[0].mxu0
      %v7572 = vpop.f32.mrb[0].mxu0
      %v7573 = vadd.f32 0.0, %v7572
      %v7574 = vpop.f32.mrb[0].mxu0
      %7575 = vmatprep.mubr.bf16.mxu0 0
      %7576 = vmatmul.mubr.bf16.gmra.mrb[0].mxu0 %v7472
      %v7577 = vpop.f32.mrb[0].mxu0
      %v7578 = vadd.f32 0.0, %v7577
      %v7579 = vpop.f32.mrb[0].mxu0
      %v7580 = vpop.f32.mrb[0].mxu0
      %v7581 = vadd.f32 0.0, %v7580
      %v7582 = vpop.f32.mrb[0].mxu0
      %7583 = vmatprep.mubr.bf16.mxu0 0
      %7584 = vmatmul.mubr.bf16.gmra.mrb[0].mxu0 %v7475
      %v7585 = vpop.f32.mrb[0].mxu0
      %v7586 = vadd.f32 0.0, %v7585
      %v7587 = vpop.f32.mrb[0].mxu0
      %v7588 = vpop.f32.mrb[0].mxu0
      %v7589 = vadd.f32 0.0, %v7588
      %v7590 = vpop.f32.mrb[0].mxu0
      %7591 = vmatprep.mubr.bf16.mxu0 0
      %7592 = vmatmul.mubr.bf16.gmra.mrb[0].mxu0 %v7478
      %v7593 = vpop.f32.mrb[0].mxu0
      %v7594 = vadd.f32 0.0, %v7593
      %v7595 = vpop.f32.mrb[0].mxu0
      %v7596 = vpop.f32.mrb[0].mxu0
      %v7597 = vadd.f32 0.0, %v7596
      %v7598 = vpop.f32.mrb[0].mxu0
      %7599 = vmatprep.mubr.bf16.mxu0 0
      %7600 = vmatmul.mubr.bf16.gmra.mrb[0].mxu0 %v7481
      %v7601 = vpop.f32.mrb[0].mxu0
      %v7602 = vadd.f32 0.0, %v7601
      %v7603 = vpop.f32.mrb[0].mxu0
      %v7604 = vpop.f32.mrb[0].mxu0
      %v7605 = vadd.f32 0.0, %v7604
      %v7606 = vpop.f32.mrb[0].mxu0
      %7607 = vmatprep.mubr.bf16.mxu0 0
      %7608 = vmatmul.mubr.bf16.gmra.mrb[0].mxu0 %v7484
      %v7609 = vpop.f32.mrb[0].mxu0
      %v7610 = vadd.f32 0.0, %v7609
      %v7611 = vpop.f32.mrb[0].mxu0
      %v7612 = vpop.f32.mrb[0].mxu0
      %v7613 = vadd.f32 0.0, %v7612
      %v7614 = vpop.f32.mrb[0].mxu0
      %7615 = vmatprep.mubr.bf16.mxu0 0
      %7616 = vmatmul.mubr.bf16.gmra.mrb[0].mxu0 %v7487
      %v7617 = vpop.f32.mrb[0].mxu0
      %v7618 = vadd.f32 0.0, %v7617
      %v7619 = vpop.f32.mrb[0].mxu0
      %v7620 = vpop.f32.mrb[0].mxu0
      %v7621 = vadd.f32 0.0, %v7620
      %v7622 = vpop.f32.mrb[0].mxu0
      %7623 = vmatprep.mubr.bf16.mxu0 0
      %7624 = vmatmul.mubr.bf16.gmra.mrb[0].mxu0 %v7490
      %v7625 = vpop.f32.mrb[0].mxu0
      %v7626 = vadd.f32 0.0, %v7625
      %v7627 = vpop.f32.mrb[0].mxu0
      %v7628 = vpop.f32.mrb[0].mxu0
      %v7629 = vadd.f32 0.0, %v7628
      %v7630 = vpop.f32.mrb[0].mxu0
      %7631 = vmatprep.mubr.bf16.mxu0 0
      %7632 = vmatmul.mubr.bf16.gmra.mrb[0].mxu0 %v7493
      %v7633 = vpop.f32.mrb[0].mxu0
      %v7634 = vadd.f32 0.0, %v7633
      %v7635 = vpop.f32.mrb[0].mxu0
      %v7636 = vpop.f32.mrb[0].mxu0
      %v7637 = vadd.f32 0.0, %v7636
      %v7638 = vpop.f32.mrb[0].mxu0
      %7639 = vmatprep.mubr.bf16.mxu0 0
      %7640 = vmatmul.mubr.bf16.gmra.mrb[0].mxu0 %v7496
      %v7641 = vpop.f32.mrb[0].mxu0
      %v7642 = vadd.f32 0.0, %v7641
      %v7643 = vpop.f32.mrb[0].mxu0
      %v7644 = vpop.f32.mrb[0].mxu0
      %v7645 = vadd.f32 0.0, %v7644
      %v7646 = vpop.f32.mrb[0].mxu0
      %7647 = vmatprep.mubr.bf16.mxu0 0
      %7648 = vmatmul.mubr.bf16.gmra.mrb[0].mxu0 %v7499
      %v7649 = vpop.f32.mrb[0].mxu0
      %v7650 = vadd.f32 0.0, %v7649
      %v7651 = vpop.f32.mrb[0].mxu0
      %v7652 = vpop.f32.mrb[0].mxu0
      %v7653 = vadd.f32 0.0, %v7652
      %v7654 = vpop.f32.mrb[0].mxu0
      %7655 = vmatprep.mubr.bf16.mxu0 0
      %7656 = vmatmul.mubr.bf16.gmra.mrb[0].mxu0 %v7502
      %v7657 = vpop.f32.mrb[0].mxu0
      %v7658 = vadd.f32 0.0, %v7657
      %v7659 = vpop.f32.mrb[0].mxu0
      %v7660 = vpop.f32.mrb[0].mxu0
      %v7661 = vadd.f32 0.0, %v7660
      %v7662 = vpop.f32.mrb[0].mxu0
      %7663 = vmatprep.mubr.bf16.mxu0 0
      %7664 = vmatmul.mubr.bf16.gmra.mrb[0].mxu0 %v7505
      %v7665 = vpop.f32.mrb[0].mxu0
      %v7666 = vadd.f32 0.0, %v7665
      %v7667 = vpop.f32.mrb[0].mxu0
      %v7668 = vpop.f32.mrb[0].mxu0
      %v7669 = vadd.f32 0.0, %v7668
      %v7670 = vpop.f32.mrb[0].mxu0
      %7671 = vmatprep.mubr.bf16.mxu0 0
      %7672 = vmatmul.mubr.bf16.gmra.mrb[0].mxu0 %v7508
      %v7673 = vpop.f32.mrb[0].mxu0
      %v7674 = vadd.f32 0.0, %v7673
      %v7675 = vpop.f32.mrb[0].mxu0
      %v7676 = vpop.f32.mrb[0].mxu0
      %v7677 = vadd.f32 0.0, %v7676
      %v7678 = vpop.f32.mrb[0].mxu0
      %7679 = vmatprep.mubr.bf16.mxu0 0
      %7680 = vmatmul.mubr.bf16.gmra.mrb[0].mxu0 %v7511
      %v7681 = vpop.f32.mrb[0].mxu0
      %v7682 = vadd.f32 0.0, %v7681
      %v7683 = vpop.f32.mrb[0].mxu0
      %v7684 = vpop.f32.mrb[0].mxu0
      %v7685 = vadd.f32 0.0, %v7684
      %v7686 = vpop.f32.mrb[0].mxu0
      %7687 = vmatprep.mubr.bf16.mxu0 0
      %7688 = vmatmul.mubr.bf16.gmra.mrb[0].mxu0 %v7514
      %v7689 = vpop.f32.mrb[0].mxu0
      %v7690 = vadd.f32 0.0, %v7689
      %v7691 = vpop.f32.mrb[0].mxu0
      %v7692 = vpop.f32.mrb[0].mxu0
      %v7693 = vadd.f32 0.0, %v7692
      %v7694 = vpop.f32.mrb[0].mxu0
      %7695 = vdwg.mxu0
      %v7696 = vadd.f32 %v7424, %v7554
      %v7697 = vadd.f32 %v7425, %v7557
      %v7698 = vadd.f32 %v7426, %v7562
      %v7699 = vadd.f32 %v7427, %v7565
      %v7700 = vadd.f32 %v7428, %v7570
      %v7701 = vadd.f32 %v7429, %v7573
      %v7702 = vadd.f32 %v7430, %v7578
      %v7703 = vadd.f32 %v7431, %v7581
      %v7704 = vadd.f32 %v7432, %v7586
      %v7705 = vadd.f32 %v7433, %v7589
      %v7706 = vadd.f32 %v7434, %v7594
      %v7707 = vadd.f32 %v7435, %v7597
      %v7708 = vadd.f32 %v7436, %v7602
      %v7709 = vadd.f32 %v7437, %v7605
      %v7710 = vadd.f32 %v7438, %v7610
      %v7711 = vadd.f32 %v7439, %v7613
      %v7712 = vadd.f32 %v7440, %v7618
      %v7713 = vadd.f32 %v7441, %v7621
      %v7714 = vadd.f32 %v7442, %v7626
      %v7715 = vadd.f32 %v7443, %v7629
      %v7716 = vadd.f32 %v7444, %v7634
      %v7717 = vadd.f32 %v7445, %v7637
      %v7718 = vadd.f32 %v7446, %v7642
      %v7719 = vadd.f32 %v7447, %v7645
      %v7720 = vadd.f32 %v7448, %v7650
      %v7721 = vadd.f32 %v7449, %v7653
      %v7722 = vadd.f32 %v7450, %v7658
      %v7723 = vadd.f32 %v7451, %v7661
      %v7724 = vadd.f32 %v7452, %v7666
      %v7725 = vadd.f32 %v7453, %v7669
      %v7726 = vadd.f32 %v7454, %v7674
      %v7727 = vadd.f32 %v7455, %v7677
      %v7728 = vadd.f32 %v7456, %v7682
      %v7729 = vadd.f32 %v7457, %v7685
      %v7730 = vadd.f32 %v7458, %v7690
      %v7731 = vadd.f32 %v7459, %v7693
      %7732 = vst.msk [vmem:[#allocation4] sm:$0xff] %vm361, %v7696
      %7733 = vst.msk [vmem:[#allocation4 + $0x8] sm:$0xff] %vm361, %v7697
      %7734 = vst.msk [vmem:[#allocation4 + $0x10] sm:$0xff] %vm361, %v7698
      %7735 = vst.msk [vmem:[#allocation4 + $0x18] sm:$0xff] %vm361, %v7699
      %7736 = vst.msk [vmem:[#allocation4 + $0x20] sm:$0xff] %vm361, %v7700
      %7737 = vst.msk [vmem:[#allocation4 + $0x28] sm:$0xff] %vm361, %v7701
      %7738 = vst.msk [vmem:[#allocation4 + $0x30] sm:$0xff] %vm361, %v7702
      %7739 = vst.msk [vmem:[#allocation4 + $0x38] sm:$0xff] %vm361, %v7703
      %7740 = vst.msk [vmem:[#allocation4 + $0x40] sm:$0xff] %vm361, %v7704
      %7741 = vst.msk [vmem:[#allocation4 + $0x48] sm:$0xff] %vm361, %v7705
      %7742 = vst.msk [vmem:[#allocation4 + $0x50] sm:$0xff] %vm361, %v7706
      %7743 = vst.msk [vmem:[#allocation4 + $0x58] sm:$0xff] %vm361, %v7707
      %7744 = vst.msk [vmem:[#allocation4 + $0x60] sm:$0xff] %vm361, %v7708
      %7745 = vst.msk [vmem:[#allocation4 + $0x68] sm:$0xff] %vm361, %v7709
      %7746 = vst.msk [vmem:[#allocation4 + $0x70] sm:$0xff] %vm361, %v7710
      %7747 = vst.msk [vmem:[#allocation4 + $0x78] sm:$0xff] %vm361, %v7711
      %7748 = vst.msk [vmem:[#allocation4 + $0x80] sm:$0xff] %vm361, %v7712
      %7749 = vst.msk [vmem:[#allocation4 + $0x88] sm:$0xff] %vm361, %v7713
      %7750 = vst.msk [vmem:[#allocation4 + $0x90] sm:$0xff] %vm361, %v7714
      %7751 = vst.msk [vmem:[#allocation4 + $0x98] sm:$0xff] %vm361, %v7715
      %7752 = vst.msk [vmem:[#allocation4 + $0xa0] sm:$0xff] %vm361, %v7716
      %7753 = vst.msk [vmem:[#allocation4 + $0xa8] sm:$0xff] %vm361, %v7717
      %7754 = vst.msk [vmem:[#allocation4 + $0xb0] sm:$0xff] %vm361, %v7718
      %7755 = vst.msk [vmem:[#allocation4 + $0xb8] sm:$0xff] %vm361, %v7719
      %7756 = vst.msk [vmem:[#allocation4 + $0xc0] sm:$0xff] %vm361, %v7720
      %7757 = vst.msk [vmem:[#allocation4 + $0xc8] sm:$0xff] %vm361, %v7721
      %7758 = vst.msk [vmem:[#allocation4 + $0xd0] sm:$0xff] %vm361, %v7722
      %7759 = vst.msk [vmem:[#allocation4 + $0xd8] sm:$0xff] %vm361, %v7723
      %7760 = vst.msk [vmem:[#allocation4 + $0xe0] sm:$0xff] %vm361, %v7724
      %7761 = vst.msk [vmem:[#allocation4 + $0xe8] sm:$0xff] %vm361, %v7725
      %7762 = vst.msk [vmem:[#allocation4 + $0xf0] sm:$0xff] %vm361, %v7726
      %7763 = vst.msk [vmem:[#allocation4 + $0xf8] sm:$0xff] %vm361, %v7727
      %7764 = vst.msk [vmem:[#allocation4 + $0x100] sm:$0xff] %vm361, %v7728
      %7765 = vst.msk [vmem:[#allocation4 + $0x108] sm:$0xff] %vm361, %v7729
      %7766 = vst.msk [vmem:[#allocation4 + $0x110] sm:$0xff] %vm361, %v7730
      %7767 = vst.msk [vmem:[#allocation4 + $0x118] sm:$0xff] %vm361, %v7731
      %v7768 = vld [vmem:[#allocation3 + $0x26] sm:$0xff]
      %v7769 = vld [vmem:[#allocation3 + $0x2e] sm:$0xff]
      %v7770 = vld [vmem:[#allocation3 + $0x36] sm:$0xff]
      %v7771 = vld [vmem:[#allocation3 + $0x3e] sm:$0xff]
      %v7772 = vld [vmem:[#allocation3 + $0x46] sm:$0xff]
      %v7773 = vld [vmem:[#allocation3 + $0x4e] sm:$0xff]
      %v7774 = vld [vmem:[#allocation3 + $0x56] sm:$0xff]
      %v7775 = vld [vmem:[#allocation3 + $0x5e] sm:$0xff]
      %v7776 = vld [vmem:[#allocation3 + $0x66] sm:$0xff]
      %v7777 = vld [vmem:[#allocation3 + $0x6e] sm:$0xff]
      %v7778 = vld [vmem:[#allocation3 + $0x76] sm:$0xff]
      %v7779 = vld [vmem:[#allocation3 + $0x7e] sm:$0xff]
      %v7780 = vld [vmem:[#allocation3 + $0x86] sm:$0xff]
      %v7781 = vld [vmem:[#allocation3 + $0x8e] sm:$0xff]
      %v7782 = vld [vmem:[#allocation3 + $0x96] sm:$0xff]
      %v7783 = vld [vmem:[#allocation3 + $0x9e] sm:$0xff]
      %v7784 = vld [vmem:[#allocation3 + $0xa6] sm:$0xff]
      %v7785 = vld [vmem:[#allocation3 + $0xae] sm:$0xff]
      %v7786 = vld [vmem:[#allocation3 + $0xb6] sm:$0xff]
      %v7787 = vld [vmem:[#allocation3 + $0xbe] sm:$0xff]
      %v7788 = vld [vmem:[#allocation3 + $0xc6] sm:$0xff]
      %v7789 = vld [vmem:[#allocation3 + $0xce] sm:$0xff]
      %v7790 = vld [vmem:[#allocation3 + $0xd6] sm:$0xff]
      %v7791 = vld [vmem:[#allocation3 + $0xde] sm:$0xff]
      %v7792 = vld [vmem:[#allocation3 + $0xe6] sm:$0xff]
      %v7793 = vld [vmem:[#allocation3 + $0xee] sm:$0xff]
      %v7794 = vld [vmem:[#allocation3 + $0xf6] sm:$0xff]
      %v7795 = vld [vmem:[#allocation3 + $0xfe] sm:$0xff]
      %v7796 = vld [vmem:[#allocation3 + $0x106] sm:$0xff]
      %v7797 = vld [vmem:[#allocation3 + $0x10e] sm:$0xff]
      %v7798 = vld [vmem:[#allocation3 + $0x116] sm:$0xff]
      %v7799 = vld [vmem:[#allocation3 + $0x11e] sm:$0xff]
      %v7800 = vld [vmem:[#allocation3 + $0x126] sm:$0xff]
      %v7801 = vld [vmem:[#allocation3 + $0x12e] sm:$0xff]
      %v7802 = vld [vmem:[#allocation3 + $0x136] sm:$0xff]
      %v7803 = vld [vmem:[#allocation3 + $0x13e] sm:$0xff]
      %v7804 = vpack.c.bf16 %v7769, %v7768
      %v7805 = vpack.c.bf16 %v7771, %v7770
      %v7806 = vpack.c.bf16 %v7773, %v7772
      %v7807 = vpack.c.bf16 %v7775, %v7774
      %v7808 = vpack.c.bf16 %v7777, %v7776
      %v7809 = vpack.c.bf16 %v7779, %v7778
      %v7810 = vpack.c.bf16 %v7781, %v7780
      %v7811 = vpack.c.bf16 %v7783, %v7782
      %v7812 = vpack.c.bf16 %v7785, %v7784
      %v7813 = vpack.c.bf16 %v7787, %v7786
      %v7814 = vpack.c.bf16 %v7789, %v7788
      %v7815 = vpack.c.bf16 %v7791, %v7790
      %v7816 = vpack.c.bf16 %v7793, %v7792
      %v7817 = vpack.c.bf16 %v7795, %v7794
      %v7818 = vpack.c.bf16 %v7797, %v7796
      %v7819 = vpack.c.bf16 %v7799, %v7798
      %v7820 = vpack.c.bf16 %v7801, %v7800
      %v7821 = vpack.c.bf16 %v7803, %v7802
      %v7822 = vld [vmem:[#allocation4] sm:$0xff]
      %v7823 = vld [vmem:[#allocation4 + $0x8] sm:$0xff]
      %v7824 = vld [vmem:[#allocation4 + $0x10] sm:$0xff]
      %v7825 = vld [vmem:[#allocation4 + $0x18] sm:$0xff]
      %v7826 = vld [vmem:[#allocation4 + $0x20] sm:$0xff]
      %v7827 = vld [vmem:[#allocation4 + $0x28] sm:$0xff]
      %v7828 = vld [vmem:[#allocation4 + $0x30] sm:$0xff]
      %v7829 = vld [vmem:[#allocation4 + $0x38] sm:$0xff]
      %v7830 = vld [vmem:[#allocation4 + $0x40] sm:$0xff]
      %v7831 = vld [vmem:[#allocation4 + $0x48] sm:$0xff]
      %v7832 = vld [vmem:[#allocation4 + $0x50] sm:$0xff]
      %v7833 = vld [vmem:[#allocation4 + $0x58] sm:$0xff]
      %v7834 = vld [vmem:[#allocation4 + $0x60] sm:$0xff]
      %v7835 = vld [vmem:[#allocation4 + $0x68] sm:$0xff]
      %v7836 = vld [vmem:[#allocation4 + $0x70] sm:$0xff]
      %v7837 = vld [vmem:[#allocation4 + $0x78] sm:$0xff]
      %v7838 = vld [vmem:[#allocation4 + $0x80] sm:$0xff]
      %v7839 = vld [vmem:[#allocation4 + $0x88] sm:$0xff]
      %v7840 = vld [vmem:[#allocation4 + $0x90] sm:$0xff]
      %v7841 = vld [vmem:[#allocation4 + $0x98] sm:$0xff]
      %v7842 = vld [vmem:[#allocation4 + $0xa0] sm:$0xff]
      %v7843 = vld [vmem:[#allocation4 + $0xa8] sm:$0xff]
      %v7844 = vld [vmem:[#allocation4 + $0xb0] sm:$0xff]
      %v7845 = vld [vmem:[#allocation4 + $0xb8] sm:$0xff]
      %v7846 = vld [vmem:[#allocation4 + $0xc0] sm:$0xff]
      %v7847 = vld [vmem:[#allocation4 + $0xc8] sm:$0xff]
      %v7848 = vld [vmem:[#allocation4 + $0xd0] sm:$0xff]
      %v7849 = vld [vmem:[#allocation4 + $0xd8] sm:$0xff]
      %v7850 = vld [vmem:[#allocation4 + $0xe0] sm:$0xff]
      %v7851 = vld [vmem:[#allocation4 + $0xe8] sm:$0xff]
      %v7852 = vld [vmem:[#allocation4 + $0xf0] sm:$0xff]
      %v7853 = vld [vmem:[#allocation4 + $0xf8] sm:$0xff]
      %v7854 = vld [vmem:[#allocation4 + $0x100] sm:$0xff]
      %v7855 = vld [vmem:[#allocation4 + $0x108] sm:$0xff]
      %v7856 = vld [vmem:[#allocation4 + $0x110] sm:$0xff]
      %v7857 = vld [vmem:[#allocation4 + $0x118] sm:$0xff]
      %s7858 = scalar_lea.vmem %s4, 16
      %v7859 = vld [vmem:[%s7858] sm:$0x3]
      %v7861 = vsel %vm361, %v7804, 0
      %v7864 = vsel %vm361, %v7805, 0
      %v7867 = vsel %vm361, %v7806, 0
      %v7870 = vsel %vm361, %v7807, 0
      %v7873 = vsel %vm361, %v7808, 0
      %v7876 = vsel %vm361, %v7809, 0
      %v7879 = vsel %vm361, %v7810, 0
      %v7882 = vsel %vm361, %v7811, 0
      %v7885 = vsel %vm361, %v7812, 0
      %v7888 = vsel %vm361, %v7813, 0
      %v7891 = vsel %vm361, %v7814, 0
      %v7894 = vsel %vm361, %v7815, 0
      %v7897 = vsel %vm361, %v7816, 0
      %v7900 = vsel %vm361, %v7817, 0
      %v7903 = vsel %vm361, %v7818, 0
      %v7906 = vsel %vm361, %v7819, 0
      %v7909 = vsel %vm361, %v7820, 0
      %v7912 = vsel %vm361, %v7821, 0
      %v7915 = vsel %vm709, %v7859, 0
      %7917 = vmatprep.subr.bf16.mxu0 0
      %7918 = vmatpush1.bf16.msra.mxu0 %v7915
      %7919 = vmatprep.subr.bf16.mxu0 0
      %7920 = vmatpush1.bf16.msra.mxu0 0
      %7921 = vmatprep.subr.bf16.mxu0 0
      %7922 = vmatpush1.bf16.msra.mxu0 0
      %7923 = vmatprep.subr.bf16.mxu0 0
      %7924 = vmatpush1.bf16.msra.mxu0 0
      %7925 = vmatprep.subr.bf16.mxu0 0
      %7926 = vmatpush1.bf16.msra.mxu0 0
      %7927 = vmatprep.subr.bf16.mxu0 0
      %7928 = vmatpush1.bf16.msra.mxu0 0
      %7929 = vmatprep.subr.bf16.mxu0 0
      %7930 = vmatpush1.bf16.msra.mxu0 0
      %7931 = vmatprep.subr.bf16.mxu0 0
      %7932 = vmatpush1.bf16.msra.mxu0 0
      %7933 = vmatprep.subr.bf16.mxu0 0
      %7934 = vmatpush1.bf16.msra.mxu0 0
      %7935 = vmatprep.subr.bf16.mxu0 0
      %7936 = vmatpush1.bf16.msra.mxu0 0
      %7937 = vmatprep.subr.bf16.mxu0 0
      %7938 = vmatpush1.bf16.msra.mxu0 0
      %7939 = vmatprep.subr.bf16.mxu0 0
      %7940 = vmatpush1.bf16.msra.mxu0 0
      %7941 = vmatprep.subr.bf16.mxu0 0
      %7942 = vmatpush1.bf16.msra.mxu0 0
      %7943 = vmatprep.subr.bf16.mxu0 0
      %7944 = vmatpush1.bf16.msra.mxu0 0
      %7945 = vmatprep.subr.bf16.mxu0 0
      %7946 = vmatpush1.bf16.msra.mxu0 0
      %7947 = vmatprep.subr.bf16.mxu0 0
      %7948 = vmatpush1.bf16.msra.mxu0 0
      %7949 = vmatprep.mubr.bf16.mxu0 0
      %7950 = vmatmul.mubr.bf16.gmra.mrb[0].mxu0 %v7861
      %v7951 = vpop.f32.mrb[0].mxu0
      %v7952 = vadd.f32 0.0, %v7951
      %v7953 = vpop.f32.mrb[0].mxu0
      %v7954 = vpop.f32.mrb[0].mxu0
      %v7955 = vadd.f32 0.0, %v7954
      %v7956 = vpop.f32.mrb[0].mxu0
      %7957 = vmatprep.mubr.bf16.mxu0 0
      %7958 = vmatmul.mubr.bf16.gmra.mrb[0].mxu0 %v7864
      %v7959 = vpop.f32.mrb[0].mxu0
      %v7960 = vadd.f32 0.0, %v7959
      %v7961 = vpop.f32.mrb[0].mxu0
      %v7962 = vpop.f32.mrb[0].mxu0
      %v7963 = vadd.f32 0.0, %v7962
      %v7964 = vpop.f32.mrb[0].mxu0
      %7965 = vmatprep.mubr.bf16.mxu0 0
      %7966 = vmatmul.mubr.bf16.gmra.mrb[0].mxu0 %v7867
      %v7967 = vpop.f32.mrb[0].mxu0
      %v7968 = vadd.f32 0.0, %v7967
      %v7969 = vpop.f32.mrb[0].mxu0
      %v7970 = vpop.f32.mrb[0].mxu0
      %v7971 = vadd.f32 0.0, %v7970
      %v7972 = vpop.f32.mrb[0].mxu0
      %7973 = vmatprep.mubr.bf16.mxu0 0
      %7974 = vmatmul.mubr.bf16.gmra.mrb[0].mxu0 %v7870
      %v7975 = vpop.f32.mrb[0].mxu0
      %v7976 = vadd.f32 0.0, %v7975
      %v7977 = vpop.f32.mrb[0].mxu0
      %v7978 = vpop.f32.mrb[0].mxu0
      %v7979 = vadd.f32 0.0, %v7978
      %v7980 = vpop.f32.mrb[0].mxu0
      %7981 = vmatprep.mubr.bf16.mxu0 0
      %7982 = vmatmul.mubr.bf16.gmra.mrb[0].mxu0 %v7873
      %v7983 = vpop.f32.mrb[0].mxu0
      %v7984 = vadd.f32 0.0, %v7983
      %v7985 = vpop.f32.mrb[0].mxu0
      %v7986 = vpop.f32.mrb[0].mxu0
      %v7987 = vadd.f32 0.0, %v7986
      %v7988 = vpop.f32.mrb[0].mxu0
      %7989 = vmatprep.mubr.bf16.mxu0 0
      %7990 = vmatmul.mubr.bf16.gmra.mrb[0].mxu0 %v7876
      %v7991 = vpop.f32.mrb[0].mxu0
      %v7992 = vadd.f32 0.0, %v7991
      %v7993 = vpop.f32.mrb[0].mxu0
      %v7994 = vpop.f32.mrb[0].mxu0
      %v7995 = vadd.f32 0.0, %v7994
      %v7996 = vpop.f32.mrb[0].mxu0
      %7997 = vmatprep.mubr.bf16.mxu0 0
      %7998 = vmatmul.mubr.bf16.gmra.mrb[0].mxu0 %v7879
      %v7999 = vpop.f32.mrb[0].mxu0
      %v8000 = vadd.f32 0.0, %v7999
      %v8001 = vpop.f32.mrb[0].mxu0
      %v8002 = vpop.f32.mrb[0].mxu0
      %v8003 = vadd.f32 0.0, %v8002
      %v8004 = vpop.f32.mrb[0].mxu0
      %8005 = vmatprep.mubr.bf16.mxu0 0
      %8006 = vmatmul.mubr.bf16.gmra.mrb[0].mxu0 %v7882
      %v8007 = vpop.f32.mrb[0].mxu0
      %v8008 = vadd.f32 0.0, %v8007
      %v8009 = vpop.f32.mrb[0].mxu0
      %v8010 = vpop.f32.mrb[0].mxu0
      %v8011 = vadd.f32 0.0, %v8010
      %v8012 = vpop.f32.mrb[0].mxu0
      %8013 = vmatprep.mubr.bf16.mxu0 0
      %8014 = vmatmul.mubr.bf16.gmra.mrb[0].mxu0 %v7885
      %v8015 = vpop.f32.mrb[0].mxu0
      %v8016 = vadd.f32 0.0, %v8015
      %v8017 = vpop.f32.mrb[0].mxu0
      %v8018 = vpop.f32.mrb[0].mxu0
      %v8019 = vadd.f32 0.0, %v8018
      %v8020 = vpop.f32.mrb[0].mxu0
      %8021 = vmatprep.mubr.bf16.mxu0 0
      %8022 = vmatmul.mubr.bf16.gmra.mrb[0].mxu0 %v7888
      %v8023 = vpop.f32.mrb[0].mxu0
      %v8024 = vadd.f32 0.0, %v8023
      %v8025 = vpop.f32.mrb[0].mxu0
      %v8026 = vpop.f32.mrb[0].mxu0
      %v8027 = vadd.f32 0.0, %v8026
      %v8028 = vpop.f32.mrb[0].mxu0
      %8029 = vmatprep.mubr.bf16.mxu0 0
      %8030 = vmatmul.mubr.bf16.gmra.mrb[0].mxu0 %v7891
      %v8031 = vpop.f32.mrb[0].mxu0
      %v8032 = vadd.f32 0.0, %v8031
      %v8033 = vpop.f32.mrb[0].mxu0
      %v8034 = vpop.f32.mrb[0].mxu0
      %v8035 = vadd.f32 0.0, %v8034
      %v8036 = vpop.f32.mrb[0].mxu0
      %8037 = vmatprep.mubr.bf16.mxu0 0
      %8038 = vmatmul.mubr.bf16.gmra.mrb[0].mxu0 %v7894
      %v8039 = vpop.f32.mrb[0].mxu0
      %v8040 = vadd.f32 0.0, %v8039
      %v8041 = vpop.f32.mrb[0].mxu0
      %v8042 = vpop.f32.mrb[0].mxu0
      %v8043 = vadd.f32 0.0, %v8042
      %v8044 = vpop.f32.mrb[0].mxu0
      %8045 = vmatprep.mubr.bf16.mxu0 0
      %8046 = vmatmul.mubr.bf16.gmra.mrb[0].mxu0 %v7897
      %v8047 = vpop.f32.mrb[0].mxu0
      %v8048 = vadd.f32 0.0, %v8047
      %v8049 = vpop.f32.mrb[0].mxu0
      %v8050 = vpop.f32.mrb[0].mxu0
      %v8051 = vadd.f32 0.0, %v8050
      %v8052 = vpop.f32.mrb[0].mxu0
      %8053 = vmatprep.mubr.bf16.mxu0 0
      %8054 = vmatmul.mubr.bf16.gmra.mrb[0].mxu0 %v7900
      %v8055 = vpop.f32.mrb[0].mxu0
      %v8056 = vadd.f32 0.0, %v8055
      %v8057 = vpop.f32.mrb[0].mxu0
      %v8058 = vpop.f32.mrb[0].mxu0
      %v8059 = vadd.f32 0.0, %v8058
      %v8060 = vpop.f32.mrb[0].mxu0
      %8061 = vmatprep.mubr.bf16.mxu0 0
      %8062 = vmatmul.mubr.bf16.gmra.mrb[0].mxu0 %v7903
      %v8063 = vpop.f32.mrb[0].mxu0
      %v8064 = vadd.f32 0.0, %v8063
      %v8065 = vpop.f32.mrb[0].mxu0
      %v8066 = vpop.f32.mrb[0].mxu0
      %v8067 = vadd.f32 0.0, %v8066
      %v8068 = vpop.f32.mrb[0].mxu0
      %8069 = vmatprep.mubr.bf16.mxu0 0
      %8070 = vmatmul.mubr.bf16.gmra.mrb[0].mxu0 %v7906
      %v8071 = vpop.f32.mrb[0].mxu0
      %v8072 = vadd.f32 0.0, %v8071
      %v8073 = vpop.f32.mrb[0].mxu0
      %v8074 = vpop.f32.mrb[0].mxu0
      %v8075 = vadd.f32 0.0, %v8074
      %v8076 = vpop.f32.mrb[0].mxu0
      %8077 = vmatprep.mubr.bf16.mxu0 0
      %8078 = vmatmul.mubr.bf16.gmra.mrb[0].mxu0 %v7909
      %v8079 = vpop.f32.mrb[0].mxu0
      %v8080 = vadd.f32 0.0, %v8079
      %v8081 = vpop.f32.mrb[0].mxu0
      %v8082 = vpop.f32.mrb[0].mxu0
      %v8083 = vadd.f32 0.0, %v8082
      %v8084 = vpop.f32.mrb[0].mxu0
      %8085 = vmatprep.mubr.bf16.mxu0 0
      %8086 = vmatmul.mubr.bf16.gmra.mrb[0].mxu0 %v7912
      %v8087 = vpop.f32.mrb[0].mxu0
      %v8088 = vadd.f32 0.0, %v8087
      %v8089 = vpop.f32.mrb[0].mxu0
      %v8090 = vpop.f32.mrb[0].mxu0
      %v8091 = vadd.f32 0.0, %v8090
      %v8092 = vpop.f32.mrb[0].mxu0
      %8093 = vdwg.mxu0
      %v8094 = vadd.f32 %v7822, %v7952
      %v8095 = vadd.f32 %v7823, %v7955
      %v8096 = vadd.f32 %v7824, %v7960
      %v8097 = vadd.f32 %v7825, %v7963
      %v8098 = vadd.f32 %v7826, %v7968
      %v8099 = vadd.f32 %v7827, %v7971
      %v8100 = vadd.f32 %v7828, %v7976
      %v8101 = vadd.f32 %v7829, %v7979
      %v8102 = vadd.f32 %v7830, %v7984
      %v8103 = vadd.f32 %v7831, %v7987
      %v8104 = vadd.f32 %v7832, %v7992
      %v8105 = vadd.f32 %v7833, %v7995
      %v8106 = vadd.f32 %v7834, %v8000
      %v8107 = vadd.f32 %v7835, %v8003
      %v8108 = vadd.f32 %v7836, %v8008
      %v8109 = vadd.f32 %v7837, %v8011
      %v8110 = vadd.f32 %v7838, %v8016
      %v8111 = vadd.f32 %v7839, %v8019
      %v8112 = vadd.f32 %v7840, %v8024
      %v8113 = vadd.f32 %v7841, %v8027
      %v8114 = vadd.f32 %v7842, %v8032
      %v8115 = vadd.f32 %v7843, %v8035
      %v8116 = vadd.f32 %v7844, %v8040
      %v8117 = vadd.f32 %v7845, %v8043
      %v8118 = vadd.f32 %v7846, %v8048
      %v8119 = vadd.f32 %v7847, %v8051
      %v8120 = vadd.f32 %v7848, %v8056
      %v8121 = vadd.f32 %v7849, %v8059
      %v8122 = vadd.f32 %v7850, %v8064
      %v8123 = vadd.f32 %v7851, %v8067
      %v8124 = vadd.f32 %v7852, %v8072
      %v8125 = vadd.f32 %v7853, %v8075
      %v8126 = vadd.f32 %v7854, %v8080
      %v8127 = vadd.f32 %v7855, %v8083
      %v8128 = vadd.f32 %v7856, %v8088
      %v8129 = vadd.f32 %v7857, %v8091
      %8130 = vst.msk [vmem:[#allocation4] sm:$0xff] %vm361, %v8094
      %8131 = vst.msk [vmem:[#allocation4 + $0x8] sm:$0xff] %vm361, %v8095
      %8132 = vst.msk [vmem:[#allocation4 + $0x10] sm:$0xff] %vm361, %v8096
      %8133 = vst.msk [vmem:[#allocation4 + $0x18] sm:$0xff] %vm361, %v8097
      %8134 = vst.msk [vmem:[#allocation4 + $0x20] sm:$0xff] %vm361, %v8098
      %8135 = vst.msk [vmem:[#allocation4 + $0x28] sm:$0xff] %vm361, %v8099
      %8136 = vst.msk [vmem:[#allocation4 + $0x30] sm:$0xff] %vm361, %v8100
      %8137 = vst.msk [vmem:[#allocation4 + $0x38] sm:$0xff] %vm361, %v8101
      %8138 = vst.msk [vmem:[#allocation4 + $0x40] sm:$0xff] %vm361, %v8102
      %8139 = vst.msk [vmem:[#allocation4 + $0x48] sm:$0xff] %vm361, %v8103
      %8140 = vst.msk [vmem:[#allocation4 + $0x50] sm:$0xff] %vm361, %v8104
      %8141 = vst.msk [vmem:[#allocation4 + $0x58] sm:$0xff] %vm361, %v8105
      %8142 = vst.msk [vmem:[#allocation4 + $0x60] sm:$0xff] %vm361, %v8106
      %8143 = vst.msk [vmem:[#allocation4 + $0x68] sm:$0xff] %vm361, %v8107
      %8144 = vst.msk [vmem:[#allocation4 + $0x70] sm:$0xff] %vm361, %v8108
      %8145 = vst.msk [vmem:[#allocation4 + $0x78] sm:$0xff] %vm361, %v8109
      %8146 = vst.msk [vmem:[#allocation4 + $0x80] sm:$0xff] %vm361, %v8110
      %8147 = vst.msk [vmem:[#allocation4 + $0x88] sm:$0xff] %vm361, %v8111
      %8148 = vst.msk [vmem:[#allocation4 + $0x90] sm:$0xff] %vm361, %v8112
      %8149 = vst.msk [vmem:[#allocation4 + $0x98] sm:$0xff] %vm361, %v8113
      %8150 = vst.msk [vmem:[#allocation4 + $0xa0] sm:$0xff] %vm361, %v8114
      %8151 = vst.msk [vmem:[#allocation4 + $0xa8] sm:$0xff] %vm361, %v8115
      %8152 = vst.msk [vmem:[#allocation4 + $0xb0] sm:$0xff] %vm361, %v8116
      %8153 = vst.msk [vmem:[#allocation4 + $0xb8] sm:$0xff] %vm361, %v8117
      %8154 = vst.msk [vmem:[#allocation4 + $0xc0] sm:$0xff] %vm361, %v8118
      %8155 = vst.msk [vmem:[#allocation4 + $0xc8] sm:$0xff] %vm361, %v8119
      %8156 = vst.msk [vmem:[#allocation4 + $0xd0] sm:$0xff] %vm361, %v8120
      %8157 = vst.msk [vmem:[#allocation4 + $0xd8] sm:$0xff] %vm361, %v8121
      %8158 = vst.msk [vmem:[#allocation4 + $0xe0] sm:$0xff] %vm361, %v8122
      %8159 = vst.msk [vmem:[#allocation4 + $0xe8] sm:$0xff] %vm361, %v8123
      %8160 = vst.msk [vmem:[#allocation4 + $0xf0] sm:$0xff] %vm361, %v8124
      %8161 = vst.msk [vmem:[#allocation4 + $0xf8] sm:$0xff] %vm361, %v8125
      %8162 = vst.msk [vmem:[#allocation4 + $0x100] sm:$0xff] %vm361, %v8126
      %8163 = vst.msk [vmem:[#allocation4 + $0x108] sm:$0xff] %vm361, %v8127
      %8164 = vst.msk [vmem:[#allocation4 + $0x110] sm:$0xff] %vm361, %v8128
      %8165 = vst.msk [vmem:[#allocation4 + $0x118] sm:$0xff] %vm361, %v8129
      %v8166 = vld [vmem:[#allocation4] sm:$0xff]
      %v8167 = vld [vmem:[#allocation4 + $0x8] sm:$0xff]
      %v8168 = vld [vmem:[#allocation4 + $0x10] sm:$0xff]
      %v8169 = vld [vmem:[#allocation4 + $0x18] sm:$0xff]
      %v8170 = vld [vmem:[#allocation4 + $0x20] sm:$0xff]
      %v8171 = vld [vmem:[#allocation4 + $0x28] sm:$0xff]
      %v8172 = vld [vmem:[#allocation4 + $0x30] sm:$0xff]
      %v8173 = vld [vmem:[#allocation4 + $0x38] sm:$0xff]
      %v8174 = vld [vmem:[#allocation4 + $0x40] sm:$0xff]
      %v8175 = vld [vmem:[#allocation4 + $0x48] sm:$0xff]
      %v8176 = vld [vmem:[#allocation4 + $0x50] sm:$0xff]
      %v8177 = vld [vmem:[#allocation4 + $0x58] sm:$0xff]
      %v8178 = vld [vmem:[#allocation4 + $0x60] sm:$0xff]
      %v8179 = vld [vmem:[#allocation4 + $0x68] sm:$0xff]
      %v8180 = vld [vmem:[#allocation4 + $0x70] sm:$0xff]
      %v8181 = vld [vmem:[#allocation4 + $0x78] sm:$0xff]
      %v8182 = vld [vmem:[#allocation4 + $0x80] sm:$0xff]
      %v8183 = vld [vmem:[#allocation4 + $0x88] sm:$0xff]
      %v8184 = vld [vmem:[#allocation4 + $0x90] sm:$0xff]
      %v8185 = vld [vmem:[#allocation4 + $0x98] sm:$0xff]
      %v8186 = vld [vmem:[#allocation4 + $0xa0] sm:$0xff]
      %v8187 = vld [vmem:[#allocation4 + $0xa8] sm:$0xff]
      %v8188 = vld [vmem:[#allocation4 + $0xb0] sm:$0xff]
      %v8189 = vld [vmem:[#allocation4 + $0xb8] sm:$0xff]
      %v8190 = vld [vmem:[#allocation4 + $0xc0] sm:$0xff]
      %v8191 = vld [vmem:[#allocation4 + $0xc8] sm:$0xff]
      %v8192 = vld [vmem:[#allocation4 + $0xd0] sm:$0xff]
      %v8193 = vld [vmem:[#allocation4 + $0xd8] sm:$0xff]
      %v8194 = vld [vmem:[#allocation4 + $0xe0] sm:$0xff]
      %v8195 = vld [vmem:[#allocation4 + $0xe8] sm:$0xff]
      %v8196 = vld [vmem:[#allocation4 + $0xf0] sm:$0xff]
      %v8197 = vld [vmem:[#allocation4 + $0xf8] sm:$0xff]
      %v8198 = vld [vmem:[#allocation4 + $0x100] sm:$0xff]
      %v8199 = vld [vmem:[#allocation4 + $0x108] sm:$0xff]
      %v8200 = vld [vmem:[#allocation4 + $0x110] sm:$0xff]
      %v8201 = vld [vmem:[#allocation4 + $0x118] sm:$0xff]
      %v8202 = vld [vmem:[%s1] sm:$0xff]
      %v8203 = vld [vmem:[%s1 + $0x8] sm:$0xff]
      %v8204 = vld [vmem:[%s1 + $0x10] sm:$0xff]
      %v8205 = vld [vmem:[%s1 + $0x18] sm:$0xff]
      %v8206 = vld [vmem:[%s1 + $0x20] sm:$0xff]
      %v8207 = vld [vmem:[%s1 + $0x28] sm:$0xff]
      %v8208 = vld [vmem:[%s1 + $0x30] sm:$0xff]
      %v8209 = vld [vmem:[%s1 + $0x38] sm:$0xff]
      %v8210 = vld [vmem:[%s1 + $0x40] sm:$0xff]
      %v8211 = vld [vmem:[%s1 + $0x48] sm:$0xff]
      %v8212 = vld [vmem:[%s1 + $0x50] sm:$0xff]
      %v8213 = vld [vmem:[%s1 + $0x58] sm:$0xff]
      %v8214 = vld [vmem:[%s1 + $0x60] sm:$0xff]
      %v8215 = vld [vmem:[%s1 + $0x68] sm:$0xff]
      %v8216 = vld [vmem:[%s1 + $0x70] sm:$0xff]
      %v8217 = vld [vmem:[%s1 + $0x78] sm:$0xff]
      %v8218 = vld [vmem:[%s1 + $0x80] sm:$0xff]
      %v8219 = vld [vmem:[%s1 + $0x88] sm:$0xff]
      %v8220 = vld [vmem:[%s1 + $0x90] sm:$0xff]
      %v8221 = vld [vmem:[%s1 + $0x98] sm:$0xff]
      %v8222 = vld [vmem:[%s1 + $0xa0] sm:$0xff]
      %v8223 = vld [vmem:[%s1 + $0xa8] sm:$0xff]
      %v8224 = vld [vmem:[%s1 + $0xb0] sm:$0xff]
      %v8225 = vld [vmem:[%s1 + $0xb8] sm:$0xff]
      %v8226 = vld [vmem:[%s1 + $0xc0] sm:$0xff]
      %v8227 = vld [vmem:[%s1 + $0xc8] sm:$0xff]
      %v8228 = vld [vmem:[%s1 + $0xd0] sm:$0xff]
      %v8229 = vld [vmem:[%s1 + $0xd8] sm:$0xff]
      %v8230 = vld [vmem:[%s1 + $0xe0] sm:$0xff]
      %v8231 = vld [vmem:[%s1 + $0xe8] sm:$0xff]
      %v8232 = vld [vmem:[%s1 + $0xf0] sm:$0xff]
      %v8233 = vld [vmem:[%s1 + $0xf8] sm:$0xff]
      %v8234 = vld [vmem:[%s1 + $0x100] sm:$0xff]
      %v8235 = vld [vmem:[%s1 + $0x108] sm:$0xff]
      %v8236 = vld [vmem:[%s1 + $0x110] sm:$0xff]
      %v8237 = vld [vmem:[%s1 + $0x118] sm:$0xff]
      %8239 = vset.pattern.permute.xlu0 0
      %8240 = vperm.xlu0 %8239, %v8202
      %v8241 = vpop.permute.xlu0 %8240
      %8244 = vset.pattern.permute.xlu0 0
      %8245 = vperm.xlu0 %8244, %v8203
      %v8246 = vpop.permute.xlu0 %8245
      %8249 = vset.pattern.permute.xlu0 0
      %8250 = vperm.xlu0 %8249, %v8204
      %v8251 = vpop.permute.xlu0 %8250
      %8254 = vset.pattern.permute.xlu0 0
      %8255 = vperm.xlu0 %8254, %v8205
      %v8256 = vpop.permute.xlu0 %8255
      %8259 = vset.pattern.permute.xlu0 0
      %8260 = vperm.xlu0 %8259, %v8206
      %v8261 = vpop.permute.xlu0 %8260
      %8264 = vset.pattern.permute.xlu0 0
      %8265 = vperm.xlu0 %8264, %v8207
      %v8266 = vpop.permute.xlu0 %8265
      %8269 = vset.pattern.permute.xlu0 0
      %8270 = vperm.xlu0 %8269, %v8208
      %v8271 = vpop.permute.xlu0 %8270
      %8274 = vset.pattern.permute.xlu0 0
      %8275 = vperm.xlu0 %8274, %v8209
      %v8276 = vpop.permute.xlu0 %8275
      %8279 = vset.pattern.permute.xlu0 0
      %8280 = vperm.xlu0 %8279, %v8210
      %v8281 = vpop.permute.xlu0 %8280
      %8284 = vset.pattern.permute.xlu0 0
      %8285 = vperm.xlu0 %8284, %v8211
      %v8286 = vpop.permute.xlu0 %8285
      %8289 = vset.pattern.permute.xlu0 0
      %8290 = vperm.xlu0 %8289, %v8212
      %v8291 = vpop.permute.xlu0 %8290
      %8294 = vset.pattern.permute.xlu0 0
      %8295 = vperm.xlu0 %8294, %v8213
      %v8296 = vpop.permute.xlu0 %8295
      %8299 = vset.pattern.permute.xlu0 0
      %8300 = vperm.xlu0 %8299, %v8214
      %v8301 = vpop.permute.xlu0 %8300
      %8304 = vset.pattern.permute.xlu0 0
      %8305 = vperm.xlu0 %8304, %v8215
      %v8306 = vpop.permute.xlu0 %8305
      %8309 = vset.pattern.permute.xlu0 0
      %8310 = vperm.xlu0 %8309, %v8216
      %v8311 = vpop.permute.xlu0 %8310
      %8314 = vset.pattern.permute.xlu0 0
      %8315 = vperm.xlu0 %8314, %v8217
      %v8316 = vpop.permute.xlu0 %8315
      %8319 = vset.pattern.permute.xlu0 0
      %8320 = vperm.xlu0 %8319, %v8218
      %v8321 = vpop.permute.xlu0 %8320
      %8324 = vset.pattern.permute.xlu0 0
      %8325 = vperm.xlu0 %8324, %v8219
      %v8326 = vpop.permute.xlu0 %8325
      %8329 = vset.pattern.permute.xlu0 0
      %8330 = vperm.xlu0 %8329, %v8220
      %v8331 = vpop.permute.xlu0 %8330
      %8334 = vset.pattern.permute.xlu0 0
      %8335 = vperm.xlu0 %8334, %v8221
      %v8336 = vpop.permute.xlu0 %8335
      %8339 = vset.pattern.permute.xlu0 0
      %8340 = vperm.xlu0 %8339, %v8222
      %v8341 = vpop.permute.xlu0 %8340
      %8344 = vset.pattern.permute.xlu0 0
      %8345 = vperm.xlu0 %8344, %v8223
      %v8346 = vpop.permute.xlu0 %8345
      %8349 = vset.pattern.permute.xlu0 0
      %8350 = vperm.xlu0 %8349, %v8224
      %v8351 = vpop.permute.xlu0 %8350
      %8354 = vset.pattern.permute.xlu0 0
      %8355 = vperm.xlu0 %8354, %v8225
      %v8356 = vpop.permute.xlu0 %8355
      %8359 = vset.pattern.permute.xlu0 0
      %8360 = vperm.xlu0 %8359, %v8226
      %v8361 = vpop.permute.xlu0 %8360
      %8364 = vset.pattern.permute.xlu0 0
      %8365 = vperm.xlu0 %8364, %v8227
      %v8366 = vpop.permute.xlu0 %8365
      %8369 = vset.pattern.permute.xlu0 0
      %8370 = vperm.xlu0 %8369, %v8228
      %v8371 = vpop.permute.xlu0 %8370
      %8374 = vset.pattern.permute.xlu0 0
      %8375 = vperm.xlu0 %8374, %v8229
      %v8376 = vpop.permute.xlu0 %8375
      %8379 = vset.pattern.permute.xlu0 0
      %8380 = vperm.xlu0 %8379, %v8230
      %v8381 = vpop.permute.xlu0 %8380
      %8384 = vset.pattern.permute.xlu0 0
      %8385 = vperm.xlu0 %8384, %v8231
      %v8386 = vpop.permute.xlu0 %8385
      %8389 = vset.pattern.permute.xlu0 0
      %8390 = vperm.xlu0 %8389, %v8232
      %v8391 = vpop.permute.xlu0 %8390
      %8394 = vset.pattern.permute.xlu0 0
      %8395 = vperm.xlu0 %8394, %v8233
      %v8396 = vpop.permute.xlu0 %8395
      %8399 = vset.pattern.permute.xlu0 0
      %8400 = vperm.xlu0 %8399, %v8234
      %v8401 = vpop.permute.xlu0 %8400
      %8404 = vset.pattern.permute.xlu0 0
      %8405 = vperm.xlu0 %8404, %v8235
      %v8406 = vpop.permute.xlu0 %8405
      %8409 = vset.pattern.permute.xlu0 0
      %8410 = vperm.xlu0 %8409, %v8236
      %v8411 = vpop.permute.xlu0 %8410
      %8414 = vset.pattern.permute.xlu0 0
      %8415 = vperm.xlu0 %8414, %v8237
      %v8416 = vpop.permute.xlu0 %8415
      %v8418 = vmul.f32 %v8166, %v8241
      %v8419 = vmul.f32 %v8167, %v8246
      %v8420 = vmul.f32 %v8168, %v8251
      %v8421 = vmul.f32 %v8169, %v8256
      %v8422 = vmul.f32 %v8170, %v8261
      %v8423 = vmul.f32 %v8171, %v8266
      %v8424 = vmul.f32 %v8172, %v8271
      %v8425 = vmul.f32 %v8173, %v8276
      %v8426 = vmul.f32 %v8174, %v8281
      %v8427 = vmul.f32 %v8175, %v8286
      %v8428 = vmul.f32 %v8176, %v8291
      %v8429 = vmul.f32 %v8177, %v8296
      %v8430 = vmul.f32 %v8178, %v8301
      %v8431 = vmul.f32 %v8179, %v8306
      %v8432 = vmul.f32 %v8180, %v8311
      %v8433 = vmul.f32 %v8181, %v8316
      %v8434 = vmul.f32 %v8182, %v8321
      %v8435 = vmul.f32 %v8183, %v8326
      %v8436 = vmul.f32 %v8184, %v8331
      %v8437 = vmul.f32 %v8185, %v8336
      %v8438 = vmul.f32 %v8186, %v8341
      %v8439 = vmul.f32 %v8187, %v8346
      %v8440 = vmul.f32 %v8188, %v8351
      %v8441 = vmul.f32 %v8189, %v8356
      %v8442 = vmul.f32 %v8190, %v8361
      %v8443 = vmul.f32 %v8191, %v8366
      %v8444 = vmul.f32 %v8192, %v8371
      %v8445 = vmul.f32 %v8193, %v8376
      %v8446 = vmul.f32 %v8194, %v8381
      %v8447 = vmul.f32 %v8195, %v8386
      %v8448 = vmul.f32 %v8196, %v8391
      %v8449 = vmul.f32 %v8197, %v8396
      %v8450 = vmul.f32 %v8198, %v8401
      %v8451 = vmul.f32 %v8199, %v8406
      %v8452 = vmul.f32 %v8200, %v8411
      %v8453 = vmul.f32 %v8201, %v8416
      %v8454 = vsel %vm361, %v8418, 0.0
      %v8455 = vsel %vm361, %v8419, 0.0
      %v8456 = vadd.f32 %v8454, %v8455
      %v8457 = vsel %vm361, %v8420, 0.0
      %v8458 = vadd.f32 %v8456, %v8457
      %v8459 = vsel %vm361, %v8421, 0.0
      %v8460 = vadd.f32 %v8458, %v8459
      %v8461 = vsel %vm361, %v8422, 0.0
      %v8462 = vadd.f32 %v8460, %v8461
      %v8463 = vsel %vm361, %v8423, 0.0
      %v8464 = vadd.f32 %v8462, %v8463
      %v8465 = vsel %vm361, %v8424, 0.0
      %v8466 = vadd.f32 %v8464, %v8465
      %v8467 = vsel %vm361, %v8425, 0.0
      %v8468 = vadd.f32 %v8466, %v8467
      %v8469 = vsel %vm361, %v8426, 0.0
      %v8470 = vadd.f32 %v8468, %v8469
      %v8471 = vsel %vm361, %v8427, 0.0
      %v8472 = vadd.f32 %v8470, %v8471
      %v8473 = vsel %vm361, %v8428, 0.0
      %v8474 = vadd.f32 %v8472, %v8473
      %v8475 = vsel %vm361, %v8429, 0.0
      %v8476 = vadd.f32 %v8474, %v8475
      %v8477 = vsel %vm361, %v8430, 0.0
      %v8478 = vadd.f32 %v8476, %v8477
      %v8479 = vsel %vm361, %v8431, 0.0
      %v8480 = vadd.f32 %v8478, %v8479
      %v8481 = vsel %vm361, %v8432, 0.0
      %v8482 = vadd.f32 %v8480, %v8481
      %v8483 = vsel %vm361, %v8433, 0.0
      %v8484 = vadd.f32 %v8482, %v8483
      %v8485 = vsel %vm361, %v8434, 0.0
      %v8486 = vadd.f32 %v8484, %v8485
      %v8487 = vsel %vm361, %v8435, 0.0
      %v8488 = vadd.f32 %v8486, %v8487
      %v8489 = vsel %vm361, %v8436, 0.0
      %v8490 = vadd.f32 %v8488, %v8489
      %v8491 = vsel %vm361, %v8437, 0.0
      %v8492 = vadd.f32 %v8490, %v8491
      %v8493 = vsel %vm361, %v8438, 0.0
      %v8494 = vadd.f32 %v8492, %v8493
      %v8495 = vsel %vm361, %v8439, 0.0
      %v8496 = vadd.f32 %v8494, %v8495
      %v8497 = vsel %vm361, %v8440, 0.0
      %v8498 = vadd.f32 %v8496, %v8497
      %v8499 = vsel %vm361, %v8441, 0.0
      %v8500 = vadd.f32 %v8498, %v8499
      %v8501 = vsel %vm361, %v8442, 0.0
      %v8502 = vadd.f32 %v8500, %v8501
      %v8503 = vsel %vm361, %v8443, 0.0
      %v8504 = vadd.f32 %v8502, %v8503
      %v8505 = vsel %vm361, %v8444, 0.0
      %v8506 = vadd.f32 %v8504, %v8505
      %v8507 = vsel %vm361, %v8445, 0.0
      %v8508 = vadd.f32 %v8506, %v8507
      %v8509 = vsel %vm361, %v8446, 0.0
      %v8510 = vadd.f32 %v8508, %v8509
      %v8511 = vsel %vm361, %v8447, 0.0
      %v8512 = vadd.f32 %v8510, %v8511
      %v8513 = vsel %vm361, %v8448, 0.0
      %v8514 = vadd.f32 %v8512, %v8513
      %v8515 = vsel %vm361, %v8449, 0.0
      %v8516 = vadd.f32 %v8514, %v8515
      %v8517 = vsel %vm361, %v8450, 0.0
      %v8518 = vadd.f32 %v8516, %v8517
      %v8519 = vsel %vm361, %v8451, 0.0
      %v8520 = vadd.f32 %v8518, %v8519
      %v8521 = vsel %vm361, %v8452, 0.0
      %v8522 = vadd.f32 %v8520, %v8521
      %v8523 = vsel %vm361, %v8453, 0.0
      %v8524 = vadd.f32 %v8522, %v8523
      %v8525 = vrot.slane %v8524, 4
      %v8526 = vadd.f32 %v8524, %v8525
      %v8527 = vrot.slane %v8526, 2
      %v8528 = vadd.f32 %v8526, %v8527
      %v8529 = vrot.slane %v8528, 1
      %v8530 = vadd.f32 %v8528, %v8529
      %v8531 = vrcp.pop 256.0
      %v8532 = vmul.f32 %v8530, %v8531
      %v8533 = vld [vmem:[%s5] sm:$0x1]
      %v8534 = vadd.f32 %v8532, %v8533
      %v8535 = vld [vmem:[%s6] sm:$0xf]
      %v8536 = vld [vmem:[%s7] sm:$0x1]
      %v8538 = vsel %vm361, %v8534, 0
      %vm8540 = vcmask 1043456
      %v8542 = vsel %vm8540, %v8535, 0
      %8544 = vmatprep.subr.mxu0 0.0
      %8545 = vmatpush1.msra.mxu0 %v8542
      %8546 = vmatprep.subr.mxu0 0.0
      %8547 = vmatpush1.msra.mxu0 0.0
      %8548 = vmatprep.subr.mxu0 0.0
      %8549 = vmatpush1.msra.mxu0 0.0
      %8550 = vmatprep.subr.mxu0 0.0
      %8551 = vmatpush1.msra.mxu0 0.0
      %8552 = vmatprep.subr.mxu0 0.0
      %8553 = vmatpush1.msra.mxu0 0.0
      %8554 = vmatprep.subr.mxu0 0.0
      %8555 = vmatpush1.msra.mxu0 0.0
      %8556 = vmatprep.subr.mxu0 0.0
      %8557 = vmatpush1.msra.mxu0 0.0
      %8558 = vmatprep.subr.mxu0 0.0
      %8559 = vmatpush1.msra.mxu0 0.0
      %8560 = vmatprep.subr.mxu0 0.0
      %8561 = vmatpush1.msra.mxu0 0.0
      %8562 = vmatprep.subr.mxu0 0.0
      %8563 = vmatpush1.msra.mxu0 0.0
      %8564 = vmatprep.subr.mxu0 0.0
      %8565 = vmatpush1.msra.mxu0 0.0
      %8566 = vmatprep.subr.mxu0 0.0
      %8567 = vmatpush1.msra.mxu0 0.0
      %8568 = vmatprep.subr.mxu0 0.0
      %8569 = vmatpush1.msra.mxu0 0.0
      %8570 = vmatprep.subr.mxu0 0.0
      %8571 = vmatpush1.msra.mxu0 0.0
      %8572 = vmatprep.subr.mxu0 0.0
      %8573 = vmatpush1.msra.mxu0 0.0
      %8574 = vmatprep.subr.mxu0 0.0
      %8575 = vmatpush1.msra.mxu0 0.0
      %8576 = vmatprep.subr.mxu0 0.0
      %8577 = vmatpush1.msra.mxu0 0.0
      %8578 = vmatprep.subr.mxu0 0.0
      %8579 = vmatpush1.msra.mxu0 0.0
      %8580 = vmatprep.subr.mxu0 0.0
      %8581 = vmatpush1.msra.mxu0 0.0
      %8582 = vmatprep.subr.mxu0 0.0
      %8583 = vmatpush1.msra.mxu0 0.0
      %8584 = vmatprep.subr.mxu0 0.0
      %8585 = vmatpush1.msra.mxu0 0.0
      %8586 = vmatprep.subr.mxu0 0.0
      %8587 = vmatpush1.msra.mxu0 0.0
      %8588 = vmatprep.subr.mxu0 0.0
      %8589 = vmatpush1.msra.mxu0 0.0
      %8590 = vmatprep.subr.mxu0 0.0
      %8591 = vmatpush1.msra.mxu0 0.0
      %8592 = vmatprep.subr.mxu0 0.0
      %8593 = vmatpush1.msra.mxu0 0.0
      %8594 = vmatprep.subr.mxu0 0.0
      %8595 = vmatpush1.msra.mxu0 0.0
      %8596 = vmatprep.subr.mxu0 0.0
      %8597 = vmatpush1.msra.mxu0 0.0
      %8598 = vmatprep.subr.mxu0 0.0
      %8599 = vmatpush1.msra.mxu0 0.0
      %8600 = vmatprep.subr.mxu0 0.0
      %8601 = vmatpush1.msra.mxu0 0.0
      %8602 = vmatprep.subr.mxu0 0.0
      %8603 = vmatpush1.msra.mxu0 0.0
      %8604 = vmatprep.subr.mxu0 0.0
      %8605 = vmatpush1.msra.mxu0 0.0
      %8606 = vmatprep.subr.mxu0 0.0
      %8607 = vmatpush1.msra.mxu0 0.0
      %8608 = vmatprep.mubr.f32.mxu0 0.0
      %8609 = vmatmul.mubr.f32.gmra.mrb[0].mxu0 %v8538
      %v8610 = vpop.f32.mrb[0].mxu0
      %v8611 = vadd.f32 %v8536, %v8610
      %v8612 = vpop.f32.mrb[0].mxu0
      %8613 = vdwg.mxu0
      %v8614 = vmax.f32 %v8611, 0.0
      %v8615 = vld [vmem:[%s8] sm:$0xff]
      %v8616 = vld [vmem:[%s8 + $0x8] sm:$0xff]
      %v8617 = vld [vmem:[%s9] sm:$0x1]
      %vm8618 = vcmask 130048
      %v8620 = vsel %vm8618, %v8614, 0
      %8622 = vmatprep.subr.mxu0 0.0
      %8623 = vmatpush1.msra.mxu0 %v8615
      %8624 = vmatprep.subr.mxu0 0.0
      %8625 = vmatpush1.msra.mxu0 %v8616
      %8626 = vmatprep.subr.mxu0 0.0
      %8627 = vmatpush1.msra.mxu0 0.0
      %8628 = vmatprep.subr.mxu0 0.0
      %8629 = vmatpush1.msra.mxu0 0.0
      %8630 = vmatprep.subr.mxu0 0.0
      %8631 = vmatpush1.msra.mxu0 0.0
      %8632 = vmatprep.subr.mxu0 0.0
      %8633 = vmatpush1.msra.mxu0 0.0
      %8634 = vmatprep.subr.mxu0 0.0
      %8635 = vmatpush1.msra.mxu0 0.0
      %8636 = vmatprep.subr.mxu0 0.0
      %8637 = vmatpush1.msra.mxu0 0.0
      %8638 = vmatprep.subr.mxu0 0.0
      %8639 = vmatpush1.msra.mxu0 0.0
      %8640 = vmatprep.subr.mxu0 0.0
      %8641 = vmatpush1.msra.mxu0 0.0
      %8642 = vmatprep.subr.mxu0 0.0
      %8643 = vmatpush1.msra.mxu0 0.0
      %8644 = vmatprep.subr.mxu0 0.0
      %8645 = vmatpush1.msra.mxu0 0.0
      %8646 = vmatprep.subr.mxu0 0.0
      %8647 = vmatpush1.msra.mxu0 0.0
      %8648 = vmatprep.subr.mxu0 0.0
      %8649 = vmatpush1.msra.mxu0 0.0
      %8650 = vmatprep.subr.mxu0 0.0
      %8651 = vmatpush1.msra.mxu0 0.0
      %8652 = vmatprep.subr.mxu0 0.0
      %8653 = vmatpush1.msra.mxu0 0.0
      %8654 = vmatprep.subr.mxu0 0.0
      %8655 = vmatpush1.msra.mxu0 0.0
      %8656 = vmatprep.subr.mxu0 0.0
      %8657 = vmatpush1.msra.mxu0 0.0
      %8658 = vmatprep.subr.mxu0 0.0
      %8659 = vmatpush1.msra.mxu0 0.0
      %8660 = vmatprep.subr.mxu0 0.0
      %8661 = vmatpush1.msra.mxu0 0.0
      %8662 = vmatprep.subr.mxu0 0.0
      %8663 = vmatpush1.msra.mxu0 0.0
      %8664 = vmatprep.subr.mxu0 0.0
      %8665 = vmatpush1.msra.mxu0 0.0
      %8666 = vmatprep.subr.mxu0 0.0
      %8667 = vmatpush1.msra.mxu0 0.0
      %8668 = vmatprep.subr.mxu0 0.0
      %8669 = vmatpush1.msra.mxu0 0.0
      %8670 = vmatprep.subr.mxu0 0.0
      %8671 = vmatpush1.msra.mxu0 0.0
      %8672 = vmatprep.subr.mxu0 0.0
      %8673 = vmatpush1.msra.mxu0 0.0
      %8674 = vmatprep.subr.mxu0 0.0
      %8675 = vmatpush1.msra.mxu0 0.0
      %8676 = vmatprep.subr.mxu0 0.0
      %8677 = vmatpush1.msra.mxu0 0.0
      %8678 = vmatprep.subr.mxu0 0.0
      %8679 = vmatpush1.msra.mxu0 0.0
      %8680 = vmatprep.subr.mxu0 0.0
      %8681 = vmatpush1.msra.mxu0 0.0
      %8682 = vmatprep.subr.mxu0 0.0
      %8683 = vmatpush1.msra.mxu0 0.0
      %8684 = vmatprep.subr.mxu0 0.0
      %8685 = vmatpush1.msra.mxu0 0.0
      %8686 = vmatprep.mubr.f32.mxu0 0.0
      %8687 = vmatmul.mubr.f32.gmra.mrb[0].mxu0 %v8620
      %v8688 = vpop.f32.mrb[0].mxu0
      %v8689 = vadd.f32 %v8617, %v8688
      %v8690 = vpop.f32.mrb[0].mxu0
      %8691 = vdwg.mxu0
      %v8692 = vxor.u32 %v8689, 2147483648
      %v8693 = vmul.f32 %v8692, 1.442695
      %v8694 = vpow.pop %v8693
      %v8695 = vadd.f32 %v8694, 1.0
      %v8696 = vrcp.pop %v8695
      %v8697 = vmul.f32 1.0, %v8696
      %v8698 = vld [vmem:[#allocation4] sm:$0xff]
      %v8699 = vld [vmem:[#allocation4 + $0x8] sm:$0xff]
      %v8701 = vlaneseq
      %v8702 = vshrl.u32 %v8701, 7
      %v8703 = vsub.s32 0, %v8702
      %v8704 = vrot.slane %v8533, %v8703
      %v8706 = vadd.f32 %v8698, %v8704
      %v8707 = vadd.f32 %v8699, %v8704
      %v8708 = vlaneseq
      %v8709 = vshrl.u32 %v8708, 7
      %v8710 = vsub.s32 0, %v8709
      %v8711 = vrot.slane %v8697, %v8710
      %v8712 = vmul.f32 %v8706, %v8711
      %v8713 = vmul.f32 %v8707, %v8711
      %v8714 = vld [vmem:[%s354] sm:$0xff]
      %v8715 = vld [vmem:[%s354 + $0x8] sm:$0xff]
      %v8716 = vadd.f32 %v8712, %v8714
      %v8717 = vadd.f32 %v8713, %v8715
      %v8718 = vmax.f32 %v8716, 0.0
      %v8719 = vmax.f32 %v8717, 0.0
      %8720 = vst.msk [vmem:[%s359] sm:$0xff] %vm361, %v8718
      %8721 = vst.msk [vmem:[%s359 + $0x8] sm:$0xff] %vm361, %v8719
      %v8722 = vld [vmem:[#allocation4 + $0x12] sm:$0xff]
      %v8723 = vld [vmem:[#allocation4 + $0x1a] sm:$0xff]
      %v8724 = vld [vmem:[%s5] sm:$0x1]
      %v8726 = vlaneseq
      %v8727 = vshrl.u32 %v8726, 7
      %v8728 = vsub.s32 0, %v8727
      %v8729 = vrot.slane %v8724, %v8728
      %v8731 = vadd.f32 %v8722, %v8729
      %v8732 = vadd.f32 %v8723, %v8729
      %v8733 = vmul.f32 %v8731, %v8711
      %v8734 = vmul.f32 %v8732, %v8711
      %v8735 = vld [vmem:[%s453] sm:$0xff]
      %v8736 = vld [vmem:[%s453 + $0x8] sm:$0xff]
      %v8737 = vadd.f32 %v8733, %v8735
      %v8738 = vadd.f32 %v8734, %v8736
      %v8739 = vmax.f32 %v8737, 0.0
      %v8740 = vmax.f32 %v8738, 0.0
      %s8741 = scalar_lea.vmem %s359, 16
      %8742 = vst.msk [vmem:[%s8741] sm:$0xff] %vm361, %v8739
      %8743 = vst.msk [vmem:[%s8741 + $0x8] sm:$0xff] %vm361, %v8740
      %v8744 = vld [vmem:[#allocation4 + $0x24] sm:$0xff]
      %v8745 = vld [vmem:[#allocation4 + $0x2c] sm:$0xff]
      %v8746 = vld [vmem:[%s5] sm:$0x1]
      %v8748 = vlaneseq
      %v8749 = vshrl.u32 %v8748, 7
      %v8750 = vsub.s32 0, %v8749
      %v8751 = vrot.slane %v8746, %v8750
      %v8753 = vadd.f32 %v8744, %v8751
      %v8754 = vadd.f32 %v8745, %v8751
      %v8755 = vmul.f32 %v8753, %v8711
      %v8756 = vmul.f32 %v8754, %v8711
      %v8757 = vld [vmem:[%s458] sm:$0xff]
      %v8758 = vld [vmem:[%s458 + $0x8] sm:$0xff]
      %v8759 = vadd.f32 %v8755, %v8757
      %v8760 = vadd.f32 %v8756, %v8758
      %v8761 = vmax.f32 %v8759, 0.0
      %v8762 = vmax.f32 %v8760, 0.0
      %s8763 = scalar_lea.vmem %s359, 32
      %8764 = vst.msk [vmem:[%s8763] sm:$0xff] %vm361, %v8761
      %8765 = vst.msk [vmem:[%s8763 + $0x8] sm:$0xff] %vm361, %v8762
      %v8766 = vld [vmem:[#allocation4 + $0x36] sm:$0xff]
      %v8767 = vld [vmem:[#allocation4 + $0x3e] sm:$0xff]
      %v8768 = vld [vmem:[%s5] sm:$0x1]
      %v8770 = vlaneseq
      %v8771 = vshrl.u32 %v8770, 7
      %v8772 = vsub.s32 0, %v8771
      %v8773 = vrot.slane %v8768, %v8772
      %v8775 = vadd.f32 %v8766, %v8773
      %v8776 = vadd.f32 %v8767, %v8773
      %v8777 = vmul.f32 %v8775, %v8711
      %v8778 = vmul.f32 %v8776, %v8711
      %v8779 = vld [vmem:[%s463] sm:$0xff]
      %v8780 = vld [vmem:[%s463 + $0x8] sm:$0xff]
      %v8781 = vadd.f32 %v8777, %v8779
      %v8782 = vadd.f32 %v8778, %v8780
      %v8783 = vmax.f32 %v8781, 0.0
      %v8784 = vmax.f32 %v8782, 0.0
      %s8785 = scalar_lea.vmem %s359, 48
      %8786 = vst.msk [vmem:[%s8785] sm:$0xff] %vm361, %v8783
      %8787 = vst.msk [vmem:[%s8785 + $0x8] sm:$0xff] %vm361, %v8784
      %v8788 = vld [vmem:[#allocation4 + $0x48] sm:$0xff]
      %v8789 = vld [vmem:[#allocation4 + $0x50] sm:$0xff]
      %v8790 = vld [vmem:[%s5] sm:$0x1]
      %v8792 = vlaneseq
      %v8793 = vshrl.u32 %v8792, 7
      %v8794 = vsub.s32 0, %v8793
      %v8795 = vrot.slane %v8790, %v8794
      %v8797 = vadd.f32 %v8788, %v8795
      %v8798 = vadd.f32 %v8789, %v8795
      %v8799 = vmul.f32 %v8797, %v8711
      %v8800 = vmul.f32 %v8798, %v8711
      %v8801 = vld [vmem:[%s468] sm:$0xff]
      %v8802 = vld [vmem:[%s468 + $0x8] sm:$0xff]
      %v8803 = vadd.f32 %v8799, %v8801
      %v8804 = vadd.f32 %v8800, %v8802
      %v8805 = vmax.f32 %v8803, 0.0
      %v8806 = vmax.f32 %v8804, 0.0
      %s8807 = scalar_lea.vmem %s359, 64
      %8808 = vst.msk [vmem:[%s8807] sm:$0xff] %vm361, %v8805
      %8809 = vst.msk [vmem:[%s8807 + $0x8] sm:$0xff] %vm361, %v8806
      %v8810 = vld [vmem:[#allocation4 + $0x5a] sm:$0xff]
      %v8811 = vld [vmem:[#allocation4 + $0x62] sm:$0xff]
      %v8812 = vld [vmem:[%s5] sm:$0x1]
      %v8814 = vlaneseq
      %v8815 = vshrl.u32 %v8814, 7
      %v8816 = vsub.s32 0, %v8815
      %v8817 = vrot.slane %v8812, %v8816
      %v8819 = vadd.f32 %v8810, %v8817
      %v8820 = vadd.f32 %v8811, %v8817
      %v8821 = vmul.f32 %v8819, %v8711
      %v8822 = vmul.f32 %v8820, %v8711
      %v8823 = vld [vmem:[%s473] sm:$0xff]
      %v8824 = vld [vmem:[%s473 + $0x8] sm:$0xff]
      %v8825 = vadd.f32 %v8821, %v8823
      %v8826 = vadd.f32 %v8822, %v8824
      %v8827 = vmax.f32 %v8825, 0.0
      %v8828 = vmax.f32 %v8826, 0.0
      %s8829 = scalar_lea.vmem %s359, 80
      %8830 = vst.msk [vmem:[%s8829] sm:$0xff] %vm361, %v8827
      %8831 = vst.msk [vmem:[%s8829 + $0x8] sm:$0xff] %vm361, %v8828
      %v8832 = vld [vmem:[#allocation4 + $0x6c] sm:$0xff]
      %v8833 = vld [vmem:[#allocation4 + $0x74] sm:$0xff]
      %v8834 = vld [vmem:[%s5] sm:$0x1]
      %v8836 = vlaneseq
      %v8837 = vshrl.u32 %v8836, 7
      %v8838 = vsub.s32 0, %v8837
      %v8839 = vrot.slane %v8834, %v8838
      %v8841 = vadd.f32 %v8832, %v8839
      %v8842 = vadd.f32 %v8833, %v8839
      %v8843 = vmul.f32 %v8841, %v8711
      %v8844 = vmul.f32 %v8842, %v8711
      %v8845 = vld [vmem:[%s478] sm:$0xff]
      %v8846 = vld [vmem:[%s478 + $0x8] sm:$0xff]
      %v8847 = vadd.f32 %v8843, %v8845
      %v8848 = vadd.f32 %v8844, %v8846
      %v8849 = vmax.f32 %v8847, 0.0
      %v8850 = vmax.f32 %v8848, 0.0
      %s8851 = scalar_lea.vmem %s359, 96
      %8852 = vst.msk [vmem:[%s8851] sm:$0xff] %vm361, %v8849
      %8853 = vst.msk [vmem:[%s8851 + $0x8] sm:$0xff] %vm361, %v8850
      %v8854 = vld [vmem:[#allocation4 + $0x7e] sm:$0xff]
      %v8855 = vld [vmem:[#allocation4 + $0x86] sm:$0xff]
      %v8856 = vld [vmem:[%s5] sm:$0x1]
      %v8858 = vlaneseq
      %v8859 = vshrl.u32 %v8858, 7
      %v8860 = vsub.s32 0, %v8859
      %v8861 = vrot.slane %v8856, %v8860
      %v8863 = vadd.f32 %v8854, %v8861
      %v8864 = vadd.f32 %v8855, %v8861
      %v8865 = vmul.f32 %v8863, %v8711
      %v8866 = vmul.f32 %v8864, %v8711
      %v8867 = vld [vmem:[%s483] sm:$0xff]
      %v8868 = vld [vmem:[%s483 + $0x8] sm:$0xff]
      %v8869 = vadd.f32 %v8865, %v8867
      %v8870 = vadd.f32 %v8866, %v8868
      %v8871 = vmax.f32 %v8869, 0.0
      %v8872 = vmax.f32 %v8870, 0.0
      %s8873 = scalar_lea.vmem %s359, 112
      %8874 = vst.msk [vmem:[%s8873] sm:$0xff] %vm361, %v8871
      %8875 = vst.msk [vmem:[%s8873 + $0x8] sm:$0xff] %vm361, %v8872
      %v8876 = vld [vmem:[#allocation4 + $0x90] sm:$0xff]
      %v8877 = vld [vmem:[#allocation4 + $0x98] sm:$0xff]
      %v8878 = vld [vmem:[%s5] sm:$0x1]
      %v8880 = vlaneseq
      %v8881 = vshrl.u32 %v8880, 7
      %v8882 = vsub.s32 0, %v8881
      %v8883 = vrot.slane %v8878, %v8882
      %v8885 = vadd.f32 %v8876, %v8883
      %v8886 = vadd.f32 %v8877, %v8883
      %v8887 = vmul.f32 %v8885, %v8711
      %v8888 = vmul.f32 %v8886, %v8711
      %v8889 = vld [vmem:[%s488] sm:$0xff]
      %v8890 = vld [vmem:[%s488 + $0x8] sm:$0xff]
      %v8891 = vadd.f32 %v8887, %v8889
      %v8892 = vadd.f32 %v8888, %v8890
      %v8893 = vmax.f32 %v8891, 0.0
      %v8894 = vmax.f32 %v8892, 0.0
      %s8895 = scalar_lea.vmem %s359, 128
      %8896 = vst.msk [vmem:[%s8895] sm:$0xff] %vm361, %v8893
      %8897 = vst.msk [vmem:[%s8895 + $0x8] sm:$0xff] %vm361, %v8894
      %v8898 = vld [vmem:[#allocation4 + $0xa2] sm:$0xff]
      %v8899 = vld [vmem:[#allocation4 + $0xaa] sm:$0xff]
      %v8900 = vld [vmem:[%s5] sm:$0x1]
      %v8902 = vlaneseq
      %v8903 = vshrl.u32 %v8902, 7
      %v8904 = vsub.s32 0, %v8903
      %v8905 = vrot.slane %v8900, %v8904
      %v8907 = vadd.f32 %v8898, %v8905
      %v8908 = vadd.f32 %v8899, %v8905
      %v8909 = vmul.f32 %v8907, %v8711
      %v8910 = vmul.f32 %v8908, %v8711
      %v8911 = vld [vmem:[%s493] sm:$0xff]
      %v8912 = vld [vmem:[%s493 + $0x8] sm:$0xff]
      %v8913 = vadd.f32 %v8909, %v8911
      %v8914 = vadd.f32 %v8910, %v8912
      %v8915 = vmax.f32 %v8913, 0.0
      %v8916 = vmax.f32 %v8914, 0.0
      %s8917 = scalar_lea.vmem %s359, 144
      %8918 = vst.msk [vmem:[%s8917] sm:$0xff] %vm361, %v8915
      %8919 = vst.msk [vmem:[%s8917 + $0x8] sm:$0xff] %vm361, %v8916
      %v8920 = vld [vmem:[#allocation4 + $0xb4] sm:$0xff]
      %v8921 = vld [vmem:[#allocation4 + $0xbc] sm:$0xff]
      %v8922 = vld [vmem:[%s5] sm:$0x1]
      %v8924 = vlaneseq
      %v8925 = vshrl.u32 %v8924, 7
      %v8926 = vsub.s32 0, %v8925
      %v8927 = vrot.slane %v8922, %v8926
      %v8929 = vadd.f32 %v8920, %v8927
      %v8930 = vadd.f32 %v8921, %v8927
      %v8931 = vmul.f32 %v8929, %v8711
      %v8932 = vmul.f32 %v8930, %v8711
      %v8933 = vld [vmem:[%s498] sm:$0xff]
      %v8934 = vld [vmem:[%s498 + $0x8] sm:$0xff]
      %v8935 = vadd.f32 %v8931, %v8933
      %v8936 = vadd.f32 %v8932, %v8934
      %v8937 = vmax.f32 %v8935, 0.0
      %v8938 = vmax.f32 %v8936, 0.0
      %s8939 = scalar_lea.vmem %s359, 160
      %8940 = vst.msk [vmem:[%s8939] sm:$0xff] %vm361, %v8937
      %8941 = vst.msk [vmem:[%s8939 + $0x8] sm:$0xff] %vm361, %v8938
      %v8942 = vld [vmem:[#allocation4 + $0xc6] sm:$0xff]
      %v8943 = vld [vmem:[#allocation4 + $0xce] sm:$0xff]
      %v8944 = vld [vmem:[%s5] sm:$0x1]
      %v8946 = vlaneseq
      %v8947 = vshrl.u32 %v8946, 7
      %v8948 = vsub.s32 0, %v8947
      %v8949 = vrot.slane %v8944, %v8948
      %v8951 = vadd.f32 %v8942, %v8949
      %v8952 = vadd.f32 %v8943, %v8949
      %v8953 = vmul.f32 %v8951, %v8711
      %v8954 = vmul.f32 %v8952, %v8711
      %v8955 = vld [vmem:[%s503] sm:$0xff]
      %v8956 = vld [vmem:[%s503 + $0x8] sm:$0xff]
      %v8957 = vadd.f32 %v8953, %v8955
      %v8958 = vadd.f32 %v8954, %v8956
      %v8959 = vmax.f32 %v8957, 0.0
      %v8960 = vmax.f32 %v8958, 0.0
      %s8961 = scalar_lea.vmem %s359, 176
      %8962 = vst.msk [vmem:[%s8961] sm:$0xff] %vm361, %v8959
      %8963 = vst.msk [vmem:[%s8961 + $0x8] sm:$0xff] %vm361, %v8960
      %v8964 = vld [vmem:[#allocation4 + $0xd8] sm:$0xff]
      %v8965 = vld [vmem:[#allocation4 + $0xe0] sm:$0xff]
      %v8966 = vld [vmem:[%s5] sm:$0x1]
      %v8968 = vlaneseq
      %v8969 = vshrl.u32 %v8968, 7
      %v8970 = vsub.s32 0, %v8969
      %v8971 = vrot.slane %v8966, %v8970
      %v8973 = vadd.f32 %v8964, %v8971
      %v8974 = vadd.f32 %v8965, %v8971
      %v8975 = vmul.f32 %v8973, %v8711
      %v8976 = vmul.f32 %v8974, %v8711
      %v8977 = vld [vmem:[%s508] sm:$0xff]
      %v8978 = vld [vmem:[%s508 + $0x8] sm:$0xff]
      %v8979 = vadd.f32 %v8975, %v8977
      %v8980 = vadd.f32 %v8976, %v8978
      %v8981 = vmax.f32 %v8979, 0.0
      %v8982 = vmax.f32 %v8980, 0.0
      %s8983 = scalar_lea.vmem %s359, 192
      %8984 = vst.msk [vmem:[%s8983] sm:$0xff] %vm361, %v8981
      %8985 = vst.msk [vmem:[%s8983 + $0x8] sm:$0xff] %vm361, %v8982
      %v8986 = vld [vmem:[#allocation4 + $0xea] sm:$0xff]
      %v8987 = vld [vmem:[#allocation4 + $0xf2] sm:$0xff]
      %v8988 = vld [vmem:[%s5] sm:$0x1]
      %v8990 = vlaneseq
      %v8991 = vshrl.u32 %v8990, 7
      %v8992 = vsub.s32 0, %v8991
      %v8993 = vrot.slane %v8988, %v8992
      %v8995 = vadd.f32 %v8986, %v8993
      %v8996 = vadd.f32 %v8987, %v8993
      %v8997 = vmul.f32 %v8995, %v8711
      %v8998 = vmul.f32 %v8996, %v8711
      %v8999 = vld [vmem:[%s513] sm:$0xff]
      %v9000 = vld [vmem:[%s513 + $0x8] sm:$0xff]
      %v9001 = vadd.f32 %v8997, %v8999
      %v9002 = vadd.f32 %v8998, %v9000
      %v9003 = vmax.f32 %v9001, 0.0
      %v9004 = vmax.f32 %v9002, 0.0
      %s9005 = scalar_lea.vmem %s359, 208
      %9006 = vst.msk [vmem:[%s9005] sm:$0xff] %vm361, %v9003
      %9007 = vst.msk [vmem:[%s9005 + $0x8] sm:$0xff] %vm361, %v9004
      %v9008 = vld [vmem:[#allocation4 + $0xfc] sm:$0xff]
      %v9009 = vld [vmem:[#allocation4 + $0x104] sm:$0xff]
      %v9010 = vld [vmem:[%s5] sm:$0x1]
      %v9012 = vlaneseq
      %v9013 = vshrl.u32 %v9012, 7
      %v9014 = vsub.s32 0, %v9013
      %v9015 = vrot.slane %v9010, %v9014
      %v9017 = vadd.f32 %v9008, %v9015
      %v9018 = vadd.f32 %v9009, %v9015
      %v9019 = vmul.f32 %v9017, %v8711
      %v9020 = vmul.f32 %v9018, %v8711
      %v9021 = vld [vmem:[%s518] sm:$0xff]
      %v9022 = vld [vmem:[%s518 + $0x8] sm:$0xff]
      %v9023 = vadd.f32 %v9019, %v9021
      %v9024 = vadd.f32 %v9020, %v9022
      %v9025 = vmax.f32 %v9023, 0.0
      %v9026 = vmax.f32 %v9024, 0.0
      %s9027 = scalar_lea.vmem %s359, 224
      %9028 = vst.msk [vmem:[%s9027] sm:$0xff] %vm361, %v9025
      %9029 = vst.msk [vmem:[%s9027 + $0x8] sm:$0xff] %vm361, %v9026
      %v9030 = vld [vmem:[#allocation4 + $0x10e] sm:$0xff]
      %v9031 = vld [vmem:[#allocation4 + $0x116] sm:$0xff]
      %v9032 = vld [vmem:[%s5] sm:$0x1]
      %v9034 = vlaneseq
      %v9035 = vshrl.u32 %v9034, 7
      %v9036 = vsub.s32 0, %v9035
      %v9037 = vrot.slane %v9032, %v9036
      %v9039 = vadd.f32 %v9030, %v9037
      %v9040 = vadd.f32 %v9031, %v9037
      %v9041 = vmul.f32 %v9039, %v8711
      %v9042 = vmul.f32 %v9040, %v8711
      %v9043 = vld [vmem:[%s523] sm:$0xff]
      %v9044 = vld [vmem:[%s523 + $0x8] sm:$0xff]
      %v9045 = vadd.f32 %v9041, %v9043
      %v9046 = vadd.f32 %v9042, %v9044
      %v9047 = vmax.f32 %v9045, 0.0
      %v9048 = vmax.f32 %v9046, 0.0
      %s9049 = scalar_lea.vmem %s359, 240
      %9050 = vst.msk [vmem:[%s9049] sm:$0xff] %vm361, %v9047
      %9051 = vst.msk [vmem:[%s9049 + $0x8] sm:$0xff] %vm361, %v9048
      %p9052 = scmp.lt.s32.totalorder %s21, 1
      %s9053 = scalar_select %p9052, %s21, 1
      %s9054 = smul.addr %s9053, 32
      %s9055 = smul.addr %s9054, 8
      %s9056 = scalar_lea.vmem %s10, %s9055
      // Predicated region
      $region61: #{tpu_custom_call.1} parent=59 // pred_check
        %p9057 = pneg %p254
      $region62: #{tpu_custom_call.1} parent=59 // pred_check_branch
        %9059 = sbr.rel (%p9057) target = $region64
      $region63: #{tpu_custom_call.1} parent=59 // pred_region
        _
      $region64: #{tpu_custom_call.1} parent=59 // pred_fallthru
        _
    $region60: #{tpu_custom_call.1} parent=5 // pred_fallthru
      _
    %p9060 = scmp.le.s32.totalorder 2, %s16
    // Predicated region
    $region65: #{tpu_custom_call.1} parent=5 // pred_check
      %p9061 = pneg %p9060
    $region66: #{tpu_custom_call.1} parent=5 // pred_check_branch
      %9063 = sbr.rel (%p9061) target = $region68
    $region67: #{tpu_custom_call.1} parent=5 // pred_region
      %s9064 = ssub.s32 %s16, 2
      // Predicated region
      $region69: #{tpu_custom_call.1} parent=67 // pred_check
        %p9065 = pneg %p260
      $region70: #{tpu_custom_call.1} parent=67 // pred_check_branch
        %9067 = sbr.rel (%p9065) target = $region72
      $region71: #{tpu_custom_call.1} parent=67 // pred_region
        %p9068 = scmp.lt.s32.totalorder %s22, 1
        %s9069 = scalar_select %p9068, %s22, 1
        %s9070 = smul.addr %s9069, 32
        %s9071 = smul.addr %s9070, 8
        %s9072 = scalar_lea.vmem %s10, %s9071
      $region72: #{tpu_custom_call.1} parent=67 // pred_fallthru
        _
    $region68: #{tpu_custom_call.1} parent=5 // pred_fallthru
      _
  $region6: #{tpu_custom_call.1} parent=0 // loop_footer
    %s20 = sadd.s32 1, %s16
  $region7: #{tpu_custom_call.1} parent=0 // loop_footer_branch
    %15 = sbr.rel target = $region3
  $region8: #{tpu_custom_call.1} parent=0 // loop_exit
    _

</llo_original>
